<compile_context>
chip_gen: v7x
topology: tpu7x:2x2x1
jax: 0.10.0
libtpu: 0.0.40
codegen_flags: <defaults>
</compile_context>

<pallas_src>
import math

import jax
import jax.numpy as jnp
from jax.experimental import pallas as pl
from jax.experimental.pallas import tpu as pltpu

D = 8
W = 256
INPUT_CH = 3
INPUT_CH_VIEWS = 3
IN_TOTAL = INPUT_CH + INPUT_CH_VIEWS      # 6 (view dirs unused, weights padded w/ zeros)
OUTPUT_CH = 4
OUT_PAD = 128                             # lane-dense padded output width
SKIPS = (4,)


def nerf_kernel(x_ref, w_in_ref, w_hid_ref, b_ref, w_out_ref, b_out_ref,
                out_ref, feat_ref):
    """One tile of rays: full NeRF trunk + output head.

    x_ref      : (tile_n, 6)  bf16   full input (pts + views)
    w_in_ref   : (2, 6, W)    bf16   [w0_padded, w5_pts_part_padded] (zeros on view rows)
    w_hid_ref  : (7, W, W)    bf16   [w1, w2, w3, w4, w5_h_part, w6, w7]
    b_ref      : (8, W)       f32    biases of pts_linears[0..7]
    w_out_ref  : (W, 128)     bf16   output_linear weight, zero-padded past col 4
    b_out_ref  : (1, 128)     f32    output_linear bias,   zero-padded past col 4
    out_ref    : (tile_n,128) f32
    feat_ref   : (tile_n, W)  bf16

    All weights are stored [in, out] (transposed vs. torch nn.Linear.weight),
    so a layer is h @ w + b.  The skip layer's concat([pts, h]) @ W5 is computed
    as x @ w_in[1] + h @ w_hid[4], which is algebraically identical because the
    view-dir rows of w_in[1] are zero.
    """
    x = x_ref[...]                                        # (tile_n, 6) bf16

    def dot_f32(a, w):
        return jnp.dot(a, w, preferred_element_type=jnp.float32)

    # layer 0 : pts -> W   (views contribute 0 via zero-padded weight rows)
    h = jnp.maximum(dot_f32(x, w_in_ref[0]) + b_ref[0], 0.0)

    # layers 1..4 : W -> W
    for j in range(4):
        h = jnp.maximum(
            dot_f32(h.astype(jnp.bfloat16), w_hid_ref[j]) + b_ref[j + 1], 0.0)

    # skip at i=4: h = cat([input_pts, h], -1); layer 5 : (W+3) -> W
    h = jnp.maximum(
        dot_f32(x, w_in_ref[1])
        + dot_f32(h.astype(jnp.bfloat16), w_hid_ref[4])
        + b_ref[5], 0.0)

    # layers 6..7 : W -> W
    for j in range(5, 7):
        h = jnp.maximum(
            dot_f32(h.astype(jnp.bfloat16), w_hid_ref[j]) + b_ref[j + 1], 0.0)

    h_bf16 = h.astype(jnp.bfloat16)

    # use_viewdirs=False: feature_alph == feature_rgb == h (written once;
    # the wrapper returns it twice), outputs = output_linear(h)
    feat_ref[...] = h_bf16
    out_ref[...] = dot_f32(h_bf16, w_out_ref[...]) + b_out_ref[...]


def _xavier_uniform(key, fan_in, fan_out, gain=1.0):
    limit = gain * math.sqrt(6.0 / (fan_in + fan_out))
    # stored [in, out]
    return jax.random.uniform(key, (fan_in, fan_out), jnp.float32, -limit, limit)


def init_nerf_params(key):
    """Deterministic synthetic init mirroring tensorflow_init_weights shapes.

    pts_linears: [3->W, W->W x4, (W+3)->W, W->W x2]; output_linear: W->output_ch.
    Weights stored [in, out]; trunk biases zero (as in the torch module);
    output_linear bias drawn from the torch-default-like uniform range.
    """
    relu_gain = math.sqrt(2.0)
    keys = jax.random.split(key, D + 2)
    in_dims = [INPUT_CH] + [W] * 4 + [W + INPUT_CH] + [W] * 2  # layers 0..7
    weights, biases = [], []
    for i in range(D):
        weights.append(_xavier_uniform(keys[i], in_dims[i], W, gain=relu_gain))
        biases.append(jnp.zeros((W,), jnp.float32))
    w_out = _xavier_uniform(keys[D], W, OUTPUT_CH, gain=1.0)
    bound = 1.0 / math.sqrt(W)
    b_out = jax.random.uniform(keys[D + 1], (OUTPUT_CH,), jnp.float32,
                               -bound, bound)
    return weights, biases, w_out, b_out


def _pack_params(weights, biases, w_out, b_out):
    """Repack torch-layout params into the kernel's stacked bf16 layout."""
    # layer 0 weight: (3, W) -> zero-pad view rows -> (6, W)
    w0_pad = jnp.pad(weights[0], ((0, INPUT_CH_VIEWS), (0, 0)))
    # skip layer weight (W+3, W): split into pts part (3, W) and h part (W, W)
    w5 = weights[5]
    w5p_pad = jnp.pad(w5[:INPUT_CH, :], ((0, INPUT_CH_VIEWS), (0, 0)))
    w5h = w5[INPUT_CH:, :]

    w_in = jnp.stack([w0_pad, w5p_pad]).astype(jnp.bfloat16)        # (2, 6, W)
    w_hid = jnp.stack([weights[1], weights[2], weights[3], weights[4],
                       w5h, weights[6], weights[7]]).astype(jnp.bfloat16)  # (7, W, W)
    b_stack = jnp.stack(biases).astype(jnp.float32)                 # (8, W)

    w_out_pad = jnp.zeros((W, OUT_PAD), jnp.float32).at[:, :OUTPUT_CH].set(w_out)
    w_out_pad = w_out_pad.astype(jnp.bfloat16)                      # (W, 128)
    b_out_pad = jnp.zeros((1, OUT_PAD), jnp.float32).at[0, :OUTPUT_CH].set(b_out)
    return w_in, w_hid, b_stack, w_out_pad, b_out_pad


def nerf_forward(x, weights, biases, w_out, b_out, *, tile_n=512):
    """Pallas NeRF forward. Returns (outputs, feature_alph, feature_rgb)."""
    N, C = x.shape
    assert C == IN_TOTAL

    n_tiles = -(-N // tile_n)          # ceil div
    n_pad = n_tiles * tile_n
    x_bf16 = x.astype(jnp.bfloat16)
    if n_pad != N:
        x_bf16 = jnp.pad(x_bf16, ((0, n_pad - N), (0, 0)))

    w_in, w_hid, b_stack, w_out_pad, b_out_pad = _pack_params(
        weights, biases, w_out, b_out)

    def const_spec(arr):
        nd = arr.ndim
        return pl.BlockSpec(arr.shape, lambda i, nd=nd: (0,) * nd)

    grid = (n_tiles,)
    in_specs = [
        pl.BlockSpec((tile_n, C), lambda i: (i, 0)),
        const_spec(w_in),
        const_spec(w_hid),
        const_spec(b_stack),
        const_spec(w_out_pad),
        const_spec(b_out_pad),
    ]
    out_specs = [
        pl.BlockSpec((tile_n, OUT_PAD), lambda i: (i, 0)),
        pl.BlockSpec((tile_n, W), lambda i: (i, 0)),
    ]
    out_shape = (
        jax.ShapeDtypeStruct((n_pad, OUT_PAD), jnp.float32),
        jax.ShapeDtypeStruct((n_pad, W), jnp.bfloat16),
    )

    fn = pl.pallas_call(
        nerf_kernel,
        grid_spec=pltpu.PrefetchScalarGridSpec(
            num_scalar_prefetch=0,
            grid=grid,
            in_specs=in_specs,
            out_specs=out_specs,
        ),
        out_shape=out_shape,
        compiler_params=pltpu.CompilerParams(
            dimension_semantics=("parallel",)),
    )
    out_full, feat_full = fn(x_bf16, w_in, w_hid, b_stack, w_out_pad, b_out_pad)

    outputs = out_full[:N, :OUTPUT_CH]
    feat = feat_full[:N, :]
    # use_viewdirs=False: feature_alph and feature_rgb are the same tensor.
    return outputs, feat, feat


def nerf_forward_ref(x, weights, biases, w_out, b_out):
    """Pure-JAX f32 reference mirroring the torch forward (use_viewdirs=False)."""
    input_pts = x[:, :INPUT_CH]
    h = input_pts
    for i in range(D):
        h = jnp.maximum(h @ weights[i] + biases[i], 0.0)
        if i in SKIPS:
            h = jnp.concatenate([input_pts, h], axis=-1)
    feature_alph = h
    feature_rgb = h
    outputs = h @ w_out + b_out
    return outputs, feature_alph, feature_rgb


if __name__ == "__main__":
    key = jax.random.PRNGKey(0)
    k_x, k_p = jax.random.split(key)

    # Small demo: 1024 sampled points, tile_n=512 -> 2 grid steps
    # (even step count so v7x's two TensorCores both get work).
    N = 1024
    TILE_N = 512
    x = jax.random.normal(k_x, (N, IN_TOTAL), jnp.float32)

    weights, biases, w_out, b_out = init_nerf_params(k_p)

    outputs, feat_a, feat_r = nerf_forward(x, weights, biases, w_out, b_out,
                                           tile_n=TILE_N)
    jax.block_until_ready((outputs, feat_a, feat_r))

    ref_out, ref_fa, ref_fr = nerf_forward_ref(x, weights, biases, w_out, b_out)

    assert outputs.shape == (N, OUTPUT_CH)
    assert feat_a.shape == (N, W) and feat_r.shape == (N, W)
    # bf16 weights/activations vs. f32 reference -> loose tolerance.
    assert jnp.allclose(outputs, ref_out, atol=3e-2, rtol=3e-2)
    assert jnp.allclose(feat_a.astype(jnp.float32), ref_fa, atol=3e-2, rtol=3e-2)
    assert jnp.allclose(feat_r.astype(jnp.float32), ref_fr, atol=3e-2, rtol=3e-2)

    print("KERNEL_OK")
</pallas_src>

<mosaic_0001>
module attributes {stable_mosaic.version = 11 : i64} {
  func.func @nerf_kernel(%arg0: i32, %arg1: memref<512x6xbf16, #tpu.memory_space<vmem>>, %arg2: memref<2x6x256xbf16, #tpu.memory_space<vmem>>, %arg3: memref<7x256x256xbf16, #tpu.memory_space<vmem>>, %arg4: memref<8x256xf32, #tpu.memory_space<vmem>>, %arg5: memref<256x128xbf16, #tpu.memory_space<vmem>>, %arg6: memref<1x128xf32, #tpu.memory_space<vmem>>, %arg7: memref<512x128xf32, #tpu.memory_space<vmem>>, %arg8: memref<512x256xbf16, #tpu.memory_space<vmem>>) attributes {dimension_semantics = [#tpu.dimension_semantics<parallel>], iteration_bounds = array<i64: 2>, scalar_prefetch = 0 : i64, scratch_operands = 0 : i64, tpu.core_type = #tpu.core_type<tc>, window_params = [{transform_indices = @transform_0, window_bounds = array<i64: 512, 6>}, {pipeline_mode = #tpu.pipeline_mode<synchronous>, transform_indices = @transform_1, window_bounds = array<i64: 2, 6, 256>}, {pipeline_mode = #tpu.pipeline_mode<synchronous>, transform_indices = @transform_2, window_bounds = array<i64: 7, 256, 256>}, {pipeline_mode = #tpu.pipeline_mode<synchronous>, transform_indices = @transform_3, window_bounds = array<i64: 8, 256>}, {pipeline_mode = #tpu.pipeline_mode<synchronous>, transform_indices = @transform_4, window_bounds = array<i64: 256, 128>}, {pipeline_mode = #tpu.pipeline_mode<synchronous>, transform_indices = @transform_5, window_bounds = array<i64: 1, 128>}, {transform_indices = @transform_6, window_bounds = array<i64: 512, 128>}, {transform_indices = @transform_7, window_bounds = array<i64: 512, 256>}]} {
    %c0 = arith.constant 0 : index
    %c0_0 = arith.constant 0 : index
    %0 = vector.load %arg1[%c0, %c0_0] : memref<512x6xbf16, #tpu.memory_space<vmem>>, vector<512x6xbf16>
    %c0_1 = arith.constant 0 : index
    %c0_2 = arith.constant 0 : index
    %c0_3 = arith.constant 0 : index
    %1 = vector.load %arg2[%c0_1, %c0_2, %c0_3] : memref<2x6x256xbf16, #tpu.memory_space<vmem>>, vector<1x6x256xbf16>
    %2 = vector.shape_cast %1 : vector<1x6x256xbf16> to vector<6x256xbf16>
    %cst = arith.constant dense<0.000000e+00> : vector<512x256xf32>
    %3 = tpu.matmul %0, %2, %cst {dimension_numbers = #tpu.dot_dimension_numbers<[1], [0], [0], [1], [0, 0, 1, 1], [], []>} : vector<512x6xbf16>, vector<6x256xbf16>, vector<512x256xf32> -> vector<512x256xf32>
    %c0_4 = arith.constant 0 : index
    %c0_5 = arith.constant 0 : index
    %4 = vector.load %arg4[%c0_4, %c0_5] : memref<8x256xf32, #tpu.memory_space<vmem>>, vector<1x256xf32>
    %5 = vector.shape_cast %4 : vector<1x256xf32> to vector<256xf32>
    %6 = vector.shape_cast %5 : vector<256xf32> to vector<1x256xf32>
    %7 = vector.broadcast %6 : vector<1x256xf32> to vector<512x256xf32>
    %8 = arith.addf %3, %7 : vector<512x256xf32>
    %cst_6 = arith.constant 0.000000e+00 : f32
    %9 = vector.broadcast %cst_6 : f32 to vector<512x256xf32>
    %10 = arith.maximumf %8, %9 : vector<512x256xf32>
    %11 = arith.truncf %10 : vector<512x256xf32> to vector<512x256xbf16>
    %c0_7 = arith.constant 0 : index
    %c0_8 = arith.constant 0 : index
    %c0_9 = arith.constant 0 : index
    %12 = vector.load %arg3[%c0_7, %c0_8, %c0_9] : memref<7x256x256xbf16, #tpu.memory_space<vmem>>, vector<1x256x256xbf16>
    %13 = vector.shape_cast %12 : vector<1x256x256xbf16> to vector<256x256xbf16>
    %cst_10 = arith.constant dense<0.000000e+00> : vector<512x256xf32>
    %14 = tpu.matmul %11, %13, %cst_10 {dimension_numbers = #tpu.dot_dimension_numbers<[1], [0], [0], [1], [0, 0, 1, 1], [], []>} : vector<512x256xbf16>, vector<256x256xbf16>, vector<512x256xf32> -> vector<512x256xf32>
    %c1 = arith.constant 1 : index
    %c0_11 = arith.constant 0 : index
    %15 = vector.load %arg4[%c1, %c0_11] : memref<8x256xf32, #tpu.memory_space<vmem>>, vector<1x256xf32>
    %16 = vector.shape_cast %15 : vector<1x256xf32> to vector<256xf32>
    %17 = vector.shape_cast %16 : vector<256xf32> to vector<1x256xf32>
    %18 = vector.broadcast %17 : vector<1x256xf32> to vector<512x256xf32>
    %19 = arith.addf %14, %18 : vector<512x256xf32>
    %cst_12 = arith.constant 0.000000e+00 : f32
    %20 = vector.broadcast %cst_12 : f32 to vector<512x256xf32>
    %21 = arith.maximumf %19, %20 : vector<512x256xf32>
    %22 = arith.truncf %21 : vector<512x256xf32> to vector<512x256xbf16>
    %c1_13 = arith.constant 1 : index
    %c0_14 = arith.constant 0 : index
    %c0_15 = arith.constant 0 : index
    %23 = vector.load %arg3[%c1_13, %c0_14, %c0_15] : memref<7x256x256xbf16, #tpu.memory_space<vmem>>, vector<1x256x256xbf16>
    %24 = vector.shape_cast %23 : vector<1x256x256xbf16> to vector<256x256xbf16>
    %cst_16 = arith.constant dense<0.000000e+00> : vector<512x256xf32>
    %25 = tpu.matmul %22, %24, %cst_16 {dimension_numbers = #tpu.dot_dimension_numbers<[1], [0], [0], [1], [0, 0, 1, 1], [], []>} : vector<512x256xbf16>, vector<256x256xbf16>, vector<512x256xf32> -> vector<512x256xf32>
    %c2 = arith.constant 2 : index
    %c0_17 = arith.constant 0 : index
    %26 = vector.load %arg4[%c2, %c0_17] : memref<8x256xf32, #tpu.memory_space<vmem>>, vector<1x256xf32>
    %27 = vector.shape_cast %26 : vector<1x256xf32> to vector<256xf32>
    %28 = vector.shape_cast %27 : vector<256xf32> to vector<1x256xf32>
    %29 = vector.broadcast %28 : vector<1x256xf32> to vector<512x256xf32>
    %30 = arith.addf %25, %29 : vector<512x256xf32>
    %cst_18 = arith.constant 0.000000e+00 : f32
    %31 = vector.broadcast %cst_18 : f32 to vector<512x256xf32>
    %32 = arith.maximumf %30, %31 : vector<512x256xf32>
    %33 = arith.truncf %32 : vector<512x256xf32> to vector<512x256xbf16>
    %c2_19 = arith.constant 2 : index
    %c0_20 = arith.constant 0 : index
    %c0_21 = arith.constant 0 : index
    %34 = vector.load %arg3[%c2_19, %c0_20, %c0_21] : memref<7x256x256xbf16, #tpu.memory_space<vmem>>, vector<1x256x256xbf16>
    %35 = vector.shape_cast %34 : vector<1x256x256xbf16> to vector<256x256xbf16>
    %cst_22 = arith.constant dense<0.000000e+00> : vector<512x256xf32>
    %36 = tpu.matmul %33, %35, %cst_22 {dimension_numbers = #tpu.dot_dimension_numbers<[1], [0], [0], [1], [0, 0, 1, 1], [], []>} : vector<512x256xbf16>, vector<256x256xbf16>, vector<512x256xf32> -> vector<512x256xf32>
    %c3 = arith.constant 3 : index
    %c0_23 = arith.constant 0 : index
    %37 = vector.load %arg4[%c3, %c0_23] : memref<8x256xf32, #tpu.memory_space<vmem>>, vector<1x256xf32>
    %38 = vector.shape_cast %37 : vector<1x256xf32> to vector<256xf32>
    %39 = vector.shape_cast %38 : vector<256xf32> to vector<1x256xf32>
    %40 = vector.broadcast %39 : vector<1x256xf32> to vector<512x256xf32>
    %41 = arith.addf %36, %40 : vector<512x256xf32>
    %cst_24 = arith.constant 0.000000e+00 : f32
    %42 = vector.broadcast %cst_24 : f32 to vector<512x256xf32>
    %43 = arith.maximumf %41, %42 : vector<512x256xf32>
    %44 = arith.truncf %43 : vector<512x256xf32> to vector<512x256xbf16>
    %c3_25 = arith.constant 3 : index
    %c0_26 = arith.constant 0 : index
    %c0_27 = arith.constant 0 : index
    %45 = vector.load %arg3[%c3_25, %c0_26, %c0_27] : memref<7x256x256xbf16, #tpu.memory_space<vmem>>, vector<1x256x256xbf16>
    %46 = vector.shape_cast %45 : vector<1x256x256xbf16> to vector<256x256xbf16>
    %cst_28 = arith.constant dense<0.000000e+00> : vector<512x256xf32>
    %47 = tpu.matmul %44, %46, %cst_28 {dimension_numbers = #tpu.dot_dimension_numbers<[1], [0], [0], [1], [0, 0, 1, 1], [], []>} : vector<512x256xbf16>, vector<256x256xbf16>, vector<512x256xf32> -> vector<512x256xf32>
    %c4 = arith.constant 4 : index
    %c0_29 = arith.constant 0 : index
    %48 = vector.load %arg4[%c4, %c0_29] : memref<8x256xf32, #tpu.memory_space<vmem>>, vector<1x256xf32>
    %49 = vector.shape_cast %48 : vector<1x256xf32> to vector<256xf32>
    %50 = vector.shape_cast %49 : vector<256xf32> to vector<1x256xf32>
    %51 = vector.broadcast %50 : vector<1x256xf32> to vector<512x256xf32>
    %52 = arith.addf %47, %51 : vector<512x256xf32>
    %cst_30 = arith.constant 0.000000e+00 : f32
    %53 = vector.broadcast %cst_30 : f32 to vector<512x256xf32>
    %54 = arith.maximumf %52, %53 : vector<512x256xf32>
    %c1_31 = arith.constant 1 : index
    %c0_32 = arith.constant 0 : index
    %c0_33 = arith.constant 0 : index
    %55 = vector.load %arg2[%c1_31, %c0_32, %c0_33] : memref<2x6x256xbf16, #tpu.memory_space<vmem>>, vector<1x6x256xbf16>
    %56 = vector.shape_cast %55 : vector<1x6x256xbf16> to vector<6x256xbf16>
    %cst_34 = arith.constant dense<0.000000e+00> : vector<512x256xf32>
    %57 = tpu.matmul %0, %56, %cst_34 {dimension_numbers = #tpu.dot_dimension_numbers<[1], [0], [0], [1], [0, 0, 1, 1], [], []>} : vector<512x6xbf16>, vector<6x256xbf16>, vector<512x256xf32> -> vector<512x256xf32>
    %58 = arith.truncf %54 : vector<512x256xf32> to vector<512x256xbf16>
    %c4_35 = arith.constant 4 : index
    %c0_36 = arith.constant 0 : index
    %c0_37 = arith.constant 0 : index
    %59 = vector.load %arg3[%c4_35, %c0_36, %c0_37] : memref<7x256x256xbf16, #tpu.memory_space<vmem>>, vector<1x256x256xbf16>
    %60 = vector.shape_cast %59 : vector<1x256x256xbf16> to vector<256x256xbf16>
    %cst_38 = arith.constant dense<0.000000e+00> : vector<512x256xf32>
    %61 = tpu.matmul %58, %60, %cst_38 {dimension_numbers = #tpu.dot_dimension_numbers<[1], [0], [0], [1], [0, 0, 1, 1], [], []>} : vector<512x256xbf16>, vector<256x256xbf16>, vector<512x256xf32> -> vector<512x256xf32>
    %62 = arith.addf %57, %61 : vector<512x256xf32>
    %c5 = arith.constant 5 : index
    %c0_39 = arith.constant 0 : index
    %63 = vector.load %arg4[%c5, %c0_39] : memref<8x256xf32, #tpu.memory_space<vmem>>, vector<1x256xf32>
    %64 = vector.shape_cast %63 : vector<1x256xf32> to vector<256xf32>
    %65 = vector.shape_cast %64 : vector<256xf32> to vector<1x256xf32>
    %66 = vector.broadcast %65 : vector<1x256xf32> to vector<512x256xf32>
    %67 = arith.addf %62, %66 : vector<512x256xf32>
    %cst_40 = arith.constant 0.000000e+00 : f32
    %68 = vector.broadcast %cst_40 : f32 to vector<512x256xf32>
    %69 = arith.maximumf %67, %68 : vector<512x256xf32>
    %70 = arith.truncf %69 : vector<512x256xf32> to vector<512x256xbf16>
    %c5_41 = arith.constant 5 : index
    %c0_42 = arith.constant 0 : index
    %c0_43 = arith.constant 0 : index
    %71 = vector.load %arg3[%c5_41, %c0_42, %c0_43] : memref<7x256x256xbf16, #tpu.memory_space<vmem>>, vector<1x256x256xbf16>
    %72 = vector.shape_cast %71 : vector<1x256x256xbf16> to vector<256x256xbf16>
    %cst_44 = arith.constant dense<0.000000e+00> : vector<512x256xf32>
    %73 = tpu.matmul %70, %72, %cst_44 {dimension_numbers = #tpu.dot_dimension_numbers<[1], [0], [0], [1], [0, 0, 1, 1], [], []>} : vector<512x256xbf16>, vector<256x256xbf16>, vector<512x256xf32> -> vector<512x256xf32>
    %c6 = arith.constant 6 : index
    %c0_45 = arith.constant 0 : index
    %74 = vector.load %arg4[%c6, %c0_45] : memref<8x256xf32, #tpu.memory_space<vmem>>, vector<1x256xf32>
    %75 = vector.shape_cast %74 : vector<1x256xf32> to vector<256xf32>
    %76 = vector.shape_cast %75 : vector<256xf32> to vector<1x256xf32>
    %77 = vector.broadcast %76 : vector<1x256xf32> to vector<512x256xf32>
    %78 = arith.addf %73, %77 : vector<512x256xf32>
    %cst_46 = arith.constant 0.000000e+00 : f32
    %79 = vector.broadcast %cst_46 : f32 to vector<512x256xf32>
    %80 = arith.maximumf %78, %79 : vector<512x256xf32>
    %81 = arith.truncf %80 : vector<512x256xf32> to vector<512x256xbf16>
    %c6_47 = arith.constant 6 : index
    %c0_48 = arith.constant 0 : index
    %c0_49 = arith.constant 0 : index
    %82 = vector.load %arg3[%c6_47, %c0_48, %c0_49] : memref<7x256x256xbf16, #tpu.memory_space<vmem>>, vector<1x256x256xbf16>
    %83 = vector.shape_cast %82 : vector<1x256x256xbf16> to vector<256x256xbf16>
    %cst_50 = arith.constant dense<0.000000e+00> : vector<512x256xf32>
    %84 = tpu.matmul %81, %83, %cst_50 {dimension_numbers = #tpu.dot_dimension_numbers<[1], [0], [0], [1], [0, 0, 1, 1], [], []>} : vector<512x256xbf16>, vector<256x256xbf16>, vector<512x256xf32> -> vector<512x256xf32>
    %c7 = arith.constant 7 : index
    %c0_51 = arith.constant 0 : index
    %85 = vector.load %arg4[%c7, %c0_51] : memref<8x256xf32, #tpu.memory_space<vmem>>, vector<1x256xf32>
    %86 = vector.shape_cast %85 : vector<1x256xf32> to vector<256xf32>
    %87 = vector.shape_cast %86 : vector<256xf32> to vector<1x256xf32>
    %88 = vector.broadcast %87 : vector<1x256xf32> to vector<512x256xf32>
    %89 = arith.addf %84, %88 : vector<512x256xf32>
    %cst_52 = arith.constant 0.000000e+00 : f32
    %90 = vector.broadcast %cst_52 : f32 to vector<512x256xf32>
    %91 = arith.maximumf %89, %90 : vector<512x256xf32>
    %92 = arith.truncf %91 : vector<512x256xf32> to vector<512x256xbf16>
    %c0_53 = arith.constant 0 : index
    %c0_54 = arith.constant 0 : index
    %93 = vector.load %arg8[%c0_53, %c0_54] : memref<512x256xbf16, #tpu.memory_space<vmem>>, vector<512x256xbf16>
    tpu.vector_store %arg8[%c0_53, %c0_54], %92 {strides = array<i32>} : memref<512x256xbf16, #tpu.memory_space<vmem>>, vector<512x256xbf16>,
    %c0_55 = arith.constant 0 : index
    %c0_56 = arith.constant 0 : index
    %94 = vector.load %arg5[%c0_55, %c0_56] : memref<256x128xbf16, #tpu.memory_space<vmem>>, vector<256x128xbf16>
    %cst_57 = arith.constant dense<0.000000e+00> : vector<512x128xf32>
    %95 = tpu.matmul %92, %94, %cst_57 {dimension_numbers = #tpu.dot_dimension_numbers<[1], [0], [0], [1], [0, 0, 1, 1], [], []>} : vector<512x256xbf16>, vector<256x128xbf16>, vector<512x128xf32> -> vector<512x128xf32>
    %c0_58 = arith.constant 0 : index
    %c0_59 = arith.constant 0 : index
    %96 = vector.load %arg6[%c0_58, %c0_59] : memref<1x128xf32, #tpu.memory_space<vmem>>, vector<1x128xf32>
    %97 = vector.broadcast %96 : vector<1x128xf32> to vector<512x128xf32>
    %98 = arith.addf %95, %97 : vector<512x128xf32>
    %c0_60 = arith.constant 0 : index
    %c0_61 = arith.constant 0 : index
    %99 = vector.load %arg7[%c0_60, %c0_61] : memref<512x128xf32, #tpu.memory_space<vmem>>, vector<512x128xf32>
    tpu.vector_store %arg7[%c0_60, %c0_61], %98 {strides = array<i32>} : memref<512x128xf32, #tpu.memory_space<vmem>>, vector<512x128xf32>,
    return
  }
  func.func @transform_0(%arg0: i32) -> (i32, i32) {
    %c0_i32 = arith.constant 0 : i32
    %c0_i32_0 = arith.constant 0 : i32
    return %arg0, %c0_i32 : i32, i32
  }
  func.func @transform_1(%arg0: i32) -> (i32, i32, i32) {
    %c0_i32 = arith.constant 0 : i32
    %c0_i32_0 = arith.constant 0 : i32
    %c0_i32_1 = arith.constant 0 : i32
    %c0_i32_2 = arith.constant 0 : i32
    return %c0_i32, %c0_i32_0, %c0_i32_1 : i32, i32, i32
  }
  func.func @transform_2(%arg0: i32) -> (i32, i32, i32) {
    %c0_i32 = arith.constant 0 : i32
    %c0_i32_0 = arith.constant 0 : i32
    %c0_i32_1 = arith.constant 0 : i32
    %c0_i32_2 = arith.constant 0 : i32
    return %c0_i32, %c0_i32_0, %c0_i32_1 : i32, i32, i32
  }
  func.func @transform_3(%arg0: i32) -> (i32, i32) {
    %c0_i32 = arith.constant 0 : i32
    %c0_i32_0 = arith.constant 0 : i32
    %c0_i32_1 = arith.constant 0 : i32
    return %c0_i32, %c0_i32_0 : i32, i32
  }
  func.func @transform_4(%arg0: i32) -> (i32, i32) {
    %c0_i32 = arith.constant 0 : i32
    %c0_i32_0 = arith.constant 0 : i32
    %c0_i32_1 = arith.constant 0 : i32
    return %c0_i32, %c0_i32_0 : i32, i32
  }
  func.func @transform_5(%arg0: i32) -> (i32, i32) {
    %c0_i32 = arith.constant 0 : i32
    %c0_i32_0 = arith.constant 0 : i32
    %c0_i32_1 = arith.constant 0 : i32
    return %c0_i32, %c0_i32_0 : i32, i32
  }
  func.func @transform_6(%arg0: i32) -> (i32, i32) {
    %c0_i32 = arith.constant 0 : i32
    %c0_i32_0 = arith.constant 0 : i32
    return %arg0, %c0_i32 : i32, i32
  }
  func.func @transform_7(%arg0: i32) -> (i32, i32) {
    %c0_i32 = arith.constant 0 : i32
    %c0_i32_0 = arith.constant 0 : i32
    return %arg0, %c0_i32 : i32, i32
  }
}

</mosaic_0001>

<llo_original>
// kernel: tpu_custom_call.1
$region0: #{tpu_custom_call.1}
  #allocation0 [shape = 'u32[]', space=smem, size = 0x4, offset = 0x4, fixed_abs, tag = 'smem constant byte address 0x4 - core index']
  #allocation1 [shape = 'u32[144,128]{1,0:T(1,128)}', space=vmem, size = 0x12000, scoped, tag = 'internal scratch']
  %s0 = inlined_call_operand.vmem [shape: bf16[1024,6], index: 0, kind: input, shape index: {}]
  %s1 = inlined_call_operand.vmem [shape: bf16[2,6,256], index: 1, kind: input, shape index: {}]
  %s2 = inlined_call_operand.hbm [shape: bf16[7,256,256], index: 2, kind: input, shape index: {}]
  %s3 = inlined_call_operand.vmem [shape: f32[8,256], index: 3, kind: input, shape index: {}]
  %s4 = inlined_call_operand.vmem [shape: bf16[256,128], index: 4, kind: input, shape index: {}]
  %s5 = inlined_call_operand.vmem [shape: f32[1,128], index: 5, kind: input, shape index: {}]
  %s6 = inlined_call_operand.hbm [shape: f32[1024,128], index: 6, kind: output, shape index: {0}]
  %s7 = inlined_call_operand.hbm [shape: bf16[1024,256], index: 7, kind: output, shape index: {1}]
  %8 = xla_tuple %s6, %s7
  %s9 = sld [smem:[#allocation0]]
  $region69: #{tpu_custom_call.1} parent=0
    _
  %s11 = ssub.s32 1, %s9
  %s12 = scalar_select 0, %s11, %s9
  $region1: #{tpu_custom_call.1} parent=0
    #allocation2 [shape = 'u8[917504]{0}', space=vmem, size = 0xe0000, scoped, tag = 'input window, operand 2, single buffered']
    #allocation3 [shape = 's32[2]{0}', space=sflag, size = 0x8, scoped, tag = 'scoped memory for tpu_custom_call.1']
    #allocation4 [shape = 's32[2]{0}', space=sflag, size = 0x8, scoped, tag = 'scoped memory for tpu_custom_call.1']
    #allocation5 [shape = 'u8[524288]{0}', space=vmem, size = 0x80000, scoped, tag = 'output window, operand 0']
    #allocation6 [shape = 'u8[524288]{0}', space=vmem, size = 0x80000, scoped, tag = 'output window, operand 1']
    #allocation7 [shape = 's32[2]{0}', space=sflag, size = 0x8, scoped, tag = 'scoped memory for tpu_custom_call.1']
    %13 = vsyncpa [#allocation3], 0
    %14 = vsyncpa [#allocation4], 0
    %s15 = scalar_lea.sflag [#allocation4], 1
    %16 = vsyncpa %s15, 0
    %17 = vsyncpa [#allocation7], 0
    %s18 = scalar_lea.sflag [#allocation7], 1
    %19 = vsyncpa %s18, 0
    loop: start=0, step=1, limit=4
    $region2: #{tpu_custom_call.1} parent=1 // loop_pre_header
      _
    $region3: #{tpu_custom_call.1} parent=1 // loop_header
      %s21 = sphi 0, %s25
      %p22 = scmp.ge.s32.totalorder %s21, 4
      %s31 = sphi 0, %s33
      %s34 = sphi 0, %s31
      %s35 = sphi 0, %s34
      %s51 = sphi 0, %s35
      %s55 = sphi 0, %s55
      %s57 = sphi 0, %s55
      %s58 = sphi 0, %s57
      %s72 = sphi 0, %s58
      %s76 = sphi 0, %s76
      %s78 = sphi 0, %s76
      %s79 = sphi 0, %s78
      %s93 = sphi 0, %s79
      %s97 = sphi 0, %s97
      %s99 = sphi 0, %s97
      %s100 = sphi 0, %s99
      %s114 = sphi 0, %s100
      %s118 = sphi 0, %s118
      %s120 = sphi 0, %s118
      %s121 = sphi 0, %s120
      %s135 = sphi 0, %s121
      %s139 = sphi 0, %s139
      %s141 = sphi 0, %s139
      %s142 = sphi 0, %s141
      %s156 = sphi 0, %s142
      %s162 = sphi 0, %s164
      %s165 = sphi 0, %s162
      %s166 = sphi 0, %s165
      %s182 = sphi 0, %s166
      %s188 = sphi 0, %s190
      %s191 = sphi 0, %s188
      %s192 = sphi 0, %s191
      %s208 = sphi 0, %s192
    $region4: #{tpu_custom_call.1} parent=1 // loop_header_branch
      %24 = sbr.rel (%p22) target = $region8
    $region5: #{tpu_custom_call.1} parent=1 // loop_body
      %s26 = ssub.s32 %s21, 1
      %s27 = ssub.s32 %s21, 2
      %s28 = sadd.s32 %s21, 1
      %s29 = ssub.s32 %s21, %s28
      %p30 = scmp.eq.s32.totalorder %s29, 0
      %s32 = sadd.s32 %s31, 1
      %s33 = scalar_select %p30, %s31, %s32
      %p36 = pneg %p30
      %p37 = scmp.eq.s32.totalorder %s21, 1
      %p38 = por %p36, %p37
      %p39 = scmp.ne.s32.totalorder %s31, %s34
      %p40 = scmp.eq.s32.totalorder %s21, 0
      %p41 = por %p39, %p40
      %p42 = scmp.ne.s32.totalorder %s31, %s34
      %p43 = scmp.eq.s32.totalorder %s26, 1
      %p44 = por %p42, %p43
      %p45 = scmp.ne.s32.totalorder %s34, %s35
      %p46 = scmp.eq.s32.totalorder %s26, 0
      %p47 = por %p45, %p46
      %p48 = scmp.ne.s32.totalorder %s34, %s35
      %p49 = scmp.eq.s32.totalorder %s27, 1
      %p50 = por %p48, %p49
      %p52 = scmp.ne.s32.totalorder %s35, %s51
      %p53 = scmp.eq.s32.totalorder %s27, 0
      %p54 = por %p52, %p53
      %s56 = sadd.s32 %s55, 1
      %p59 = scmp.eq.s32.totalorder %s21, 1
      %p60 = scmp.ne.s32.totalorder %s55, %s57
      %p61 = scmp.eq.s32.totalorder %s21, 0
      %p62 = por %p60, %p61
      %p63 = scmp.ne.s32.totalorder %s55, %s57
      %p64 = scmp.eq.s32.totalorder %s26, 1
      %p65 = por %p63, %p64
      %p66 = scmp.ne.s32.totalorder %s57, %s58
      %p67 = scmp.eq.s32.totalorder %s26, 0
      %p68 = por %p66, %p67
      %p69 = scmp.ne.s32.totalorder %s57, %s58
      %p70 = scmp.eq.s32.totalorder %s27, 1
      %p71 = por %p69, %p70
      %p73 = scmp.ne.s32.totalorder %s58, %s72
      %p74 = scmp.eq.s32.totalorder %s27, 0
      %p75 = por %p73, %p74
      %s77 = sadd.s32 %s76, 1
      %p80 = scmp.eq.s32.totalorder %s21, 1
      %p81 = scmp.ne.s32.totalorder %s76, %s78
      %p82 = scmp.eq.s32.totalorder %s21, 0
      %p83 = por %p81, %p82
      %p84 = scmp.ne.s32.totalorder %s76, %s78
      %p85 = scmp.eq.s32.totalorder %s26, 1
      %p86 = por %p84, %p85
      %p87 = scmp.ne.s32.totalorder %s78, %s79
      %p88 = scmp.eq.s32.totalorder %s26, 0
      %p89 = por %p87, %p88
      %p90 = scmp.ne.s32.totalorder %s78, %s79
      %p91 = scmp.eq.s32.totalorder %s27, 1
      %p92 = por %p90, %p91
      %p94 = scmp.ne.s32.totalorder %s79, %s93
      %p95 = scmp.eq.s32.totalorder %s27, 0
      %p96 = por %p94, %p95
      %s98 = sadd.s32 %s97, 1
      %p101 = scmp.eq.s32.totalorder %s21, 1
      %p102 = scmp.ne.s32.totalorder %s97, %s99
      %p103 = scmp.eq.s32.totalorder %s21, 0
      %p104 = por %p102, %p103
      %p105 = scmp.ne.s32.totalorder %s97, %s99
      %p106 = scmp.eq.s32.totalorder %s26, 1
      %p107 = por %p105, %p106
      %p108 = scmp.ne.s32.totalorder %s99, %s100
      %p109 = scmp.eq.s32.totalorder %s26, 0
      %p110 = por %p108, %p109
      %p111 = scmp.ne.s32.totalorder %s99, %s100
      %p112 = scmp.eq.s32.totalorder %s27, 1
      %p113 = por %p111, %p112
      %p115 = scmp.ne.s32.totalorder %s100, %s114
      %p116 = scmp.eq.s32.totalorder %s27, 0
      %p117 = por %p115, %p116
      %s119 = sadd.s32 %s118, 1
      %p122 = scmp.eq.s32.totalorder %s21, 1
      %p123 = scmp.ne.s32.totalorder %s118, %s120
      %p124 = scmp.eq.s32.totalorder %s21, 0
      %p125 = por %p123, %p124
      %p126 = scmp.ne.s32.totalorder %s118, %s120
      %p127 = scmp.eq.s32.totalorder %s26, 1
      %p128 = por %p126, %p127
      %p129 = scmp.ne.s32.totalorder %s120, %s121
      %p130 = scmp.eq.s32.totalorder %s26, 0
      %p131 = por %p129, %p130
      %p132 = scmp.ne.s32.totalorder %s120, %s121
      %p133 = scmp.eq.s32.totalorder %s27, 1
      %p134 = por %p132, %p133
      %p136 = scmp.ne.s32.totalorder %s121, %s135
      %p137 = scmp.eq.s32.totalorder %s27, 0
      %p138 = por %p136, %p137
      %s140 = sadd.s32 %s139, 1
      %p143 = scmp.eq.s32.totalorder %s21, 1
      %p144 = scmp.ne.s32.totalorder %s139, %s141
      %p145 = scmp.eq.s32.totalorder %s21, 0
      %p146 = por %p144, %p145
      %p147 = scmp.ne.s32.totalorder %s139, %s141
      %p148 = scmp.eq.s32.totalorder %s26, 1
      %p149 = por %p147, %p148
      %p150 = scmp.ne.s32.totalorder %s141, %s142
      %p151 = scmp.eq.s32.totalorder %s26, 0
      %p152 = por %p150, %p151
      %p153 = scmp.ne.s32.totalorder %s141, %s142
      %p154 = scmp.eq.s32.totalorder %s27, 1
      %p155 = por %p153, %p154
      %p157 = scmp.ne.s32.totalorder %s142, %s156
      %p158 = scmp.eq.s32.totalorder %s27, 0
      %p159 = por %p157, %p158
      %s160 = ssub.s32 %s21, %s28
      %p161 = scmp.eq.s32.totalorder %s160, 0
      %s163 = sadd.s32 %s162, 1
      %s164 = scalar_select %p161, %s162, %s163
      %p167 = pneg %p161
      %p168 = scmp.eq.s32.totalorder %s21, 1
      %p169 = por %p167, %p168
      %p170 = scmp.ne.s32.totalorder %s162, %s165
      %p171 = scmp.eq.s32.totalorder %s21, 0
      %p172 = por %p170, %p171
      %p173 = scmp.ne.s32.totalorder %s162, %s165
      %p174 = scmp.eq.s32.totalorder %s26, 1
      %p175 = por %p173, %p174
      %p176 = scmp.ne.s32.totalorder %s165, %s166
      %p177 = scmp.eq.s32.totalorder %s26, 0
      %p178 = por %p176, %p177
      %p179 = scmp.ne.s32.totalorder %s165, %s166
      %p180 = scmp.eq.s32.totalorder %s27, 1
      %p181 = por %p179, %p180
      %p183 = scmp.ne.s32.totalorder %s166, %s182
      %p184 = scmp.eq.s32.totalorder %s27, 0
      %p185 = por %p183, %p184
      %s186 = ssub.s32 %s21, %s28
      %p187 = scmp.eq.s32.totalorder %s186, 0
      %s189 = sadd.s32 %s188, 1
      %s190 = scalar_select %p187, %s188, %s189
      %p193 = pneg %p187
      %p194 = scmp.eq.s32.totalorder %s21, 1
      %p195 = por %p193, %p194
      %p196 = scmp.ne.s32.totalorder %s188, %s191
      %p197 = scmp.eq.s32.totalorder %s21, 0
      %p198 = por %p196, %p197
      %p199 = scmp.ne.s32.totalorder %s188, %s191
      %p200 = scmp.eq.s32.totalorder %s26, 1
      %p201 = por %p199, %p200
      %p202 = scmp.ne.s32.totalorder %s191, %s192
      %p203 = scmp.eq.s32.totalorder %s26, 0
      %p204 = por %p202, %p203
      %p205 = scmp.ne.s32.totalorder %s191, %s192
      %p206 = scmp.eq.s32.totalorder %s27, 1
      %p207 = por %p205, %p206
      %p209 = scmp.ne.s32.totalorder %s192, %s208
      %p210 = scmp.eq.s32.totalorder %s27, 0
      %p211 = por %p209, %p210
      %p212 = scmp.le.s32.totalorder 1, %s21
      %p213 = scmp.lt.s32.totalorder %s21, 3
      %p214 = pnand %p212, %p213
      %p215 = pneg %p214
      // Predicated region
      $region9: #{tpu_custom_call.1} parent=5 // pred_check
        _
      $region10: #{tpu_custom_call.1} parent=5 // pred_check_branch
        %217 = sbr.rel (%p214) target = $region12
      $region11: #{tpu_custom_call.1} parent=5 // pred_region
        %s218 = ssub.s32 %s21, 1
        // Predicated region
        $region13: #{tpu_custom_call.1} parent=11 // pred_check
          %p219 = pneg %p68
        $region14: #{tpu_custom_call.1} parent=11 // pred_check_branch
          %221 = sbr.rel (%p219) target = $region16
        $region15: #{tpu_custom_call.1} parent=11 // pred_region
          _
        $region16: #{tpu_custom_call.1} parent=11 // pred_fallthru
          _
        // Predicated region
        $region17: #{tpu_custom_call.1} parent=11 // pred_check
          %p222 = pneg %p89
        $region18: #{tpu_custom_call.1} parent=11 // pred_check_branch
          %224 = sbr.rel (%p222) target = $region20
        $region19: #{tpu_custom_call.1} parent=11 // pred_region
          %s226 = ssub.s32 28672, 28672
          %227 = vsyncadd [#allocation3], %s226
          %s228 = sshll.u32 [#allocation2], 4
          %s229 = int_to_ptr.vmem [resolvable:$true] %s228
          %234 = dma.hbm_to_vmem [thread:$0]  %s2, 28672, %s229, [#allocation3], 128, 128, 8
        $region20: #{tpu_custom_call.1} parent=11 // pred_fallthru
          _
        // Predicated region
        $region21: #{tpu_custom_call.1} parent=11 // pred_check
          %p235 = pneg %p110
        $region22: #{tpu_custom_call.1} parent=11 // pred_check_branch
          %237 = sbr.rel (%p235) target = $region24
        $region23: #{tpu_custom_call.1} parent=11 // pred_region
          _
        $region24: #{tpu_custom_call.1} parent=11 // pred_fallthru
          _
        // Predicated region
        $region25: #{tpu_custom_call.1} parent=11 // pred_check
          %p238 = pneg %p131
        $region26: #{tpu_custom_call.1} parent=11 // pred_check_branch
          %240 = sbr.rel (%p238) target = $region28
        $region27: #{tpu_custom_call.1} parent=11 // pred_region
          _
        $region28: #{tpu_custom_call.1} parent=11 // pred_fallthru
          _
        // Predicated region
        $region29: #{tpu_custom_call.1} parent=11 // pred_check
          %p241 = pneg %p152
        $region30: #{tpu_custom_call.1} parent=11 // pred_check_branch
          %243 = sbr.rel (%p241) target = $region32
        $region31: #{tpu_custom_call.1} parent=11 // pred_region
          _
        $region32: #{tpu_custom_call.1} parent=11 // pred_fallthru
          _
      $region12: #{tpu_custom_call.1} parent=5 // pred_fallthru
        _
      %p244 = scmp.lt.s32.totalorder %s21, 2
      // Predicated region
      $region33: #{tpu_custom_call.1} parent=5 // pred_check
        %p245 = pneg %p244
      $region34: #{tpu_custom_call.1} parent=5 // pred_check_branch
        %247 = sbr.rel (%p245) target = $region36
      $region35: #{tpu_custom_call.1} parent=5 // pred_region
        // Predicated region
        $region37: #{tpu_custom_call.1} parent=35 // pred_check
          %p248 = pneg %p41
        $region38: #{tpu_custom_call.1} parent=35 // pred_check_branch
          %250 = sbr.rel (%p248) target = $region40
        $region39: #{tpu_custom_call.1} parent=35 // pred_region
          %s251 = smul.u32 64, %s21
          %p252 = scmp.lt.s32.totalorder %s251, 127
          %s253 = scalar_select %p252, %s251, 127
          %s254 = smul.addr %s253, 4
          %s255 = scalar_lea.vmem %s0, %s254
          %s256 = smul.u32 64, %s21
        $region40: #{tpu_custom_call.1} parent=35 // pred_fallthru
          _
      $region36: #{tpu_custom_call.1} parent=5 // pred_fallthru
        _
      %p257 = scmp.le.s32.totalorder 1, %s21
      %p258 = scmp.lt.s32.totalorder %s21, 3
      %p259 = pnand %p257, %p258
      %p260 = pneg %p259
      // Predicated region
      $region41: #{tpu_custom_call.1} parent=5 // pred_check
        _
      $region42: #{tpu_custom_call.1} parent=5 // pred_check_branch
        %262 = sbr.rel (%p259) target = $region44
      $region43: #{tpu_custom_call.1} parent=5 // pred_region
        %s263 = ssub.s32 %s21, 1
        // Predicated region
        $region45: #{tpu_custom_call.1} parent=43 // pred_check
          %p264 = pneg %p89
        $region46: #{tpu_custom_call.1} parent=43 // pred_check_branch
          %266 = sbr.rel (%p264) target = $region48
        $region47: #{tpu_custom_call.1} parent=43 // pred_region
          %267 = dma.done [#allocation3], 28672
        $region48: #{tpu_custom_call.1} parent=43 // pred_fallthru
          _
        %s268 = smul.u32 64, %s26
        %p269 = scmp.lt.s32.totalorder %s268, 127
        %s270 = scalar_select %p269, %s268, 127
        %s271 = smul.addr %s270, 4
        %s272 = scalar_lea.vmem %s0, %s271
        %p273 = pneg %p47
        %p274 = pneg %p44
        %p275 = pneg %p68
        %p276 = pneg %p65
        %p277 = pneg %p89
        %p278 = pneg %p86
        %p279 = pneg %p110
        %p280 = pneg %p107
        %p281 = pneg %p131
        %p282 = pneg %p128
        %p283 = pneg %p152
        %p284 = pneg %p149
        %p285 = pneg %p178
        %p286 = pneg %p175
        %s287 = sand.u32 %s165, 1
        %s288 = scalar_lea.sflag [#allocation4], %s287
        %s289 = sand.u32 %s165, 1
        %s290 = smul.addr %s289, 512
        %s291 = scalar_lea.vmem [#allocation5], %s290
        %p292 = pneg %p204
        %p293 = pneg %p201
        %s294 = sand.u32 %s191, 1
        %s295 = scalar_lea.sflag [#allocation7], %s294
        %s296 = sand.u32 %s191, 1
        %s297 = smul.addr %s296, 512
        %s298 = scalar_lea.vmem [#allocation6], %s297
        %s299 = smul.u32 64, %s26
        %p300 = scmp.lt.s32.totalorder %s299, 127
        %s301 = scalar_select %p300, %s299, 127
        %s302 = smul.addr %s301, 4
        %s303 = scalar_lea.vmem %s0, %s302
        %s304 = smul.u32 64, %s26
        %s305 = smul.u32 64, %s26
        %s306 = smul.u32 64, %s26
        %v308 = vld [vmem:[%s303] sm:$0xf]
        %v309 = vld [vmem:[%s303 + $0x4] sm:$0xf]
        %v310 = vld [vmem:[%s303 + $0x8] sm:$0xf]
        %v311 = vld [vmem:[%s303 + $0xc] sm:$0xf]
        %v312 = vld [vmem:[%s303 + $0x10] sm:$0xf]
        %v313 = vld [vmem:[%s303 + $0x14] sm:$0xf]
        %v314 = vld [vmem:[%s303 + $0x18] sm:$0xf]
        %v315 = vld [vmem:[%s303 + $0x1c] sm:$0xf]
        %v316 = vld [vmem:[%s303 + $0x20] sm:$0xf]
        %v317 = vld [vmem:[%s303 + $0x24] sm:$0xf]
        %v318 = vld [vmem:[%s303 + $0x28] sm:$0xf]
        %v319 = vld [vmem:[%s303 + $0x2c] sm:$0xf]
        %v320 = vld [vmem:[%s303 + $0x30] sm:$0xf]
        %v321 = vld [vmem:[%s303 + $0x34] sm:$0xf]
        %v322 = vld [vmem:[%s303 + $0x38] sm:$0xf]
        %v323 = vld [vmem:[%s303 + $0x3c] sm:$0xf]
        %v324 = vld [vmem:[%s303 + $0x40] sm:$0xf]
        %v325 = vld [vmem:[%s303 + $0x44] sm:$0xf]
        %v326 = vld [vmem:[%s303 + $0x48] sm:$0xf]
        %v327 = vld [vmem:[%s303 + $0x4c] sm:$0xf]
        %v328 = vld [vmem:[%s303 + $0x50] sm:$0xf]
        %v329 = vld [vmem:[%s303 + $0x54] sm:$0xf]
        %v330 = vld [vmem:[%s303 + $0x58] sm:$0xf]
        %v331 = vld [vmem:[%s303 + $0x5c] sm:$0xf]
        %v332 = vld [vmem:[%s303 + $0x60] sm:$0xf]
        %v333 = vld [vmem:[%s303 + $0x64] sm:$0xf]
        %v334 = vld [vmem:[%s303 + $0x68] sm:$0xf]
        %v335 = vld [vmem:[%s303 + $0x6c] sm:$0xf]
        %v336 = vld [vmem:[%s303 + $0x70] sm:$0xf]
        %v337 = vld [vmem:[%s303 + $0x74] sm:$0xf]
        %v338 = vld [vmem:[%s303 + $0x78] sm:$0xf]
        %v339 = vld [vmem:[%s303 + $0x7c] sm:$0xf]
        %v340 = vld [vmem:[%s303 + $0x80] sm:$0xf]
        %v341 = vld [vmem:[%s303 + $0x84] sm:$0xf]
        %v342 = vld [vmem:[%s303 + $0x88] sm:$0xf]
        %v343 = vld [vmem:[%s303 + $0x8c] sm:$0xf]
        %v344 = vld [vmem:[%s303 + $0x90] sm:$0xf]
        %v345 = vld [vmem:[%s303 + $0x94] sm:$0xf]
        %v346 = vld [vmem:[%s303 + $0x98] sm:$0xf]
        %v347 = vld [vmem:[%s303 + $0x9c] sm:$0xf]
        %v348 = vld [vmem:[%s303 + $0xa0] sm:$0xf]
        %v349 = vld [vmem:[%s303 + $0xa4] sm:$0xf]
        %v350 = vld [vmem:[%s303 + $0xa8] sm:$0xf]
        %v351 = vld [vmem:[%s303 + $0xac] sm:$0xf]
        %v352 = vld [vmem:[%s303 + $0xb0] sm:$0xf]
        %v353 = vld [vmem:[%s303 + $0xb4] sm:$0xf]
        %v354 = vld [vmem:[%s303 + $0xb8] sm:$0xf]
        %v355 = vld [vmem:[%s303 + $0xbc] sm:$0xf]
        %v356 = vld [vmem:[%s303 + $0xc0] sm:$0xf]
        %v357 = vld [vmem:[%s303 + $0xc4] sm:$0xf]
        %v358 = vld [vmem:[%s303 + $0xc8] sm:$0xf]
        %v359 = vld [vmem:[%s303 + $0xcc] sm:$0xf]
        %v360 = vld [vmem:[%s303 + $0xd0] sm:$0xf]
        %v361 = vld [vmem:[%s303 + $0xd4] sm:$0xf]
        %v362 = vld [vmem:[%s303 + $0xd8] sm:$0xf]
        %v363 = vld [vmem:[%s303 + $0xdc] sm:$0xf]
        %v364 = vld [vmem:[%s303 + $0xe0] sm:$0xf]
        %v365 = vld [vmem:[%s303 + $0xe4] sm:$0xf]
        %v366 = vld [vmem:[%s303 + $0xe8] sm:$0xf]
        %v367 = vld [vmem:[%s303 + $0xec] sm:$0xf]
        %v368 = vld [vmem:[%s303 + $0xf0] sm:$0xf]
        %v369 = vld [vmem:[%s303 + $0xf4] sm:$0xf]
        %v370 = vld [vmem:[%s303 + $0xf8] sm:$0xf]
        %v371 = vld [vmem:[%s303 + $0xfc] sm:$0xf]
        %v372 = vld [vmem:[%s1] sm:$0x77]
        %v373 = vld [vmem:[%s3] ss:$8 sm:$0x3]
        %v375 = vlaneseq
        %v376 = vshrl.u32 %v375, 7
        %v377 = vsub.s32 0, %v376
        %v378 = vrot.slane %v373, %v377
        %v379 = vlaneseq
        %v380 = vshrl.u32 %v379, 7
        %v381 = vsub.s32 1, %v380
        %v382 = vrot.slane %v373, %v381
        %v449 = vunpack.c.l.b16 %v308
        %v450 = vunpack.c.l.b16 %v309
        %v451 = vunpack.c.l.b16 %v310
        %v452 = vunpack.c.l.b16 %v311
        %v453 = vunpack.c.l.b16 %v312
        %v454 = vunpack.c.l.b16 %v313
        %v455 = vunpack.c.l.b16 %v314
        %v456 = vunpack.c.l.b16 %v315
        %v457 = vunpack.c.l.b16 %v316
        %v458 = vunpack.c.l.b16 %v317
        %v459 = vunpack.c.l.b16 %v318
        %v460 = vunpack.c.l.b16 %v319
        %v461 = vunpack.c.l.b16 %v320
        %v462 = vunpack.c.l.b16 %v321
        %v463 = vunpack.c.l.b16 %v322
        %v464 = vunpack.c.l.b16 %v323
        %v465 = vunpack.c.l.b16 %v324
        %v466 = vunpack.c.l.b16 %v325
        %v467 = vunpack.c.l.b16 %v326
        %v468 = vunpack.c.l.b16 %v327
        %v469 = vunpack.c.l.b16 %v328
        %v470 = vunpack.c.l.b16 %v329
        %v471 = vunpack.c.l.b16 %v330
        %v472 = vunpack.c.l.b16 %v331
        %v473 = vunpack.c.l.b16 %v332
        %v474 = vunpack.c.l.b16 %v333
        %v475 = vunpack.c.l.b16 %v334
        %v476 = vunpack.c.l.b16 %v335
        %v477 = vunpack.c.l.b16 %v336
        %v478 = vunpack.c.l.b16 %v337
        %v479 = vunpack.c.l.b16 %v338
        %v480 = vunpack.c.l.b16 %v339
        %v481 = vunpack.c.l.b16 %v340
        %v482 = vunpack.c.l.b16 %v341
        %v483 = vunpack.c.l.b16 %v342
        %v484 = vunpack.c.l.b16 %v343
        %v485 = vunpack.c.l.b16 %v344
        %v486 = vunpack.c.l.b16 %v345
        %v487 = vunpack.c.l.b16 %v346
        %v488 = vunpack.c.l.b16 %v347
        %v489 = vunpack.c.l.b16 %v348
        %v490 = vunpack.c.l.b16 %v349
        %v491 = vunpack.c.l.b16 %v350
        %v492 = vunpack.c.l.b16 %v351
        %v493 = vunpack.c.l.b16 %v352
        %v494 = vunpack.c.l.b16 %v353
        %v495 = vunpack.c.l.b16 %v354
        %v496 = vunpack.c.l.b16 %v355
        %v497 = vunpack.c.l.b16 %v356
        %v498 = vunpack.c.l.b16 %v357
        %v499 = vunpack.c.l.b16 %v358
        %v500 = vunpack.c.l.b16 %v359
        %v501 = vunpack.c.l.b16 %v360
        %v502 = vunpack.c.l.b16 %v361
        %v503 = vunpack.c.l.b16 %v362
        %v504 = vunpack.c.l.b16 %v363
        %v505 = vunpack.c.l.b16 %v364
        %v506 = vunpack.c.l.b16 %v365
        %v507 = vunpack.c.l.b16 %v366
        %v508 = vunpack.c.l.b16 %v367
        %v509 = vunpack.c.l.b16 %v368
        %v510 = vunpack.c.l.b16 %v369
        %v511 = vunpack.c.l.b16 %v370
        %v512 = vunpack.c.l.b16 %v371
        %v513 = vpack.c.b16 %v450, %v449
        %v514 = vpack.c.b16 %v452, %v451
        %v515 = vpack.c.b16 %v454, %v453
        %v516 = vpack.c.b16 %v456, %v455
        %v517 = vpack.c.b16 %v458, %v457
        %v518 = vpack.c.b16 %v460, %v459
        %v519 = vpack.c.b16 %v462, %v461
        %v520 = vpack.c.b16 %v464, %v463
        %v521 = vpack.c.b16 %v466, %v465
        %v522 = vpack.c.b16 %v468, %v467
        %v523 = vpack.c.b16 %v470, %v469
        %v524 = vpack.c.b16 %v472, %v471
        %v525 = vpack.c.b16 %v474, %v473
        %v526 = vpack.c.b16 %v476, %v475
        %v527 = vpack.c.b16 %v478, %v477
        %v528 = vpack.c.b16 %v480, %v479
        %v529 = vpack.c.b16 %v482, %v481
        %v530 = vpack.c.b16 %v484, %v483
        %v531 = vpack.c.b16 %v486, %v485
        %v532 = vpack.c.b16 %v488, %v487
        %v533 = vpack.c.b16 %v490, %v489
        %v534 = vpack.c.b16 %v492, %v491
        %v535 = vpack.c.b16 %v494, %v493
        %v536 = vpack.c.b16 %v496, %v495
        %v537 = vpack.c.b16 %v498, %v497
        %v538 = vpack.c.b16 %v500, %v499
        %v539 = vpack.c.b16 %v502, %v501
        %v540 = vpack.c.b16 %v504, %v503
        %v541 = vpack.c.b16 %v506, %v505
        %v542 = vpack.c.b16 %v508, %v507
        %v543 = vpack.c.b16 %v510, %v509
        %v544 = vpack.c.b16 %v512, %v511
        %v546 = vunpack.c.l.b16 %v372
        %v547 = vunpack.c.h.b16 %v372
        %v548 = vpack.c.b16 %v546, %v546
        %v549 = vpack.c.b16 %v547, %v547
        %vm550 = vcmask 48128
        %v552 = vsel %vm550, %v513, 0
        %v555 = vsel %vm550, %v514, 0
        %v558 = vsel %vm550, %v515, 0
        %v561 = vsel %vm550, %v516, 0
        %v564 = vsel %vm550, %v517, 0
        %v567 = vsel %vm550, %v518, 0
        %v570 = vsel %vm550, %v519, 0
        %v573 = vsel %vm550, %v520, 0
        %v576 = vsel %vm550, %v521, 0
        %v579 = vsel %vm550, %v522, 0
        %v582 = vsel %vm550, %v523, 0
        %v585 = vsel %vm550, %v524, 0
        %v588 = vsel %vm550, %v525, 0
        %v591 = vsel %vm550, %v526, 0
        %v594 = vsel %vm550, %v527, 0
        %v597 = vsel %vm550, %v528, 0
        %v600 = vsel %vm550, %v529, 0
        %v603 = vsel %vm550, %v530, 0
        %v606 = vsel %vm550, %v531, 0
        %v609 = vsel %vm550, %v532, 0
        %v612 = vsel %vm550, %v533, 0
        %v615 = vsel %vm550, %v534, 0
        %v618 = vsel %vm550, %v535, 0
        %v621 = vsel %vm550, %v536, 0
        %v624 = vsel %vm550, %v537, 0
        %v627 = vsel %vm550, %v538, 0
        %v630 = vsel %vm550, %v539, 0
        %v633 = vsel %vm550, %v540, 0
        %v636 = vsel %vm550, %v541, 0
        %v639 = vsel %vm550, %v542, 0
        %v642 = vsel %vm550, %v543, 0
        %v645 = vsel %vm550, %v544, 0
        %vm647 = vcmask 1042432
        %v649 = vsel %vm647, %v548, 0
        %v652 = vsel %vm647, %v549, 0
        %654 = vmatprep.subr.bf16.mxu0 %v652
        %655 = vmatpush1.bf16.msra.mxu0 %v649
        %656 = vmatprep.subr.bf16.mxu0 0
        %657 = vmatpush1.bf16.msra.mxu0 0
        %658 = vmatprep.subr.bf16.mxu0 0
        %659 = vmatpush1.bf16.msra.mxu0 0
        %660 = vmatprep.subr.bf16.mxu0 0
        %661 = vmatpush1.bf16.msra.mxu0 0
        %662 = vmatprep.subr.bf16.mxu0 0
        %663 = vmatpush1.bf16.msra.mxu0 0
        %664 = vmatprep.subr.bf16.mxu0 0
        %665 = vmatpush1.bf16.msra.mxu0 0
        %666 = vmatprep.subr.bf16.mxu0 0
        %667 = vmatpush1.bf16.msra.mxu0 0
        %668 = vmatprep.subr.bf16.mxu0 0
        %669 = vmatpush1.bf16.msra.mxu0 0
        %670 = vmatprep.subr.bf16.mxu0 0
        %671 = vmatpush1.bf16.msra.mxu0 0
        %672 = vmatprep.subr.bf16.mxu0 0
        %673 = vmatpush1.bf16.msra.mxu0 0
        %674 = vmatprep.subr.bf16.mxu0 0
        %675 = vmatpush1.bf16.msra.mxu0 0
        %676 = vmatprep.subr.bf16.mxu0 0
        %677 = vmatpush1.bf16.msra.mxu0 0
        %678 = vmatprep.subr.bf16.mxu0 0
        %679 = vmatpush1.bf16.msra.mxu0 0
        %680 = vmatprep.subr.bf16.mxu0 0
        %681 = vmatpush1.bf16.msra.mxu0 0
        %682 = vmatprep.subr.bf16.mxu0 0
        %683 = vmatpush1.bf16.msra.mxu0 0
        %684 = vmatprep.subr.bf16.mxu0 0
        %685 = vmatpush1.bf16.msra.mxu0 0
        %686 = vmatprep.mubr.bf16.mxu0 0
        %687 = vmatmul.mubr.bf16.gmra.mrb[0].mxu0 %v552
        %v688 = vpop.f32.mrb[0].mxu0
        %v689 = vadd.f32 %v378, %v688
        %v690 = vpop.f32.mrb[0].mxu0
        %v691 = vadd.f32 %v382, %v690
        %v692 = vpop.f32.mrb[0].mxu0
        %v693 = vadd.f32 %v378, %v692
        %v694 = vpop.f32.mrb[0].mxu0
        %v695 = vadd.f32 %v382, %v694
        %696 = vmatprep.mubr.bf16.mxu0 0
        %697 = vmatmul.mubr.bf16.gmra.mrb[0].mxu0 %v555
        %v698 = vpop.f32.mrb[0].mxu0
        %v699 = vadd.f32 %v378, %v698
        %v700 = vpop.f32.mrb[0].mxu0
        %v701 = vadd.f32 %v382, %v700
        %v702 = vpop.f32.mrb[0].mxu0
        %v703 = vadd.f32 %v378, %v702
        %v704 = vpop.f32.mrb[0].mxu0
        %v705 = vadd.f32 %v382, %v704
        %706 = vmatprep.mubr.bf16.mxu0 0
        %707 = vmatmul.mubr.bf16.gmra.mrb[0].mxu0 %v558
        %v708 = vpop.f32.mrb[0].mxu0
        %v709 = vadd.f32 %v378, %v708
        %v710 = vpop.f32.mrb[0].mxu0
        %v711 = vadd.f32 %v382, %v710
        %v712 = vpop.f32.mrb[0].mxu0
        %v713 = vadd.f32 %v378, %v712
        %v714 = vpop.f32.mrb[0].mxu0
        %v715 = vadd.f32 %v382, %v714
        %716 = vmatprep.mubr.bf16.mxu0 0
        %717 = vmatmul.mubr.bf16.gmra.mrb[0].mxu0 %v561
        %v718 = vpop.f32.mrb[0].mxu0
        %v719 = vadd.f32 %v378, %v718
        %v720 = vpop.f32.mrb[0].mxu0
        %v721 = vadd.f32 %v382, %v720
        %v722 = vpop.f32.mrb[0].mxu0
        %v723 = vadd.f32 %v378, %v722
        %v724 = vpop.f32.mrb[0].mxu0
        %v725 = vadd.f32 %v382, %v724
        %726 = vmatprep.mubr.bf16.mxu0 0
        %727 = vmatmul.mubr.bf16.gmra.mrb[0].mxu0 %v564
        %v728 = vpop.f32.mrb[0].mxu0
        %v729 = vadd.f32 %v378, %v728
        %v730 = vpop.f32.mrb[0].mxu0
        %v731 = vadd.f32 %v382, %v730
        %v732 = vpop.f32.mrb[0].mxu0
        %v733 = vadd.f32 %v378, %v732
        %v734 = vpop.f32.mrb[0].mxu0
        %v735 = vadd.f32 %v382, %v734
        %736 = vmatprep.mubr.bf16.mxu0 0
        %737 = vmatmul.mubr.bf16.gmra.mrb[0].mxu0 %v567
        %v738 = vpop.f32.mrb[0].mxu0
        %v739 = vadd.f32 %v378, %v738
        %v740 = vpop.f32.mrb[0].mxu0
        %v741 = vadd.f32 %v382, %v740
        %v742 = vpop.f32.mrb[0].mxu0
        %v743 = vadd.f32 %v378, %v742
        %v744 = vpop.f32.mrb[0].mxu0
        %v745 = vadd.f32 %v382, %v744
        %746 = vmatprep.mubr.bf16.mxu0 0
        %747 = vmatmul.mubr.bf16.gmra.mrb[0].mxu0 %v570
        %v748 = vpop.f32.mrb[0].mxu0
        %v749 = vadd.f32 %v378, %v748
        %v750 = vpop.f32.mrb[0].mxu0
        %v751 = vadd.f32 %v382, %v750
        %v752 = vpop.f32.mrb[0].mxu0
        %v753 = vadd.f32 %v378, %v752
        %v754 = vpop.f32.mrb[0].mxu0
        %v755 = vadd.f32 %v382, %v754
        %756 = vmatprep.mubr.bf16.mxu0 0
        %757 = vmatmul.mubr.bf16.gmra.mrb[0].mxu0 %v573
        %v758 = vpop.f32.mrb[0].mxu0
        %v759 = vadd.f32 %v378, %v758
        %v760 = vpop.f32.mrb[0].mxu0
        %v761 = vadd.f32 %v382, %v760
        %v762 = vpop.f32.mrb[0].mxu0
        %v763 = vadd.f32 %v378, %v762
        %v764 = vpop.f32.mrb[0].mxu0
        %v765 = vadd.f32 %v382, %v764
        %766 = vmatprep.mubr.bf16.mxu0 0
        %767 = vmatmul.mubr.bf16.gmra.mrb[0].mxu0 %v576
        %v768 = vpop.f32.mrb[0].mxu0
        %v769 = vadd.f32 %v378, %v768
        %v770 = vpop.f32.mrb[0].mxu0
        %v771 = vadd.f32 %v382, %v770
        %v772 = vpop.f32.mrb[0].mxu0
        %v773 = vadd.f32 %v378, %v772
        %v774 = vpop.f32.mrb[0].mxu0
        %v775 = vadd.f32 %v382, %v774
        %776 = vmatprep.mubr.bf16.mxu0 0
        %777 = vmatmul.mubr.bf16.gmra.mrb[0].mxu0 %v579
        %v778 = vpop.f32.mrb[0].mxu0
        %v779 = vadd.f32 %v378, %v778
        %v780 = vpop.f32.mrb[0].mxu0
        %v781 = vadd.f32 %v382, %v780
        %v782 = vpop.f32.mrb[0].mxu0
        %v783 = vadd.f32 %v378, %v782
        %v784 = vpop.f32.mrb[0].mxu0
        %v785 = vadd.f32 %v382, %v784
        %786 = vmatprep.mubr.bf16.mxu0 0
        %787 = vmatmul.mubr.bf16.gmra.mrb[0].mxu0 %v582
        %v788 = vpop.f32.mrb[0].mxu0
        %v789 = vadd.f32 %v378, %v788
        %v790 = vpop.f32.mrb[0].mxu0
        %v791 = vadd.f32 %v382, %v790
        %v792 = vpop.f32.mrb[0].mxu0
        %v793 = vadd.f32 %v378, %v792
        %v794 = vpop.f32.mrb[0].mxu0
        %v795 = vadd.f32 %v382, %v794
        %796 = vmatprep.mubr.bf16.mxu0 0
        %797 = vmatmul.mubr.bf16.gmra.mrb[0].mxu0 %v585
        %v798 = vpop.f32.mrb[0].mxu0
        %v799 = vadd.f32 %v378, %v798
        %v800 = vpop.f32.mrb[0].mxu0
        %v801 = vadd.f32 %v382, %v800
        %v802 = vpop.f32.mrb[0].mxu0
        %v803 = vadd.f32 %v378, %v802
        %v804 = vpop.f32.mrb[0].mxu0
        %v805 = vadd.f32 %v382, %v804
        %806 = vmatprep.mubr.bf16.mxu0 0
        %807 = vmatmul.mubr.bf16.gmra.mrb[0].mxu0 %v588
        %v808 = vpop.f32.mrb[0].mxu0
        %v809 = vadd.f32 %v378, %v808
        %v810 = vpop.f32.mrb[0].mxu0
        %v811 = vadd.f32 %v382, %v810
        %v812 = vpop.f32.mrb[0].mxu0
        %v813 = vadd.f32 %v378, %v812
        %v814 = vpop.f32.mrb[0].mxu0
        %v815 = vadd.f32 %v382, %v814
        %816 = vmatprep.mubr.bf16.mxu0 0
        %817 = vmatmul.mubr.bf16.gmra.mrb[0].mxu0 %v591
        %v818 = vpop.f32.mrb[0].mxu0
        %v819 = vadd.f32 %v378, %v818
        %v820 = vpop.f32.mrb[0].mxu0
        %v821 = vadd.f32 %v382, %v820
        %v822 = vpop.f32.mrb[0].mxu0
        %v823 = vadd.f32 %v378, %v822
        %v824 = vpop.f32.mrb[0].mxu0
        %v825 = vadd.f32 %v382, %v824
        %826 = vmatprep.mubr.bf16.mxu0 0
        %827 = vmatmul.mubr.bf16.gmra.mrb[0].mxu0 %v594
        %v828 = vpop.f32.mrb[0].mxu0
        %v829 = vadd.f32 %v378, %v828
        %v830 = vpop.f32.mrb[0].mxu0
        %v831 = vadd.f32 %v382, %v830
        %v832 = vpop.f32.mrb[0].mxu0
        %v833 = vadd.f32 %v378, %v832
        %v834 = vpop.f32.mrb[0].mxu0
        %v835 = vadd.f32 %v382, %v834
        %836 = vmatprep.mubr.bf16.mxu0 0
        %837 = vmatmul.mubr.bf16.gmra.mrb[0].mxu0 %v597
        %v838 = vpop.f32.mrb[0].mxu0
        %v839 = vadd.f32 %v378, %v838
        %v840 = vpop.f32.mrb[0].mxu0
        %v841 = vadd.f32 %v382, %v840
        %v842 = vpop.f32.mrb[0].mxu0
        %v843 = vadd.f32 %v378, %v842
        %v844 = vpop.f32.mrb[0].mxu0
        %v845 = vadd.f32 %v382, %v844
        %846 = vmatprep.mubr.bf16.mxu0 0
        %847 = vmatmul.mubr.bf16.gmra.mrb[0].mxu0 %v600
        %v848 = vpop.f32.mrb[0].mxu0
        %v849 = vadd.f32 %v378, %v848
        %v850 = vpop.f32.mrb[0].mxu0
        %v851 = vadd.f32 %v382, %v850
        %v852 = vpop.f32.mrb[0].mxu0
        %v853 = vadd.f32 %v378, %v852
        %v854 = vpop.f32.mrb[0].mxu0
        %v855 = vadd.f32 %v382, %v854
        %856 = vmatprep.mubr.bf16.mxu0 0
        %857 = vmatmul.mubr.bf16.gmra.mrb[0].mxu0 %v603
        %v858 = vpop.f32.mrb[0].mxu0
        %v859 = vadd.f32 %v378, %v858
        %v860 = vpop.f32.mrb[0].mxu0
        %v861 = vadd.f32 %v382, %v860
        %v862 = vpop.f32.mrb[0].mxu0
        %v863 = vadd.f32 %v378, %v862
        %v864 = vpop.f32.mrb[0].mxu0
        %v865 = vadd.f32 %v382, %v864
        %866 = vmatprep.mubr.bf16.mxu0 0
        %867 = vmatmul.mubr.bf16.gmra.mrb[0].mxu0 %v606
        %v868 = vpop.f32.mrb[0].mxu0
        %v869 = vadd.f32 %v378, %v868
        %v870 = vpop.f32.mrb[0].mxu0
        %v871 = vadd.f32 %v382, %v870
        %v872 = vpop.f32.mrb[0].mxu0
        %v873 = vadd.f32 %v378, %v872
        %v874 = vpop.f32.mrb[0].mxu0
        %v875 = vadd.f32 %v382, %v874
        %876 = vmatprep.mubr.bf16.mxu0 0
        %877 = vmatmul.mubr.bf16.gmra.mrb[0].mxu0 %v609
        %v878 = vpop.f32.mrb[0].mxu0
        %v879 = vadd.f32 %v378, %v878
        %v880 = vpop.f32.mrb[0].mxu0
        %v881 = vadd.f32 %v382, %v880
        %v882 = vpop.f32.mrb[0].mxu0
        %v883 = vadd.f32 %v378, %v882
        %v884 = vpop.f32.mrb[0].mxu0
        %v885 = vadd.f32 %v382, %v884
        %886 = vmatprep.mubr.bf16.mxu0 0
        %887 = vmatmul.mubr.bf16.gmra.mrb[0].mxu0 %v612
        %v888 = vpop.f32.mrb[0].mxu0
        %v889 = vadd.f32 %v378, %v888
        %v890 = vpop.f32.mrb[0].mxu0
        %v891 = vadd.f32 %v382, %v890
        %v892 = vpop.f32.mrb[0].mxu0
        %v893 = vadd.f32 %v378, %v892
        %v894 = vpop.f32.mrb[0].mxu0
        %v895 = vadd.f32 %v382, %v894
        %896 = vmatprep.mubr.bf16.mxu0 0
        %897 = vmatmul.mubr.bf16.gmra.mrb[0].mxu0 %v615
        %v898 = vpop.f32.mrb[0].mxu0
        %v899 = vadd.f32 %v378, %v898
        %v900 = vpop.f32.mrb[0].mxu0
        %v901 = vadd.f32 %v382, %v900
        %v902 = vpop.f32.mrb[0].mxu0
        %v903 = vadd.f32 %v378, %v902
        %v904 = vpop.f32.mrb[0].mxu0
        %v905 = vadd.f32 %v382, %v904
        %906 = vmatprep.mubr.bf16.mxu0 0
        %907 = vmatmul.mubr.bf16.gmra.mrb[0].mxu0 %v618
        %v908 = vpop.f32.mrb[0].mxu0
        %v909 = vadd.f32 %v378, %v908
        %v910 = vpop.f32.mrb[0].mxu0
        %v911 = vadd.f32 %v382, %v910
        %v912 = vpop.f32.mrb[0].mxu0
        %v913 = vadd.f32 %v378, %v912
        %v914 = vpop.f32.mrb[0].mxu0
        %v915 = vadd.f32 %v382, %v914
        %916 = vmatprep.mubr.bf16.mxu0 0
        %917 = vmatmul.mubr.bf16.gmra.mrb[0].mxu0 %v621
        %v918 = vpop.f32.mrb[0].mxu0
        %v919 = vadd.f32 %v378, %v918
        %v920 = vpop.f32.mrb[0].mxu0
        %v921 = vadd.f32 %v382, %v920
        %v922 = vpop.f32.mrb[0].mxu0
        %v923 = vadd.f32 %v378, %v922
        %v924 = vpop.f32.mrb[0].mxu0
        %v925 = vadd.f32 %v382, %v924
        %926 = vmatprep.mubr.bf16.mxu0 0
        %927 = vmatmul.mubr.bf16.gmra.mrb[0].mxu0 %v624
        %v928 = vpop.f32.mrb[0].mxu0
        %v929 = vadd.f32 %v378, %v928
        %v930 = vpop.f32.mrb[0].mxu0
        %v931 = vadd.f32 %v382, %v930
        %v932 = vpop.f32.mrb[0].mxu0
        %v933 = vadd.f32 %v378, %v932
        %v934 = vpop.f32.mrb[0].mxu0
        %v935 = vadd.f32 %v382, %v934
        %936 = vmatprep.mubr.bf16.mxu0 0
        %937 = vmatmul.mubr.bf16.gmra.mrb[0].mxu0 %v627
        %v938 = vpop.f32.mrb[0].mxu0
        %v939 = vadd.f32 %v378, %v938
        %v940 = vpop.f32.mrb[0].mxu0
        %v941 = vadd.f32 %v382, %v940
        %v942 = vpop.f32.mrb[0].mxu0
        %v943 = vadd.f32 %v378, %v942
        %v944 = vpop.f32.mrb[0].mxu0
        %v945 = vadd.f32 %v382, %v944
        %946 = vmatprep.mubr.bf16.mxu0 0
        %947 = vmatmul.mubr.bf16.gmra.mrb[0].mxu0 %v630
        %v948 = vpop.f32.mrb[0].mxu0
        %v949 = vadd.f32 %v378, %v948
        %v950 = vpop.f32.mrb[0].mxu0
        %v951 = vadd.f32 %v382, %v950
        %v952 = vpop.f32.mrb[0].mxu0
        %v953 = vadd.f32 %v378, %v952
        %v954 = vpop.f32.mrb[0].mxu0
        %v955 = vadd.f32 %v382, %v954
        %956 = vmatprep.mubr.bf16.mxu0 0
        %957 = vmatmul.mubr.bf16.gmra.mrb[0].mxu0 %v633
        %v958 = vpop.f32.mrb[0].mxu0
        %v959 = vadd.f32 %v378, %v958
        %v960 = vpop.f32.mrb[0].mxu0
        %v961 = vadd.f32 %v382, %v960
        %v962 = vpop.f32.mrb[0].mxu0
        %v963 = vadd.f32 %v378, %v962
        %v964 = vpop.f32.mrb[0].mxu0
        %v965 = vadd.f32 %v382, %v964
        %966 = vmatprep.mubr.bf16.mxu0 0
        %967 = vmatmul.mubr.bf16.gmra.mrb[0].mxu0 %v636
        %v968 = vpop.f32.mrb[0].mxu0
        %v969 = vadd.f32 %v378, %v968
        %v970 = vpop.f32.mrb[0].mxu0
        %v971 = vadd.f32 %v382, %v970
        %v972 = vpop.f32.mrb[0].mxu0
        %v973 = vadd.f32 %v378, %v972
        %v974 = vpop.f32.mrb[0].mxu0
        %v975 = vadd.f32 %v382, %v974
        %976 = vmatprep.mubr.bf16.mxu0 0
        %977 = vmatmul.mubr.bf16.gmra.mrb[0].mxu0 %v639
        %v978 = vpop.f32.mrb[0].mxu0
        %v979 = vadd.f32 %v378, %v978
        %v980 = vpop.f32.mrb[0].mxu0
        %v981 = vadd.f32 %v382, %v980
        %v982 = vpop.f32.mrb[0].mxu0
        %v983 = vadd.f32 %v378, %v982
        %v984 = vpop.f32.mrb[0].mxu0
        %v985 = vadd.f32 %v382, %v984
        %986 = vmatprep.mubr.bf16.mxu0 0
        %987 = vmatmul.mubr.bf16.gmra.mrb[0].mxu0 %v642
        %v988 = vpop.f32.mrb[0].mxu0
        %v989 = vadd.f32 %v378, %v988
        %v990 = vpop.f32.mrb[0].mxu0
        %v991 = vadd.f32 %v382, %v990
        %v992 = vpop.f32.mrb[0].mxu0
        %v993 = vadd.f32 %v378, %v992
        %v994 = vpop.f32.mrb[0].mxu0
        %v995 = vadd.f32 %v382, %v994
        %996 = vmatprep.mubr.bf16.mxu0 0
        %997 = vmatmul.mubr.bf16.gmra.mrb[0].mxu0 %v645
        %v998 = vpop.f32.mrb[0].mxu0
        %v999 = vadd.f32 %v378, %v998
        %v1000 = vpop.f32.mrb[0].mxu0
        %v1001 = vadd.f32 %v382, %v1000
        %v1002 = vpop.f32.mrb[0].mxu0
        %v1003 = vadd.f32 %v378, %v1002
        %v1004 = vpop.f32.mrb[0].mxu0
        %v1005 = vadd.f32 %v382, %v1004
        %1006 = vdwg.mxu0
        %v1007 = vmax.f32 %v689, 0.0
        %v1008 = vmax.f32 %v691, 0.0
        %v1009 = vmax.f32 %v693, 0.0
        %v1010 = vmax.f32 %v695, 0.0
        %v1011 = vmax.f32 %v699, 0.0
        %v1012 = vmax.f32 %v701, 0.0
        %v1013 = vmax.f32 %v703, 0.0
        %v1014 = vmax.f32 %v705, 0.0
        %v1015 = vmax.f32 %v709, 0.0
        %v1016 = vmax.f32 %v711, 0.0
        %v1017 = vmax.f32 %v713, 0.0
        %v1018 = vmax.f32 %v715, 0.0
        %v1019 = vmax.f32 %v719, 0.0
        %v1020 = vmax.f32 %v721, 0.0
        %v1021 = vmax.f32 %v723, 0.0
        %v1022 = vmax.f32 %v725, 0.0
        %v1023 = vmax.f32 %v729, 0.0
        %v1024 = vmax.f32 %v731, 0.0
        %v1025 = vmax.f32 %v733, 0.0
        %v1026 = vmax.f32 %v735, 0.0
        %v1027 = vmax.f32 %v739, 0.0
        %v1028 = vmax.f32 %v741, 0.0
        %v1029 = vmax.f32 %v743, 0.0
        %v1030 = vmax.f32 %v745, 0.0
        %v1031 = vmax.f32 %v749, 0.0
        %v1032 = vmax.f32 %v751, 0.0
        %v1033 = vmax.f32 %v753, 0.0
        %v1034 = vmax.f32 %v755, 0.0
        %v1035 = vmax.f32 %v759, 0.0
        %v1036 = vmax.f32 %v761, 0.0
        %v1037 = vmax.f32 %v763, 0.0
        %v1038 = vmax.f32 %v765, 0.0
        %v1039 = vmax.f32 %v769, 0.0
        %v1040 = vmax.f32 %v771, 0.0
        %v1041 = vmax.f32 %v773, 0.0
        %v1042 = vmax.f32 %v775, 0.0
        %v1043 = vmax.f32 %v779, 0.0
        %v1044 = vmax.f32 %v781, 0.0
        %v1045 = vmax.f32 %v783, 0.0
        %v1046 = vmax.f32 %v785, 0.0
        %v1047 = vmax.f32 %v789, 0.0
        %v1048 = vmax.f32 %v791, 0.0
        %v1049 = vmax.f32 %v793, 0.0
        %v1050 = vmax.f32 %v795, 0.0
        %v1051 = vmax.f32 %v799, 0.0
        %v1052 = vmax.f32 %v801, 0.0
        %v1053 = vmax.f32 %v803, 0.0
        %v1054 = vmax.f32 %v805, 0.0
        %v1055 = vmax.f32 %v809, 0.0
        %v1056 = vmax.f32 %v811, 0.0
        %v1057 = vmax.f32 %v813, 0.0
        %v1058 = vmax.f32 %v815, 0.0
        %v1059 = vmax.f32 %v819, 0.0
        %v1060 = vmax.f32 %v821, 0.0
        %v1061 = vmax.f32 %v823, 0.0
        %v1062 = vmax.f32 %v825, 0.0
        %v1063 = vmax.f32 %v829, 0.0
        %v1064 = vmax.f32 %v831, 0.0
        %v1065 = vmax.f32 %v833, 0.0
        %v1066 = vmax.f32 %v835, 0.0
        %v1067 = vmax.f32 %v839, 0.0
        %v1068 = vmax.f32 %v841, 0.0
        %v1069 = vmax.f32 %v843, 0.0
        %v1070 = vmax.f32 %v845, 0.0
        %v1071 = vmax.f32 %v849, 0.0
        %v1072 = vmax.f32 %v851, 0.0
        %v1073 = vmax.f32 %v853, 0.0
        %v1074 = vmax.f32 %v855, 0.0
        %v1075 = vmax.f32 %v859, 0.0
        %v1076 = vmax.f32 %v861, 0.0
        %v1077 = vmax.f32 %v863, 0.0
        %v1078 = vmax.f32 %v865, 0.0
        %v1079 = vmax.f32 %v869, 0.0
        %v1080 = vmax.f32 %v871, 0.0
        %v1081 = vmax.f32 %v873, 0.0
        %v1082 = vmax.f32 %v875, 0.0
        %v1083 = vmax.f32 %v879, 0.0
        %v1084 = vmax.f32 %v881, 0.0
        %v1085 = vmax.f32 %v883, 0.0
        %v1086 = vmax.f32 %v885, 0.0
        %v1087 = vmax.f32 %v889, 0.0
        %v1088 = vmax.f32 %v891, 0.0
        %v1089 = vmax.f32 %v893, 0.0
        %v1090 = vmax.f32 %v895, 0.0
        %v1091 = vmax.f32 %v899, 0.0
        %v1092 = vmax.f32 %v901, 0.0
        %v1093 = vmax.f32 %v903, 0.0
        %v1094 = vmax.f32 %v905, 0.0
        %v1095 = vmax.f32 %v909, 0.0
        %v1096 = vmax.f32 %v911, 0.0
        %v1097 = vmax.f32 %v913, 0.0
        %v1098 = vmax.f32 %v915, 0.0
        %v1099 = vmax.f32 %v919, 0.0
        %v1100 = vmax.f32 %v921, 0.0
        %v1101 = vmax.f32 %v923, 0.0
        %v1102 = vmax.f32 %v925, 0.0
        %v1103 = vmax.f32 %v929, 0.0
        %v1104 = vmax.f32 %v931, 0.0
        %v1105 = vmax.f32 %v933, 0.0
        %v1106 = vmax.f32 %v935, 0.0
        %v1107 = vmax.f32 %v939, 0.0
        %v1108 = vmax.f32 %v941, 0.0
        %v1109 = vmax.f32 %v943, 0.0
        %v1110 = vmax.f32 %v945, 0.0
        %v1111 = vmax.f32 %v949, 0.0
        %v1112 = vmax.f32 %v951, 0.0
        %v1113 = vmax.f32 %v953, 0.0
        %v1114 = vmax.f32 %v955, 0.0
        %v1115 = vmax.f32 %v959, 0.0
        %v1116 = vmax.f32 %v961, 0.0
        %v1117 = vmax.f32 %v963, 0.0
        %v1118 = vmax.f32 %v965, 0.0
        %v1119 = vmax.f32 %v969, 0.0
        %v1120 = vmax.f32 %v971, 0.0
        %v1121 = vmax.f32 %v973, 0.0
        %v1122 = vmax.f32 %v975, 0.0
        %v1123 = vmax.f32 %v979, 0.0
        %v1124 = vmax.f32 %v981, 0.0
        %v1125 = vmax.f32 %v983, 0.0
        %v1126 = vmax.f32 %v985, 0.0
        %v1127 = vmax.f32 %v989, 0.0
        %v1128 = vmax.f32 %v991, 0.0
        %v1129 = vmax.f32 %v993, 0.0
        %v1130 = vmax.f32 %v995, 0.0
        %v1131 = vmax.f32 %v999, 0.0
        %v1132 = vmax.f32 %v1001, 0.0
        %v1133 = vmax.f32 %v1003, 0.0
        %v1134 = vmax.f32 %v1005, 0.0
        %v1135 = vpack.c.bf16 %v1009, %v1007
        %v1136 = vpack.c.bf16 %v1010, %v1008
        %v1137 = vpack.c.bf16 %v1013, %v1011
        %v1138 = vpack.c.bf16 %v1014, %v1012
        %v1139 = vpack.c.bf16 %v1017, %v1015
        %v1140 = vpack.c.bf16 %v1018, %v1016
        %v1141 = vpack.c.bf16 %v1021, %v1019
        %v1142 = vpack.c.bf16 %v1022, %v1020
        %v1143 = vpack.c.bf16 %v1025, %v1023
        %v1144 = vpack.c.bf16 %v1026, %v1024
        %v1145 = vpack.c.bf16 %v1029, %v1027
        %v1146 = vpack.c.bf16 %v1030, %v1028
        %v1147 = vpack.c.bf16 %v1033, %v1031
        %v1148 = vpack.c.bf16 %v1034, %v1032
        %v1149 = vpack.c.bf16 %v1037, %v1035
        %v1150 = vpack.c.bf16 %v1038, %v1036
        %v1151 = vpack.c.bf16 %v1041, %v1039
        %v1152 = vpack.c.bf16 %v1042, %v1040
        %v1153 = vpack.c.bf16 %v1045, %v1043
        %v1154 = vpack.c.bf16 %v1046, %v1044
        %v1155 = vpack.c.bf16 %v1049, %v1047
        %v1156 = vpack.c.bf16 %v1050, %v1048
        %v1157 = vpack.c.bf16 %v1053, %v1051
        %v1158 = vpack.c.bf16 %v1054, %v1052
        %v1159 = vpack.c.bf16 %v1057, %v1055
        %v1160 = vpack.c.bf16 %v1058, %v1056
        %v1161 = vpack.c.bf16 %v1061, %v1059
        %v1162 = vpack.c.bf16 %v1062, %v1060
        %v1163 = vpack.c.bf16 %v1065, %v1063
        %v1164 = vpack.c.bf16 %v1066, %v1064
        %v1165 = vpack.c.bf16 %v1069, %v1067
        %v1166 = vpack.c.bf16 %v1070, %v1068
        %v1167 = vpack.c.bf16 %v1073, %v1071
        %v1168 = vpack.c.bf16 %v1074, %v1072
        %v1169 = vpack.c.bf16 %v1077, %v1075
        %v1170 = vpack.c.bf16 %v1078, %v1076
        %v1171 = vpack.c.bf16 %v1081, %v1079
        %v1172 = vpack.c.bf16 %v1082, %v1080
        %v1173 = vpack.c.bf16 %v1085, %v1083
        %v1174 = vpack.c.bf16 %v1086, %v1084
        %v1175 = vpack.c.bf16 %v1089, %v1087
        %v1176 = vpack.c.bf16 %v1090, %v1088
        %v1177 = vpack.c.bf16 %v1093, %v1091
        %v1178 = vpack.c.bf16 %v1094, %v1092
        %v1179 = vpack.c.bf16 %v1097, %v1095
        %v1180 = vpack.c.bf16 %v1098, %v1096
        %v1181 = vpack.c.bf16 %v1101, %v1099
        %v1182 = vpack.c.bf16 %v1102, %v1100
        %v1183 = vpack.c.bf16 %v1105, %v1103
        %v1184 = vpack.c.bf16 %v1106, %v1104
        %v1185 = vpack.c.bf16 %v1109, %v1107
        %v1186 = vpack.c.bf16 %v1110, %v1108
        %v1187 = vpack.c.bf16 %v1113, %v1111
        %v1188 = vpack.c.bf16 %v1114, %v1112
        %v1189 = vpack.c.bf16 %v1117, %v1115
        %v1190 = vpack.c.bf16 %v1118, %v1116
        %v1191 = vpack.c.bf16 %v1121, %v1119
        %v1192 = vpack.c.bf16 %v1122, %v1120
        %v1193 = vpack.c.bf16 %v1125, %v1123
        %v1194 = vpack.c.bf16 %v1126, %v1124
        %v1195 = vpack.c.bf16 %v1129, %v1127
        %v1196 = vpack.c.bf16 %v1130, %v1128
        %v1197 = vpack.c.bf16 %v1133, %v1131
        %v1198 = vpack.c.bf16 %v1134, %v1132
        %v1199 = vld [vmem:[#allocation2] sm:$0xff]
        %v1200 = vld [vmem:[#allocation2 + $0x8] sm:$0xff]
        %v1201 = vld [vmem:[#allocation2 + $0x10] sm:$0xff]
        %v1202 = vld [vmem:[#allocation2 + $0x18] sm:$0xff]
        %v1203 = vld [vmem:[#allocation2 + $0x20] sm:$0xff]
        %v1204 = vld [vmem:[#allocation2 + $0x28] sm:$0xff]
        %v1205 = vld [vmem:[#allocation2 + $0x30] sm:$0xff]
        %v1206 = vld [vmem:[#allocation2 + $0x38] sm:$0xff]
        %v1207 = vld [vmem:[#allocation2 + $0x40] sm:$0xff]
        %v1208 = vld [vmem:[#allocation2 + $0x48] sm:$0xff]
        %v1209 = vld [vmem:[#allocation2 + $0x50] sm:$0xff]
        %v1210 = vld [vmem:[#allocation2 + $0x58] sm:$0xff]
        %v1211 = vld [vmem:[#allocation2 + $0x60] sm:$0xff]
        %v1212 = vld [vmem:[#allocation2 + $0x68] sm:$0xff]
        %v1213 = vld [vmem:[#allocation2 + $0x70] sm:$0xff]
        %v1214 = vld [vmem:[#allocation2 + $0x78] sm:$0xff]
        %v1215 = vld [vmem:[#allocation2 + $0x80] sm:$0xff]
        %v1216 = vld [vmem:[#allocation2 + $0x88] sm:$0xff]
        %v1217 = vld [vmem:[#allocation2 + $0x90] sm:$0xff]
        %v1218 = vld [vmem:[#allocation2 + $0x98] sm:$0xff]
        %v1219 = vld [vmem:[#allocation2 + $0xa0] sm:$0xff]
        %v1220 = vld [vmem:[#allocation2 + $0xa8] sm:$0xff]
        %v1221 = vld [vmem:[#allocation2 + $0xb0] sm:$0xff]
        %v1222 = vld [vmem:[#allocation2 + $0xb8] sm:$0xff]
        %v1223 = vld [vmem:[#allocation2 + $0xc0] sm:$0xff]
        %v1224 = vld [vmem:[#allocation2 + $0xc8] sm:$0xff]
        %v1225 = vld [vmem:[#allocation2 + $0xd0] sm:$0xff]
        %v1226 = vld [vmem:[#allocation2 + $0xd8] sm:$0xff]
        %v1227 = vld [vmem:[#allocation2 + $0xe0] sm:$0xff]
        %v1228 = vld [vmem:[#allocation2 + $0xe8] sm:$0xff]
        %v1229 = vld [vmem:[#allocation2 + $0xf0] sm:$0xff]
        %v1230 = vld [vmem:[#allocation2 + $0xf8] sm:$0xff]
        %s1231 = scalar_lea.vmem %s3, 1
        %v1232 = vld [vmem:[%s1231] ss:$8 sm:$0x3]
        %v1234 = vlaneseq
        %v1235 = vshrl.u32 %v1234, 7
        %v1236 = vsub.s32 0, %v1235
        %v1237 = vrot.slane %v1232, %v1236
        %v1238 = vlaneseq
        %v1239 = vshrl.u32 %v1238, 7
        %v1240 = vsub.s32 1, %v1239
        %v1241 = vrot.slane %v1232, %v1240
        %v1276 = vunpack.c.l.b16 %v1199
        %v1277 = vunpack.c.h.b16 %v1199
        %v1278 = vunpack.c.l.b16 %v1200
        %v1279 = vunpack.c.h.b16 %v1200
        %v1280 = vunpack.c.l.b16 %v1201
        %v1281 = vunpack.c.h.b16 %v1201
        %v1282 = vunpack.c.l.b16 %v1202
        %v1283 = vunpack.c.h.b16 %v1202
        %v1284 = vunpack.c.l.b16 %v1203
        %v1285 = vunpack.c.h.b16 %v1203
        %v1286 = vunpack.c.l.b16 %v1204
        %v1287 = vunpack.c.h.b16 %v1204
        %v1288 = vunpack.c.l.b16 %v1205
        %v1289 = vunpack.c.h.b16 %v1205
        %v1290 = vunpack.c.l.b16 %v1206
        %v1291 = vunpack.c.h.b16 %v1206
        %v1292 = vunpack.c.l.b16 %v1207
        %v1293 = vunpack.c.h.b16 %v1207
        %v1294 = vunpack.c.l.b16 %v1208
        %v1295 = vunpack.c.h.b16 %v1208
        %v1296 = vunpack.c.l.b16 %v1209
        %v1297 = vunpack.c.h.b16 %v1209
        %v1298 = vunpack.c.l.b16 %v1210
        %v1299 = vunpack.c.h.b16 %v1210
        %v1300 = vunpack.c.l.b16 %v1211
        %v1301 = vunpack.c.h.b16 %v1211
        %v1302 = vunpack.c.l.b16 %v1212
        %v1303 = vunpack.c.h.b16 %v1212
        %v1304 = vunpack.c.l.b16 %v1213
        %v1305 = vunpack.c.h.b16 %v1213
        %v1306 = vunpack.c.l.b16 %v1214
        %v1307 = vunpack.c.h.b16 %v1214
        %v1308 = vunpack.c.l.b16 %v1215
        %v1309 = vunpack.c.h.b16 %v1215
        %v1310 = vunpack.c.l.b16 %v1216
        %v1311 = vunpack.c.h.b16 %v1216
        %v1312 = vunpack.c.l.b16 %v1217
        %v1313 = vunpack.c.h.b16 %v1217
        %v1314 = vunpack.c.l.b16 %v1218
        %v1315 = vunpack.c.h.b16 %v1218
        %v1316 = vunpack.c.l.b16 %v1219
        %v1317 = vunpack.c.h.b16 %v1219
        %v1318 = vunpack.c.l.b16 %v1220
        %v1319 = vunpack.c.h.b16 %v1220
        %v1320 = vunpack.c.l.b16 %v1221
        %v1321 = vunpack.c.h.b16 %v1221
        %v1322 = vunpack.c.l.b16 %v1222
        %v1323 = vunpack.c.h.b16 %v1222
        %v1324 = vunpack.c.l.b16 %v1223
        %v1325 = vunpack.c.h.b16 %v1223
        %v1326 = vunpack.c.l.b16 %v1224
        %v1327 = vunpack.c.h.b16 %v1224
        %v1328 = vunpack.c.l.b16 %v1225
        %v1329 = vunpack.c.h.b16 %v1225
        %v1330 = vunpack.c.l.b16 %v1226
        %v1331 = vunpack.c.h.b16 %v1226
        %v1332 = vunpack.c.l.b16 %v1227
        %v1333 = vunpack.c.h.b16 %v1227
        %v1334 = vunpack.c.l.b16 %v1228
        %v1335 = vunpack.c.h.b16 %v1228
        %v1336 = vunpack.c.l.b16 %v1229
        %v1337 = vunpack.c.h.b16 %v1229
        %v1338 = vunpack.c.l.b16 %v1230
        %v1339 = vunpack.c.h.b16 %v1230
        %v1340 = vpack.c.b16 %v1278, %v1276
        %v1341 = vpack.c.b16 %v1279, %v1277
        %v1342 = vpack.c.b16 %v1282, %v1280
        %v1343 = vpack.c.b16 %v1283, %v1281
        %v1344 = vpack.c.b16 %v1286, %v1284
        %v1345 = vpack.c.b16 %v1287, %v1285
        %v1346 = vpack.c.b16 %v1290, %v1288
        %v1347 = vpack.c.b16 %v1291, %v1289
        %v1348 = vpack.c.b16 %v1294, %v1292
        %v1349 = vpack.c.b16 %v1295, %v1293
        %v1350 = vpack.c.b16 %v1298, %v1296
        %v1351 = vpack.c.b16 %v1299, %v1297
        %v1352 = vpack.c.b16 %v1302, %v1300
        %v1353 = vpack.c.b16 %v1303, %v1301
        %v1354 = vpack.c.b16 %v1306, %v1304
        %v1355 = vpack.c.b16 %v1307, %v1305
        %v1356 = vpack.c.b16 %v1310, %v1308
        %v1357 = vpack.c.b16 %v1311, %v1309
        %v1358 = vpack.c.b16 %v1314, %v1312
        %v1359 = vpack.c.b16 %v1315, %v1313
        %v1360 = vpack.c.b16 %v1318, %v1316
        %v1361 = vpack.c.b16 %v1319, %v1317
        %v1362 = vpack.c.b16 %v1322, %v1320
        %v1363 = vpack.c.b16 %v1323, %v1321
        %v1364 = vpack.c.b16 %v1326, %v1324
        %v1365 = vpack.c.b16 %v1327, %v1325
        %v1366 = vpack.c.b16 %v1330, %v1328
        %v1367 = vpack.c.b16 %v1331, %v1329
        %v1368 = vpack.c.b16 %v1334, %v1332
        %v1369 = vpack.c.b16 %v1335, %v1333
        %v1370 = vpack.c.b16 %v1338, %v1336
        %v1371 = vpack.c.b16 %v1339, %v1337
        %1404 = vmatprep.subr.bf16.mxu0 %v1341
        %1405 = vmatpush1.bf16.msra.mxu0 %v1340
        %1406 = vmatprep.subr.bf16.mxu0 %v1343
        %1407 = vmatpush1.bf16.msra.mxu0 %v1342
        %1408 = vmatprep.subr.bf16.mxu0 %v1345
        %1409 = vmatpush1.bf16.msra.mxu0 %v1344
        %1410 = vmatprep.subr.bf16.mxu0 %v1347
        %1411 = vmatpush1.bf16.msra.mxu0 %v1346
        %1412 = vmatprep.subr.bf16.mxu0 %v1349
        %1413 = vmatpush1.bf16.msra.mxu0 %v1348
        %1414 = vmatprep.subr.bf16.mxu0 %v1351
        %1415 = vmatpush1.bf16.msra.mxu0 %v1350
        %1416 = vmatprep.subr.bf16.mxu0 %v1353
        %1417 = vmatpush1.bf16.msra.mxu0 %v1352
        %1418 = vmatprep.subr.bf16.mxu0 %v1355
        %1419 = vmatpush1.bf16.msra.mxu0 %v1354
        %1420 = vmatprep.subr.bf16.mxu0 %v1357
        %1421 = vmatpush1.bf16.msra.mxu0 %v1356
        %1422 = vmatprep.subr.bf16.mxu0 %v1359
        %1423 = vmatpush1.bf16.msra.mxu0 %v1358
        %1424 = vmatprep.subr.bf16.mxu0 %v1361
        %1425 = vmatpush1.bf16.msra.mxu0 %v1360
        %1426 = vmatprep.subr.bf16.mxu0 %v1363
        %1427 = vmatpush1.bf16.msra.mxu0 %v1362
        %1428 = vmatprep.subr.bf16.mxu0 %v1365
        %1429 = vmatpush1.bf16.msra.mxu0 %v1364
        %1430 = vmatprep.subr.bf16.mxu0 %v1367
        %1431 = vmatpush1.bf16.msra.mxu0 %v1366
        %1432 = vmatprep.subr.bf16.mxu0 %v1369
        %1433 = vmatpush1.bf16.msra.mxu0 %v1368
        %1434 = vmatprep.subr.bf16.mxu0 %v1371
        %1435 = vmatpush1.bf16.msra.mxu0 %v1370
        %1436 = vmatprep.mubr.bf16.mxu0 %v1136
        %1437 = vmatmul.mubr.bf16.gmra.mrb[0].mxu0 %v1135
        %v1438 = vpop.f32.mrb[0].mxu0
        %v1439 = vadd.f32 %v1237, %v1438
        %v1440 = vpop.f32.mrb[0].mxu0
        %v1441 = vadd.f32 %v1241, %v1440
        %v1442 = vpop.f32.mrb[0].mxu0
        %v1443 = vadd.f32 %v1237, %v1442
        %v1444 = vpop.f32.mrb[0].mxu0
        %v1445 = vadd.f32 %v1241, %v1444
        %1446 = vmatprep.mubr.bf16.mxu0 %v1138
        %1447 = vmatmul.mubr.bf16.gmra.mrb[0].mxu0 %v1137
        %v1448 = vpop.f32.mrb[0].mxu0
        %v1449 = vadd.f32 %v1237, %v1448
        %v1450 = vpop.f32.mrb[0].mxu0
        %v1451 = vadd.f32 %v1241, %v1450
        %v1452 = vpop.f32.mrb[0].mxu0
        %v1453 = vadd.f32 %v1237, %v1452
        %v1454 = vpop.f32.mrb[0].mxu0
        %v1455 = vadd.f32 %v1241, %v1454
        %1456 = vmatprep.mubr.bf16.mxu0 %v1140
        %1457 = vmatmul.mubr.bf16.gmra.mrb[0].mxu0 %v1139
        %v1458 = vpop.f32.mrb[0].mxu0
        %v1459 = vadd.f32 %v1237, %v1458
        %v1460 = vpop.f32.mrb[0].mxu0
        %v1461 = vadd.f32 %v1241, %v1460
        %v1462 = vpop.f32.mrb[0].mxu0
        %v1463 = vadd.f32 %v1237, %v1462
        %v1464 = vpop.f32.mrb[0].mxu0
        %v1465 = vadd.f32 %v1241, %v1464
        %1466 = vmatprep.mubr.bf16.mxu0 %v1142
        %1467 = vmatmul.mubr.bf16.gmra.mrb[0].mxu0 %v1141
        %v1468 = vpop.f32.mrb[0].mxu0
        %v1469 = vadd.f32 %v1237, %v1468
        %v1470 = vpop.f32.mrb[0].mxu0
        %v1471 = vadd.f32 %v1241, %v1470
        %v1472 = vpop.f32.mrb[0].mxu0
        %v1473 = vadd.f32 %v1237, %v1472
        %v1474 = vpop.f32.mrb[0].mxu0
        %v1475 = vadd.f32 %v1241, %v1474
        %1476 = vmatprep.mubr.bf16.mxu0 %v1144
        %1477 = vmatmul.mubr.bf16.gmra.mrb[0].mxu0 %v1143
        %v1478 = vpop.f32.mrb[0].mxu0
        %v1479 = vadd.f32 %v1237, %v1478
        %v1480 = vpop.f32.mrb[0].mxu0
        %v1481 = vadd.f32 %v1241, %v1480
        %v1482 = vpop.f32.mrb[0].mxu0
        %v1483 = vadd.f32 %v1237, %v1482
        %v1484 = vpop.f32.mrb[0].mxu0
        %v1485 = vadd.f32 %v1241, %v1484
        %1486 = vmatprep.mubr.bf16.mxu0 %v1146
        %1487 = vmatmul.mubr.bf16.gmra.mrb[0].mxu0 %v1145
        %v1488 = vpop.f32.mrb[0].mxu0
        %v1489 = vadd.f32 %v1237, %v1488
        %v1490 = vpop.f32.mrb[0].mxu0
        %v1491 = vadd.f32 %v1241, %v1490
        %v1492 = vpop.f32.mrb[0].mxu0
        %v1493 = vadd.f32 %v1237, %v1492
        %v1494 = vpop.f32.mrb[0].mxu0
        %v1495 = vadd.f32 %v1241, %v1494
        %1496 = vmatprep.mubr.bf16.mxu0 %v1148
        %1497 = vmatmul.mubr.bf16.gmra.mrb[0].mxu0 %v1147
        %v1498 = vpop.f32.mrb[0].mxu0
        %v1499 = vadd.f32 %v1237, %v1498
        %v1500 = vpop.f32.mrb[0].mxu0
        %v1501 = vadd.f32 %v1241, %v1500
        %v1502 = vpop.f32.mrb[0].mxu0
        %v1503 = vadd.f32 %v1237, %v1502
        %v1504 = vpop.f32.mrb[0].mxu0
        %v1505 = vadd.f32 %v1241, %v1504
        %1506 = vmatprep.mubr.bf16.mxu0 %v1150
        %1507 = vmatmul.mubr.bf16.gmra.mrb[0].mxu0 %v1149
        %v1508 = vpop.f32.mrb[0].mxu0
        %v1509 = vadd.f32 %v1237, %v1508
        %v1510 = vpop.f32.mrb[0].mxu0
        %v1511 = vadd.f32 %v1241, %v1510
        %v1512 = vpop.f32.mrb[0].mxu0
        %v1513 = vadd.f32 %v1237, %v1512
        %v1514 = vpop.f32.mrb[0].mxu0
        %v1515 = vadd.f32 %v1241, %v1514
        %1516 = vmatprep.mubr.bf16.mxu0 %v1152
        %1517 = vmatmul.mubr.bf16.gmra.mrb[0].mxu0 %v1151
        %v1518 = vpop.f32.mrb[0].mxu0
        %v1519 = vadd.f32 %v1237, %v1518
        %v1520 = vpop.f32.mrb[0].mxu0
        %v1521 = vadd.f32 %v1241, %v1520
        %v1522 = vpop.f32.mrb[0].mxu0
        %v1523 = vadd.f32 %v1237, %v1522
        %v1524 = vpop.f32.mrb[0].mxu0
        %v1525 = vadd.f32 %v1241, %v1524
        %1526 = vmatprep.mubr.bf16.mxu0 %v1154
        %1527 = vmatmul.mubr.bf16.gmra.mrb[0].mxu0 %v1153
        %v1528 = vpop.f32.mrb[0].mxu0
        %v1529 = vadd.f32 %v1237, %v1528
        %v1530 = vpop.f32.mrb[0].mxu0
        %v1531 = vadd.f32 %v1241, %v1530
        %v1532 = vpop.f32.mrb[0].mxu0
        %v1533 = vadd.f32 %v1237, %v1532
        %v1534 = vpop.f32.mrb[0].mxu0
        %v1535 = vadd.f32 %v1241, %v1534
        %1536 = vmatprep.mubr.bf16.mxu0 %v1156
        %1537 = vmatmul.mubr.bf16.gmra.mrb[0].mxu0 %v1155
        %v1538 = vpop.f32.mrb[0].mxu0
        %v1539 = vadd.f32 %v1237, %v1538
        %v1540 = vpop.f32.mrb[0].mxu0
        %v1541 = vadd.f32 %v1241, %v1540
        %v1542 = vpop.f32.mrb[0].mxu0
        %v1543 = vadd.f32 %v1237, %v1542
        %v1544 = vpop.f32.mrb[0].mxu0
        %v1545 = vadd.f32 %v1241, %v1544
        %1546 = vmatprep.mubr.bf16.mxu0 %v1158
        %1547 = vmatmul.mubr.bf16.gmra.mrb[0].mxu0 %v1157
        %v1548 = vpop.f32.mrb[0].mxu0
        %v1549 = vadd.f32 %v1237, %v1548
        %v1550 = vpop.f32.mrb[0].mxu0
        %v1551 = vadd.f32 %v1241, %v1550
        %v1552 = vpop.f32.mrb[0].mxu0
        %v1553 = vadd.f32 %v1237, %v1552
        %v1554 = vpop.f32.mrb[0].mxu0
        %v1555 = vadd.f32 %v1241, %v1554
        %1556 = vmatprep.mubr.bf16.mxu0 %v1160
        %1557 = vmatmul.mubr.bf16.gmra.mrb[0].mxu0 %v1159
        %v1558 = vpop.f32.mrb[0].mxu0
        %v1559 = vadd.f32 %v1237, %v1558
        %v1560 = vpop.f32.mrb[0].mxu0
        %v1561 = vadd.f32 %v1241, %v1560
        %v1562 = vpop.f32.mrb[0].mxu0
        %v1563 = vadd.f32 %v1237, %v1562
        %v1564 = vpop.f32.mrb[0].mxu0
        %v1565 = vadd.f32 %v1241, %v1564
        %1566 = vmatprep.mubr.bf16.mxu0 %v1162
        %1567 = vmatmul.mubr.bf16.gmra.mrb[0].mxu0 %v1161
        %v1568 = vpop.f32.mrb[0].mxu0
        %v1569 = vadd.f32 %v1237, %v1568
        %v1570 = vpop.f32.mrb[0].mxu0
        %v1571 = vadd.f32 %v1241, %v1570
        %v1572 = vpop.f32.mrb[0].mxu0
        %v1573 = vadd.f32 %v1237, %v1572
        %v1574 = vpop.f32.mrb[0].mxu0
        %v1575 = vadd.f32 %v1241, %v1574
        %1576 = vmatprep.mubr.bf16.mxu0 %v1164
        %1577 = vmatmul.mubr.bf16.gmra.mrb[0].mxu0 %v1163
        %v1578 = vpop.f32.mrb[0].mxu0
        %v1579 = vadd.f32 %v1237, %v1578
        %v1580 = vpop.f32.mrb[0].mxu0
        %v1581 = vadd.f32 %v1241, %v1580
        %v1582 = vpop.f32.mrb[0].mxu0
        %v1583 = vadd.f32 %v1237, %v1582
        %v1584 = vpop.f32.mrb[0].mxu0
        %v1585 = vadd.f32 %v1241, %v1584
        %1586 = vmatprep.mubr.bf16.mxu0 %v1166
        %1587 = vmatmul.mubr.bf16.gmra.mrb[0].mxu0 %v1165
        %v1588 = vpop.f32.mrb[0].mxu0
        %v1589 = vadd.f32 %v1237, %v1588
        %v1590 = vpop.f32.mrb[0].mxu0
        %v1591 = vadd.f32 %v1241, %v1590
        %v1592 = vpop.f32.mrb[0].mxu0
        %v1593 = vadd.f32 %v1237, %v1592
        %v1594 = vpop.f32.mrb[0].mxu0
        %v1595 = vadd.f32 %v1241, %v1594
        %1596 = vmatprep.mubr.bf16.mxu0 %v1168
        %1597 = vmatmul.mubr.bf16.gmra.mrb[0].mxu0 %v1167
        %v1598 = vpop.f32.mrb[0].mxu0
        %v1599 = vadd.f32 %v1237, %v1598
        %v1600 = vpop.f32.mrb[0].mxu0
        %v1601 = vadd.f32 %v1241, %v1600
        %v1602 = vpop.f32.mrb[0].mxu0
        %v1603 = vadd.f32 %v1237, %v1602
        %v1604 = vpop.f32.mrb[0].mxu0
        %v1605 = vadd.f32 %v1241, %v1604
        %1606 = vmatprep.mubr.bf16.mxu0 %v1170
        %1607 = vmatmul.mubr.bf16.gmra.mrb[0].mxu0 %v1169
        %v1608 = vpop.f32.mrb[0].mxu0
        %v1609 = vadd.f32 %v1237, %v1608
        %v1610 = vpop.f32.mrb[0].mxu0
        %v1611 = vadd.f32 %v1241, %v1610
        %v1612 = vpop.f32.mrb[0].mxu0
        %v1613 = vadd.f32 %v1237, %v1612
        %v1614 = vpop.f32.mrb[0].mxu0
        %v1615 = vadd.f32 %v1241, %v1614
        %1616 = vmatprep.mubr.bf16.mxu0 %v1172
        %1617 = vmatmul.mubr.bf16.gmra.mrb[0].mxu0 %v1171
        %v1618 = vpop.f32.mrb[0].mxu0
        %v1619 = vadd.f32 %v1237, %v1618
        %v1620 = vpop.f32.mrb[0].mxu0
        %v1621 = vadd.f32 %v1241, %v1620
        %v1622 = vpop.f32.mrb[0].mxu0
        %v1623 = vadd.f32 %v1237, %v1622
        %v1624 = vpop.f32.mrb[0].mxu0
        %v1625 = vadd.f32 %v1241, %v1624
        %1626 = vmatprep.mubr.bf16.mxu0 %v1174
        %1627 = vmatmul.mubr.bf16.gmra.mrb[0].mxu0 %v1173
        %v1628 = vpop.f32.mrb[0].mxu0
        %v1629 = vadd.f32 %v1237, %v1628
        %v1630 = vpop.f32.mrb[0].mxu0
        %v1631 = vadd.f32 %v1241, %v1630
        %v1632 = vpop.f32.mrb[0].mxu0
        %v1633 = vadd.f32 %v1237, %v1632
        %v1634 = vpop.f32.mrb[0].mxu0
        %v1635 = vadd.f32 %v1241, %v1634
        %1636 = vmatprep.mubr.bf16.mxu0 %v1176
        %1637 = vmatmul.mubr.bf16.gmra.mrb[0].mxu0 %v1175
        %v1638 = vpop.f32.mrb[0].mxu0
        %v1639 = vadd.f32 %v1237, %v1638
        %v1640 = vpop.f32.mrb[0].mxu0
        %v1641 = vadd.f32 %v1241, %v1640
        %v1642 = vpop.f32.mrb[0].mxu0
        %v1643 = vadd.f32 %v1237, %v1642
        %v1644 = vpop.f32.mrb[0].mxu0
        %v1645 = vadd.f32 %v1241, %v1644
        %1646 = vmatprep.mubr.bf16.mxu0 %v1178
        %1647 = vmatmul.mubr.bf16.gmra.mrb[0].mxu0 %v1177
        %v1648 = vpop.f32.mrb[0].mxu0
        %v1649 = vadd.f32 %v1237, %v1648
        %v1650 = vpop.f32.mrb[0].mxu0
        %v1651 = vadd.f32 %v1241, %v1650
        %v1652 = vpop.f32.mrb[0].mxu0
        %v1653 = vadd.f32 %v1237, %v1652
        %v1654 = vpop.f32.mrb[0].mxu0
        %v1655 = vadd.f32 %v1241, %v1654
        %1656 = vmatprep.mubr.bf16.mxu0 %v1180
        %1657 = vmatmul.mubr.bf16.gmra.mrb[0].mxu0 %v1179
        %v1658 = vpop.f32.mrb[0].mxu0
        %v1659 = vadd.f32 %v1237, %v1658
        %v1660 = vpop.f32.mrb[0].mxu0
        %v1661 = vadd.f32 %v1241, %v1660
        %v1662 = vpop.f32.mrb[0].mxu0
        %v1663 = vadd.f32 %v1237, %v1662
        %v1664 = vpop.f32.mrb[0].mxu0
        %v1665 = vadd.f32 %v1241, %v1664
        %1666 = vmatprep.mubr.bf16.mxu0 %v1182
        %1667 = vmatmul.mubr.bf16.gmra.mrb[0].mxu0 %v1181
        %v1668 = vpop.f32.mrb[0].mxu0
        %v1669 = vadd.f32 %v1237, %v1668
        %v1670 = vpop.f32.mrb[0].mxu0
        %v1671 = vadd.f32 %v1241, %v1670
        %v1672 = vpop.f32.mrb[0].mxu0
        %v1673 = vadd.f32 %v1237, %v1672
        %v1674 = vpop.f32.mrb[0].mxu0
        %v1675 = vadd.f32 %v1241, %v1674
        %1676 = vmatprep.mubr.bf16.mxu0 %v1184
        %1677 = vmatmul.mubr.bf16.gmra.mrb[0].mxu0 %v1183
        %v1678 = vpop.f32.mrb[0].mxu0
        %v1679 = vadd.f32 %v1237, %v1678
        %v1680 = vpop.f32.mrb[0].mxu0
        %v1681 = vadd.f32 %v1241, %v1680
        %v1682 = vpop.f32.mrb[0].mxu0
        %v1683 = vadd.f32 %v1237, %v1682
        %v1684 = vpop.f32.mrb[0].mxu0
        %v1685 = vadd.f32 %v1241, %v1684
        %1686 = vmatprep.mubr.bf16.mxu0 %v1186
        %1687 = vmatmul.mubr.bf16.gmra.mrb[0].mxu0 %v1185
        %v1688 = vpop.f32.mrb[0].mxu0
        %v1689 = vadd.f32 %v1237, %v1688
        %v1690 = vpop.f32.mrb[0].mxu0
        %v1691 = vadd.f32 %v1241, %v1690
        %v1692 = vpop.f32.mrb[0].mxu0
        %v1693 = vadd.f32 %v1237, %v1692
        %v1694 = vpop.f32.mrb[0].mxu0
        %v1695 = vadd.f32 %v1241, %v1694
        %1696 = vmatprep.mubr.bf16.mxu0 %v1188
        %1697 = vmatmul.mubr.bf16.gmra.mrb[0].mxu0 %v1187
        %v1698 = vpop.f32.mrb[0].mxu0
        %v1699 = vadd.f32 %v1237, %v1698
        %v1700 = vpop.f32.mrb[0].mxu0
        %v1701 = vadd.f32 %v1241, %v1700
        %v1702 = vpop.f32.mrb[0].mxu0
        %v1703 = vadd.f32 %v1237, %v1702
        %v1704 = vpop.f32.mrb[0].mxu0
        %v1705 = vadd.f32 %v1241, %v1704
        %1706 = vmatprep.mubr.bf16.mxu0 %v1190
        %1707 = vmatmul.mubr.bf16.gmra.mrb[0].mxu0 %v1189
        %v1708 = vpop.f32.mrb[0].mxu0
        %v1709 = vadd.f32 %v1237, %v1708
        %v1710 = vpop.f32.mrb[0].mxu0
        %v1711 = vadd.f32 %v1241, %v1710
        %v1712 = vpop.f32.mrb[0].mxu0
        %v1713 = vadd.f32 %v1237, %v1712
        %v1714 = vpop.f32.mrb[0].mxu0
        %v1715 = vadd.f32 %v1241, %v1714
        %1716 = vmatprep.mubr.bf16.mxu0 %v1192
        %1717 = vmatmul.mubr.bf16.gmra.mrb[0].mxu0 %v1191
        %v1718 = vpop.f32.mrb[0].mxu0
        %v1719 = vadd.f32 %v1237, %v1718
        %v1720 = vpop.f32.mrb[0].mxu0
        %v1721 = vadd.f32 %v1241, %v1720
        %v1722 = vpop.f32.mrb[0].mxu0
        %v1723 = vadd.f32 %v1237, %v1722
        %v1724 = vpop.f32.mrb[0].mxu0
        %v1725 = vadd.f32 %v1241, %v1724
        %1726 = vmatprep.mubr.bf16.mxu0 %v1194
        %1727 = vmatmul.mubr.bf16.gmra.mrb[0].mxu0 %v1193
        %v1728 = vpop.f32.mrb[0].mxu0
        %v1729 = vadd.f32 %v1237, %v1728
        %v1730 = vpop.f32.mrb[0].mxu0
        %v1731 = vadd.f32 %v1241, %v1730
        %v1732 = vpop.f32.mrb[0].mxu0
        %v1733 = vadd.f32 %v1237, %v1732
        %v1734 = vpop.f32.mrb[0].mxu0
        %v1735 = vadd.f32 %v1241, %v1734
        %1736 = vmatprep.mubr.bf16.mxu0 %v1196
        %1737 = vmatmul.mubr.bf16.gmra.mrb[0].mxu0 %v1195
        %v1738 = vpop.f32.mrb[0].mxu0
        %v1739 = vadd.f32 %v1237, %v1738
        %v1740 = vpop.f32.mrb[0].mxu0
        %v1741 = vadd.f32 %v1241, %v1740
        %v1742 = vpop.f32.mrb[0].mxu0
        %v1743 = vadd.f32 %v1237, %v1742
        %v1744 = vpop.f32.mrb[0].mxu0
        %v1745 = vadd.f32 %v1241, %v1744
        %1746 = vmatprep.mubr.bf16.mxu0 %v1198
        %1747 = vmatmul.mubr.bf16.gmra.mrb[0].mxu0 %v1197
        %v1748 = vpop.f32.mrb[0].mxu0
        %v1749 = vadd.f32 %v1237, %v1748
        %v1750 = vpop.f32.mrb[0].mxu0
        %v1751 = vadd.f32 %v1241, %v1750
        %v1752 = vpop.f32.mrb[0].mxu0
        %v1753 = vadd.f32 %v1237, %v1752
        %v1754 = vpop.f32.mrb[0].mxu0
        %v1755 = vadd.f32 %v1241, %v1754
        %1756 = vdwg.mxu0
        %v1757 = vmax.f32 %v1439, 0.0
        %v1758 = vmax.f32 %v1441, 0.0
        %v1759 = vmax.f32 %v1443, 0.0
        %v1760 = vmax.f32 %v1445, 0.0
        %v1761 = vmax.f32 %v1449, 0.0
        %v1762 = vmax.f32 %v1451, 0.0
        %v1763 = vmax.f32 %v1453, 0.0
        %v1764 = vmax.f32 %v1455, 0.0
        %v1765 = vmax.f32 %v1459, 0.0
        %v1766 = vmax.f32 %v1461, 0.0
        %v1767 = vmax.f32 %v1463, 0.0
        %v1768 = vmax.f32 %v1465, 0.0
        %v1769 = vmax.f32 %v1469, 0.0
        %v1770 = vmax.f32 %v1471, 0.0
        %v1771 = vmax.f32 %v1473, 0.0
        %v1772 = vmax.f32 %v1475, 0.0
        %v1773 = vmax.f32 %v1479, 0.0
        %v1774 = vmax.f32 %v1481, 0.0
        %v1775 = vmax.f32 %v1483, 0.0
        %v1776 = vmax.f32 %v1485, 0.0
        %v1777 = vmax.f32 %v1489, 0.0
        %v1778 = vmax.f32 %v1491, 0.0
        %v1779 = vmax.f32 %v1493, 0.0
        %v1780 = vmax.f32 %v1495, 0.0
        %v1781 = vmax.f32 %v1499, 0.0
        %v1782 = vmax.f32 %v1501, 0.0
        %v1783 = vmax.f32 %v1503, 0.0
        %v1784 = vmax.f32 %v1505, 0.0
        %v1785 = vmax.f32 %v1509, 0.0
        %v1786 = vmax.f32 %v1511, 0.0
        %v1787 = vmax.f32 %v1513, 0.0
        %v1788 = vmax.f32 %v1515, 0.0
        %v1789 = vmax.f32 %v1519, 0.0
        %v1790 = vmax.f32 %v1521, 0.0
        %v1791 = vmax.f32 %v1523, 0.0
        %v1792 = vmax.f32 %v1525, 0.0
        %v1793 = vmax.f32 %v1529, 0.0
        %v1794 = vmax.f32 %v1531, 0.0
        %v1795 = vmax.f32 %v1533, 0.0
        %v1796 = vmax.f32 %v1535, 0.0
        %v1797 = vmax.f32 %v1539, 0.0
        %v1798 = vmax.f32 %v1541, 0.0
        %v1799 = vmax.f32 %v1543, 0.0
        %v1800 = vmax.f32 %v1545, 0.0
        %v1801 = vmax.f32 %v1549, 0.0
        %v1802 = vmax.f32 %v1551, 0.0
        %v1803 = vmax.f32 %v1553, 0.0
        %v1804 = vmax.f32 %v1555, 0.0
        %v1805 = vmax.f32 %v1559, 0.0
        %v1806 = vmax.f32 %v1561, 0.0
        %v1807 = vmax.f32 %v1563, 0.0
        %v1808 = vmax.f32 %v1565, 0.0
        %v1809 = vmax.f32 %v1569, 0.0
        %v1810 = vmax.f32 %v1571, 0.0
        %v1811 = vmax.f32 %v1573, 0.0
        %v1812 = vmax.f32 %v1575, 0.0
        %v1813 = vmax.f32 %v1579, 0.0
        %v1814 = vmax.f32 %v1581, 0.0
        %v1815 = vmax.f32 %v1583, 0.0
        %v1816 = vmax.f32 %v1585, 0.0
        %v1817 = vmax.f32 %v1589, 0.0
        %v1818 = vmax.f32 %v1591, 0.0
        %v1819 = vmax.f32 %v1593, 0.0
        %v1820 = vmax.f32 %v1595, 0.0
        %v1821 = vmax.f32 %v1599, 0.0
        %v1822 = vmax.f32 %v1601, 0.0
        %v1823 = vmax.f32 %v1603, 0.0
        %v1824 = vmax.f32 %v1605, 0.0
        %v1825 = vmax.f32 %v1609, 0.0
        %v1826 = vmax.f32 %v1611, 0.0
        %v1827 = vmax.f32 %v1613, 0.0
        %v1828 = vmax.f32 %v1615, 0.0
        %v1829 = vmax.f32 %v1619, 0.0
        %v1830 = vmax.f32 %v1621, 0.0
        %v1831 = vmax.f32 %v1623, 0.0
        %v1832 = vmax.f32 %v1625, 0.0
        %v1833 = vmax.f32 %v1629, 0.0
        %v1834 = vmax.f32 %v1631, 0.0
        %v1835 = vmax.f32 %v1633, 0.0
        %v1836 = vmax.f32 %v1635, 0.0
        %v1837 = vmax.f32 %v1639, 0.0
        %v1838 = vmax.f32 %v1641, 0.0
        %v1839 = vmax.f32 %v1643, 0.0
        %v1840 = vmax.f32 %v1645, 0.0
        %v1841 = vmax.f32 %v1649, 0.0
        %v1842 = vmax.f32 %v1651, 0.0
        %v1843 = vmax.f32 %v1653, 0.0
        %v1844 = vmax.f32 %v1655, 0.0
        %v1845 = vmax.f32 %v1659, 0.0
        %v1846 = vmax.f32 %v1661, 0.0
        %v1847 = vmax.f32 %v1663, 0.0
        %v1848 = vmax.f32 %v1665, 0.0
        %v1849 = vmax.f32 %v1669, 0.0
        %v1850 = vmax.f32 %v1671, 0.0
        %v1851 = vmax.f32 %v1673, 0.0
        %v1852 = vmax.f32 %v1675, 0.0
        %v1853 = vmax.f32 %v1679, 0.0
        %v1854 = vmax.f32 %v1681, 0.0
        %v1855 = vmax.f32 %v1683, 0.0
        %v1856 = vmax.f32 %v1685, 0.0
        %v1857 = vmax.f32 %v1689, 0.0
        %v1858 = vmax.f32 %v1691, 0.0
        %v1859 = vmax.f32 %v1693, 0.0
        %v1860 = vmax.f32 %v1695, 0.0
        %v1861 = vmax.f32 %v1699, 0.0
        %v1862 = vmax.f32 %v1701, 0.0
        %v1863 = vmax.f32 %v1703, 0.0
        %v1864 = vmax.f32 %v1705, 0.0
        %v1865 = vmax.f32 %v1709, 0.0
        %v1866 = vmax.f32 %v1711, 0.0
        %v1867 = vmax.f32 %v1713, 0.0
        %v1868 = vmax.f32 %v1715, 0.0
        %v1869 = vmax.f32 %v1719, 0.0
        %v1870 = vmax.f32 %v1721, 0.0
        %v1871 = vmax.f32 %v1723, 0.0
        %v1872 = vmax.f32 %v1725, 0.0
        %v1873 = vmax.f32 %v1729, 0.0
        %v1874 = vmax.f32 %v1731, 0.0
        %v1875 = vmax.f32 %v1733, 0.0
        %v1876 = vmax.f32 %v1735, 0.0
        %v1877 = vmax.f32 %v1739, 0.0
        %v1878 = vmax.f32 %v1741, 0.0
        %v1879 = vmax.f32 %v1743, 0.0
        %v1880 = vmax.f32 %v1745, 0.0
        %v1881 = vmax.f32 %v1749, 0.0
        %v1882 = vmax.f32 %v1751, 0.0
        %v1883 = vmax.f32 %v1753, 0.0
        %v1884 = vmax.f32 %v1755, 0.0
        %v1885 = vpack.c.bf16 %v1759, %v1757
        %v1886 = vpack.c.bf16 %v1760, %v1758
        %v1887 = vpack.c.bf16 %v1763, %v1761
        %v1888 = vpack.c.bf16 %v1764, %v1762
        %v1889 = vpack.c.bf16 %v1767, %v1765
        %v1890 = vpack.c.bf16 %v1768, %v1766
        %v1891 = vpack.c.bf16 %v1771, %v1769
        %v1892 = vpack.c.bf16 %v1772, %v1770
        %v1893 = vpack.c.bf16 %v1775, %v1773
        %v1894 = vpack.c.bf16 %v1776, %v1774
        %v1895 = vpack.c.bf16 %v1779, %v1777
        %v1896 = vpack.c.bf16 %v1780, %v1778
        %v1897 = vpack.c.bf16 %v1783, %v1781
        %v1898 = vpack.c.bf16 %v1784, %v1782
        %v1899 = vpack.c.bf16 %v1787, %v1785
        %v1900 = vpack.c.bf16 %v1788, %v1786
        %v1901 = vpack.c.bf16 %v1791, %v1789
        %v1902 = vpack.c.bf16 %v1792, %v1790
        %v1903 = vpack.c.bf16 %v1795, %v1793
        %v1904 = vpack.c.bf16 %v1796, %v1794
        %v1905 = vpack.c.bf16 %v1799, %v1797
        %v1906 = vpack.c.bf16 %v1800, %v1798
        %v1907 = vpack.c.bf16 %v1803, %v1801
        %v1908 = vpack.c.bf16 %v1804, %v1802
        %v1909 = vpack.c.bf16 %v1807, %v1805
        %v1910 = vpack.c.bf16 %v1808, %v1806
        %v1911 = vpack.c.bf16 %v1811, %v1809
        %v1912 = vpack.c.bf16 %v1812, %v1810
        %v1913 = vpack.c.bf16 %v1815, %v1813
        %v1914 = vpack.c.bf16 %v1816, %v1814
        %v1915 = vpack.c.bf16 %v1819, %v1817
        %v1916 = vpack.c.bf16 %v1820, %v1818
        %v1917 = vpack.c.bf16 %v1823, %v1821
        %v1918 = vpack.c.bf16 %v1824, %v1822
        %v1919 = vpack.c.bf16 %v1827, %v1825
        %v1920 = vpack.c.bf16 %v1828, %v1826
        %v1921 = vpack.c.bf16 %v1831, %v1829
        %v1922 = vpack.c.bf16 %v1832, %v1830
        %v1923 = vpack.c.bf16 %v1835, %v1833
        %v1924 = vpack.c.bf16 %v1836, %v1834
        %v1925 = vpack.c.bf16 %v1839, %v1837
        %v1926 = vpack.c.bf16 %v1840, %v1838
        %v1927 = vpack.c.bf16 %v1843, %v1841
        %v1928 = vpack.c.bf16 %v1844, %v1842
        %v1929 = vpack.c.bf16 %v1847, %v1845
        %v1930 = vpack.c.bf16 %v1848, %v1846
        %v1931 = vpack.c.bf16 %v1851, %v1849
        %v1932 = vpack.c.bf16 %v1852, %v1850
        %v1933 = vpack.c.bf16 %v1855, %v1853
        %v1934 = vpack.c.bf16 %v1856, %v1854
        %v1935 = vpack.c.bf16 %v1859, %v1857
        %v1936 = vpack.c.bf16 %v1860, %v1858
        %v1937 = vpack.c.bf16 %v1863, %v1861
        %v1938 = vpack.c.bf16 %v1864, %v1862
        %v1939 = vpack.c.bf16 %v1867, %v1865
        %v1940 = vpack.c.bf16 %v1868, %v1866
        %v1941 = vpack.c.bf16 %v1871, %v1869
        %v1942 = vpack.c.bf16 %v1872, %v1870
        %v1943 = vpack.c.bf16 %v1875, %v1873
        %v1944 = vpack.c.bf16 %v1876, %v1874
        %v1945 = vpack.c.bf16 %v1879, %v1877
        %v1946 = vpack.c.bf16 %v1880, %v1878
        %v1947 = vpack.c.bf16 %v1883, %v1881
        %v1948 = vpack.c.bf16 %v1884, %v1882
        %s1949 = scalar_lea.vmem [#allocation2], 256
        %v1950 = vld [vmem:[%s1949] sm:$0xff]
        %v1951 = vld [vmem:[%s1949 + $0x8] sm:$0xff]
        %v1952 = vld [vmem:[%s1949 + $0x10] sm:$0xff]
        %v1953 = vld [vmem:[%s1949 + $0x18] sm:$0xff]
        %v1954 = vld [vmem:[%s1949 + $0x20] sm:$0xff]
        %v1955 = vld [vmem:[%s1949 + $0x28] sm:$0xff]
        %v1956 = vld [vmem:[%s1949 + $0x30] sm:$0xff]
        %v1957 = vld [vmem:[%s1949 + $0x38] sm:$0xff]
        %v1958 = vld [vmem:[%s1949 + $0x40] sm:$0xff]
        %v1959 = vld [vmem:[%s1949 + $0x48] sm:$0xff]
        %v1960 = vld [vmem:[%s1949 + $0x50] sm:$0xff]
        %v1961 = vld [vmem:[%s1949 + $0x58] sm:$0xff]
        %v1962 = vld [vmem:[%s1949 + $0x60] sm:$0xff]
        %v1963 = vld [vmem:[%s1949 + $0x68] sm:$0xff]
        %v1964 = vld [vmem:[%s1949 + $0x70] sm:$0xff]
        %v1965 = vld [vmem:[%s1949 + $0x78] sm:$0xff]
        %v1966 = vld [vmem:[%s1949 + $0x80] sm:$0xff]
        %v1967 = vld [vmem:[%s1949 + $0x88] sm:$0xff]
        %v1968 = vld [vmem:[%s1949 + $0x90] sm:$0xff]
        %v1969 = vld [vmem:[%s1949 + $0x98] sm:$0xff]
        %v1970 = vld [vmem:[%s1949 + $0xa0] sm:$0xff]
        %v1971 = vld [vmem:[%s1949 + $0xa8] sm:$0xff]
        %v1972 = vld [vmem:[%s1949 + $0xb0] sm:$0xff]
        %v1973 = vld [vmem:[%s1949 + $0xb8] sm:$0xff]
        %v1974 = vld [vmem:[%s1949 + $0xc0] sm:$0xff]
        %v1975 = vld [vmem:[%s1949 + $0xc8] sm:$0xff]
        %v1976 = vld [vmem:[%s1949 + $0xd0] sm:$0xff]
        %v1977 = vld [vmem:[%s1949 + $0xd8] sm:$0xff]
        %v1978 = vld [vmem:[%s1949 + $0xe0] sm:$0xff]
        %v1979 = vld [vmem:[%s1949 + $0xe8] sm:$0xff]
        %v1980 = vld [vmem:[%s1949 + $0xf0] sm:$0xff]
        %v1981 = vld [vmem:[%s1949 + $0xf8] sm:$0xff]
        %s1982 = scalar_lea.vmem %s3, 2
        %v1983 = vld [vmem:[%s1982] ss:$8 sm:$0x3]
        %v1985 = vlaneseq
        %v1986 = vshrl.u32 %v1985, 7
        %v1987 = vsub.s32 0, %v1986
        %v1988 = vrot.slane %v1983, %v1987
        %v1989 = vlaneseq
        %v1990 = vshrl.u32 %v1989, 7
        %v1991 = vsub.s32 1, %v1990
        %v1992 = vrot.slane %v1983, %v1991
        %v2027 = vunpack.c.l.b16 %v1950
        %v2028 = vunpack.c.h.b16 %v1950
        %v2029 = vunpack.c.l.b16 %v1951
        %v2030 = vunpack.c.h.b16 %v1951
        %v2031 = vunpack.c.l.b16 %v1952
        %v2032 = vunpack.c.h.b16 %v1952
        %v2033 = vunpack.c.l.b16 %v1953
        %v2034 = vunpack.c.h.b16 %v1953
        %v2035 = vunpack.c.l.b16 %v1954
        %v2036 = vunpack.c.h.b16 %v1954
        %v2037 = vunpack.c.l.b16 %v1955
        %v2038 = vunpack.c.h.b16 %v1955
        %v2039 = vunpack.c.l.b16 %v1956
        %v2040 = vunpack.c.h.b16 %v1956
        %v2041 = vunpack.c.l.b16 %v1957
        %v2042 = vunpack.c.h.b16 %v1957
        %v2043 = vunpack.c.l.b16 %v1958
        %v2044 = vunpack.c.h.b16 %v1958
        %v2045 = vunpack.c.l.b16 %v1959
        %v2046 = vunpack.c.h.b16 %v1959
        %v2047 = vunpack.c.l.b16 %v1960
        %v2048 = vunpack.c.h.b16 %v1960
        %v2049 = vunpack.c.l.b16 %v1961
        %v2050 = vunpack.c.h.b16 %v1961
        %v2051 = vunpack.c.l.b16 %v1962
        %v2052 = vunpack.c.h.b16 %v1962
        %v2053 = vunpack.c.l.b16 %v1963
        %v2054 = vunpack.c.h.b16 %v1963
        %v2055 = vunpack.c.l.b16 %v1964
        %v2056 = vunpack.c.h.b16 %v1964
        %v2057 = vunpack.c.l.b16 %v1965
        %v2058 = vunpack.c.h.b16 %v1965
        %v2059 = vunpack.c.l.b16 %v1966
        %v2060 = vunpack.c.h.b16 %v1966
        %v2061 = vunpack.c.l.b16 %v1967
        %v2062 = vunpack.c.h.b16 %v1967
        %v2063 = vunpack.c.l.b16 %v1968
        %v2064 = vunpack.c.h.b16 %v1968
        %v2065 = vunpack.c.l.b16 %v1969
        %v2066 = vunpack.c.h.b16 %v1969
        %v2067 = vunpack.c.l.b16 %v1970
        %v2068 = vunpack.c.h.b16 %v1970
        %v2069 = vunpack.c.l.b16 %v1971
        %v2070 = vunpack.c.h.b16 %v1971
        %v2071 = vunpack.c.l.b16 %v1972
        %v2072 = vunpack.c.h.b16 %v1972
        %v2073 = vunpack.c.l.b16 %v1973
        %v2074 = vunpack.c.h.b16 %v1973
        %v2075 = vunpack.c.l.b16 %v1974
        %v2076 = vunpack.c.h.b16 %v1974
        %v2077 = vunpack.c.l.b16 %v1975
        %v2078 = vunpack.c.h.b16 %v1975
        %v2079 = vunpack.c.l.b16 %v1976
        %v2080 = vunpack.c.h.b16 %v1976
        %v2081 = vunpack.c.l.b16 %v1977
        %v2082 = vunpack.c.h.b16 %v1977
        %v2083 = vunpack.c.l.b16 %v1978
        %v2084 = vunpack.c.h.b16 %v1978
        %v2085 = vunpack.c.l.b16 %v1979
        %v2086 = vunpack.c.h.b16 %v1979
        %v2087 = vunpack.c.l.b16 %v1980
        %v2088 = vunpack.c.h.b16 %v1980
        %v2089 = vunpack.c.l.b16 %v1981
        %v2090 = vunpack.c.h.b16 %v1981
        %v2091 = vpack.c.b16 %v2029, %v2027
        %v2092 = vpack.c.b16 %v2030, %v2028
        %v2093 = vpack.c.b16 %v2033, %v2031
        %v2094 = vpack.c.b16 %v2034, %v2032
        %v2095 = vpack.c.b16 %v2037, %v2035
        %v2096 = vpack.c.b16 %v2038, %v2036
        %v2097 = vpack.c.b16 %v2041, %v2039
        %v2098 = vpack.c.b16 %v2042, %v2040
        %v2099 = vpack.c.b16 %v2045, %v2043
        %v2100 = vpack.c.b16 %v2046, %v2044
        %v2101 = vpack.c.b16 %v2049, %v2047
        %v2102 = vpack.c.b16 %v2050, %v2048
        %v2103 = vpack.c.b16 %v2053, %v2051
        %v2104 = vpack.c.b16 %v2054, %v2052
        %v2105 = vpack.c.b16 %v2057, %v2055
        %v2106 = vpack.c.b16 %v2058, %v2056
        %v2107 = vpack.c.b16 %v2061, %v2059
        %v2108 = vpack.c.b16 %v2062, %v2060
        %v2109 = vpack.c.b16 %v2065, %v2063
        %v2110 = vpack.c.b16 %v2066, %v2064
        %v2111 = vpack.c.b16 %v2069, %v2067
        %v2112 = vpack.c.b16 %v2070, %v2068
        %v2113 = vpack.c.b16 %v2073, %v2071
        %v2114 = vpack.c.b16 %v2074, %v2072
        %v2115 = vpack.c.b16 %v2077, %v2075
        %v2116 = vpack.c.b16 %v2078, %v2076
        %v2117 = vpack.c.b16 %v2081, %v2079
        %v2118 = vpack.c.b16 %v2082, %v2080
        %v2119 = vpack.c.b16 %v2085, %v2083
        %v2120 = vpack.c.b16 %v2086, %v2084
        %v2121 = vpack.c.b16 %v2089, %v2087
        %v2122 = vpack.c.b16 %v2090, %v2088
        %2155 = vmatprep.subr.bf16.mxu0 %v2092
        %2156 = vmatpush1.bf16.msra.mxu0 %v2091
        %2157 = vmatprep.subr.bf16.mxu0 %v2094
        %2158 = vmatpush1.bf16.msra.mxu0 %v2093
        %2159 = vmatprep.subr.bf16.mxu0 %v2096
        %2160 = vmatpush1.bf16.msra.mxu0 %v2095
        %2161 = vmatprep.subr.bf16.mxu0 %v2098
        %2162 = vmatpush1.bf16.msra.mxu0 %v2097
        %2163 = vmatprep.subr.bf16.mxu0 %v2100
        %2164 = vmatpush1.bf16.msra.mxu0 %v2099
        %2165 = vmatprep.subr.bf16.mxu0 %v2102
        %2166 = vmatpush1.bf16.msra.mxu0 %v2101
        %2167 = vmatprep.subr.bf16.mxu0 %v2104
        %2168 = vmatpush1.bf16.msra.mxu0 %v2103
        %2169 = vmatprep.subr.bf16.mxu0 %v2106
        %2170 = vmatpush1.bf16.msra.mxu0 %v2105
        %2171 = vmatprep.subr.bf16.mxu0 %v2108
        %2172 = vmatpush1.bf16.msra.mxu0 %v2107
        %2173 = vmatprep.subr.bf16.mxu0 %v2110
        %2174 = vmatpush1.bf16.msra.mxu0 %v2109
        %2175 = vmatprep.subr.bf16.mxu0 %v2112
        %2176 = vmatpush1.bf16.msra.mxu0 %v2111
        %2177 = vmatprep.subr.bf16.mxu0 %v2114
        %2178 = vmatpush1.bf16.msra.mxu0 %v2113
        %2179 = vmatprep.subr.bf16.mxu0 %v2116
        %2180 = vmatpush1.bf16.msra.mxu0 %v2115
        %2181 = vmatprep.subr.bf16.mxu0 %v2118
        %2182 = vmatpush1.bf16.msra.mxu0 %v2117
        %2183 = vmatprep.subr.bf16.mxu0 %v2120
        %2184 = vmatpush1.bf16.msra.mxu0 %v2119
        %2185 = vmatprep.subr.bf16.mxu0 %v2122
        %2186 = vmatpush1.bf16.msra.mxu0 %v2121
        %2187 = vmatprep.mubr.bf16.mxu0 %v1886
        %2188 = vmatmul.mubr.bf16.gmra.mrb[0].mxu0 %v1885
        %v2189 = vpop.f32.mrb[0].mxu0
        %v2190 = vadd.f32 %v1988, %v2189
        %v2191 = vpop.f32.mrb[0].mxu0
        %v2192 = vadd.f32 %v1992, %v2191
        %v2193 = vpop.f32.mrb[0].mxu0
        %v2194 = vadd.f32 %v1988, %v2193
        %v2195 = vpop.f32.mrb[0].mxu0
        %v2196 = vadd.f32 %v1992, %v2195
        %2197 = vmatprep.mubr.bf16.mxu0 %v1888
        %2198 = vmatmul.mubr.bf16.gmra.mrb[0].mxu0 %v1887
        %v2199 = vpop.f32.mrb[0].mxu0
        %v2200 = vadd.f32 %v1988, %v2199
        %v2201 = vpop.f32.mrb[0].mxu0
        %v2202 = vadd.f32 %v1992, %v2201
        %v2203 = vpop.f32.mrb[0].mxu0
        %v2204 = vadd.f32 %v1988, %v2203
        %v2205 = vpop.f32.mrb[0].mxu0
        %v2206 = vadd.f32 %v1992, %v2205
        %2207 = vmatprep.mubr.bf16.mxu0 %v1890
        %2208 = vmatmul.mubr.bf16.gmra.mrb[0].mxu0 %v1889
        %v2209 = vpop.f32.mrb[0].mxu0
        %v2210 = vadd.f32 %v1988, %v2209
        %v2211 = vpop.f32.mrb[0].mxu0
        %v2212 = vadd.f32 %v1992, %v2211
        %v2213 = vpop.f32.mrb[0].mxu0
        %v2214 = vadd.f32 %v1988, %v2213
        %v2215 = vpop.f32.mrb[0].mxu0
        %v2216 = vadd.f32 %v1992, %v2215
        %2217 = vmatprep.mubr.bf16.mxu0 %v1892
        %2218 = vmatmul.mubr.bf16.gmra.mrb[0].mxu0 %v1891
        %v2219 = vpop.f32.mrb[0].mxu0
        %v2220 = vadd.f32 %v1988, %v2219
        %v2221 = vpop.f32.mrb[0].mxu0
        %v2222 = vadd.f32 %v1992, %v2221
        %v2223 = vpop.f32.mrb[0].mxu0
        %v2224 = vadd.f32 %v1988, %v2223
        %v2225 = vpop.f32.mrb[0].mxu0
        %v2226 = vadd.f32 %v1992, %v2225
        %2227 = vmatprep.mubr.bf16.mxu0 %v1894
        %2228 = vmatmul.mubr.bf16.gmra.mrb[0].mxu0 %v1893
        %v2229 = vpop.f32.mrb[0].mxu0
        %v2230 = vadd.f32 %v1988, %v2229
        %v2231 = vpop.f32.mrb[0].mxu0
        %v2232 = vadd.f32 %v1992, %v2231
        %v2233 = vpop.f32.mrb[0].mxu0
        %v2234 = vadd.f32 %v1988, %v2233
        %v2235 = vpop.f32.mrb[0].mxu0
        %v2236 = vadd.f32 %v1992, %v2235
        %2237 = vmatprep.mubr.bf16.mxu0 %v1896
        %2238 = vmatmul.mubr.bf16.gmra.mrb[0].mxu0 %v1895
        %v2239 = vpop.f32.mrb[0].mxu0
        %v2240 = vadd.f32 %v1988, %v2239
        %v2241 = vpop.f32.mrb[0].mxu0
        %v2242 = vadd.f32 %v1992, %v2241
        %v2243 = vpop.f32.mrb[0].mxu0
        %v2244 = vadd.f32 %v1988, %v2243
        %v2245 = vpop.f32.mrb[0].mxu0
        %v2246 = vadd.f32 %v1992, %v2245
        %2247 = vmatprep.mubr.bf16.mxu0 %v1898
        %2248 = vmatmul.mubr.bf16.gmra.mrb[0].mxu0 %v1897
        %v2249 = vpop.f32.mrb[0].mxu0
        %v2250 = vadd.f32 %v1988, %v2249
        %v2251 = vpop.f32.mrb[0].mxu0
        %v2252 = vadd.f32 %v1992, %v2251
        %v2253 = vpop.f32.mrb[0].mxu0
        %v2254 = vadd.f32 %v1988, %v2253
        %v2255 = vpop.f32.mrb[0].mxu0
        %v2256 = vadd.f32 %v1992, %v2255
        %2257 = vmatprep.mubr.bf16.mxu0 %v1900
        %2258 = vmatmul.mubr.bf16.gmra.mrb[0].mxu0 %v1899
        %v2259 = vpop.f32.mrb[0].mxu0
        %v2260 = vadd.f32 %v1988, %v2259
        %v2261 = vpop.f32.mrb[0].mxu0
        %v2262 = vadd.f32 %v1992, %v2261
        %v2263 = vpop.f32.mrb[0].mxu0
        %v2264 = vadd.f32 %v1988, %v2263
        %v2265 = vpop.f32.mrb[0].mxu0
        %v2266 = vadd.f32 %v1992, %v2265
        %2267 = vmatprep.mubr.bf16.mxu0 %v1902
        %2268 = vmatmul.mubr.bf16.gmra.mrb[0].mxu0 %v1901
        %v2269 = vpop.f32.mrb[0].mxu0
        %v2270 = vadd.f32 %v1988, %v2269
        %v2271 = vpop.f32.mrb[0].mxu0
        %v2272 = vadd.f32 %v1992, %v2271
        %v2273 = vpop.f32.mrb[0].mxu0
        %v2274 = vadd.f32 %v1988, %v2273
        %v2275 = vpop.f32.mrb[0].mxu0
        %v2276 = vadd.f32 %v1992, %v2275
        %2277 = vmatprep.mubr.bf16.mxu0 %v1904
        %2278 = vmatmul.mubr.bf16.gmra.mrb[0].mxu0 %v1903
        %v2279 = vpop.f32.mrb[0].mxu0
        %v2280 = vadd.f32 %v1988, %v2279
        %v2281 = vpop.f32.mrb[0].mxu0
        %v2282 = vadd.f32 %v1992, %v2281
        %v2283 = vpop.f32.mrb[0].mxu0
        %v2284 = vadd.f32 %v1988, %v2283
        %v2285 = vpop.f32.mrb[0].mxu0
        %v2286 = vadd.f32 %v1992, %v2285
        %2287 = vmatprep.mubr.bf16.mxu0 %v1906
        %2288 = vmatmul.mubr.bf16.gmra.mrb[0].mxu0 %v1905
        %v2289 = vpop.f32.mrb[0].mxu0
        %v2290 = vadd.f32 %v1988, %v2289
        %v2291 = vpop.f32.mrb[0].mxu0
        %v2292 = vadd.f32 %v1992, %v2291
        %v2293 = vpop.f32.mrb[0].mxu0
        %v2294 = vadd.f32 %v1988, %v2293
        %v2295 = vpop.f32.mrb[0].mxu0
        %v2296 = vadd.f32 %v1992, %v2295
        %2297 = vmatprep.mubr.bf16.mxu0 %v1908
        %2298 = vmatmul.mubr.bf16.gmra.mrb[0].mxu0 %v1907
        %v2299 = vpop.f32.mrb[0].mxu0
        %v2300 = vadd.f32 %v1988, %v2299
        %v2301 = vpop.f32.mrb[0].mxu0
        %v2302 = vadd.f32 %v1992, %v2301
        %v2303 = vpop.f32.mrb[0].mxu0
        %v2304 = vadd.f32 %v1988, %v2303
        %v2305 = vpop.f32.mrb[0].mxu0
        %v2306 = vadd.f32 %v1992, %v2305
        %2307 = vmatprep.mubr.bf16.mxu0 %v1910
        %2308 = vmatmul.mubr.bf16.gmra.mrb[0].mxu0 %v1909
        %v2309 = vpop.f32.mrb[0].mxu0
        %v2310 = vadd.f32 %v1988, %v2309
        %v2311 = vpop.f32.mrb[0].mxu0
        %v2312 = vadd.f32 %v1992, %v2311
        %v2313 = vpop.f32.mrb[0].mxu0
        %v2314 = vadd.f32 %v1988, %v2313
        %v2315 = vpop.f32.mrb[0].mxu0
        %v2316 = vadd.f32 %v1992, %v2315
        %2317 = vmatprep.mubr.bf16.mxu0 %v1912
        %2318 = vmatmul.mubr.bf16.gmra.mrb[0].mxu0 %v1911
        %v2319 = vpop.f32.mrb[0].mxu0
        %v2320 = vadd.f32 %v1988, %v2319
        %v2321 = vpop.f32.mrb[0].mxu0
        %v2322 = vadd.f32 %v1992, %v2321
        %v2323 = vpop.f32.mrb[0].mxu0
        %v2324 = vadd.f32 %v1988, %v2323
        %v2325 = vpop.f32.mrb[0].mxu0
        %v2326 = vadd.f32 %v1992, %v2325
        %2327 = vmatprep.mubr.bf16.mxu0 %v1914
        %2328 = vmatmul.mubr.bf16.gmra.mrb[0].mxu0 %v1913
        %v2329 = vpop.f32.mrb[0].mxu0
        %v2330 = vadd.f32 %v1988, %v2329
        %v2331 = vpop.f32.mrb[0].mxu0
        %v2332 = vadd.f32 %v1992, %v2331
        %v2333 = vpop.f32.mrb[0].mxu0
        %v2334 = vadd.f32 %v1988, %v2333
        %v2335 = vpop.f32.mrb[0].mxu0
        %v2336 = vadd.f32 %v1992, %v2335
        %2337 = vmatprep.mubr.bf16.mxu0 %v1916
        %2338 = vmatmul.mubr.bf16.gmra.mrb[0].mxu0 %v1915
        %v2339 = vpop.f32.mrb[0].mxu0
        %v2340 = vadd.f32 %v1988, %v2339
        %v2341 = vpop.f32.mrb[0].mxu0
        %v2342 = vadd.f32 %v1992, %v2341
        %v2343 = vpop.f32.mrb[0].mxu0
        %v2344 = vadd.f32 %v1988, %v2343
        %v2345 = vpop.f32.mrb[0].mxu0
        %v2346 = vadd.f32 %v1992, %v2345
        %2347 = vmatprep.mubr.bf16.mxu0 %v1918
        %2348 = vmatmul.mubr.bf16.gmra.mrb[0].mxu0 %v1917
        %v2349 = vpop.f32.mrb[0].mxu0
        %v2350 = vadd.f32 %v1988, %v2349
        %v2351 = vpop.f32.mrb[0].mxu0
        %v2352 = vadd.f32 %v1992, %v2351
        %v2353 = vpop.f32.mrb[0].mxu0
        %v2354 = vadd.f32 %v1988, %v2353
        %v2355 = vpop.f32.mrb[0].mxu0
        %v2356 = vadd.f32 %v1992, %v2355
        %2357 = vmatprep.mubr.bf16.mxu0 %v1920
        %2358 = vmatmul.mubr.bf16.gmra.mrb[0].mxu0 %v1919
        %v2359 = vpop.f32.mrb[0].mxu0
        %v2360 = vadd.f32 %v1988, %v2359
        %v2361 = vpop.f32.mrb[0].mxu0
        %v2362 = vadd.f32 %v1992, %v2361
        %v2363 = vpop.f32.mrb[0].mxu0
        %v2364 = vadd.f32 %v1988, %v2363
        %v2365 = vpop.f32.mrb[0].mxu0
        %v2366 = vadd.f32 %v1992, %v2365
        %2367 = vmatprep.mubr.bf16.mxu0 %v1922
        %2368 = vmatmul.mubr.bf16.gmra.mrb[0].mxu0 %v1921
        %v2369 = vpop.f32.mrb[0].mxu0
        %v2370 = vadd.f32 %v1988, %v2369
        %v2371 = vpop.f32.mrb[0].mxu0
        %v2372 = vadd.f32 %v1992, %v2371
        %v2373 = vpop.f32.mrb[0].mxu0
        %v2374 = vadd.f32 %v1988, %v2373
        %v2375 = vpop.f32.mrb[0].mxu0
        %v2376 = vadd.f32 %v1992, %v2375
        %2377 = vmatprep.mubr.bf16.mxu0 %v1924
        %2378 = vmatmul.mubr.bf16.gmra.mrb[0].mxu0 %v1923
        %v2379 = vpop.f32.mrb[0].mxu0
        %v2380 = vadd.f32 %v1988, %v2379
        %v2381 = vpop.f32.mrb[0].mxu0
        %v2382 = vadd.f32 %v1992, %v2381
        %v2383 = vpop.f32.mrb[0].mxu0
        %v2384 = vadd.f32 %v1988, %v2383
        %v2385 = vpop.f32.mrb[0].mxu0
        %v2386 = vadd.f32 %v1992, %v2385
        %2387 = vmatprep.mubr.bf16.mxu0 %v1926
        %2388 = vmatmul.mubr.bf16.gmra.mrb[0].mxu0 %v1925
        %v2389 = vpop.f32.mrb[0].mxu0
        %v2390 = vadd.f32 %v1988, %v2389
        %v2391 = vpop.f32.mrb[0].mxu0
        %v2392 = vadd.f32 %v1992, %v2391
        %v2393 = vpop.f32.mrb[0].mxu0
        %v2394 = vadd.f32 %v1988, %v2393
        %v2395 = vpop.f32.mrb[0].mxu0
        %v2396 = vadd.f32 %v1992, %v2395
        %2397 = vmatprep.mubr.bf16.mxu0 %v1928
        %2398 = vmatmul.mubr.bf16.gmra.mrb[0].mxu0 %v1927
        %v2399 = vpop.f32.mrb[0].mxu0
        %v2400 = vadd.f32 %v1988, %v2399
        %v2401 = vpop.f32.mrb[0].mxu0
        %v2402 = vadd.f32 %v1992, %v2401
        %v2403 = vpop.f32.mrb[0].mxu0
        %v2404 = vadd.f32 %v1988, %v2403
        %v2405 = vpop.f32.mrb[0].mxu0
        %v2406 = vadd.f32 %v1992, %v2405
        %2407 = vmatprep.mubr.bf16.mxu0 %v1930
        %2408 = vmatmul.mubr.bf16.gmra.mrb[0].mxu0 %v1929
        %v2409 = vpop.f32.mrb[0].mxu0
        %v2410 = vadd.f32 %v1988, %v2409
        %v2411 = vpop.f32.mrb[0].mxu0
        %v2412 = vadd.f32 %v1992, %v2411
        %v2413 = vpop.f32.mrb[0].mxu0
        %v2414 = vadd.f32 %v1988, %v2413
        %v2415 = vpop.f32.mrb[0].mxu0
        %v2416 = vadd.f32 %v1992, %v2415
        %2417 = vmatprep.mubr.bf16.mxu0 %v1932
        %2418 = vmatmul.mubr.bf16.gmra.mrb[0].mxu0 %v1931
        %v2419 = vpop.f32.mrb[0].mxu0
        %v2420 = vadd.f32 %v1988, %v2419
        %v2421 = vpop.f32.mrb[0].mxu0
        %v2422 = vadd.f32 %v1992, %v2421
        %v2423 = vpop.f32.mrb[0].mxu0
        %v2424 = vadd.f32 %v1988, %v2423
        %v2425 = vpop.f32.mrb[0].mxu0
        %v2426 = vadd.f32 %v1992, %v2425
        %2427 = vmatprep.mubr.bf16.mxu0 %v1934
        %2428 = vmatmul.mubr.bf16.gmra.mrb[0].mxu0 %v1933
        %v2429 = vpop.f32.mrb[0].mxu0
        %v2430 = vadd.f32 %v1988, %v2429
        %v2431 = vpop.f32.mrb[0].mxu0
        %v2432 = vadd.f32 %v1992, %v2431
        %v2433 = vpop.f32.mrb[0].mxu0
        %v2434 = vadd.f32 %v1988, %v2433
        %v2435 = vpop.f32.mrb[0].mxu0
        %v2436 = vadd.f32 %v1992, %v2435
        %2437 = vmatprep.mubr.bf16.mxu0 %v1936
        %2438 = vmatmul.mubr.bf16.gmra.mrb[0].mxu0 %v1935
        %v2439 = vpop.f32.mrb[0].mxu0
        %v2440 = vadd.f32 %v1988, %v2439
        %v2441 = vpop.f32.mrb[0].mxu0
        %v2442 = vadd.f32 %v1992, %v2441
        %v2443 = vpop.f32.mrb[0].mxu0
        %v2444 = vadd.f32 %v1988, %v2443
        %v2445 = vpop.f32.mrb[0].mxu0
        %v2446 = vadd.f32 %v1992, %v2445
        %2447 = vmatprep.mubr.bf16.mxu0 %v1938
        %2448 = vmatmul.mubr.bf16.gmra.mrb[0].mxu0 %v1937
        %v2449 = vpop.f32.mrb[0].mxu0
        %v2450 = vadd.f32 %v1988, %v2449
        %v2451 = vpop.f32.mrb[0].mxu0
        %v2452 = vadd.f32 %v1992, %v2451
        %v2453 = vpop.f32.mrb[0].mxu0
        %v2454 = vadd.f32 %v1988, %v2453
        %v2455 = vpop.f32.mrb[0].mxu0
        %v2456 = vadd.f32 %v1992, %v2455
        %2457 = vmatprep.mubr.bf16.mxu0 %v1940
        %2458 = vmatmul.mubr.bf16.gmra.mrb[0].mxu0 %v1939
        %v2459 = vpop.f32.mrb[0].mxu0
        %v2460 = vadd.f32 %v1988, %v2459
        %v2461 = vpop.f32.mrb[0].mxu0
        %v2462 = vadd.f32 %v1992, %v2461
        %v2463 = vpop.f32.mrb[0].mxu0
        %v2464 = vadd.f32 %v1988, %v2463
        %v2465 = vpop.f32.mrb[0].mxu0
        %v2466 = vadd.f32 %v1992, %v2465
        %2467 = vmatprep.mubr.bf16.mxu0 %v1942
        %2468 = vmatmul.mubr.bf16.gmra.mrb[0].mxu0 %v1941
        %v2469 = vpop.f32.mrb[0].mxu0
        %v2470 = vadd.f32 %v1988, %v2469
        %v2471 = vpop.f32.mrb[0].mxu0
        %v2472 = vadd.f32 %v1992, %v2471
        %v2473 = vpop.f32.mrb[0].mxu0
        %v2474 = vadd.f32 %v1988, %v2473
        %v2475 = vpop.f32.mrb[0].mxu0
        %v2476 = vadd.f32 %v1992, %v2475
        %2477 = vmatprep.mubr.bf16.mxu0 %v1944
        %2478 = vmatmul.mubr.bf16.gmra.mrb[0].mxu0 %v1943
        %v2479 = vpop.f32.mrb[0].mxu0
        %v2480 = vadd.f32 %v1988, %v2479
        %v2481 = vpop.f32.mrb[0].mxu0
        %v2482 = vadd.f32 %v1992, %v2481
        %v2483 = vpop.f32.mrb[0].mxu0
        %v2484 = vadd.f32 %v1988, %v2483
        %v2485 = vpop.f32.mrb[0].mxu0
        %v2486 = vadd.f32 %v1992, %v2485
        %2487 = vmatprep.mubr.bf16.mxu0 %v1946
        %2488 = vmatmul.mubr.bf16.gmra.mrb[0].mxu0 %v1945
        %v2489 = vpop.f32.mrb[0].mxu0
        %v2490 = vadd.f32 %v1988, %v2489
        %v2491 = vpop.f32.mrb[0].mxu0
        %v2492 = vadd.f32 %v1992, %v2491
        %v2493 = vpop.f32.mrb[0].mxu0
        %v2494 = vadd.f32 %v1988, %v2493
        %v2495 = vpop.f32.mrb[0].mxu0
        %v2496 = vadd.f32 %v1992, %v2495
        %2497 = vmatprep.mubr.bf16.mxu0 %v1948
        %2498 = vmatmul.mubr.bf16.gmra.mrb[0].mxu0 %v1947
        %v2499 = vpop.f32.mrb[0].mxu0
        %v2500 = vadd.f32 %v1988, %v2499
        %v2501 = vpop.f32.mrb[0].mxu0
        %v2502 = vadd.f32 %v1992, %v2501
        %v2503 = vpop.f32.mrb[0].mxu0
        %v2504 = vadd.f32 %v1988, %v2503
        %v2505 = vpop.f32.mrb[0].mxu0
        %v2506 = vadd.f32 %v1992, %v2505
        %2507 = vdwg.mxu0
        %v2508 = vmax.f32 %v2190, 0.0
        %v2509 = vmax.f32 %v2192, 0.0
        %v2510 = vmax.f32 %v2194, 0.0
        %v2511 = vmax.f32 %v2196, 0.0
        %v2512 = vmax.f32 %v2200, 0.0
        %v2513 = vmax.f32 %v2202, 0.0
        %v2514 = vmax.f32 %v2204, 0.0
        %v2515 = vmax.f32 %v2206, 0.0
        %v2516 = vmax.f32 %v2210, 0.0
        %v2517 = vmax.f32 %v2212, 0.0
        %v2518 = vmax.f32 %v2214, 0.0
        %v2519 = vmax.f32 %v2216, 0.0
        %v2520 = vmax.f32 %v2220, 0.0
        %v2521 = vmax.f32 %v2222, 0.0
        %v2522 = vmax.f32 %v2224, 0.0
        %v2523 = vmax.f32 %v2226, 0.0
        %v2524 = vmax.f32 %v2230, 0.0
        %v2525 = vmax.f32 %v2232, 0.0
        %v2526 = vmax.f32 %v2234, 0.0
        %v2527 = vmax.f32 %v2236, 0.0
        %v2528 = vmax.f32 %v2240, 0.0
        %v2529 = vmax.f32 %v2242, 0.0
        %v2530 = vmax.f32 %v2244, 0.0
        %v2531 = vmax.f32 %v2246, 0.0
        %v2532 = vmax.f32 %v2250, 0.0
        %v2533 = vmax.f32 %v2252, 0.0
        %v2534 = vmax.f32 %v2254, 0.0
        %v2535 = vmax.f32 %v2256, 0.0
        %v2536 = vmax.f32 %v2260, 0.0
        %v2537 = vmax.f32 %v2262, 0.0
        %v2538 = vmax.f32 %v2264, 0.0
        %v2539 = vmax.f32 %v2266, 0.0
        %v2540 = vmax.f32 %v2270, 0.0
        %v2541 = vmax.f32 %v2272, 0.0
        %v2542 = vmax.f32 %v2274, 0.0
        %v2543 = vmax.f32 %v2276, 0.0
        %v2544 = vmax.f32 %v2280, 0.0
        %v2545 = vmax.f32 %v2282, 0.0
        %v2546 = vmax.f32 %v2284, 0.0
        %v2547 = vmax.f32 %v2286, 0.0
        %v2548 = vmax.f32 %v2290, 0.0
        %v2549 = vmax.f32 %v2292, 0.0
        %v2550 = vmax.f32 %v2294, 0.0
        %v2551 = vmax.f32 %v2296, 0.0
        %v2552 = vmax.f32 %v2300, 0.0
        %v2553 = vmax.f32 %v2302, 0.0
        %v2554 = vmax.f32 %v2304, 0.0
        %v2555 = vmax.f32 %v2306, 0.0
        %v2556 = vmax.f32 %v2310, 0.0
        %v2557 = vmax.f32 %v2312, 0.0
        %v2558 = vmax.f32 %v2314, 0.0
        %v2559 = vmax.f32 %v2316, 0.0
        %v2560 = vmax.f32 %v2320, 0.0
        %v2561 = vmax.f32 %v2322, 0.0
        %v2562 = vmax.f32 %v2324, 0.0
        %v2563 = vmax.f32 %v2326, 0.0
        %v2564 = vmax.f32 %v2330, 0.0
        %v2565 = vmax.f32 %v2332, 0.0
        %v2566 = vmax.f32 %v2334, 0.0
        %v2567 = vmax.f32 %v2336, 0.0
        %v2568 = vmax.f32 %v2340, 0.0
        %v2569 = vmax.f32 %v2342, 0.0
        %v2570 = vmax.f32 %v2344, 0.0
        %v2571 = vmax.f32 %v2346, 0.0
        %v2572 = vmax.f32 %v2350, 0.0
        %v2573 = vmax.f32 %v2352, 0.0
        %v2574 = vmax.f32 %v2354, 0.0
        %v2575 = vmax.f32 %v2356, 0.0
        %v2576 = vmax.f32 %v2360, 0.0
        %v2577 = vmax.f32 %v2362, 0.0
        %v2578 = vmax.f32 %v2364, 0.0
        %v2579 = vmax.f32 %v2366, 0.0
        %v2580 = vmax.f32 %v2370, 0.0
        %v2581 = vmax.f32 %v2372, 0.0
        %v2582 = vmax.f32 %v2374, 0.0
        %v2583 = vmax.f32 %v2376, 0.0
        %v2584 = vmax.f32 %v2380, 0.0
        %v2585 = vmax.f32 %v2382, 0.0
        %v2586 = vmax.f32 %v2384, 0.0
        %v2587 = vmax.f32 %v2386, 0.0
        %v2588 = vmax.f32 %v2390, 0.0
        %v2589 = vmax.f32 %v2392, 0.0
        %v2590 = vmax.f32 %v2394, 0.0
        %v2591 = vmax.f32 %v2396, 0.0
        %v2592 = vmax.f32 %v2400, 0.0
        %v2593 = vmax.f32 %v2402, 0.0
        %v2594 = vmax.f32 %v2404, 0.0
        %v2595 = vmax.f32 %v2406, 0.0
        %v2596 = vmax.f32 %v2410, 0.0
        %v2597 = vmax.f32 %v2412, 0.0
        %v2598 = vmax.f32 %v2414, 0.0
        %v2599 = vmax.f32 %v2416, 0.0
        %v2600 = vmax.f32 %v2420, 0.0
        %v2601 = vmax.f32 %v2422, 0.0
        %v2602 = vmax.f32 %v2424, 0.0
        %v2603 = vmax.f32 %v2426, 0.0
        %v2604 = vmax.f32 %v2430, 0.0
        %v2605 = vmax.f32 %v2432, 0.0
        %v2606 = vmax.f32 %v2434, 0.0
        %v2607 = vmax.f32 %v2436, 0.0
        %v2608 = vmax.f32 %v2440, 0.0
        %v2609 = vmax.f32 %v2442, 0.0
        %v2610 = vmax.f32 %v2444, 0.0
        %v2611 = vmax.f32 %v2446, 0.0
        %v2612 = vmax.f32 %v2450, 0.0
        %v2613 = vmax.f32 %v2452, 0.0
        %v2614 = vmax.f32 %v2454, 0.0
        %v2615 = vmax.f32 %v2456, 0.0
        %v2616 = vmax.f32 %v2460, 0.0
        %v2617 = vmax.f32 %v2462, 0.0
        %v2618 = vmax.f32 %v2464, 0.0
        %v2619 = vmax.f32 %v2466, 0.0
        %v2620 = vmax.f32 %v2470, 0.0
        %v2621 = vmax.f32 %v2472, 0.0
        %v2622 = vmax.f32 %v2474, 0.0
        %v2623 = vmax.f32 %v2476, 0.0
        %v2624 = vmax.f32 %v2480, 0.0
        %v2625 = vmax.f32 %v2482, 0.0
        %v2626 = vmax.f32 %v2484, 0.0
        %v2627 = vmax.f32 %v2486, 0.0
        %v2628 = vmax.f32 %v2490, 0.0
        %v2629 = vmax.f32 %v2492, 0.0
        %v2630 = vmax.f32 %v2494, 0.0
        %v2631 = vmax.f32 %v2496, 0.0
        %v2632 = vmax.f32 %v2500, 0.0
        %v2633 = vmax.f32 %v2502, 0.0
        %v2634 = vmax.f32 %v2504, 0.0
        %v2635 = vmax.f32 %v2506, 0.0
        %v2636 = vpack.c.bf16 %v2510, %v2508
        %v2637 = vpack.c.bf16 %v2511, %v2509
        %v2638 = vpack.c.bf16 %v2514, %v2512
        %v2639 = vpack.c.bf16 %v2515, %v2513
        %v2640 = vpack.c.bf16 %v2518, %v2516
        %v2641 = vpack.c.bf16 %v2519, %v2517
        %v2642 = vpack.c.bf16 %v2522, %v2520
        %v2643 = vpack.c.bf16 %v2523, %v2521
        %v2644 = vpack.c.bf16 %v2526, %v2524
        %v2645 = vpack.c.bf16 %v2527, %v2525
        %v2646 = vpack.c.bf16 %v2530, %v2528
        %v2647 = vpack.c.bf16 %v2531, %v2529
        %v2648 = vpack.c.bf16 %v2534, %v2532
        %v2649 = vpack.c.bf16 %v2535, %v2533
        %v2650 = vpack.c.bf16 %v2538, %v2536
        %v2651 = vpack.c.bf16 %v2539, %v2537
        %v2652 = vpack.c.bf16 %v2542, %v2540
        %v2653 = vpack.c.bf16 %v2543, %v2541
        %v2654 = vpack.c.bf16 %v2546, %v2544
        %v2655 = vpack.c.bf16 %v2547, %v2545
        %v2656 = vpack.c.bf16 %v2550, %v2548
        %v2657 = vpack.c.bf16 %v2551, %v2549
        %v2658 = vpack.c.bf16 %v2554, %v2552
        %v2659 = vpack.c.bf16 %v2555, %v2553
        %v2660 = vpack.c.bf16 %v2558, %v2556
        %v2661 = vpack.c.bf16 %v2559, %v2557
        %v2662 = vpack.c.bf16 %v2562, %v2560
        %v2663 = vpack.c.bf16 %v2563, %v2561
        %v2664 = vpack.c.bf16 %v2566, %v2564
        %v2665 = vpack.c.bf16 %v2567, %v2565
        %v2666 = vpack.c.bf16 %v2570, %v2568
        %v2667 = vpack.c.bf16 %v2571, %v2569
        %v2668 = vpack.c.bf16 %v2574, %v2572
        %v2669 = vpack.c.bf16 %v2575, %v2573
        %v2670 = vpack.c.bf16 %v2578, %v2576
        %v2671 = vpack.c.bf16 %v2579, %v2577
        %v2672 = vpack.c.bf16 %v2582, %v2580
        %v2673 = vpack.c.bf16 %v2583, %v2581
        %v2674 = vpack.c.bf16 %v2586, %v2584
        %v2675 = vpack.c.bf16 %v2587, %v2585
        %v2676 = vpack.c.bf16 %v2590, %v2588
        %v2677 = vpack.c.bf16 %v2591, %v2589
        %v2678 = vpack.c.bf16 %v2594, %v2592
        %v2679 = vpack.c.bf16 %v2595, %v2593
        %v2680 = vpack.c.bf16 %v2598, %v2596
        %v2681 = vpack.c.bf16 %v2599, %v2597
        %v2682 = vpack.c.bf16 %v2602, %v2600
        %v2683 = vpack.c.bf16 %v2603, %v2601
        %v2684 = vpack.c.bf16 %v2606, %v2604
        %v2685 = vpack.c.bf16 %v2607, %v2605
        %v2686 = vpack.c.bf16 %v2610, %v2608
        %v2687 = vpack.c.bf16 %v2611, %v2609
        %v2688 = vpack.c.bf16 %v2614, %v2612
        %v2689 = vpack.c.bf16 %v2615, %v2613
        %v2690 = vpack.c.bf16 %v2618, %v2616
        %v2691 = vpack.c.bf16 %v2619, %v2617
        %v2692 = vpack.c.bf16 %v2622, %v2620
        %v2693 = vpack.c.bf16 %v2623, %v2621
        %v2694 = vpack.c.bf16 %v2626, %v2624
        %v2695 = vpack.c.bf16 %v2627, %v2625
        %v2696 = vpack.c.bf16 %v2630, %v2628
        %v2697 = vpack.c.bf16 %v2631, %v2629
        %v2698 = vpack.c.bf16 %v2634, %v2632
        %v2699 = vpack.c.bf16 %v2635, %v2633
        %s2700 = scalar_lea.vmem [#allocation2], 512
        %v2701 = vld [vmem:[%s2700] sm:$0xff]
        %v2702 = vld [vmem:[%s2700 + $0x8] sm:$0xff]
        %v2703 = vld [vmem:[%s2700 + $0x10] sm:$0xff]
        %v2704 = vld [vmem:[%s2700 + $0x18] sm:$0xff]
        %v2705 = vld [vmem:[%s2700 + $0x20] sm:$0xff]
        %v2706 = vld [vmem:[%s2700 + $0x28] sm:$0xff]
        %v2707 = vld [vmem:[%s2700 + $0x30] sm:$0xff]
        %v2708 = vld [vmem:[%s2700 + $0x38] sm:$0xff]
        %v2709 = vld [vmem:[%s2700 + $0x40] sm:$0xff]
        %v2710 = vld [vmem:[%s2700 + $0x48] sm:$0xff]
        %v2711 = vld [vmem:[%s2700 + $0x50] sm:$0xff]
        %v2712 = vld [vmem:[%s2700 + $0x58] sm:$0xff]
        %v2713 = vld [vmem:[%s2700 + $0x60] sm:$0xff]
        %v2714 = vld [vmem:[%s2700 + $0x68] sm:$0xff]
        %v2715 = vld [vmem:[%s2700 + $0x70] sm:$0xff]
        %v2716 = vld [vmem:[%s2700 + $0x78] sm:$0xff]
        %v2717 = vld [vmem:[%s2700 + $0x80] sm:$0xff]
        %v2718 = vld [vmem:[%s2700 + $0x88] sm:$0xff]
        %v2719 = vld [vmem:[%s2700 + $0x90] sm:$0xff]
        %v2720 = vld [vmem:[%s2700 + $0x98] sm:$0xff]
        %v2721 = vld [vmem:[%s2700 + $0xa0] sm:$0xff]
        %v2722 = vld [vmem:[%s2700 + $0xa8] sm:$0xff]
        %v2723 = vld [vmem:[%s2700 + $0xb0] sm:$0xff]
        %v2724 = vld [vmem:[%s2700 + $0xb8] sm:$0xff]
        %v2725 = vld [vmem:[%s2700 + $0xc0] sm:$0xff]
        %v2726 = vld [vmem:[%s2700 + $0xc8] sm:$0xff]
        %v2727 = vld [vmem:[%s2700 + $0xd0] sm:$0xff]
        %v2728 = vld [vmem:[%s2700 + $0xd8] sm:$0xff]
        %v2729 = vld [vmem:[%s2700 + $0xe0] sm:$0xff]
        %v2730 = vld [vmem:[%s2700 + $0xe8] sm:$0xff]
        %v2731 = vld [vmem:[%s2700 + $0xf0] sm:$0xff]
        %v2732 = vld [vmem:[%s2700 + $0xf8] sm:$0xff]
        %s2733 = scalar_lea.vmem %s3, 3
        %v2734 = vld [vmem:[%s2733] ss:$8 sm:$0x3]
        %v2736 = vlaneseq
        %v2737 = vshrl.u32 %v2736, 7
        %v2738 = vsub.s32 0, %v2737
        %v2739 = vrot.slane %v2734, %v2738
        %v2740 = vlaneseq
        %v2741 = vshrl.u32 %v2740, 7
        %v2742 = vsub.s32 1, %v2741
        %v2743 = vrot.slane %v2734, %v2742
        %v2778 = vunpack.c.l.b16 %v2701
        %v2779 = vunpack.c.h.b16 %v2701
        %v2780 = vunpack.c.l.b16 %v2702
        %v2781 = vunpack.c.h.b16 %v2702
        %v2782 = vunpack.c.l.b16 %v2703
        %v2783 = vunpack.c.h.b16 %v2703
        %v2784 = vunpack.c.l.b16 %v2704
        %v2785 = vunpack.c.h.b16 %v2704
        %v2786 = vunpack.c.l.b16 %v2705
        %v2787 = vunpack.c.h.b16 %v2705
        %v2788 = vunpack.c.l.b16 %v2706
        %v2789 = vunpack.c.h.b16 %v2706
        %v2790 = vunpack.c.l.b16 %v2707
        %v2791 = vunpack.c.h.b16 %v2707
        %v2792 = vunpack.c.l.b16 %v2708
        %v2793 = vunpack.c.h.b16 %v2708
        %v2794 = vunpack.c.l.b16 %v2709
        %v2795 = vunpack.c.h.b16 %v2709
        %v2796 = vunpack.c.l.b16 %v2710
        %v2797 = vunpack.c.h.b16 %v2710
        %v2798 = vunpack.c.l.b16 %v2711
        %v2799 = vunpack.c.h.b16 %v2711
        %v2800 = vunpack.c.l.b16 %v2712
        %v2801 = vunpack.c.h.b16 %v2712
        %v2802 = vunpack.c.l.b16 %v2713
        %v2803 = vunpack.c.h.b16 %v2713
        %v2804 = vunpack.c.l.b16 %v2714
        %v2805 = vunpack.c.h.b16 %v2714
        %v2806 = vunpack.c.l.b16 %v2715
        %v2807 = vunpack.c.h.b16 %v2715
        %v2808 = vunpack.c.l.b16 %v2716
        %v2809 = vunpack.c.h.b16 %v2716
        %v2810 = vunpack.c.l.b16 %v2717
        %v2811 = vunpack.c.h.b16 %v2717
        %v2812 = vunpack.c.l.b16 %v2718
        %v2813 = vunpack.c.h.b16 %v2718
        %v2814 = vunpack.c.l.b16 %v2719
        %v2815 = vunpack.c.h.b16 %v2719
        %v2816 = vunpack.c.l.b16 %v2720
        %v2817 = vunpack.c.h.b16 %v2720
        %v2818 = vunpack.c.l.b16 %v2721
        %v2819 = vunpack.c.h.b16 %v2721
        %v2820 = vunpack.c.l.b16 %v2722
        %v2821 = vunpack.c.h.b16 %v2722
        %v2822 = vunpack.c.l.b16 %v2723
        %v2823 = vunpack.c.h.b16 %v2723
        %v2824 = vunpack.c.l.b16 %v2724
        %v2825 = vunpack.c.h.b16 %v2724
        %v2826 = vunpack.c.l.b16 %v2725
        %v2827 = vunpack.c.h.b16 %v2725
        %v2828 = vunpack.c.l.b16 %v2726
        %v2829 = vunpack.c.h.b16 %v2726
        %v2830 = vunpack.c.l.b16 %v2727
        %v2831 = vunpack.c.h.b16 %v2727
        %v2832 = vunpack.c.l.b16 %v2728
        %v2833 = vunpack.c.h.b16 %v2728
        %v2834 = vunpack.c.l.b16 %v2729
        %v2835 = vunpack.c.h.b16 %v2729
        %v2836 = vunpack.c.l.b16 %v2730
        %v2837 = vunpack.c.h.b16 %v2730
        %v2838 = vunpack.c.l.b16 %v2731
        %v2839 = vunpack.c.h.b16 %v2731
        %v2840 = vunpack.c.l.b16 %v2732
        %v2841 = vunpack.c.h.b16 %v2732
        %v2842 = vpack.c.b16 %v2780, %v2778
        %v2843 = vpack.c.b16 %v2781, %v2779
        %v2844 = vpack.c.b16 %v2784, %v2782
        %v2845 = vpack.c.b16 %v2785, %v2783
        %v2846 = vpack.c.b16 %v2788, %v2786
        %v2847 = vpack.c.b16 %v2789, %v2787
        %v2848 = vpack.c.b16 %v2792, %v2790
        %v2849 = vpack.c.b16 %v2793, %v2791
        %v2850 = vpack.c.b16 %v2796, %v2794
        %v2851 = vpack.c.b16 %v2797, %v2795
        %v2852 = vpack.c.b16 %v2800, %v2798
        %v2853 = vpack.c.b16 %v2801, %v2799
        %v2854 = vpack.c.b16 %v2804, %v2802
        %v2855 = vpack.c.b16 %v2805, %v2803
        %v2856 = vpack.c.b16 %v2808, %v2806
        %v2857 = vpack.c.b16 %v2809, %v2807
        %v2858 = vpack.c.b16 %v2812, %v2810
        %v2859 = vpack.c.b16 %v2813, %v2811
        %v2860 = vpack.c.b16 %v2816, %v2814
        %v2861 = vpack.c.b16 %v2817, %v2815
        %v2862 = vpack.c.b16 %v2820, %v2818
        %v2863 = vpack.c.b16 %v2821, %v2819
        %v2864 = vpack.c.b16 %v2824, %v2822
        %v2865 = vpack.c.b16 %v2825, %v2823
        %v2866 = vpack.c.b16 %v2828, %v2826
        %v2867 = vpack.c.b16 %v2829, %v2827
        %v2868 = vpack.c.b16 %v2832, %v2830
        %v2869 = vpack.c.b16 %v2833, %v2831
        %v2870 = vpack.c.b16 %v2836, %v2834
        %v2871 = vpack.c.b16 %v2837, %v2835
        %v2872 = vpack.c.b16 %v2840, %v2838
        %v2873 = vpack.c.b16 %v2841, %v2839
        %2906 = vmatprep.subr.bf16.mxu0 %v2843
        %2907 = vmatpush1.bf16.msra.mxu0 %v2842
        %2908 = vmatprep.subr.bf16.mxu0 %v2845
        %2909 = vmatpush1.bf16.msra.mxu0 %v2844
        %2910 = vmatprep.subr.bf16.mxu0 %v2847
        %2911 = vmatpush1.bf16.msra.mxu0 %v2846
        %2912 = vmatprep.subr.bf16.mxu0 %v2849
        %2913 = vmatpush1.bf16.msra.mxu0 %v2848
        %2914 = vmatprep.subr.bf16.mxu0 %v2851
        %2915 = vmatpush1.bf16.msra.mxu0 %v2850
        %2916 = vmatprep.subr.bf16.mxu0 %v2853
        %2917 = vmatpush1.bf16.msra.mxu0 %v2852
        %2918 = vmatprep.subr.bf16.mxu0 %v2855
        %2919 = vmatpush1.bf16.msra.mxu0 %v2854
        %2920 = vmatprep.subr.bf16.mxu0 %v2857
        %2921 = vmatpush1.bf16.msra.mxu0 %v2856
        %2922 = vmatprep.subr.bf16.mxu0 %v2859
        %2923 = vmatpush1.bf16.msra.mxu0 %v2858
        %2924 = vmatprep.subr.bf16.mxu0 %v2861
        %2925 = vmatpush1.bf16.msra.mxu0 %v2860
        %2926 = vmatprep.subr.bf16.mxu0 %v2863
        %2927 = vmatpush1.bf16.msra.mxu0 %v2862
        %2928 = vmatprep.subr.bf16.mxu0 %v2865
        %2929 = vmatpush1.bf16.msra.mxu0 %v2864
        %2930 = vmatprep.subr.bf16.mxu0 %v2867
        %2931 = vmatpush1.bf16.msra.mxu0 %v2866
        %2932 = vmatprep.subr.bf16.mxu0 %v2869
        %2933 = vmatpush1.bf16.msra.mxu0 %v2868
        %2934 = vmatprep.subr.bf16.mxu0 %v2871
        %2935 = vmatpush1.bf16.msra.mxu0 %v2870
        %2936 = vmatprep.subr.bf16.mxu0 %v2873
        %2937 = vmatpush1.bf16.msra.mxu0 %v2872
        %2938 = vmatprep.mubr.bf16.mxu0 %v2637
        %2939 = vmatmul.mubr.bf16.gmra.mrb[0].mxu0 %v2636
        %v2940 = vpop.f32.mrb[0].mxu0
        %v2941 = vadd.f32 %v2739, %v2940
        %v2942 = vpop.f32.mrb[0].mxu0
        %v2943 = vadd.f32 %v2743, %v2942
        %v2944 = vpop.f32.mrb[0].mxu0
        %v2945 = vadd.f32 %v2739, %v2944
        %v2946 = vpop.f32.mrb[0].mxu0
        %v2947 = vadd.f32 %v2743, %v2946
        %2948 = vmatprep.mubr.bf16.mxu0 %v2639
        %2949 = vmatmul.mubr.bf16.gmra.mrb[0].mxu0 %v2638
        %v2950 = vpop.f32.mrb[0].mxu0
        %v2951 = vadd.f32 %v2739, %v2950
        %v2952 = vpop.f32.mrb[0].mxu0
        %v2953 = vadd.f32 %v2743, %v2952
        %v2954 = vpop.f32.mrb[0].mxu0
        %v2955 = vadd.f32 %v2739, %v2954
        %v2956 = vpop.f32.mrb[0].mxu0
        %v2957 = vadd.f32 %v2743, %v2956
        %2958 = vmatprep.mubr.bf16.mxu0 %v2641
        %2959 = vmatmul.mubr.bf16.gmra.mrb[0].mxu0 %v2640
        %v2960 = vpop.f32.mrb[0].mxu0
        %v2961 = vadd.f32 %v2739, %v2960
        %v2962 = vpop.f32.mrb[0].mxu0
        %v2963 = vadd.f32 %v2743, %v2962
        %v2964 = vpop.f32.mrb[0].mxu0
        %v2965 = vadd.f32 %v2739, %v2964
        %v2966 = vpop.f32.mrb[0].mxu0
        %v2967 = vadd.f32 %v2743, %v2966
        %2968 = vmatprep.mubr.bf16.mxu0 %v2643
        %2969 = vmatmul.mubr.bf16.gmra.mrb[0].mxu0 %v2642
        %v2970 = vpop.f32.mrb[0].mxu0
        %v2971 = vadd.f32 %v2739, %v2970
        %v2972 = vpop.f32.mrb[0].mxu0
        %v2973 = vadd.f32 %v2743, %v2972
        %v2974 = vpop.f32.mrb[0].mxu0
        %v2975 = vadd.f32 %v2739, %v2974
        %v2976 = vpop.f32.mrb[0].mxu0
        %v2977 = vadd.f32 %v2743, %v2976
        %2978 = vmatprep.mubr.bf16.mxu0 %v2645
        %2979 = vmatmul.mubr.bf16.gmra.mrb[0].mxu0 %v2644
        %v2980 = vpop.f32.mrb[0].mxu0
        %v2981 = vadd.f32 %v2739, %v2980
        %v2982 = vpop.f32.mrb[0].mxu0
        %v2983 = vadd.f32 %v2743, %v2982
        %v2984 = vpop.f32.mrb[0].mxu0
        %v2985 = vadd.f32 %v2739, %v2984
        %v2986 = vpop.f32.mrb[0].mxu0
        %v2987 = vadd.f32 %v2743, %v2986
        %2988 = vmatprep.mubr.bf16.mxu0 %v2647
        %2989 = vmatmul.mubr.bf16.gmra.mrb[0].mxu0 %v2646
        %v2990 = vpop.f32.mrb[0].mxu0
        %v2991 = vadd.f32 %v2739, %v2990
        %v2992 = vpop.f32.mrb[0].mxu0
        %v2993 = vadd.f32 %v2743, %v2992
        %v2994 = vpop.f32.mrb[0].mxu0
        %v2995 = vadd.f32 %v2739, %v2994
        %v2996 = vpop.f32.mrb[0].mxu0
        %v2997 = vadd.f32 %v2743, %v2996
        %2998 = vmatprep.mubr.bf16.mxu0 %v2649
        %2999 = vmatmul.mubr.bf16.gmra.mrb[0].mxu0 %v2648
        %v3000 = vpop.f32.mrb[0].mxu0
        %v3001 = vadd.f32 %v2739, %v3000
        %v3002 = vpop.f32.mrb[0].mxu0
        %v3003 = vadd.f32 %v2743, %v3002
        %v3004 = vpop.f32.mrb[0].mxu0
        %v3005 = vadd.f32 %v2739, %v3004
        %v3006 = vpop.f32.mrb[0].mxu0
        %v3007 = vadd.f32 %v2743, %v3006
        %3008 = vmatprep.mubr.bf16.mxu0 %v2651
        %3009 = vmatmul.mubr.bf16.gmra.mrb[0].mxu0 %v2650
        %v3010 = vpop.f32.mrb[0].mxu0
        %v3011 = vadd.f32 %v2739, %v3010
        %v3012 = vpop.f32.mrb[0].mxu0
        %v3013 = vadd.f32 %v2743, %v3012
        %v3014 = vpop.f32.mrb[0].mxu0
        %v3015 = vadd.f32 %v2739, %v3014
        %v3016 = vpop.f32.mrb[0].mxu0
        %v3017 = vadd.f32 %v2743, %v3016
        %3018 = vmatprep.mubr.bf16.mxu0 %v2653
        %3019 = vmatmul.mubr.bf16.gmra.mrb[0].mxu0 %v2652
        %v3020 = vpop.f32.mrb[0].mxu0
        %v3021 = vadd.f32 %v2739, %v3020
        %v3022 = vpop.f32.mrb[0].mxu0
        %v3023 = vadd.f32 %v2743, %v3022
        %v3024 = vpop.f32.mrb[0].mxu0
        %v3025 = vadd.f32 %v2739, %v3024
        %v3026 = vpop.f32.mrb[0].mxu0
        %v3027 = vadd.f32 %v2743, %v3026
        %3028 = vmatprep.mubr.bf16.mxu0 %v2655
        %3029 = vmatmul.mubr.bf16.gmra.mrb[0].mxu0 %v2654
        %v3030 = vpop.f32.mrb[0].mxu0
        %v3031 = vadd.f32 %v2739, %v3030
        %v3032 = vpop.f32.mrb[0].mxu0
        %v3033 = vadd.f32 %v2743, %v3032
        %v3034 = vpop.f32.mrb[0].mxu0
        %v3035 = vadd.f32 %v2739, %v3034
        %v3036 = vpop.f32.mrb[0].mxu0
        %v3037 = vadd.f32 %v2743, %v3036
        %3038 = vmatprep.mubr.bf16.mxu0 %v2657
        %3039 = vmatmul.mubr.bf16.gmra.mrb[0].mxu0 %v2656
        %v3040 = vpop.f32.mrb[0].mxu0
        %v3041 = vadd.f32 %v2739, %v3040
        %v3042 = vpop.f32.mrb[0].mxu0
        %v3043 = vadd.f32 %v2743, %v3042
        %v3044 = vpop.f32.mrb[0].mxu0
        %v3045 = vadd.f32 %v2739, %v3044
        %v3046 = vpop.f32.mrb[0].mxu0
        %v3047 = vadd.f32 %v2743, %v3046
        %3048 = vmatprep.mubr.bf16.mxu0 %v2659
        %3049 = vmatmul.mubr.bf16.gmra.mrb[0].mxu0 %v2658
        %v3050 = vpop.f32.mrb[0].mxu0
        %v3051 = vadd.f32 %v2739, %v3050
        %v3052 = vpop.f32.mrb[0].mxu0
        %v3053 = vadd.f32 %v2743, %v3052
        %v3054 = vpop.f32.mrb[0].mxu0
        %v3055 = vadd.f32 %v2739, %v3054
        %v3056 = vpop.f32.mrb[0].mxu0
        %v3057 = vadd.f32 %v2743, %v3056
        %3058 = vmatprep.mubr.bf16.mxu0 %v2661
        %3059 = vmatmul.mubr.bf16.gmra.mrb[0].mxu0 %v2660
        %v3060 = vpop.f32.mrb[0].mxu0
        %v3061 = vadd.f32 %v2739, %v3060
        %v3062 = vpop.f32.mrb[0].mxu0
        %v3063 = vadd.f32 %v2743, %v3062
        %v3064 = vpop.f32.mrb[0].mxu0
        %v3065 = vadd.f32 %v2739, %v3064
        %v3066 = vpop.f32.mrb[0].mxu0
        %v3067 = vadd.f32 %v2743, %v3066
        %3068 = vmatprep.mubr.bf16.mxu0 %v2663
        %3069 = vmatmul.mubr.bf16.gmra.mrb[0].mxu0 %v2662
        %v3070 = vpop.f32.mrb[0].mxu0
        %v3071 = vadd.f32 %v2739, %v3070
        %v3072 = vpop.f32.mrb[0].mxu0
        %v3073 = vadd.f32 %v2743, %v3072
        %v3074 = vpop.f32.mrb[0].mxu0
        %v3075 = vadd.f32 %v2739, %v3074
        %v3076 = vpop.f32.mrb[0].mxu0
        %v3077 = vadd.f32 %v2743, %v3076
        %3078 = vmatprep.mubr.bf16.mxu0 %v2665
        %3079 = vmatmul.mubr.bf16.gmra.mrb[0].mxu0 %v2664
        %v3080 = vpop.f32.mrb[0].mxu0
        %v3081 = vadd.f32 %v2739, %v3080
        %v3082 = vpop.f32.mrb[0].mxu0
        %v3083 = vadd.f32 %v2743, %v3082
        %v3084 = vpop.f32.mrb[0].mxu0
        %v3085 = vadd.f32 %v2739, %v3084
        %v3086 = vpop.f32.mrb[0].mxu0
        %v3087 = vadd.f32 %v2743, %v3086
        %3088 = vmatprep.mubr.bf16.mxu0 %v2667
        %3089 = vmatmul.mubr.bf16.gmra.mrb[0].mxu0 %v2666
        %v3090 = vpop.f32.mrb[0].mxu0
        %v3091 = vadd.f32 %v2739, %v3090
        %v3092 = vpop.f32.mrb[0].mxu0
        %v3093 = vadd.f32 %v2743, %v3092
        %v3094 = vpop.f32.mrb[0].mxu0
        %v3095 = vadd.f32 %v2739, %v3094
        %v3096 = vpop.f32.mrb[0].mxu0
        %v3097 = vadd.f32 %v2743, %v3096
        %3098 = vmatprep.mubr.bf16.mxu0 %v2669
        %3099 = vmatmul.mubr.bf16.gmra.mrb[0].mxu0 %v2668
        %v3100 = vpop.f32.mrb[0].mxu0
        %v3101 = vadd.f32 %v2739, %v3100
        %v3102 = vpop.f32.mrb[0].mxu0
        %v3103 = vadd.f32 %v2743, %v3102
        %v3104 = vpop.f32.mrb[0].mxu0
        %v3105 = vadd.f32 %v2739, %v3104
        %v3106 = vpop.f32.mrb[0].mxu0
        %v3107 = vadd.f32 %v2743, %v3106
        %3108 = vmatprep.mubr.bf16.mxu0 %v2671
        %3109 = vmatmul.mubr.bf16.gmra.mrb[0].mxu0 %v2670
        %v3110 = vpop.f32.mrb[0].mxu0
        %v3111 = vadd.f32 %v2739, %v3110
        %v3112 = vpop.f32.mrb[0].mxu0
        %v3113 = vadd.f32 %v2743, %v3112
        %v3114 = vpop.f32.mrb[0].mxu0
        %v3115 = vadd.f32 %v2739, %v3114
        %v3116 = vpop.f32.mrb[0].mxu0
        %v3117 = vadd.f32 %v2743, %v3116
        %3118 = vmatprep.mubr.bf16.mxu0 %v2673
        %3119 = vmatmul.mubr.bf16.gmra.mrb[0].mxu0 %v2672
        %v3120 = vpop.f32.mrb[0].mxu0
        %v3121 = vadd.f32 %v2739, %v3120
        %v3122 = vpop.f32.mrb[0].mxu0
        %v3123 = vadd.f32 %v2743, %v3122
        %v3124 = vpop.f32.mrb[0].mxu0
        %v3125 = vadd.f32 %v2739, %v3124
        %v3126 = vpop.f32.mrb[0].mxu0
        %v3127 = vadd.f32 %v2743, %v3126
        %3128 = vmatprep.mubr.bf16.mxu0 %v2675
        %3129 = vmatmul.mubr.bf16.gmra.mrb[0].mxu0 %v2674
        %v3130 = vpop.f32.mrb[0].mxu0
        %v3131 = vadd.f32 %v2739, %v3130
        %v3132 = vpop.f32.mrb[0].mxu0
        %v3133 = vadd.f32 %v2743, %v3132
        %v3134 = vpop.f32.mrb[0].mxu0
        %v3135 = vadd.f32 %v2739, %v3134
        %v3136 = vpop.f32.mrb[0].mxu0
        %v3137 = vadd.f32 %v2743, %v3136
        %3138 = vmatprep.mubr.bf16.mxu0 %v2677
        %3139 = vmatmul.mubr.bf16.gmra.mrb[0].mxu0 %v2676
        %v3140 = vpop.f32.mrb[0].mxu0
        %v3141 = vadd.f32 %v2739, %v3140
        %v3142 = vpop.f32.mrb[0].mxu0
        %v3143 = vadd.f32 %v2743, %v3142
        %v3144 = vpop.f32.mrb[0].mxu0
        %v3145 = vadd.f32 %v2739, %v3144
        %v3146 = vpop.f32.mrb[0].mxu0
        %v3147 = vadd.f32 %v2743, %v3146
        %3148 = vmatprep.mubr.bf16.mxu0 %v2679
        %3149 = vmatmul.mubr.bf16.gmra.mrb[0].mxu0 %v2678
        %v3150 = vpop.f32.mrb[0].mxu0
        %v3151 = vadd.f32 %v2739, %v3150
        %v3152 = vpop.f32.mrb[0].mxu0
        %v3153 = vadd.f32 %v2743, %v3152
        %v3154 = vpop.f32.mrb[0].mxu0
        %v3155 = vadd.f32 %v2739, %v3154
        %v3156 = vpop.f32.mrb[0].mxu0
        %v3157 = vadd.f32 %v2743, %v3156
        %3158 = vmatprep.mubr.bf16.mxu0 %v2681
        %3159 = vmatmul.mubr.bf16.gmra.mrb[0].mxu0 %v2680
        %v3160 = vpop.f32.mrb[0].mxu0
        %v3161 = vadd.f32 %v2739, %v3160
        %v3162 = vpop.f32.mrb[0].mxu0
        %v3163 = vadd.f32 %v2743, %v3162
        %v3164 = vpop.f32.mrb[0].mxu0
        %v3165 = vadd.f32 %v2739, %v3164
        %v3166 = vpop.f32.mrb[0].mxu0
        %v3167 = vadd.f32 %v2743, %v3166
        %3168 = vmatprep.mubr.bf16.mxu0 %v2683
        %3169 = vmatmul.mubr.bf16.gmra.mrb[0].mxu0 %v2682
        %v3170 = vpop.f32.mrb[0].mxu0
        %v3171 = vadd.f32 %v2739, %v3170
        %v3172 = vpop.f32.mrb[0].mxu0
        %v3173 = vadd.f32 %v2743, %v3172
        %v3174 = vpop.f32.mrb[0].mxu0
        %v3175 = vadd.f32 %v2739, %v3174
        %v3176 = vpop.f32.mrb[0].mxu0
        %v3177 = vadd.f32 %v2743, %v3176
        %3178 = vmatprep.mubr.bf16.mxu0 %v2685
        %3179 = vmatmul.mubr.bf16.gmra.mrb[0].mxu0 %v2684
        %v3180 = vpop.f32.mrb[0].mxu0
        %v3181 = vadd.f32 %v2739, %v3180
        %v3182 = vpop.f32.mrb[0].mxu0
        %v3183 = vadd.f32 %v2743, %v3182
        %v3184 = vpop.f32.mrb[0].mxu0
        %v3185 = vadd.f32 %v2739, %v3184
        %v3186 = vpop.f32.mrb[0].mxu0
        %v3187 = vadd.f32 %v2743, %v3186
        %3188 = vmatprep.mubr.bf16.mxu0 %v2687
        %3189 = vmatmul.mubr.bf16.gmra.mrb[0].mxu0 %v2686
        %v3190 = vpop.f32.mrb[0].mxu0
        %v3191 = vadd.f32 %v2739, %v3190
        %v3192 = vpop.f32.mrb[0].mxu0
        %v3193 = vadd.f32 %v2743, %v3192
        %v3194 = vpop.f32.mrb[0].mxu0
        %v3195 = vadd.f32 %v2739, %v3194
        %v3196 = vpop.f32.mrb[0].mxu0
        %v3197 = vadd.f32 %v2743, %v3196
        %3198 = vmatprep.mubr.bf16.mxu0 %v2689
        %3199 = vmatmul.mubr.bf16.gmra.mrb[0].mxu0 %v2688
        %v3200 = vpop.f32.mrb[0].mxu0
        %v3201 = vadd.f32 %v2739, %v3200
        %v3202 = vpop.f32.mrb[0].mxu0
        %v3203 = vadd.f32 %v2743, %v3202
        %v3204 = vpop.f32.mrb[0].mxu0
        %v3205 = vadd.f32 %v2739, %v3204
        %v3206 = vpop.f32.mrb[0].mxu0
        %v3207 = vadd.f32 %v2743, %v3206
        %3208 = vmatprep.mubr.bf16.mxu0 %v2691
        %3209 = vmatmul.mubr.bf16.gmra.mrb[0].mxu0 %v2690
        %v3210 = vpop.f32.mrb[0].mxu0
        %v3211 = vadd.f32 %v2739, %v3210
        %v3212 = vpop.f32.mrb[0].mxu0
        %v3213 = vadd.f32 %v2743, %v3212
        %v3214 = vpop.f32.mrb[0].mxu0
        %v3215 = vadd.f32 %v2739, %v3214
        %v3216 = vpop.f32.mrb[0].mxu0
        %v3217 = vadd.f32 %v2743, %v3216
        %3218 = vmatprep.mubr.bf16.mxu0 %v2693
        %3219 = vmatmul.mubr.bf16.gmra.mrb[0].mxu0 %v2692
        %v3220 = vpop.f32.mrb[0].mxu0
        %v3221 = vadd.f32 %v2739, %v3220
        %v3222 = vpop.f32.mrb[0].mxu0
        %v3223 = vadd.f32 %v2743, %v3222
        %v3224 = vpop.f32.mrb[0].mxu0
        %v3225 = vadd.f32 %v2739, %v3224
        %v3226 = vpop.f32.mrb[0].mxu0
        %v3227 = vadd.f32 %v2743, %v3226
        %3228 = vmatprep.mubr.bf16.mxu0 %v2695
        %3229 = vmatmul.mubr.bf16.gmra.mrb[0].mxu0 %v2694
        %v3230 = vpop.f32.mrb[0].mxu0
        %v3231 = vadd.f32 %v2739, %v3230
        %v3232 = vpop.f32.mrb[0].mxu0
        %v3233 = vadd.f32 %v2743, %v3232
        %v3234 = vpop.f32.mrb[0].mxu0
        %v3235 = vadd.f32 %v2739, %v3234
        %v3236 = vpop.f32.mrb[0].mxu0
        %v3237 = vadd.f32 %v2743, %v3236
        %3238 = vmatprep.mubr.bf16.mxu0 %v2697
        %3239 = vmatmul.mubr.bf16.gmra.mrb[0].mxu0 %v2696
        %v3240 = vpop.f32.mrb[0].mxu0
        %v3241 = vadd.f32 %v2739, %v3240
        %v3242 = vpop.f32.mrb[0].mxu0
        %v3243 = vadd.f32 %v2743, %v3242
        %v3244 = vpop.f32.mrb[0].mxu0
        %v3245 = vadd.f32 %v2739, %v3244
        %v3246 = vpop.f32.mrb[0].mxu0
        %v3247 = vadd.f32 %v2743, %v3246
        %3248 = vmatprep.mubr.bf16.mxu0 %v2699
        %3249 = vmatmul.mubr.bf16.gmra.mrb[0].mxu0 %v2698
        %v3250 = vpop.f32.mrb[0].mxu0
        %v3251 = vadd.f32 %v2739, %v3250
        %v3252 = vpop.f32.mrb[0].mxu0
        %v3253 = vadd.f32 %v2743, %v3252
        %v3254 = vpop.f32.mrb[0].mxu0
        %v3255 = vadd.f32 %v2739, %v3254
        %v3256 = vpop.f32.mrb[0].mxu0
        %v3257 = vadd.f32 %v2743, %v3256
        %3258 = vdwg.mxu0
        %v3259 = vmax.f32 %v2941, 0.0
        %v3260 = vmax.f32 %v2943, 0.0
        %v3261 = vmax.f32 %v2945, 0.0
        %v3262 = vmax.f32 %v2947, 0.0
        %v3263 = vmax.f32 %v2951, 0.0
        %v3264 = vmax.f32 %v2953, 0.0
        %v3265 = vmax.f32 %v2955, 0.0
        %v3266 = vmax.f32 %v2957, 0.0
        %v3267 = vmax.f32 %v2961, 0.0
        %v3268 = vmax.f32 %v2963, 0.0
        %v3269 = vmax.f32 %v2965, 0.0
        %v3270 = vmax.f32 %v2967, 0.0
        %v3271 = vmax.f32 %v2971, 0.0
        %v3272 = vmax.f32 %v2973, 0.0
        %v3273 = vmax.f32 %v2975, 0.0
        %v3274 = vmax.f32 %v2977, 0.0
        %v3275 = vmax.f32 %v2981, 0.0
        %v3276 = vmax.f32 %v2983, 0.0
        %v3277 = vmax.f32 %v2985, 0.0
        %v3278 = vmax.f32 %v2987, 0.0
        %v3279 = vmax.f32 %v2991, 0.0
        %v3280 = vmax.f32 %v2993, 0.0
        %v3281 = vmax.f32 %v2995, 0.0
        %v3282 = vmax.f32 %v2997, 0.0
        %v3283 = vmax.f32 %v3001, 0.0
        %v3284 = vmax.f32 %v3003, 0.0
        %v3285 = vmax.f32 %v3005, 0.0
        %v3286 = vmax.f32 %v3007, 0.0
        %v3287 = vmax.f32 %v3011, 0.0
        %v3288 = vmax.f32 %v3013, 0.0
        %v3289 = vmax.f32 %v3015, 0.0
        %v3290 = vmax.f32 %v3017, 0.0
        %v3291 = vmax.f32 %v3021, 0.0
        %v3292 = vmax.f32 %v3023, 0.0
        %v3293 = vmax.f32 %v3025, 0.0
        %v3294 = vmax.f32 %v3027, 0.0
        %v3295 = vmax.f32 %v3031, 0.0
        %v3296 = vmax.f32 %v3033, 0.0
        %v3297 = vmax.f32 %v3035, 0.0
        %v3298 = vmax.f32 %v3037, 0.0
        %v3299 = vmax.f32 %v3041, 0.0
        %v3300 = vmax.f32 %v3043, 0.0
        %v3301 = vmax.f32 %v3045, 0.0
        %v3302 = vmax.f32 %v3047, 0.0
        %v3303 = vmax.f32 %v3051, 0.0
        %v3304 = vmax.f32 %v3053, 0.0
        %v3305 = vmax.f32 %v3055, 0.0
        %v3306 = vmax.f32 %v3057, 0.0
        %v3307 = vmax.f32 %v3061, 0.0
        %v3308 = vmax.f32 %v3063, 0.0
        %v3309 = vmax.f32 %v3065, 0.0
        %v3310 = vmax.f32 %v3067, 0.0
        %v3311 = vmax.f32 %v3071, 0.0
        %v3312 = vmax.f32 %v3073, 0.0
        %v3313 = vmax.f32 %v3075, 0.0
        %v3314 = vmax.f32 %v3077, 0.0
        %v3315 = vmax.f32 %v3081, 0.0
        %v3316 = vmax.f32 %v3083, 0.0
        %v3317 = vmax.f32 %v3085, 0.0
        %v3318 = vmax.f32 %v3087, 0.0
        %v3319 = vmax.f32 %v3091, 0.0
        %v3320 = vmax.f32 %v3093, 0.0
        %v3321 = vmax.f32 %v3095, 0.0
        %v3322 = vmax.f32 %v3097, 0.0
        %v3323 = vmax.f32 %v3101, 0.0
        %v3324 = vmax.f32 %v3103, 0.0
        %v3325 = vmax.f32 %v3105, 0.0
        %v3326 = vmax.f32 %v3107, 0.0
        %v3327 = vmax.f32 %v3111, 0.0
        %v3328 = vmax.f32 %v3113, 0.0
        %v3329 = vmax.f32 %v3115, 0.0
        %v3330 = vmax.f32 %v3117, 0.0
        %v3331 = vmax.f32 %v3121, 0.0
        %v3332 = vmax.f32 %v3123, 0.0
        %v3333 = vmax.f32 %v3125, 0.0
        %v3334 = vmax.f32 %v3127, 0.0
        %v3335 = vmax.f32 %v3131, 0.0
        %v3336 = vmax.f32 %v3133, 0.0
        %v3337 = vmax.f32 %v3135, 0.0
        %v3338 = vmax.f32 %v3137, 0.0
        %v3339 = vmax.f32 %v3141, 0.0
        %v3340 = vmax.f32 %v3143, 0.0
        %v3341 = vmax.f32 %v3145, 0.0
        %v3342 = vmax.f32 %v3147, 0.0
        %v3343 = vmax.f32 %v3151, 0.0
        %v3344 = vmax.f32 %v3153, 0.0
        %v3345 = vmax.f32 %v3155, 0.0
        %v3346 = vmax.f32 %v3157, 0.0
        %v3347 = vmax.f32 %v3161, 0.0
        %v3348 = vmax.f32 %v3163, 0.0
        %v3349 = vmax.f32 %v3165, 0.0
        %v3350 = vmax.f32 %v3167, 0.0
        %v3351 = vmax.f32 %v3171, 0.0
        %v3352 = vmax.f32 %v3173, 0.0
        %v3353 = vmax.f32 %v3175, 0.0
        %v3354 = vmax.f32 %v3177, 0.0
        %v3355 = vmax.f32 %v3181, 0.0
        %v3356 = vmax.f32 %v3183, 0.0
        %v3357 = vmax.f32 %v3185, 0.0
        %v3358 = vmax.f32 %v3187, 0.0
        %v3359 = vmax.f32 %v3191, 0.0
        %v3360 = vmax.f32 %v3193, 0.0
        %v3361 = vmax.f32 %v3195, 0.0
        %v3362 = vmax.f32 %v3197, 0.0
        %v3363 = vmax.f32 %v3201, 0.0
        %v3364 = vmax.f32 %v3203, 0.0
        %v3365 = vmax.f32 %v3205, 0.0
        %v3366 = vmax.f32 %v3207, 0.0
        %v3367 = vmax.f32 %v3211, 0.0
        %v3368 = vmax.f32 %v3213, 0.0
        %v3369 = vmax.f32 %v3215, 0.0
        %v3370 = vmax.f32 %v3217, 0.0
        %v3371 = vmax.f32 %v3221, 0.0
        %v3372 = vmax.f32 %v3223, 0.0
        %v3373 = vmax.f32 %v3225, 0.0
        %v3374 = vmax.f32 %v3227, 0.0
        %v3375 = vmax.f32 %v3231, 0.0
        %v3376 = vmax.f32 %v3233, 0.0
        %v3377 = vmax.f32 %v3235, 0.0
        %v3378 = vmax.f32 %v3237, 0.0
        %v3379 = vmax.f32 %v3241, 0.0
        %v3380 = vmax.f32 %v3243, 0.0
        %v3381 = vmax.f32 %v3245, 0.0
        %v3382 = vmax.f32 %v3247, 0.0
        %v3383 = vmax.f32 %v3251, 0.0
        %v3384 = vmax.f32 %v3253, 0.0
        %v3385 = vmax.f32 %v3255, 0.0
        %v3386 = vmax.f32 %v3257, 0.0
        %v3387 = vpack.c.bf16 %v3261, %v3259
        %v3388 = vpack.c.bf16 %v3262, %v3260
        %v3389 = vpack.c.bf16 %v3265, %v3263
        %v3390 = vpack.c.bf16 %v3266, %v3264
        %v3391 = vpack.c.bf16 %v3269, %v3267
        %v3392 = vpack.c.bf16 %v3270, %v3268
        %v3393 = vpack.c.bf16 %v3273, %v3271
        %v3394 = vpack.c.bf16 %v3274, %v3272
        %v3395 = vpack.c.bf16 %v3277, %v3275
        %v3396 = vpack.c.bf16 %v3278, %v3276
        %v3397 = vpack.c.bf16 %v3281, %v3279
        %v3398 = vpack.c.bf16 %v3282, %v3280
        %v3399 = vpack.c.bf16 %v3285, %v3283
        %v3400 = vpack.c.bf16 %v3286, %v3284
        %v3401 = vpack.c.bf16 %v3289, %v3287
        %v3402 = vpack.c.bf16 %v3290, %v3288
        %v3403 = vpack.c.bf16 %v3293, %v3291
        %v3404 = vpack.c.bf16 %v3294, %v3292
        %v3405 = vpack.c.bf16 %v3297, %v3295
        %v3406 = vpack.c.bf16 %v3298, %v3296
        %v3407 = vpack.c.bf16 %v3301, %v3299
        %v3408 = vpack.c.bf16 %v3302, %v3300
        %v3409 = vpack.c.bf16 %v3305, %v3303
        %v3410 = vpack.c.bf16 %v3306, %v3304
        %v3411 = vpack.c.bf16 %v3309, %v3307
        %v3412 = vpack.c.bf16 %v3310, %v3308
        %v3413 = vpack.c.bf16 %v3313, %v3311
        %v3414 = vpack.c.bf16 %v3314, %v3312
        %v3415 = vpack.c.bf16 %v3317, %v3315
        %v3416 = vpack.c.bf16 %v3318, %v3316
        %v3417 = vpack.c.bf16 %v3321, %v3319
        %v3418 = vpack.c.bf16 %v3322, %v3320
        %v3419 = vpack.c.bf16 %v3325, %v3323
        %v3420 = vpack.c.bf16 %v3326, %v3324
        %v3421 = vpack.c.bf16 %v3329, %v3327
        %v3422 = vpack.c.bf16 %v3330, %v3328
        %v3423 = vpack.c.bf16 %v3333, %v3331
        %v3424 = vpack.c.bf16 %v3334, %v3332
        %v3425 = vpack.c.bf16 %v3337, %v3335
        %v3426 = vpack.c.bf16 %v3338, %v3336
        %v3427 = vpack.c.bf16 %v3341, %v3339
        %v3428 = vpack.c.bf16 %v3342, %v3340
        %v3429 = vpack.c.bf16 %v3345, %v3343
        %v3430 = vpack.c.bf16 %v3346, %v3344
        %v3431 = vpack.c.bf16 %v3349, %v3347
        %v3432 = vpack.c.bf16 %v3350, %v3348
        %v3433 = vpack.c.bf16 %v3353, %v3351
        %v3434 = vpack.c.bf16 %v3354, %v3352
        %v3435 = vpack.c.bf16 %v3357, %v3355
        %v3436 = vpack.c.bf16 %v3358, %v3356
        %v3437 = vpack.c.bf16 %v3361, %v3359
        %v3438 = vpack.c.bf16 %v3362, %v3360
        %v3439 = vpack.c.bf16 %v3365, %v3363
        %v3440 = vpack.c.bf16 %v3366, %v3364
        %v3441 = vpack.c.bf16 %v3369, %v3367
        %v3442 = vpack.c.bf16 %v3370, %v3368
        %v3443 = vpack.c.bf16 %v3373, %v3371
        %v3444 = vpack.c.bf16 %v3374, %v3372
        %v3445 = vpack.c.bf16 %v3377, %v3375
        %v3446 = vpack.c.bf16 %v3378, %v3376
        %v3447 = vpack.c.bf16 %v3381, %v3379
        %v3448 = vpack.c.bf16 %v3382, %v3380
        %v3449 = vpack.c.bf16 %v3385, %v3383
        %v3450 = vpack.c.bf16 %v3386, %v3384
        %s3451 = scalar_lea.vmem [#allocation2], 768
        %v3452 = vld [vmem:[%s3451] sm:$0xff]
        %v3453 = vld [vmem:[%s3451 + $0x8] sm:$0xff]
        %v3454 = vld [vmem:[%s3451 + $0x10] sm:$0xff]
        %v3455 = vld [vmem:[%s3451 + $0x18] sm:$0xff]
        %v3456 = vld [vmem:[%s3451 + $0x20] sm:$0xff]
        %v3457 = vld [vmem:[%s3451 + $0x28] sm:$0xff]
        %v3458 = vld [vmem:[%s3451 + $0x30] sm:$0xff]
        %v3459 = vld [vmem:[%s3451 + $0x38] sm:$0xff]
        %v3460 = vld [vmem:[%s3451 + $0x40] sm:$0xff]
        %v3461 = vld [vmem:[%s3451 + $0x48] sm:$0xff]
        %v3462 = vld [vmem:[%s3451 + $0x50] sm:$0xff]
        %v3463 = vld [vmem:[%s3451 + $0x58] sm:$0xff]
        %v3464 = vld [vmem:[%s3451 + $0x60] sm:$0xff]
        %v3465 = vld [vmem:[%s3451 + $0x68] sm:$0xff]
        %v3466 = vld [vmem:[%s3451 + $0x70] sm:$0xff]
        %v3467 = vld [vmem:[%s3451 + $0x78] sm:$0xff]
        %v3468 = vld [vmem:[%s3451 + $0x80] sm:$0xff]
        %v3469 = vld [vmem:[%s3451 + $0x88] sm:$0xff]
        %v3470 = vld [vmem:[%s3451 + $0x90] sm:$0xff]
        %v3471 = vld [vmem:[%s3451 + $0x98] sm:$0xff]
        %v3472 = vld [vmem:[%s3451 + $0xa0] sm:$0xff]
        %v3473 = vld [vmem:[%s3451 + $0xa8] sm:$0xff]
        %v3474 = vld [vmem:[%s3451 + $0xb0] sm:$0xff]
        %v3475 = vld [vmem:[%s3451 + $0xb8] sm:$0xff]
        %v3476 = vld [vmem:[%s3451 + $0xc0] sm:$0xff]
        %v3477 = vld [vmem:[%s3451 + $0xc8] sm:$0xff]
        %v3478 = vld [vmem:[%s3451 + $0xd0] sm:$0xff]
        %v3479 = vld [vmem:[%s3451 + $0xd8] sm:$0xff]
        %v3480 = vld [vmem:[%s3451 + $0xe0] sm:$0xff]
        %v3481 = vld [vmem:[%s3451 + $0xe8] sm:$0xff]
        %v3482 = vld [vmem:[%s3451 + $0xf0] sm:$0xff]
        %v3483 = vld [vmem:[%s3451 + $0xf8] sm:$0xff]
        %s3484 = scalar_lea.vmem %s3, 4
        %v3485 = vld [vmem:[%s3484] ss:$8 sm:$0x3]
        %v3487 = vlaneseq
        %v3488 = vshrl.u32 %v3487, 7
        %v3489 = vsub.s32 0, %v3488
        %v3490 = vrot.slane %v3485, %v3489
        %v3491 = vlaneseq
        %v3492 = vshrl.u32 %v3491, 7
        %v3493 = vsub.s32 1, %v3492
        %v3494 = vrot.slane %v3485, %v3493
        %v3529 = vunpack.c.l.b16 %v3452
        %v3530 = vunpack.c.h.b16 %v3452
        %v3531 = vunpack.c.l.b16 %v3453
        %v3532 = vunpack.c.h.b16 %v3453
        %v3533 = vunpack.c.l.b16 %v3454
        %v3534 = vunpack.c.h.b16 %v3454
        %v3535 = vunpack.c.l.b16 %v3455
        %v3536 = vunpack.c.h.b16 %v3455
        %v3537 = vunpack.c.l.b16 %v3456
        %v3538 = vunpack.c.h.b16 %v3456
        %v3539 = vunpack.c.l.b16 %v3457
        %v3540 = vunpack.c.h.b16 %v3457
        %v3541 = vunpack.c.l.b16 %v3458
        %v3542 = vunpack.c.h.b16 %v3458
        %v3543 = vunpack.c.l.b16 %v3459
        %v3544 = vunpack.c.h.b16 %v3459
        %v3545 = vunpack.c.l.b16 %v3460
        %v3546 = vunpack.c.h.b16 %v3460
        %v3547 = vunpack.c.l.b16 %v3461
        %v3548 = vunpack.c.h.b16 %v3461
        %v3549 = vunpack.c.l.b16 %v3462
        %v3550 = vunpack.c.h.b16 %v3462
        %v3551 = vunpack.c.l.b16 %v3463
        %v3552 = vunpack.c.h.b16 %v3463
        %v3553 = vunpack.c.l.b16 %v3464
        %v3554 = vunpack.c.h.b16 %v3464
        %v3555 = vunpack.c.l.b16 %v3465
        %v3556 = vunpack.c.h.b16 %v3465
        %v3557 = vunpack.c.l.b16 %v3466
        %v3558 = vunpack.c.h.b16 %v3466
        %v3559 = vunpack.c.l.b16 %v3467
        %v3560 = vunpack.c.h.b16 %v3467
        %v3561 = vunpack.c.l.b16 %v3468
        %v3562 = vunpack.c.h.b16 %v3468
        %v3563 = vunpack.c.l.b16 %v3469
        %v3564 = vunpack.c.h.b16 %v3469
        %v3565 = vunpack.c.l.b16 %v3470
        %v3566 = vunpack.c.h.b16 %v3470
        %v3567 = vunpack.c.l.b16 %v3471
        %v3568 = vunpack.c.h.b16 %v3471
        %v3569 = vunpack.c.l.b16 %v3472
        %v3570 = vunpack.c.h.b16 %v3472
        %v3571 = vunpack.c.l.b16 %v3473
        %v3572 = vunpack.c.h.b16 %v3473
        %v3573 = vunpack.c.l.b16 %v3474
        %v3574 = vunpack.c.h.b16 %v3474
        %v3575 = vunpack.c.l.b16 %v3475
        %v3576 = vunpack.c.h.b16 %v3475
        %v3577 = vunpack.c.l.b16 %v3476
        %v3578 = vunpack.c.h.b16 %v3476
        %v3579 = vunpack.c.l.b16 %v3477
        %v3580 = vunpack.c.h.b16 %v3477
        %v3581 = vunpack.c.l.b16 %v3478
        %v3582 = vunpack.c.h.b16 %v3478
        %v3583 = vunpack.c.l.b16 %v3479
        %v3584 = vunpack.c.h.b16 %v3479
        %v3585 = vunpack.c.l.b16 %v3480
        %v3586 = vunpack.c.h.b16 %v3480
        %v3587 = vunpack.c.l.b16 %v3481
        %v3588 = vunpack.c.h.b16 %v3481
        %v3589 = vunpack.c.l.b16 %v3482
        %v3590 = vunpack.c.h.b16 %v3482
        %v3591 = vunpack.c.l.b16 %v3483
        %v3592 = vunpack.c.h.b16 %v3483
        %v3593 = vpack.c.b16 %v3531, %v3529
        %v3594 = vpack.c.b16 %v3532, %v3530
        %v3595 = vpack.c.b16 %v3535, %v3533
        %v3596 = vpack.c.b16 %v3536, %v3534
        %v3597 = vpack.c.b16 %v3539, %v3537
        %v3598 = vpack.c.b16 %v3540, %v3538
        %v3599 = vpack.c.b16 %v3543, %v3541
        %v3600 = vpack.c.b16 %v3544, %v3542
        %v3601 = vpack.c.b16 %v3547, %v3545
        %v3602 = vpack.c.b16 %v3548, %v3546
        %v3603 = vpack.c.b16 %v3551, %v3549
        %v3604 = vpack.c.b16 %v3552, %v3550
        %v3605 = vpack.c.b16 %v3555, %v3553
        %v3606 = vpack.c.b16 %v3556, %v3554
        %v3607 = vpack.c.b16 %v3559, %v3557
        %v3608 = vpack.c.b16 %v3560, %v3558
        %v3609 = vpack.c.b16 %v3563, %v3561
        %v3610 = vpack.c.b16 %v3564, %v3562
        %v3611 = vpack.c.b16 %v3567, %v3565
        %v3612 = vpack.c.b16 %v3568, %v3566
        %v3613 = vpack.c.b16 %v3571, %v3569
        %v3614 = vpack.c.b16 %v3572, %v3570
        %v3615 = vpack.c.b16 %v3575, %v3573
        %v3616 = vpack.c.b16 %v3576, %v3574
        %v3617 = vpack.c.b16 %v3579, %v3577
        %v3618 = vpack.c.b16 %v3580, %v3578
        %v3619 = vpack.c.b16 %v3583, %v3581
        %v3620 = vpack.c.b16 %v3584, %v3582
        %v3621 = vpack.c.b16 %v3587, %v3585
        %v3622 = vpack.c.b16 %v3588, %v3586
        %v3623 = vpack.c.b16 %v3591, %v3589
        %v3624 = vpack.c.b16 %v3592, %v3590
        %3657 = vmatprep.subr.bf16.mxu0 %v3594
        %3658 = vmatpush1.bf16.msra.mxu0 %v3593
        %3659 = vmatprep.subr.bf16.mxu0 %v3596
        %3660 = vmatpush1.bf16.msra.mxu0 %v3595
        %3661 = vmatprep.subr.bf16.mxu0 %v3598
        %3662 = vmatpush1.bf16.msra.mxu0 %v3597
        %3663 = vmatprep.subr.bf16.mxu0 %v3600
        %3664 = vmatpush1.bf16.msra.mxu0 %v3599
        %3665 = vmatprep.subr.bf16.mxu0 %v3602
        %3666 = vmatpush1.bf16.msra.mxu0 %v3601
        %3667 = vmatprep.subr.bf16.mxu0 %v3604
        %3668 = vmatpush1.bf16.msra.mxu0 %v3603
        %3669 = vmatprep.subr.bf16.mxu0 %v3606
        %3670 = vmatpush1.bf16.msra.mxu0 %v3605
        %3671 = vmatprep.subr.bf16.mxu0 %v3608
        %3672 = vmatpush1.bf16.msra.mxu0 %v3607
        %3673 = vmatprep.subr.bf16.mxu0 %v3610
        %3674 = vmatpush1.bf16.msra.mxu0 %v3609
        %3675 = vmatprep.subr.bf16.mxu0 %v3612
        %3676 = vmatpush1.bf16.msra.mxu0 %v3611
        %3677 = vmatprep.subr.bf16.mxu0 %v3614
        %3678 = vmatpush1.bf16.msra.mxu0 %v3613
        %3679 = vmatprep.subr.bf16.mxu0 %v3616
        %3680 = vmatpush1.bf16.msra.mxu0 %v3615
        %3681 = vmatprep.subr.bf16.mxu0 %v3618
        %3682 = vmatpush1.bf16.msra.mxu0 %v3617
        %3683 = vmatprep.subr.bf16.mxu0 %v3620
        %3684 = vmatpush1.bf16.msra.mxu0 %v3619
        %3685 = vmatprep.subr.bf16.mxu0 %v3622
        %3686 = vmatpush1.bf16.msra.mxu0 %v3621
        %3687 = vmatprep.subr.bf16.mxu0 %v3624
        %3688 = vmatpush1.bf16.msra.mxu0 %v3623
        %3689 = vmatprep.mubr.bf16.mxu0 %v3388
        %3690 = vmatmul.mubr.bf16.gmra.mrb[0].mxu0 %v3387
        %v3691 = vpop.f32.mrb[0].mxu0
        %v3692 = vadd.f32 %v3490, %v3691
        %v3693 = vpop.f32.mrb[0].mxu0
        %v3694 = vadd.f32 %v3494, %v3693
        %v3695 = vpop.f32.mrb[0].mxu0
        %v3696 = vadd.f32 %v3490, %v3695
        %v3697 = vpop.f32.mrb[0].mxu0
        %v3698 = vadd.f32 %v3494, %v3697
        %3699 = vmatprep.mubr.bf16.mxu0 %v3390
        %3700 = vmatmul.mubr.bf16.gmra.mrb[0].mxu0 %v3389
        %v3701 = vpop.f32.mrb[0].mxu0
        %v3702 = vadd.f32 %v3490, %v3701
        %v3703 = vpop.f32.mrb[0].mxu0
        %v3704 = vadd.f32 %v3494, %v3703
        %v3705 = vpop.f32.mrb[0].mxu0
        %v3706 = vadd.f32 %v3490, %v3705
        %v3707 = vpop.f32.mrb[0].mxu0
        %v3708 = vadd.f32 %v3494, %v3707
        %3709 = vmatprep.mubr.bf16.mxu0 %v3392
        %3710 = vmatmul.mubr.bf16.gmra.mrb[0].mxu0 %v3391
        %v3711 = vpop.f32.mrb[0].mxu0
        %v3712 = vadd.f32 %v3490, %v3711
        %v3713 = vpop.f32.mrb[0].mxu0
        %v3714 = vadd.f32 %v3494, %v3713
        %v3715 = vpop.f32.mrb[0].mxu0
        %v3716 = vadd.f32 %v3490, %v3715
        %v3717 = vpop.f32.mrb[0].mxu0
        %v3718 = vadd.f32 %v3494, %v3717
        %3719 = vmatprep.mubr.bf16.mxu0 %v3394
        %3720 = vmatmul.mubr.bf16.gmra.mrb[0].mxu0 %v3393
        %v3721 = vpop.f32.mrb[0].mxu0
        %v3722 = vadd.f32 %v3490, %v3721
        %v3723 = vpop.f32.mrb[0].mxu0
        %v3724 = vadd.f32 %v3494, %v3723
        %v3725 = vpop.f32.mrb[0].mxu0
        %v3726 = vadd.f32 %v3490, %v3725
        %v3727 = vpop.f32.mrb[0].mxu0
        %v3728 = vadd.f32 %v3494, %v3727
        %3729 = vmatprep.mubr.bf16.mxu0 %v3396
        %3730 = vmatmul.mubr.bf16.gmra.mrb[0].mxu0 %v3395
        %v3731 = vpop.f32.mrb[0].mxu0
        %v3732 = vadd.f32 %v3490, %v3731
        %v3733 = vpop.f32.mrb[0].mxu0
        %v3734 = vadd.f32 %v3494, %v3733
        %v3735 = vpop.f32.mrb[0].mxu0
        %v3736 = vadd.f32 %v3490, %v3735
        %v3737 = vpop.f32.mrb[0].mxu0
        %v3738 = vadd.f32 %v3494, %v3737
        %3739 = vmatprep.mubr.bf16.mxu0 %v3398
        %3740 = vmatmul.mubr.bf16.gmra.mrb[0].mxu0 %v3397
        %v3741 = vpop.f32.mrb[0].mxu0
        %v3742 = vadd.f32 %v3490, %v3741
        %v3743 = vpop.f32.mrb[0].mxu0
        %v3744 = vadd.f32 %v3494, %v3743
        %v3745 = vpop.f32.mrb[0].mxu0
        %v3746 = vadd.f32 %v3490, %v3745
        %v3747 = vpop.f32.mrb[0].mxu0
        %v3748 = vadd.f32 %v3494, %v3747
        %3749 = vmatprep.mubr.bf16.mxu0 %v3400
        %3750 = vmatmul.mubr.bf16.gmra.mrb[0].mxu0 %v3399
        %v3751 = vpop.f32.mrb[0].mxu0
        %v3752 = vadd.f32 %v3490, %v3751
        %v3753 = vpop.f32.mrb[0].mxu0
        %v3754 = vadd.f32 %v3494, %v3753
        %v3755 = vpop.f32.mrb[0].mxu0
        %v3756 = vadd.f32 %v3490, %v3755
        %v3757 = vpop.f32.mrb[0].mxu0
        %v3758 = vadd.f32 %v3494, %v3757
        %3759 = vmatprep.mubr.bf16.mxu0 %v3402
        %3760 = vmatmul.mubr.bf16.gmra.mrb[0].mxu0 %v3401
        %v3761 = vpop.f32.mrb[0].mxu0
        %v3762 = vadd.f32 %v3490, %v3761
        %v3763 = vpop.f32.mrb[0].mxu0
        %v3764 = vadd.f32 %v3494, %v3763
        %v3765 = vpop.f32.mrb[0].mxu0
        %v3766 = vadd.f32 %v3490, %v3765
        %v3767 = vpop.f32.mrb[0].mxu0
        %v3768 = vadd.f32 %v3494, %v3767
        %3769 = vmatprep.mubr.bf16.mxu0 %v3404
        %3770 = vmatmul.mubr.bf16.gmra.mrb[0].mxu0 %v3403
        %v3771 = vpop.f32.mrb[0].mxu0
        %v3772 = vadd.f32 %v3490, %v3771
        %v3773 = vpop.f32.mrb[0].mxu0
        %v3774 = vadd.f32 %v3494, %v3773
        %v3775 = vpop.f32.mrb[0].mxu0
        %v3776 = vadd.f32 %v3490, %v3775
        %v3777 = vpop.f32.mrb[0].mxu0
        %v3778 = vadd.f32 %v3494, %v3777
        %3779 = vmatprep.mubr.bf16.mxu0 %v3406
        %3780 = vmatmul.mubr.bf16.gmra.mrb[0].mxu0 %v3405
        %v3781 = vpop.f32.mrb[0].mxu0
        %v3782 = vadd.f32 %v3490, %v3781
        %v3783 = vpop.f32.mrb[0].mxu0
        %v3784 = vadd.f32 %v3494, %v3783
        %v3785 = vpop.f32.mrb[0].mxu0
        %v3786 = vadd.f32 %v3490, %v3785
        %v3787 = vpop.f32.mrb[0].mxu0
        %v3788 = vadd.f32 %v3494, %v3787
        %3789 = vmatprep.mubr.bf16.mxu0 %v3408
        %3790 = vmatmul.mubr.bf16.gmra.mrb[0].mxu0 %v3407
        %v3791 = vpop.f32.mrb[0].mxu0
        %v3792 = vadd.f32 %v3490, %v3791
        %v3793 = vpop.f32.mrb[0].mxu0
        %v3794 = vadd.f32 %v3494, %v3793
        %v3795 = vpop.f32.mrb[0].mxu0
        %v3796 = vadd.f32 %v3490, %v3795
        %v3797 = vpop.f32.mrb[0].mxu0
        %v3798 = vadd.f32 %v3494, %v3797
        %3799 = vmatprep.mubr.bf16.mxu0 %v3410
        %3800 = vmatmul.mubr.bf16.gmra.mrb[0].mxu0 %v3409
        %v3801 = vpop.f32.mrb[0].mxu0
        %v3802 = vadd.f32 %v3490, %v3801
        %v3803 = vpop.f32.mrb[0].mxu0
        %v3804 = vadd.f32 %v3494, %v3803
        %v3805 = vpop.f32.mrb[0].mxu0
        %v3806 = vadd.f32 %v3490, %v3805
        %v3807 = vpop.f32.mrb[0].mxu0
        %v3808 = vadd.f32 %v3494, %v3807
        %3809 = vmatprep.mubr.bf16.mxu0 %v3412
        %3810 = vmatmul.mubr.bf16.gmra.mrb[0].mxu0 %v3411
        %v3811 = vpop.f32.mrb[0].mxu0
        %v3812 = vadd.f32 %v3490, %v3811
        %v3813 = vpop.f32.mrb[0].mxu0
        %v3814 = vadd.f32 %v3494, %v3813
        %v3815 = vpop.f32.mrb[0].mxu0
        %v3816 = vadd.f32 %v3490, %v3815
        %v3817 = vpop.f32.mrb[0].mxu0
        %v3818 = vadd.f32 %v3494, %v3817
        %3819 = vmatprep.mubr.bf16.mxu0 %v3414
        %3820 = vmatmul.mubr.bf16.gmra.mrb[0].mxu0 %v3413
        %v3821 = vpop.f32.mrb[0].mxu0
        %v3822 = vadd.f32 %v3490, %v3821
        %v3823 = vpop.f32.mrb[0].mxu0
        %v3824 = vadd.f32 %v3494, %v3823
        %v3825 = vpop.f32.mrb[0].mxu0
        %v3826 = vadd.f32 %v3490, %v3825
        %v3827 = vpop.f32.mrb[0].mxu0
        %v3828 = vadd.f32 %v3494, %v3827
        %3829 = vmatprep.mubr.bf16.mxu0 %v3416
        %3830 = vmatmul.mubr.bf16.gmra.mrb[0].mxu0 %v3415
        %v3831 = vpop.f32.mrb[0].mxu0
        %v3832 = vadd.f32 %v3490, %v3831
        %v3833 = vpop.f32.mrb[0].mxu0
        %v3834 = vadd.f32 %v3494, %v3833
        %v3835 = vpop.f32.mrb[0].mxu0
        %v3836 = vadd.f32 %v3490, %v3835
        %v3837 = vpop.f32.mrb[0].mxu0
        %v3838 = vadd.f32 %v3494, %v3837
        %3839 = vmatprep.mubr.bf16.mxu0 %v3418
        %3840 = vmatmul.mubr.bf16.gmra.mrb[0].mxu0 %v3417
        %v3841 = vpop.f32.mrb[0].mxu0
        %v3842 = vadd.f32 %v3490, %v3841
        %v3843 = vpop.f32.mrb[0].mxu0
        %v3844 = vadd.f32 %v3494, %v3843
        %v3845 = vpop.f32.mrb[0].mxu0
        %v3846 = vadd.f32 %v3490, %v3845
        %v3847 = vpop.f32.mrb[0].mxu0
        %v3848 = vadd.f32 %v3494, %v3847
        %3849 = vmatprep.mubr.bf16.mxu0 %v3420
        %3850 = vmatmul.mubr.bf16.gmra.mrb[0].mxu0 %v3419
        %v3851 = vpop.f32.mrb[0].mxu0
        %v3852 = vadd.f32 %v3490, %v3851
        %v3853 = vpop.f32.mrb[0].mxu0
        %v3854 = vadd.f32 %v3494, %v3853
        %v3855 = vpop.f32.mrb[0].mxu0
        %v3856 = vadd.f32 %v3490, %v3855
        %v3857 = vpop.f32.mrb[0].mxu0
        %v3858 = vadd.f32 %v3494, %v3857
        %3859 = vmatprep.mubr.bf16.mxu0 %v3422
        %3860 = vmatmul.mubr.bf16.gmra.mrb[0].mxu0 %v3421
        %v3861 = vpop.f32.mrb[0].mxu0
        %v3862 = vadd.f32 %v3490, %v3861
        %v3863 = vpop.f32.mrb[0].mxu0
        %v3864 = vadd.f32 %v3494, %v3863
        %v3865 = vpop.f32.mrb[0].mxu0
        %v3866 = vadd.f32 %v3490, %v3865
        %v3867 = vpop.f32.mrb[0].mxu0
        %v3868 = vadd.f32 %v3494, %v3867
        %3869 = vmatprep.mubr.bf16.mxu0 %v3424
        %3870 = vmatmul.mubr.bf16.gmra.mrb[0].mxu0 %v3423
        %v3871 = vpop.f32.mrb[0].mxu0
        %v3872 = vadd.f32 %v3490, %v3871
        %v3873 = vpop.f32.mrb[0].mxu0
        %v3874 = vadd.f32 %v3494, %v3873
        %v3875 = vpop.f32.mrb[0].mxu0
        %v3876 = vadd.f32 %v3490, %v3875
        %v3877 = vpop.f32.mrb[0].mxu0
        %v3878 = vadd.f32 %v3494, %v3877
        %3879 = vmatprep.mubr.bf16.mxu0 %v3426
        %3880 = vmatmul.mubr.bf16.gmra.mrb[0].mxu0 %v3425
        %v3881 = vpop.f32.mrb[0].mxu0
        %v3882 = vadd.f32 %v3490, %v3881
        %v3883 = vpop.f32.mrb[0].mxu0
        %v3884 = vadd.f32 %v3494, %v3883
        %v3885 = vpop.f32.mrb[0].mxu0
        %v3886 = vadd.f32 %v3490, %v3885
        %v3887 = vpop.f32.mrb[0].mxu0
        %v3888 = vadd.f32 %v3494, %v3887
        %3889 = vmatprep.mubr.bf16.mxu0 %v3428
        %3890 = vmatmul.mubr.bf16.gmra.mrb[0].mxu0 %v3427
        %v3891 = vpop.f32.mrb[0].mxu0
        %v3892 = vadd.f32 %v3490, %v3891
        %v3893 = vpop.f32.mrb[0].mxu0
        %v3894 = vadd.f32 %v3494, %v3893
        %v3895 = vpop.f32.mrb[0].mxu0
        %v3896 = vadd.f32 %v3490, %v3895
        %v3897 = vpop.f32.mrb[0].mxu0
        %v3898 = vadd.f32 %v3494, %v3897
        %3899 = vmatprep.mubr.bf16.mxu0 %v3430
        %3900 = vmatmul.mubr.bf16.gmra.mrb[0].mxu0 %v3429
        %v3901 = vpop.f32.mrb[0].mxu0
        %v3902 = vadd.f32 %v3490, %v3901
        %v3903 = vpop.f32.mrb[0].mxu0
        %v3904 = vadd.f32 %v3494, %v3903
        %v3905 = vpop.f32.mrb[0].mxu0
        %v3906 = vadd.f32 %v3490, %v3905
        %v3907 = vpop.f32.mrb[0].mxu0
        %v3908 = vadd.f32 %v3494, %v3907
        %3909 = vmatprep.mubr.bf16.mxu0 %v3432
        %3910 = vmatmul.mubr.bf16.gmra.mrb[0].mxu0 %v3431
        %v3911 = vpop.f32.mrb[0].mxu0
        %v3912 = vadd.f32 %v3490, %v3911
        %v3913 = vpop.f32.mrb[0].mxu0
        %v3914 = vadd.f32 %v3494, %v3913
        %v3915 = vpop.f32.mrb[0].mxu0
        %v3916 = vadd.f32 %v3490, %v3915
        %v3917 = vpop.f32.mrb[0].mxu0
        %v3918 = vadd.f32 %v3494, %v3917
        %3919 = vmatprep.mubr.bf16.mxu0 %v3434
        %3920 = vmatmul.mubr.bf16.gmra.mrb[0].mxu0 %v3433
        %v3921 = vpop.f32.mrb[0].mxu0
        %v3922 = vadd.f32 %v3490, %v3921
        %v3923 = vpop.f32.mrb[0].mxu0
        %v3924 = vadd.f32 %v3494, %v3923
        %v3925 = vpop.f32.mrb[0].mxu0
        %v3926 = vadd.f32 %v3490, %v3925
        %v3927 = vpop.f32.mrb[0].mxu0
        %v3928 = vadd.f32 %v3494, %v3927
        %3929 = vmatprep.mubr.bf16.mxu0 %v3436
        %3930 = vmatmul.mubr.bf16.gmra.mrb[0].mxu0 %v3435
        %v3931 = vpop.f32.mrb[0].mxu0
        %v3932 = vadd.f32 %v3490, %v3931
        %v3933 = vpop.f32.mrb[0].mxu0
        %v3934 = vadd.f32 %v3494, %v3933
        %v3935 = vpop.f32.mrb[0].mxu0
        %v3936 = vadd.f32 %v3490, %v3935
        %v3937 = vpop.f32.mrb[0].mxu0
        %v3938 = vadd.f32 %v3494, %v3937
        %3939 = vmatprep.mubr.bf16.mxu0 %v3438
        %3940 = vmatmul.mubr.bf16.gmra.mrb[0].mxu0 %v3437
        %v3941 = vpop.f32.mrb[0].mxu0
        %v3942 = vadd.f32 %v3490, %v3941
        %v3943 = vpop.f32.mrb[0].mxu0
        %v3944 = vadd.f32 %v3494, %v3943
        %v3945 = vpop.f32.mrb[0].mxu0
        %v3946 = vadd.f32 %v3490, %v3945
        %v3947 = vpop.f32.mrb[0].mxu0
        %v3948 = vadd.f32 %v3494, %v3947
        %3949 = vmatprep.mubr.bf16.mxu0 %v3440
        %3950 = vmatmul.mubr.bf16.gmra.mrb[0].mxu0 %v3439
        %v3951 = vpop.f32.mrb[0].mxu0
        %v3952 = vadd.f32 %v3490, %v3951
        %v3953 = vpop.f32.mrb[0].mxu0
        %v3954 = vadd.f32 %v3494, %v3953
        %v3955 = vpop.f32.mrb[0].mxu0
        %v3956 = vadd.f32 %v3490, %v3955
        %v3957 = vpop.f32.mrb[0].mxu0
        %v3958 = vadd.f32 %v3494, %v3957
        %3959 = vmatprep.mubr.bf16.mxu0 %v3442
        %3960 = vmatmul.mubr.bf16.gmra.mrb[0].mxu0 %v3441
        %v3961 = vpop.f32.mrb[0].mxu0
        %v3962 = vadd.f32 %v3490, %v3961
        %v3963 = vpop.f32.mrb[0].mxu0
        %v3964 = vadd.f32 %v3494, %v3963
        %v3965 = vpop.f32.mrb[0].mxu0
        %v3966 = vadd.f32 %v3490, %v3965
        %v3967 = vpop.f32.mrb[0].mxu0
        %v3968 = vadd.f32 %v3494, %v3967
        %3969 = vmatprep.mubr.bf16.mxu0 %v3444
        %3970 = vmatmul.mubr.bf16.gmra.mrb[0].mxu0 %v3443
        %v3971 = vpop.f32.mrb[0].mxu0
        %v3972 = vadd.f32 %v3490, %v3971
        %v3973 = vpop.f32.mrb[0].mxu0
        %v3974 = vadd.f32 %v3494, %v3973
        %v3975 = vpop.f32.mrb[0].mxu0
        %v3976 = vadd.f32 %v3490, %v3975
        %v3977 = vpop.f32.mrb[0].mxu0
        %v3978 = vadd.f32 %v3494, %v3977
        %3979 = vmatprep.mubr.bf16.mxu0 %v3446
        %3980 = vmatmul.mubr.bf16.gmra.mrb[0].mxu0 %v3445
        %v3981 = vpop.f32.mrb[0].mxu0
        %v3982 = vadd.f32 %v3490, %v3981
        %v3983 = vpop.f32.mrb[0].mxu0
        %v3984 = vadd.f32 %v3494, %v3983
        %v3985 = vpop.f32.mrb[0].mxu0
        %v3986 = vadd.f32 %v3490, %v3985
        %v3987 = vpop.f32.mrb[0].mxu0
        %v3988 = vadd.f32 %v3494, %v3987
        %3989 = vmatprep.mubr.bf16.mxu0 %v3448
        %3990 = vmatmul.mubr.bf16.gmra.mrb[0].mxu0 %v3447
        %v3991 = vpop.f32.mrb[0].mxu0
        %v3992 = vadd.f32 %v3490, %v3991
        %v3993 = vpop.f32.mrb[0].mxu0
        %v3994 = vadd.f32 %v3494, %v3993
        %v3995 = vpop.f32.mrb[0].mxu0
        %v3996 = vadd.f32 %v3490, %v3995
        %v3997 = vpop.f32.mrb[0].mxu0
        %v3998 = vadd.f32 %v3494, %v3997
        %3999 = vmatprep.mubr.bf16.mxu0 %v3450
        %4000 = vmatmul.mubr.bf16.gmra.mrb[0].mxu0 %v3449
        %v4001 = vpop.f32.mrb[0].mxu0
        %v4002 = vadd.f32 %v3490, %v4001
        %v4003 = vpop.f32.mrb[0].mxu0
        %v4004 = vadd.f32 %v3494, %v4003
        %v4005 = vpop.f32.mrb[0].mxu0
        %v4006 = vadd.f32 %v3490, %v4005
        %v4007 = vpop.f32.mrb[0].mxu0
        %v4008 = vadd.f32 %v3494, %v4007
        %4009 = vdwg.mxu0
        %v4010 = vmax.f32 %v3692, 0.0
        %v4011 = vmax.f32 %v3694, 0.0
        %v4012 = vmax.f32 %v3696, 0.0
        %v4013 = vmax.f32 %v3698, 0.0
        %v4014 = vmax.f32 %v3702, 0.0
        %v4015 = vmax.f32 %v3704, 0.0
        %v4016 = vmax.f32 %v3706, 0.0
        %v4017 = vmax.f32 %v3708, 0.0
        %v4018 = vmax.f32 %v3712, 0.0
        %v4019 = vmax.f32 %v3714, 0.0
        %v4020 = vmax.f32 %v3716, 0.0
        %v4021 = vmax.f32 %v3718, 0.0
        %v4022 = vmax.f32 %v3722, 0.0
        %v4023 = vmax.f32 %v3724, 0.0
        %v4024 = vmax.f32 %v3726, 0.0
        %v4025 = vmax.f32 %v3728, 0.0
        %v4026 = vmax.f32 %v3732, 0.0
        %v4027 = vmax.f32 %v3734, 0.0
        %v4028 = vmax.f32 %v3736, 0.0
        %v4029 = vmax.f32 %v3738, 0.0
        %v4030 = vmax.f32 %v3742, 0.0
        %v4031 = vmax.f32 %v3744, 0.0
        %v4032 = vmax.f32 %v3746, 0.0
        %v4033 = vmax.f32 %v3748, 0.0
        %v4034 = vmax.f32 %v3752, 0.0
        %v4035 = vmax.f32 %v3754, 0.0
        %v4036 = vmax.f32 %v3756, 0.0
        %v4037 = vmax.f32 %v3758, 0.0
        %v4038 = vmax.f32 %v3762, 0.0
        %v4039 = vmax.f32 %v3764, 0.0
        %v4040 = vmax.f32 %v3766, 0.0
        %v4041 = vmax.f32 %v3768, 0.0
        %v4042 = vmax.f32 %v3772, 0.0
        %v4043 = vmax.f32 %v3774, 0.0
        %v4044 = vmax.f32 %v3776, 0.0
        %v4045 = vmax.f32 %v3778, 0.0
        %v4046 = vmax.f32 %v3782, 0.0
        %v4047 = vmax.f32 %v3784, 0.0
        %v4048 = vmax.f32 %v3786, 0.0
        %v4049 = vmax.f32 %v3788, 0.0
        %v4050 = vmax.f32 %v3792, 0.0
        %v4051 = vmax.f32 %v3794, 0.0
        %v4052 = vmax.f32 %v3796, 0.0
        %v4053 = vmax.f32 %v3798, 0.0
        %v4054 = vmax.f32 %v3802, 0.0
        %v4055 = vmax.f32 %v3804, 0.0
        %v4056 = vmax.f32 %v3806, 0.0
        %v4057 = vmax.f32 %v3808, 0.0
        %v4058 = vmax.f32 %v3812, 0.0
        %v4059 = vmax.f32 %v3814, 0.0
        %v4060 = vmax.f32 %v3816, 0.0
        %v4061 = vmax.f32 %v3818, 0.0
        %v4062 = vmax.f32 %v3822, 0.0
        %v4063 = vmax.f32 %v3824, 0.0
        %v4064 = vmax.f32 %v3826, 0.0
        %v4065 = vmax.f32 %v3828, 0.0
        %v4066 = vmax.f32 %v3832, 0.0
        %v4067 = vmax.f32 %v3834, 0.0
        %v4068 = vmax.f32 %v3836, 0.0
        %v4069 = vmax.f32 %v3838, 0.0
        %v4070 = vmax.f32 %v3842, 0.0
        %v4071 = vmax.f32 %v3844, 0.0
        %v4072 = vmax.f32 %v3846, 0.0
        %v4073 = vmax.f32 %v3848, 0.0
        %v4074 = vmax.f32 %v3852, 0.0
        %v4075 = vmax.f32 %v3854, 0.0
        %v4076 = vmax.f32 %v3856, 0.0
        %v4077 = vmax.f32 %v3858, 0.0
        %v4078 = vmax.f32 %v3862, 0.0
        %v4079 = vmax.f32 %v3864, 0.0
        %v4080 = vmax.f32 %v3866, 0.0
        %v4081 = vmax.f32 %v3868, 0.0
        %v4082 = vmax.f32 %v3872, 0.0
        %v4083 = vmax.f32 %v3874, 0.0
        %v4084 = vmax.f32 %v3876, 0.0
        %v4085 = vmax.f32 %v3878, 0.0
        %v4086 = vmax.f32 %v3882, 0.0
        %v4087 = vmax.f32 %v3884, 0.0
        %v4088 = vmax.f32 %v3886, 0.0
        %v4089 = vmax.f32 %v3888, 0.0
        %v4090 = vmax.f32 %v3892, 0.0
        %v4091 = vmax.f32 %v3894, 0.0
        %v4092 = vmax.f32 %v3896, 0.0
        %v4093 = vmax.f32 %v3898, 0.0
        %v4094 = vmax.f32 %v3902, 0.0
        %v4095 = vmax.f32 %v3904, 0.0
        %v4096 = vmax.f32 %v3906, 0.0
        %v4097 = vmax.f32 %v3908, 0.0
        %v4098 = vmax.f32 %v3912, 0.0
        %v4099 = vmax.f32 %v3914, 0.0
        %v4100 = vmax.f32 %v3916, 0.0
        %v4101 = vmax.f32 %v3918, 0.0
        %v4102 = vmax.f32 %v3922, 0.0
        %v4103 = vmax.f32 %v3924, 0.0
        %v4104 = vmax.f32 %v3926, 0.0
        %v4105 = vmax.f32 %v3928, 0.0
        %v4106 = vmax.f32 %v3932, 0.0
        %v4107 = vmax.f32 %v3934, 0.0
        %v4108 = vmax.f32 %v3936, 0.0
        %v4109 = vmax.f32 %v3938, 0.0
        %v4110 = vmax.f32 %v3942, 0.0
        %v4111 = vmax.f32 %v3944, 0.0
        %v4112 = vmax.f32 %v3946, 0.0
        %v4113 = vmax.f32 %v3948, 0.0
        %v4114 = vmax.f32 %v3952, 0.0
        %v4115 = vmax.f32 %v3954, 0.0
        %v4116 = vmax.f32 %v3956, 0.0
        %v4117 = vmax.f32 %v3958, 0.0
        %v4118 = vmax.f32 %v3962, 0.0
        %v4119 = vmax.f32 %v3964, 0.0
        %v4120 = vmax.f32 %v3966, 0.0
        %v4121 = vmax.f32 %v3968, 0.0
        %v4122 = vmax.f32 %v3972, 0.0
        %v4123 = vmax.f32 %v3974, 0.0
        %v4124 = vmax.f32 %v3976, 0.0
        %v4125 = vmax.f32 %v3978, 0.0
        %v4126 = vmax.f32 %v3982, 0.0
        %v4127 = vmax.f32 %v3984, 0.0
        %v4128 = vmax.f32 %v3986, 0.0
        %v4129 = vmax.f32 %v3988, 0.0
        %v4130 = vmax.f32 %v3992, 0.0
        %v4131 = vmax.f32 %v3994, 0.0
        %v4132 = vmax.f32 %v3996, 0.0
        %v4133 = vmax.f32 %v3998, 0.0
        %v4134 = vmax.f32 %v4002, 0.0
        %v4135 = vmax.f32 %v4004, 0.0
        %v4136 = vmax.f32 %v4006, 0.0
        %v4137 = vmax.f32 %v4008, 0.0
        %s4138 = scalar_lea.vmem %s1, 8
        %v4139 = vld [vmem:[%s4138] sm:$0x77]
        %v4140 = vpack.c.bf16 %v4012, %v4010
        %v4141 = vpack.c.bf16 %v4013, %v4011
        %v4142 = vpack.c.bf16 %v4016, %v4014
        %v4143 = vpack.c.bf16 %v4017, %v4015
        %v4144 = vpack.c.bf16 %v4020, %v4018
        %v4145 = vpack.c.bf16 %v4021, %v4019
        %v4146 = vpack.c.bf16 %v4024, %v4022
        %v4147 = vpack.c.bf16 %v4025, %v4023
        %v4148 = vpack.c.bf16 %v4028, %v4026
        %v4149 = vpack.c.bf16 %v4029, %v4027
        %v4150 = vpack.c.bf16 %v4032, %v4030
        %v4151 = vpack.c.bf16 %v4033, %v4031
        %v4152 = vpack.c.bf16 %v4036, %v4034
        %v4153 = vpack.c.bf16 %v4037, %v4035
        %v4154 = vpack.c.bf16 %v4040, %v4038
        %v4155 = vpack.c.bf16 %v4041, %v4039
        %v4156 = vpack.c.bf16 %v4044, %v4042
        %v4157 = vpack.c.bf16 %v4045, %v4043
        %v4158 = vpack.c.bf16 %v4048, %v4046
        %v4159 = vpack.c.bf16 %v4049, %v4047
        %v4160 = vpack.c.bf16 %v4052, %v4050
        %v4161 = vpack.c.bf16 %v4053, %v4051
        %v4162 = vpack.c.bf16 %v4056, %v4054
        %v4163 = vpack.c.bf16 %v4057, %v4055
        %v4164 = vpack.c.bf16 %v4060, %v4058
        %v4165 = vpack.c.bf16 %v4061, %v4059
        %v4166 = vpack.c.bf16 %v4064, %v4062
        %v4167 = vpack.c.bf16 %v4065, %v4063
        %v4168 = vpack.c.bf16 %v4068, %v4066
        %v4169 = vpack.c.bf16 %v4069, %v4067
        %v4170 = vpack.c.bf16 %v4072, %v4070
        %v4171 = vpack.c.bf16 %v4073, %v4071
        %v4172 = vpack.c.bf16 %v4076, %v4074
        %v4173 = vpack.c.bf16 %v4077, %v4075
        %v4174 = vpack.c.bf16 %v4080, %v4078
        %v4175 = vpack.c.bf16 %v4081, %v4079
        %v4176 = vpack.c.bf16 %v4084, %v4082
        %v4177 = vpack.c.bf16 %v4085, %v4083
        %v4178 = vpack.c.bf16 %v4088, %v4086
        %v4179 = vpack.c.bf16 %v4089, %v4087
        %v4180 = vpack.c.bf16 %v4092, %v4090
        %v4181 = vpack.c.bf16 %v4093, %v4091
        %v4182 = vpack.c.bf16 %v4096, %v4094
        %v4183 = vpack.c.bf16 %v4097, %v4095
        %v4184 = vpack.c.bf16 %v4100, %v4098
        %v4185 = vpack.c.bf16 %v4101, %v4099
        %v4186 = vpack.c.bf16 %v4104, %v4102
        %v4187 = vpack.c.bf16 %v4105, %v4103
        %v4188 = vpack.c.bf16 %v4108, %v4106
        %v4189 = vpack.c.bf16 %v4109, %v4107
        %v4190 = vpack.c.bf16 %v4112, %v4110
        %v4191 = vpack.c.bf16 %v4113, %v4111
        %v4192 = vpack.c.bf16 %v4116, %v4114
        %v4193 = vpack.c.bf16 %v4117, %v4115
        %v4194 = vpack.c.bf16 %v4120, %v4118
        %v4195 = vpack.c.bf16 %v4121, %v4119
        %v4196 = vpack.c.bf16 %v4124, %v4122
        %v4197 = vpack.c.bf16 %v4125, %v4123
        %v4198 = vpack.c.bf16 %v4128, %v4126
        %v4199 = vpack.c.bf16 %v4129, %v4127
        %v4200 = vpack.c.bf16 %v4132, %v4130
        %v4201 = vpack.c.bf16 %v4133, %v4131
        %v4202 = vpack.c.bf16 %v4136, %v4134
        %v4203 = vpack.c.bf16 %v4137, %v4135
        %s4204 = scalar_lea.vmem [#allocation2], 1024
        %v4205 = vld [vmem:[%s4204] sm:$0xff]
        %v4206 = vld [vmem:[%s4204 + $0x8] sm:$0xff]
        %v4207 = vld [vmem:[%s4204 + $0x10] sm:$0xff]
        %v4208 = vld [vmem:[%s4204 + $0x18] sm:$0xff]
        %v4209 = vld [vmem:[%s4204 + $0x20] sm:$0xff]
        %v4210 = vld [vmem:[%s4204 + $0x28] sm:$0xff]
        %v4211 = vld [vmem:[%s4204 + $0x30] sm:$0xff]
        %v4212 = vld [vmem:[%s4204 + $0x38] sm:$0xff]
        %v4213 = vld [vmem:[%s4204 + $0x40] sm:$0xff]
        %v4214 = vld [vmem:[%s4204 + $0x48] sm:$0xff]
        %v4215 = vld [vmem:[%s4204 + $0x50] sm:$0xff]
        %v4216 = vld [vmem:[%s4204 + $0x58] sm:$0xff]
        %v4217 = vld [vmem:[%s4204 + $0x60] sm:$0xff]
        %v4218 = vld [vmem:[%s4204 + $0x68] sm:$0xff]
        %v4219 = vld [vmem:[%s4204 + $0x70] sm:$0xff]
        %v4220 = vld [vmem:[%s4204 + $0x78] sm:$0xff]
        %v4221 = vld [vmem:[%s4204 + $0x80] sm:$0xff]
        %v4222 = vld [vmem:[%s4204 + $0x88] sm:$0xff]
        %v4223 = vld [vmem:[%s4204 + $0x90] sm:$0xff]
        %v4224 = vld [vmem:[%s4204 + $0x98] sm:$0xff]
        %v4225 = vld [vmem:[%s4204 + $0xa0] sm:$0xff]
        %v4226 = vld [vmem:[%s4204 + $0xa8] sm:$0xff]
        %v4227 = vld [vmem:[%s4204 + $0xb0] sm:$0xff]
        %v4228 = vld [vmem:[%s4204 + $0xb8] sm:$0xff]
        %v4229 = vld [vmem:[%s4204 + $0xc0] sm:$0xff]
        %v4230 = vld [vmem:[%s4204 + $0xc8] sm:$0xff]
        %v4231 = vld [vmem:[%s4204 + $0xd0] sm:$0xff]
        %v4232 = vld [vmem:[%s4204 + $0xd8] sm:$0xff]
        %v4233 = vld [vmem:[%s4204 + $0xe0] sm:$0xff]
        %v4234 = vld [vmem:[%s4204 + $0xe8] sm:$0xff]
        %v4235 = vld [vmem:[%s4204 + $0xf0] sm:$0xff]
        %v4236 = vld [vmem:[%s4204 + $0xf8] sm:$0xff]
        %v4269 = vunpack.c.l.b16 %v4205
        %v4270 = vunpack.c.h.b16 %v4205
        %v4271 = vunpack.c.l.b16 %v4206
        %v4272 = vunpack.c.h.b16 %v4206
        %v4273 = vunpack.c.l.b16 %v4207
        %v4274 = vunpack.c.h.b16 %v4207
        %v4275 = vunpack.c.l.b16 %v4208
        %v4276 = vunpack.c.h.b16 %v4208
        %v4277 = vunpack.c.l.b16 %v4209
        %v4278 = vunpack.c.h.b16 %v4209
        %v4279 = vunpack.c.l.b16 %v4210
        %v4280 = vunpack.c.h.b16 %v4210
        %v4281 = vunpack.c.l.b16 %v4211
        %v4282 = vunpack.c.h.b16 %v4211
        %v4283 = vunpack.c.l.b16 %v4212
        %v4284 = vunpack.c.h.b16 %v4212
        %v4285 = vunpack.c.l.b16 %v4213
        %v4286 = vunpack.c.h.b16 %v4213
        %v4287 = vunpack.c.l.b16 %v4214
        %v4288 = vunpack.c.h.b16 %v4214
        %v4289 = vunpack.c.l.b16 %v4215
        %v4290 = vunpack.c.h.b16 %v4215
        %v4291 = vunpack.c.l.b16 %v4216
        %v4292 = vunpack.c.h.b16 %v4216
        %v4293 = vunpack.c.l.b16 %v4217
        %v4294 = vunpack.c.h.b16 %v4217
        %v4295 = vunpack.c.l.b16 %v4218
        %v4296 = vunpack.c.h.b16 %v4218
        %v4297 = vunpack.c.l.b16 %v4219
        %v4298 = vunpack.c.h.b16 %v4219
        %v4299 = vunpack.c.l.b16 %v4220
        %v4300 = vunpack.c.h.b16 %v4220
        %v4301 = vunpack.c.l.b16 %v4221
        %v4302 = vunpack.c.h.b16 %v4221
        %v4303 = vunpack.c.l.b16 %v4222
        %v4304 = vunpack.c.h.b16 %v4222
        %v4305 = vunpack.c.l.b16 %v4223
        %v4306 = vunpack.c.h.b16 %v4223
        %v4307 = vunpack.c.l.b16 %v4224
        %v4308 = vunpack.c.h.b16 %v4224
        %v4309 = vunpack.c.l.b16 %v4225
        %v4310 = vunpack.c.h.b16 %v4225
        %v4311 = vunpack.c.l.b16 %v4226
        %v4312 = vunpack.c.h.b16 %v4226
        %v4313 = vunpack.c.l.b16 %v4227
        %v4314 = vunpack.c.h.b16 %v4227
        %v4315 = vunpack.c.l.b16 %v4228
        %v4316 = vunpack.c.h.b16 %v4228
        %v4317 = vunpack.c.l.b16 %v4229
        %v4318 = vunpack.c.h.b16 %v4229
        %v4319 = vunpack.c.l.b16 %v4230
        %v4320 = vunpack.c.h.b16 %v4230
        %v4321 = vunpack.c.l.b16 %v4231
        %v4322 = vunpack.c.h.b16 %v4231
        %v4323 = vunpack.c.l.b16 %v4232
        %v4324 = vunpack.c.h.b16 %v4232
        %v4325 = vunpack.c.l.b16 %v4233
        %v4326 = vunpack.c.h.b16 %v4233
        %v4327 = vunpack.c.l.b16 %v4234
        %v4328 = vunpack.c.h.b16 %v4234
        %v4329 = vunpack.c.l.b16 %v4235
        %v4330 = vunpack.c.h.b16 %v4235
        %v4331 = vunpack.c.l.b16 %v4236
        %v4332 = vunpack.c.h.b16 %v4236
        %v4333 = vpack.c.b16 %v4271, %v4269
        %v4334 = vpack.c.b16 %v4272, %v4270
        %v4335 = vpack.c.b16 %v4275, %v4273
        %v4336 = vpack.c.b16 %v4276, %v4274
        %v4337 = vpack.c.b16 %v4279, %v4277
        %v4338 = vpack.c.b16 %v4280, %v4278
        %v4339 = vpack.c.b16 %v4283, %v4281
        %v4340 = vpack.c.b16 %v4284, %v4282
        %v4341 = vpack.c.b16 %v4287, %v4285
        %v4342 = vpack.c.b16 %v4288, %v4286
        %v4343 = vpack.c.b16 %v4291, %v4289
        %v4344 = vpack.c.b16 %v4292, %v4290
        %v4345 = vpack.c.b16 %v4295, %v4293
        %v4346 = vpack.c.b16 %v4296, %v4294
        %v4347 = vpack.c.b16 %v4299, %v4297
        %v4348 = vpack.c.b16 %v4300, %v4298
        %v4349 = vpack.c.b16 %v4303, %v4301
        %v4350 = vpack.c.b16 %v4304, %v4302
        %v4351 = vpack.c.b16 %v4307, %v4305
        %v4352 = vpack.c.b16 %v4308, %v4306
        %v4353 = vpack.c.b16 %v4311, %v4309
        %v4354 = vpack.c.b16 %v4312, %v4310
        %v4355 = vpack.c.b16 %v4315, %v4313
        %v4356 = vpack.c.b16 %v4316, %v4314
        %v4357 = vpack.c.b16 %v4319, %v4317
        %v4358 = vpack.c.b16 %v4320, %v4318
        %v4359 = vpack.c.b16 %v4323, %v4321
        %v4360 = vpack.c.b16 %v4324, %v4322
        %v4361 = vpack.c.b16 %v4327, %v4325
        %v4362 = vpack.c.b16 %v4328, %v4326
        %v4363 = vpack.c.b16 %v4331, %v4329
        %v4364 = vpack.c.b16 %v4332, %v4330
        %4397 = vmatprep.subr.bf16.mxu0 %v4334
        %4398 = vmatpush1.bf16.msra.mxu0 %v4333
        %4399 = vmatprep.subr.bf16.mxu0 %v4336
        %4400 = vmatpush1.bf16.msra.mxu0 %v4335
        %4401 = vmatprep.subr.bf16.mxu0 %v4338
        %4402 = vmatpush1.bf16.msra.mxu0 %v4337
        %4403 = vmatprep.subr.bf16.mxu0 %v4340
        %4404 = vmatpush1.bf16.msra.mxu0 %v4339
        %4405 = vmatprep.subr.bf16.mxu0 %v4342
        %4406 = vmatpush1.bf16.msra.mxu0 %v4341
        %4407 = vmatprep.subr.bf16.mxu0 %v4344
        %4408 = vmatpush1.bf16.msra.mxu0 %v4343
        %4409 = vmatprep.subr.bf16.mxu0 %v4346
        %4410 = vmatpush1.bf16.msra.mxu0 %v4345
        %4411 = vmatprep.subr.bf16.mxu0 %v4348
        %4412 = vmatpush1.bf16.msra.mxu0 %v4347
        %4413 = vmatprep.subr.bf16.mxu0 %v4350
        %4414 = vmatpush1.bf16.msra.mxu0 %v4349
        %4415 = vmatprep.subr.bf16.mxu0 %v4352
        %4416 = vmatpush1.bf16.msra.mxu0 %v4351
        %4417 = vmatprep.subr.bf16.mxu0 %v4354
        %4418 = vmatpush1.bf16.msra.mxu0 %v4353
        %4419 = vmatprep.subr.bf16.mxu0 %v4356
        %4420 = vmatpush1.bf16.msra.mxu0 %v4355
        %4421 = vmatprep.subr.bf16.mxu0 %v4358
        %4422 = vmatpush1.bf16.msra.mxu0 %v4357
        %4423 = vmatprep.subr.bf16.mxu0 %v4360
        %4424 = vmatpush1.bf16.msra.mxu0 %v4359
        %4425 = vmatprep.subr.bf16.mxu0 %v4362
        %4426 = vmatpush1.bf16.msra.mxu0 %v4361
        %4427 = vmatprep.subr.bf16.mxu0 %v4364
        %4428 = vmatpush1.bf16.msra.mxu0 %v4363
        %4429 = vmatprep.mubr.bf16.mxu0 %v4141
        %4430 = vmatmul.mubr.bf16.gmra.mrb[0].mxu0 %v4140
        %v4431 = vpop.f32.mrb[0].mxu0
        %v4432 = vadd.f32 0.0, %v4431
        %v4433 = vpop.f32.mrb[0].mxu0
        %v4434 = vadd.f32 0.0, %v4433
        %v4435 = vpop.f32.mrb[0].mxu0
        %v4436 = vadd.f32 0.0, %v4435
        %v4437 = vpop.f32.mrb[0].mxu0
        %v4438 = vadd.f32 0.0, %v4437
        %4439 = vmatprep.mubr.bf16.mxu0 %v4143
        %4440 = vmatmul.mubr.bf16.gmra.mrb[0].mxu0 %v4142
        %v4441 = vpop.f32.mrb[0].mxu0
        %v4442 = vadd.f32 0.0, %v4441
        %v4443 = vpop.f32.mrb[0].mxu0
        %v4444 = vadd.f32 0.0, %v4443
        %v4445 = vpop.f32.mrb[0].mxu0
        %v4446 = vadd.f32 0.0, %v4445
        %v4447 = vpop.f32.mrb[0].mxu0
        %v4448 = vadd.f32 0.0, %v4447
        %4449 = vmatprep.mubr.bf16.mxu0 %v4145
        %4450 = vmatmul.mubr.bf16.gmra.mrb[0].mxu0 %v4144
        %v4451 = vpop.f32.mrb[0].mxu0
        %v4452 = vadd.f32 0.0, %v4451
        %v4453 = vpop.f32.mrb[0].mxu0
        %v4454 = vadd.f32 0.0, %v4453
        %v4455 = vpop.f32.mrb[0].mxu0
        %v4456 = vadd.f32 0.0, %v4455
        %v4457 = vpop.f32.mrb[0].mxu0
        %v4458 = vadd.f32 0.0, %v4457
        %4459 = vmatprep.mubr.bf16.mxu0 %v4147
        %4460 = vmatmul.mubr.bf16.gmra.mrb[0].mxu0 %v4146
        %v4461 = vpop.f32.mrb[0].mxu0
        %v4462 = vadd.f32 0.0, %v4461
        %v4463 = vpop.f32.mrb[0].mxu0
        %v4464 = vadd.f32 0.0, %v4463
        %v4465 = vpop.f32.mrb[0].mxu0
        %v4466 = vadd.f32 0.0, %v4465
        %v4467 = vpop.f32.mrb[0].mxu0
        %v4468 = vadd.f32 0.0, %v4467
        %4469 = vmatprep.mubr.bf16.mxu0 %v4149
        %4470 = vmatmul.mubr.bf16.gmra.mrb[0].mxu0 %v4148
        %v4471 = vpop.f32.mrb[0].mxu0
        %v4472 = vadd.f32 0.0, %v4471
        %v4473 = vpop.f32.mrb[0].mxu0
        %v4474 = vadd.f32 0.0, %v4473
        %v4475 = vpop.f32.mrb[0].mxu0
        %v4476 = vadd.f32 0.0, %v4475
        %v4477 = vpop.f32.mrb[0].mxu0
        %v4478 = vadd.f32 0.0, %v4477
        %4479 = vmatprep.mubr.bf16.mxu0 %v4151
        %4480 = vmatmul.mubr.bf16.gmra.mrb[0].mxu0 %v4150
        %v4481 = vpop.f32.mrb[0].mxu0
        %v4482 = vadd.f32 0.0, %v4481
        %v4483 = vpop.f32.mrb[0].mxu0
        %v4484 = vadd.f32 0.0, %v4483
        %v4485 = vpop.f32.mrb[0].mxu0
        %v4486 = vadd.f32 0.0, %v4485
        %v4487 = vpop.f32.mrb[0].mxu0
        %v4488 = vadd.f32 0.0, %v4487
        %4489 = vmatprep.mubr.bf16.mxu0 %v4153
        %4490 = vmatmul.mubr.bf16.gmra.mrb[0].mxu0 %v4152
        %v4491 = vpop.f32.mrb[0].mxu0
        %v4492 = vadd.f32 0.0, %v4491
        %v4493 = vpop.f32.mrb[0].mxu0
        %v4494 = vadd.f32 0.0, %v4493
        %v4495 = vpop.f32.mrb[0].mxu0
        %v4496 = vadd.f32 0.0, %v4495
        %v4497 = vpop.f32.mrb[0].mxu0
        %v4498 = vadd.f32 0.0, %v4497
        %4499 = vmatprep.mubr.bf16.mxu0 %v4155
        %4500 = vmatmul.mubr.bf16.gmra.mrb[0].mxu0 %v4154
        %v4501 = vpop.f32.mrb[0].mxu0
        %v4502 = vadd.f32 0.0, %v4501
        %v4503 = vpop.f32.mrb[0].mxu0
        %v4504 = vadd.f32 0.0, %v4503
        %v4505 = vpop.f32.mrb[0].mxu0
        %v4506 = vadd.f32 0.0, %v4505
        %v4507 = vpop.f32.mrb[0].mxu0
        %v4508 = vadd.f32 0.0, %v4507
        %4509 = vmatprep.mubr.bf16.mxu0 %v4157
        %4510 = vmatmul.mubr.bf16.gmra.mrb[0].mxu0 %v4156
        %v4511 = vpop.f32.mrb[0].mxu0
        %v4512 = vadd.f32 0.0, %v4511
        %v4513 = vpop.f32.mrb[0].mxu0
        %v4514 = vadd.f32 0.0, %v4513
        %v4515 = vpop.f32.mrb[0].mxu0
        %v4516 = vadd.f32 0.0, %v4515
        %v4517 = vpop.f32.mrb[0].mxu0
        %v4518 = vadd.f32 0.0, %v4517
        %4519 = vmatprep.mubr.bf16.mxu0 %v4159
        %4520 = vmatmul.mubr.bf16.gmra.mrb[0].mxu0 %v4158
        %v4521 = vpop.f32.mrb[0].mxu0
        %v4522 = vadd.f32 0.0, %v4521
        %v4523 = vpop.f32.mrb[0].mxu0
        %v4524 = vadd.f32 0.0, %v4523
        %v4525 = vpop.f32.mrb[0].mxu0
        %v4526 = vadd.f32 0.0, %v4525
        %v4527 = vpop.f32.mrb[0].mxu0
        %v4528 = vadd.f32 0.0, %v4527
        %4529 = vmatprep.mubr.bf16.mxu0 %v4161
        %4530 = vmatmul.mubr.bf16.gmra.mrb[0].mxu0 %v4160
        %v4531 = vpop.f32.mrb[0].mxu0
        %v4532 = vadd.f32 0.0, %v4531
        %v4533 = vpop.f32.mrb[0].mxu0
        %v4534 = vadd.f32 0.0, %v4533
        %v4535 = vpop.f32.mrb[0].mxu0
        %v4536 = vadd.f32 0.0, %v4535
        %v4537 = vpop.f32.mrb[0].mxu0
        %v4538 = vadd.f32 0.0, %v4537
        %4539 = vmatprep.mubr.bf16.mxu0 %v4163
        %4540 = vmatmul.mubr.bf16.gmra.mrb[0].mxu0 %v4162
        %v4541 = vpop.f32.mrb[0].mxu0
        %v4542 = vadd.f32 0.0, %v4541
        %v4543 = vpop.f32.mrb[0].mxu0
        %v4544 = vadd.f32 0.0, %v4543
        %v4545 = vpop.f32.mrb[0].mxu0
        %v4546 = vadd.f32 0.0, %v4545
        %v4547 = vpop.f32.mrb[0].mxu0
        %v4548 = vadd.f32 0.0, %v4547
        %4549 = vmatprep.mubr.bf16.mxu0 %v4165
        %4550 = vmatmul.mubr.bf16.gmra.mrb[0].mxu0 %v4164
        %v4551 = vpop.f32.mrb[0].mxu0
        %v4552 = vadd.f32 0.0, %v4551
        %v4553 = vpop.f32.mrb[0].mxu0
        %v4554 = vadd.f32 0.0, %v4553
        %v4555 = vpop.f32.mrb[0].mxu0
        %v4556 = vadd.f32 0.0, %v4555
        %v4557 = vpop.f32.mrb[0].mxu0
        %v4558 = vadd.f32 0.0, %v4557
        %4559 = vmatprep.mubr.bf16.mxu0 %v4167
        %4560 = vmatmul.mubr.bf16.gmra.mrb[0].mxu0 %v4166
        %v4561 = vpop.f32.mrb[0].mxu0
        %v4562 = vadd.f32 0.0, %v4561
        %v4563 = vpop.f32.mrb[0].mxu0
        %v4564 = vadd.f32 0.0, %v4563
        %v4565 = vpop.f32.mrb[0].mxu0
        %v4566 = vadd.f32 0.0, %v4565
        %v4567 = vpop.f32.mrb[0].mxu0
        %v4568 = vadd.f32 0.0, %v4567
        %4569 = vmatprep.mubr.bf16.mxu0 %v4169
        %4570 = vmatmul.mubr.bf16.gmra.mrb[0].mxu0 %v4168
        %v4571 = vpop.f32.mrb[0].mxu0
        %v4572 = vadd.f32 0.0, %v4571
        %v4573 = vpop.f32.mrb[0].mxu0
        %v4574 = vadd.f32 0.0, %v4573
        %v4575 = vpop.f32.mrb[0].mxu0
        %v4576 = vadd.f32 0.0, %v4575
        %v4577 = vpop.f32.mrb[0].mxu0
        %v4578 = vadd.f32 0.0, %v4577
        %4579 = vmatprep.mubr.bf16.mxu0 %v4171
        %4580 = vmatmul.mubr.bf16.gmra.mrb[0].mxu0 %v4170
        %v4581 = vpop.f32.mrb[0].mxu0
        %v4582 = vadd.f32 0.0, %v4581
        %v4583 = vpop.f32.mrb[0].mxu0
        %v4584 = vadd.f32 0.0, %v4583
        %v4585 = vpop.f32.mrb[0].mxu0
        %v4586 = vadd.f32 0.0, %v4585
        %v4587 = vpop.f32.mrb[0].mxu0
        %v4588 = vadd.f32 0.0, %v4587
        %4589 = vmatprep.mubr.bf16.mxu0 %v4173
        %4590 = vmatmul.mubr.bf16.gmra.mrb[0].mxu0 %v4172
        %v4591 = vpop.f32.mrb[0].mxu0
        %v4592 = vadd.f32 0.0, %v4591
        %v4593 = vpop.f32.mrb[0].mxu0
        %v4594 = vadd.f32 0.0, %v4593
        %v4595 = vpop.f32.mrb[0].mxu0
        %v4596 = vadd.f32 0.0, %v4595
        %v4597 = vpop.f32.mrb[0].mxu0
        %v4598 = vadd.f32 0.0, %v4597
        %4599 = vmatprep.mubr.bf16.mxu0 %v4175
        %4600 = vmatmul.mubr.bf16.gmra.mrb[0].mxu0 %v4174
        %v4601 = vpop.f32.mrb[0].mxu0
        %v4602 = vadd.f32 0.0, %v4601
        %v4603 = vpop.f32.mrb[0].mxu0
        %v4604 = vadd.f32 0.0, %v4603
        %v4605 = vpop.f32.mrb[0].mxu0
        %v4606 = vadd.f32 0.0, %v4605
        %v4607 = vpop.f32.mrb[0].mxu0
        %v4608 = vadd.f32 0.0, %v4607
        %4609 = vmatprep.mubr.bf16.mxu0 %v4177
        %4610 = vmatmul.mubr.bf16.gmra.mrb[0].mxu0 %v4176
        %v4611 = vpop.f32.mrb[0].mxu0
        %v4612 = vadd.f32 0.0, %v4611
        %v4613 = vpop.f32.mrb[0].mxu0
        %v4614 = vadd.f32 0.0, %v4613
        %v4615 = vpop.f32.mrb[0].mxu0
        %v4616 = vadd.f32 0.0, %v4615
        %v4617 = vpop.f32.mrb[0].mxu0
        %v4618 = vadd.f32 0.0, %v4617
        %4619 = vmatprep.mubr.bf16.mxu0 %v4179
        %4620 = vmatmul.mubr.bf16.gmra.mrb[0].mxu0 %v4178
        %v4621 = vpop.f32.mrb[0].mxu0
        %v4622 = vadd.f32 0.0, %v4621
        %v4623 = vpop.f32.mrb[0].mxu0
        %v4624 = vadd.f32 0.0, %v4623
        %v4625 = vpop.f32.mrb[0].mxu0
        %v4626 = vadd.f32 0.0, %v4625
        %v4627 = vpop.f32.mrb[0].mxu0
        %v4628 = vadd.f32 0.0, %v4627
        %4629 = vmatprep.mubr.bf16.mxu0 %v4181
        %4630 = vmatmul.mubr.bf16.gmra.mrb[0].mxu0 %v4180
        %v4631 = vpop.f32.mrb[0].mxu0
        %v4632 = vadd.f32 0.0, %v4631
        %v4633 = vpop.f32.mrb[0].mxu0
        %v4634 = vadd.f32 0.0, %v4633
        %v4635 = vpop.f32.mrb[0].mxu0
        %v4636 = vadd.f32 0.0, %v4635
        %v4637 = vpop.f32.mrb[0].mxu0
        %v4638 = vadd.f32 0.0, %v4637
        %4639 = vmatprep.mubr.bf16.mxu0 %v4183
        %4640 = vmatmul.mubr.bf16.gmra.mrb[0].mxu0 %v4182
        %v4641 = vpop.f32.mrb[0].mxu0
        %v4642 = vadd.f32 0.0, %v4641
        %v4643 = vpop.f32.mrb[0].mxu0
        %v4644 = vadd.f32 0.0, %v4643
        %v4645 = vpop.f32.mrb[0].mxu0
        %v4646 = vadd.f32 0.0, %v4645
        %v4647 = vpop.f32.mrb[0].mxu0
        %v4648 = vadd.f32 0.0, %v4647
        %4649 = vmatprep.mubr.bf16.mxu0 %v4185
        %4650 = vmatmul.mubr.bf16.gmra.mrb[0].mxu0 %v4184
        %v4651 = vpop.f32.mrb[0].mxu0
        %v4652 = vadd.f32 0.0, %v4651
        %v4653 = vpop.f32.mrb[0].mxu0
        %v4654 = vadd.f32 0.0, %v4653
        %v4655 = vpop.f32.mrb[0].mxu0
        %v4656 = vadd.f32 0.0, %v4655
        %v4657 = vpop.f32.mrb[0].mxu0
        %v4658 = vadd.f32 0.0, %v4657
        %4659 = vmatprep.mubr.bf16.mxu0 %v4187
        %4660 = vmatmul.mubr.bf16.gmra.mrb[0].mxu0 %v4186
        %v4661 = vpop.f32.mrb[0].mxu0
        %v4662 = vadd.f32 0.0, %v4661
        %v4663 = vpop.f32.mrb[0].mxu0
        %v4664 = vadd.f32 0.0, %v4663
        %v4665 = vpop.f32.mrb[0].mxu0
        %v4666 = vadd.f32 0.0, %v4665
        %v4667 = vpop.f32.mrb[0].mxu0
        %v4668 = vadd.f32 0.0, %v4667
        %4669 = vmatprep.mubr.bf16.mxu0 %v4189
        %4670 = vmatmul.mubr.bf16.gmra.mrb[0].mxu0 %v4188
        %v4671 = vpop.f32.mrb[0].mxu0
        %v4672 = vadd.f32 0.0, %v4671
        %v4673 = vpop.f32.mrb[0].mxu0
        %v4674 = vadd.f32 0.0, %v4673
        %v4675 = vpop.f32.mrb[0].mxu0
        %v4676 = vadd.f32 0.0, %v4675
        %v4677 = vpop.f32.mrb[0].mxu0
        %v4678 = vadd.f32 0.0, %v4677
        %4679 = vmatprep.mubr.bf16.mxu0 %v4191
        %4680 = vmatmul.mubr.bf16.gmra.mrb[0].mxu0 %v4190
        %v4681 = vpop.f32.mrb[0].mxu0
        %v4682 = vadd.f32 0.0, %v4681
        %v4683 = vpop.f32.mrb[0].mxu0
        %v4684 = vadd.f32 0.0, %v4683
        %v4685 = vpop.f32.mrb[0].mxu0
        %v4686 = vadd.f32 0.0, %v4685
        %v4687 = vpop.f32.mrb[0].mxu0
        %v4688 = vadd.f32 0.0, %v4687
        %4689 = vmatprep.mubr.bf16.mxu0 %v4193
        %4690 = vmatmul.mubr.bf16.gmra.mrb[0].mxu0 %v4192
        %v4691 = vpop.f32.mrb[0].mxu0
        %v4692 = vadd.f32 0.0, %v4691
        %v4693 = vpop.f32.mrb[0].mxu0
        %v4694 = vadd.f32 0.0, %v4693
        %v4695 = vpop.f32.mrb[0].mxu0
        %v4696 = vadd.f32 0.0, %v4695
        %v4697 = vpop.f32.mrb[0].mxu0
        %v4698 = vadd.f32 0.0, %v4697
        %4699 = vmatprep.mubr.bf16.mxu0 %v4195
        %4700 = vmatmul.mubr.bf16.gmra.mrb[0].mxu0 %v4194
        %v4701 = vpop.f32.mrb[0].mxu0
        %v4702 = vadd.f32 0.0, %v4701
        %v4703 = vpop.f32.mrb[0].mxu0
        %v4704 = vadd.f32 0.0, %v4703
        %v4705 = vpop.f32.mrb[0].mxu0
        %v4706 = vadd.f32 0.0, %v4705
        %v4707 = vpop.f32.mrb[0].mxu0
        %v4708 = vadd.f32 0.0, %v4707
        %4709 = vmatprep.mubr.bf16.mxu0 %v4197
        %4710 = vmatmul.mubr.bf16.gmra.mrb[0].mxu0 %v4196
        %v4711 = vpop.f32.mrb[0].mxu0
        %v4712 = vadd.f32 0.0, %v4711
        %v4713 = vpop.f32.mrb[0].mxu0
        %v4714 = vadd.f32 0.0, %v4713
        %v4715 = vpop.f32.mrb[0].mxu0
        %v4716 = vadd.f32 0.0, %v4715
        %v4717 = vpop.f32.mrb[0].mxu0
        %v4718 = vadd.f32 0.0, %v4717
        %4719 = vmatprep.mubr.bf16.mxu0 %v4199
        %4720 = vmatmul.mubr.bf16.gmra.mrb[0].mxu0 %v4198
        %v4721 = vpop.f32.mrb[0].mxu0
        %v4722 = vadd.f32 0.0, %v4721
        %v4723 = vpop.f32.mrb[0].mxu0
        %v4724 = vadd.f32 0.0, %v4723
        %v4725 = vpop.f32.mrb[0].mxu0
        %v4726 = vadd.f32 0.0, %v4725
        %v4727 = vpop.f32.mrb[0].mxu0
        %v4728 = vadd.f32 0.0, %v4727
        %4729 = vmatprep.mubr.bf16.mxu0 %v4201
        %4730 = vmatmul.mubr.bf16.gmra.mrb[0].mxu0 %v4200
        %v4731 = vpop.f32.mrb[0].mxu0
        %v4732 = vadd.f32 0.0, %v4731
        %v4733 = vpop.f32.mrb[0].mxu0
        %v4734 = vadd.f32 0.0, %v4733
        %v4735 = vpop.f32.mrb[0].mxu0
        %v4736 = vadd.f32 0.0, %v4735
        %v4737 = vpop.f32.mrb[0].mxu0
        %v4738 = vadd.f32 0.0, %v4737
        %4739 = vmatprep.mubr.bf16.mxu0 %v4203
        %4740 = vmatmul.mubr.bf16.gmra.mrb[0].mxu0 %v4202
        %v4741 = vpop.f32.mrb[0].mxu0
        %v4742 = vadd.f32 0.0, %v4741
        %v4743 = vpop.f32.mrb[0].mxu0
        %v4744 = vadd.f32 0.0, %v4743
        %v4745 = vpop.f32.mrb[0].mxu0
        %v4746 = vadd.f32 0.0, %v4745
        %v4747 = vpop.f32.mrb[0].mxu0
        %v4748 = vadd.f32 0.0, %v4747
        %4749 = vdwg.mxu0
        %v4751 = vunpack.c.l.b16 %v4139
        %v4752 = vunpack.c.h.b16 %v4139
        %v4753 = vpack.c.b16 %v4751, %v4751
        %v4754 = vpack.c.b16 %v4752, %v4752
        %v4756 = vsel %vm647, %v4753, 0
        %v4759 = vsel %vm647, %v4754, 0
        %4761 = vmatprep.subr.bf16.mxu0 %v4759
        %4762 = vmatpush1.bf16.msra.mxu0 %v4756
        %4763 = vmatprep.subr.bf16.mxu0 0
        %4764 = vmatpush1.bf16.msra.mxu0 0
        %4765 = vmatprep.subr.bf16.mxu0 0
        %4766 = vmatpush1.bf16.msra.mxu0 0
        %4767 = vmatprep.subr.bf16.mxu0 0
        %4768 = vmatpush1.bf16.msra.mxu0 0
        %4769 = vmatprep.subr.bf16.mxu0 0
        %4770 = vmatpush1.bf16.msra.mxu0 0
        %4771 = vmatprep.subr.bf16.mxu0 0
        %4772 = vmatpush1.bf16.msra.mxu0 0
        %4773 = vmatprep.subr.bf16.mxu0 0
        %4774 = vmatpush1.bf16.msra.mxu0 0
        %4775 = vmatprep.subr.bf16.mxu0 0
        %4776 = vmatpush1.bf16.msra.mxu0 0
        %4777 = vmatprep.subr.bf16.mxu0 0
        %4778 = vmatpush1.bf16.msra.mxu0 0
        %4779 = vmatprep.subr.bf16.mxu0 0
        %4780 = vmatpush1.bf16.msra.mxu0 0
        %4781 = vmatprep.subr.bf16.mxu0 0
        %4782 = vmatpush1.bf16.msra.mxu0 0
        %4783 = vmatprep.subr.bf16.mxu0 0
        %4784 = vmatpush1.bf16.msra.mxu0 0
        %4785 = vmatprep.subr.bf16.mxu0 0
        %4786 = vmatpush1.bf16.msra.mxu0 0
        %4787 = vmatprep.subr.bf16.mxu0 0
        %4788 = vmatpush1.bf16.msra.mxu0 0
        %4789 = vmatprep.subr.bf16.mxu0 0
        %4790 = vmatpush1.bf16.msra.mxu0 0
        %4791 = vmatprep.subr.bf16.mxu0 0
        %4792 = vmatpush1.bf16.msra.mxu0 0
        %4793 = vmatprep.mubr.bf16.mxu0 0
        %4794 = vmatmul.mubr.bf16.gmra.mrb[0].mxu0 %v552
        %v4795 = vpop.f32.mrb[0].mxu0
        %v4796 = vadd.f32 %v4432, %v4795
        %v4797 = vpop.f32.mrb[0].mxu0
        %v4798 = vadd.f32 %v4434, %v4797
        %v4799 = vpop.f32.mrb[0].mxu0
        %v4800 = vadd.f32 %v4436, %v4799
        %v4801 = vpop.f32.mrb[0].mxu0
        %v4802 = vadd.f32 %v4438, %v4801
        %4803 = vmatprep.mubr.bf16.mxu0 0
        %4804 = vmatmul.mubr.bf16.gmra.mrb[0].mxu0 %v555
        %v4805 = vpop.f32.mrb[0].mxu0
        %v4806 = vadd.f32 %v4442, %v4805
        %v4807 = vpop.f32.mrb[0].mxu0
        %v4808 = vadd.f32 %v4444, %v4807
        %v4809 = vpop.f32.mrb[0].mxu0
        %v4810 = vadd.f32 %v4446, %v4809
        %v4811 = vpop.f32.mrb[0].mxu0
        %v4812 = vadd.f32 %v4448, %v4811
        %4813 = vmatprep.mubr.bf16.mxu0 0
        %4814 = vmatmul.mubr.bf16.gmra.mrb[0].mxu0 %v558
        %v4815 = vpop.f32.mrb[0].mxu0
        %v4816 = vadd.f32 %v4452, %v4815
        %v4817 = vpop.f32.mrb[0].mxu0
        %v4818 = vadd.f32 %v4454, %v4817
        %v4819 = vpop.f32.mrb[0].mxu0
        %v4820 = vadd.f32 %v4456, %v4819
        %v4821 = vpop.f32.mrb[0].mxu0
        %v4822 = vadd.f32 %v4458, %v4821
        %4823 = vmatprep.mubr.bf16.mxu0 0
        %4824 = vmatmul.mubr.bf16.gmra.mrb[0].mxu0 %v561
        %v4825 = vpop.f32.mrb[0].mxu0
        %v4826 = vadd.f32 %v4462, %v4825
        %v4827 = vpop.f32.mrb[0].mxu0
        %v4828 = vadd.f32 %v4464, %v4827
        %v4829 = vpop.f32.mrb[0].mxu0
        %v4830 = vadd.f32 %v4466, %v4829
        %v4831 = vpop.f32.mrb[0].mxu0
        %v4832 = vadd.f32 %v4468, %v4831
        %4833 = vmatprep.mubr.bf16.mxu0 0
        %4834 = vmatmul.mubr.bf16.gmra.mrb[0].mxu0 %v564
        %v4835 = vpop.f32.mrb[0].mxu0
        %v4836 = vadd.f32 %v4472, %v4835
        %v4837 = vpop.f32.mrb[0].mxu0
        %v4838 = vadd.f32 %v4474, %v4837
        %v4839 = vpop.f32.mrb[0].mxu0
        %v4840 = vadd.f32 %v4476, %v4839
        %v4841 = vpop.f32.mrb[0].mxu0
        %v4842 = vadd.f32 %v4478, %v4841
        %4843 = vmatprep.mubr.bf16.mxu0 0
        %4844 = vmatmul.mubr.bf16.gmra.mrb[0].mxu0 %v567
        %v4845 = vpop.f32.mrb[0].mxu0
        %v4846 = vadd.f32 %v4482, %v4845
        %v4847 = vpop.f32.mrb[0].mxu0
        %v4848 = vadd.f32 %v4484, %v4847
        %v4849 = vpop.f32.mrb[0].mxu0
        %v4850 = vadd.f32 %v4486, %v4849
        %v4851 = vpop.f32.mrb[0].mxu0
        %v4852 = vadd.f32 %v4488, %v4851
        %4853 = vmatprep.mubr.bf16.mxu0 0
        %4854 = vmatmul.mubr.bf16.gmra.mrb[0].mxu0 %v570
        %v4855 = vpop.f32.mrb[0].mxu0
        %v4856 = vadd.f32 %v4492, %v4855
        %v4857 = vpop.f32.mrb[0].mxu0
        %v4858 = vadd.f32 %v4494, %v4857
        %v4859 = vpop.f32.mrb[0].mxu0
        %v4860 = vadd.f32 %v4496, %v4859
        %v4861 = vpop.f32.mrb[0].mxu0
        %v4862 = vadd.f32 %v4498, %v4861
        %4863 = vmatprep.mubr.bf16.mxu0 0
        %4864 = vmatmul.mubr.bf16.gmra.mrb[0].mxu0 %v573
        %v4865 = vpop.f32.mrb[0].mxu0
        %v4866 = vadd.f32 %v4502, %v4865
        %v4867 = vpop.f32.mrb[0].mxu0
        %v4868 = vadd.f32 %v4504, %v4867
        %v4869 = vpop.f32.mrb[0].mxu0
        %v4870 = vadd.f32 %v4506, %v4869
        %v4871 = vpop.f32.mrb[0].mxu0
        %v4872 = vadd.f32 %v4508, %v4871
        %4873 = vmatprep.mubr.bf16.mxu0 0
        %4874 = vmatmul.mubr.bf16.gmra.mrb[0].mxu0 %v576
        %v4875 = vpop.f32.mrb[0].mxu0
        %v4876 = vadd.f32 %v4512, %v4875
        %v4877 = vpop.f32.mrb[0].mxu0
        %v4878 = vadd.f32 %v4514, %v4877
        %v4879 = vpop.f32.mrb[0].mxu0
        %v4880 = vadd.f32 %v4516, %v4879
        %v4881 = vpop.f32.mrb[0].mxu0
        %v4882 = vadd.f32 %v4518, %v4881
        %4883 = vmatprep.mubr.bf16.mxu0 0
        %4884 = vmatmul.mubr.bf16.gmra.mrb[0].mxu0 %v579
        %v4885 = vpop.f32.mrb[0].mxu0
        %v4886 = vadd.f32 %v4522, %v4885
        %v4887 = vpop.f32.mrb[0].mxu0
        %v4888 = vadd.f32 %v4524, %v4887
        %v4889 = vpop.f32.mrb[0].mxu0
        %v4890 = vadd.f32 %v4526, %v4889
        %v4891 = vpop.f32.mrb[0].mxu0
        %v4892 = vadd.f32 %v4528, %v4891
        %4893 = vmatprep.mubr.bf16.mxu0 0
        %4894 = vmatmul.mubr.bf16.gmra.mrb[0].mxu0 %v582
        %v4895 = vpop.f32.mrb[0].mxu0
        %v4896 = vadd.f32 %v4532, %v4895
        %v4897 = vpop.f32.mrb[0].mxu0
        %v4898 = vadd.f32 %v4534, %v4897
        %v4899 = vpop.f32.mrb[0].mxu0
        %v4900 = vadd.f32 %v4536, %v4899
        %v4901 = vpop.f32.mrb[0].mxu0
        %v4902 = vadd.f32 %v4538, %v4901
        %4903 = vmatprep.mubr.bf16.mxu0 0
        %4904 = vmatmul.mubr.bf16.gmra.mrb[0].mxu0 %v585
        %v4905 = vpop.f32.mrb[0].mxu0
        %v4906 = vadd.f32 %v4542, %v4905
        %v4907 = vpop.f32.mrb[0].mxu0
        %v4908 = vadd.f32 %v4544, %v4907
        %v4909 = vpop.f32.mrb[0].mxu0
        %v4910 = vadd.f32 %v4546, %v4909
        %v4911 = vpop.f32.mrb[0].mxu0
        %v4912 = vadd.f32 %v4548, %v4911
        %4913 = vmatprep.mubr.bf16.mxu0 0
        %4914 = vmatmul.mubr.bf16.gmra.mrb[0].mxu0 %v588
        %v4915 = vpop.f32.mrb[0].mxu0
        %v4916 = vadd.f32 %v4552, %v4915
        %v4917 = vpop.f32.mrb[0].mxu0
        %v4918 = vadd.f32 %v4554, %v4917
        %v4919 = vpop.f32.mrb[0].mxu0
        %v4920 = vadd.f32 %v4556, %v4919
        %v4921 = vpop.f32.mrb[0].mxu0
        %v4922 = vadd.f32 %v4558, %v4921
        %4923 = vmatprep.mubr.bf16.mxu0 0
        %4924 = vmatmul.mubr.bf16.gmra.mrb[0].mxu0 %v591
        %v4925 = vpop.f32.mrb[0].mxu0
        %v4926 = vadd.f32 %v4562, %v4925
        %v4927 = vpop.f32.mrb[0].mxu0
        %v4928 = vadd.f32 %v4564, %v4927
        %v4929 = vpop.f32.mrb[0].mxu0
        %v4930 = vadd.f32 %v4566, %v4929
        %v4931 = vpop.f32.mrb[0].mxu0
        %v4932 = vadd.f32 %v4568, %v4931
        %4933 = vmatprep.mubr.bf16.mxu0 0
        %4934 = vmatmul.mubr.bf16.gmra.mrb[0].mxu0 %v594
        %v4935 = vpop.f32.mrb[0].mxu0
        %v4936 = vadd.f32 %v4572, %v4935
        %v4937 = vpop.f32.mrb[0].mxu0
        %v4938 = vadd.f32 %v4574, %v4937
        %v4939 = vpop.f32.mrb[0].mxu0
        %v4940 = vadd.f32 %v4576, %v4939
        %v4941 = vpop.f32.mrb[0].mxu0
        %v4942 = vadd.f32 %v4578, %v4941
        %4943 = vmatprep.mubr.bf16.mxu0 0
        %4944 = vmatmul.mubr.bf16.gmra.mrb[0].mxu0 %v597
        %v4945 = vpop.f32.mrb[0].mxu0
        %v4946 = vadd.f32 %v4582, %v4945
        %v4947 = vpop.f32.mrb[0].mxu0
        %v4948 = vadd.f32 %v4584, %v4947
        %v4949 = vpop.f32.mrb[0].mxu0
        %v4950 = vadd.f32 %v4586, %v4949
        %v4951 = vpop.f32.mrb[0].mxu0
        %v4952 = vadd.f32 %v4588, %v4951
        %4953 = vmatprep.mubr.bf16.mxu0 0
        %4954 = vmatmul.mubr.bf16.gmra.mrb[0].mxu0 %v600
        %v4955 = vpop.f32.mrb[0].mxu0
        %v4956 = vadd.f32 %v4592, %v4955
        %v4957 = vpop.f32.mrb[0].mxu0
        %v4958 = vadd.f32 %v4594, %v4957
        %v4959 = vpop.f32.mrb[0].mxu0
        %v4960 = vadd.f32 %v4596, %v4959
        %v4961 = vpop.f32.mrb[0].mxu0
        %v4962 = vadd.f32 %v4598, %v4961
        %4963 = vmatprep.mubr.bf16.mxu0 0
        %4964 = vmatmul.mubr.bf16.gmra.mrb[0].mxu0 %v603
        %v4965 = vpop.f32.mrb[0].mxu0
        %v4966 = vadd.f32 %v4602, %v4965
        %v4967 = vpop.f32.mrb[0].mxu0
        %v4968 = vadd.f32 %v4604, %v4967
        %v4969 = vpop.f32.mrb[0].mxu0
        %v4970 = vadd.f32 %v4606, %v4969
        %v4971 = vpop.f32.mrb[0].mxu0
        %v4972 = vadd.f32 %v4608, %v4971
        %4973 = vmatprep.mubr.bf16.mxu0 0
        %4974 = vmatmul.mubr.bf16.gmra.mrb[0].mxu0 %v606
        %v4975 = vpop.f32.mrb[0].mxu0
        %v4976 = vadd.f32 %v4612, %v4975
        %v4977 = vpop.f32.mrb[0].mxu0
        %v4978 = vadd.f32 %v4614, %v4977
        %v4979 = vpop.f32.mrb[0].mxu0
        %v4980 = vadd.f32 %v4616, %v4979
        %v4981 = vpop.f32.mrb[0].mxu0
        %v4982 = vadd.f32 %v4618, %v4981
        %4983 = vmatprep.mubr.bf16.mxu0 0
        %4984 = vmatmul.mubr.bf16.gmra.mrb[0].mxu0 %v609
        %v4985 = vpop.f32.mrb[0].mxu0
        %v4986 = vadd.f32 %v4622, %v4985
        %v4987 = vpop.f32.mrb[0].mxu0
        %v4988 = vadd.f32 %v4624, %v4987
        %v4989 = vpop.f32.mrb[0].mxu0
        %v4990 = vadd.f32 %v4626, %v4989
        %v4991 = vpop.f32.mrb[0].mxu0
        %v4992 = vadd.f32 %v4628, %v4991
        %4993 = vmatprep.mubr.bf16.mxu0 0
        %4994 = vmatmul.mubr.bf16.gmra.mrb[0].mxu0 %v612
        %v4995 = vpop.f32.mrb[0].mxu0
        %v4996 = vadd.f32 %v4632, %v4995
        %v4997 = vpop.f32.mrb[0].mxu0
        %v4998 = vadd.f32 %v4634, %v4997
        %v4999 = vpop.f32.mrb[0].mxu0
        %v5000 = vadd.f32 %v4636, %v4999
        %v5001 = vpop.f32.mrb[0].mxu0
        %v5002 = vadd.f32 %v4638, %v5001
        %5003 = vmatprep.mubr.bf16.mxu0 0
        %5004 = vmatmul.mubr.bf16.gmra.mrb[0].mxu0 %v615
        %v5005 = vpop.f32.mrb[0].mxu0
        %v5006 = vadd.f32 %v4642, %v5005
        %v5007 = vpop.f32.mrb[0].mxu0
        %v5008 = vadd.f32 %v4644, %v5007
        %v5009 = vpop.f32.mrb[0].mxu0
        %v5010 = vadd.f32 %v4646, %v5009
        %v5011 = vpop.f32.mrb[0].mxu0
        %v5012 = vadd.f32 %v4648, %v5011
        %5013 = vmatprep.mubr.bf16.mxu0 0
        %5014 = vmatmul.mubr.bf16.gmra.mrb[0].mxu0 %v618
        %v5015 = vpop.f32.mrb[0].mxu0
        %v5016 = vadd.f32 %v4652, %v5015
        %v5017 = vpop.f32.mrb[0].mxu0
        %v5018 = vadd.f32 %v4654, %v5017
        %v5019 = vpop.f32.mrb[0].mxu0
        %v5020 = vadd.f32 %v4656, %v5019
        %v5021 = vpop.f32.mrb[0].mxu0
        %v5022 = vadd.f32 %v4658, %v5021
        %5023 = vmatprep.mubr.bf16.mxu0 0
        %5024 = vmatmul.mubr.bf16.gmra.mrb[0].mxu0 %v621
        %v5025 = vpop.f32.mrb[0].mxu0
        %v5026 = vadd.f32 %v4662, %v5025
        %v5027 = vpop.f32.mrb[0].mxu0
        %v5028 = vadd.f32 %v4664, %v5027
        %v5029 = vpop.f32.mrb[0].mxu0
        %v5030 = vadd.f32 %v4666, %v5029
        %v5031 = vpop.f32.mrb[0].mxu0
        %v5032 = vadd.f32 %v4668, %v5031
        %5033 = vmatprep.mubr.bf16.mxu0 0
        %5034 = vmatmul.mubr.bf16.gmra.mrb[0].mxu0 %v624
        %v5035 = vpop.f32.mrb[0].mxu0
        %v5036 = vadd.f32 %v4672, %v5035
        %v5037 = vpop.f32.mrb[0].mxu0
        %v5038 = vadd.f32 %v4674, %v5037
        %v5039 = vpop.f32.mrb[0].mxu0
        %v5040 = vadd.f32 %v4676, %v5039
        %v5041 = vpop.f32.mrb[0].mxu0
        %v5042 = vadd.f32 %v4678, %v5041
        %5043 = vmatprep.mubr.bf16.mxu0 0
        %5044 = vmatmul.mubr.bf16.gmra.mrb[0].mxu0 %v627
        %v5045 = vpop.f32.mrb[0].mxu0
        %v5046 = vadd.f32 %v4682, %v5045
        %v5047 = vpop.f32.mrb[0].mxu0
        %v5048 = vadd.f32 %v4684, %v5047
        %v5049 = vpop.f32.mrb[0].mxu0
        %v5050 = vadd.f32 %v4686, %v5049
        %v5051 = vpop.f32.mrb[0].mxu0
        %v5052 = vadd.f32 %v4688, %v5051
        %5053 = vmatprep.mubr.bf16.mxu0 0
        %5054 = vmatmul.mubr.bf16.gmra.mrb[0].mxu0 %v630
        %v5055 = vpop.f32.mrb[0].mxu0
        %v5056 = vadd.f32 %v4692, %v5055
        %v5057 = vpop.f32.mrb[0].mxu0
        %v5058 = vadd.f32 %v4694, %v5057
        %v5059 = vpop.f32.mrb[0].mxu0
        %v5060 = vadd.f32 %v4696, %v5059
        %v5061 = vpop.f32.mrb[0].mxu0
        %v5062 = vadd.f32 %v4698, %v5061
        %5063 = vmatprep.mubr.bf16.mxu0 0
        %5064 = vmatmul.mubr.bf16.gmra.mrb[0].mxu0 %v633
        %v5065 = vpop.f32.mrb[0].mxu0
        %v5066 = vadd.f32 %v4702, %v5065
        %v5067 = vpop.f32.mrb[0].mxu0
        %v5068 = vadd.f32 %v4704, %v5067
        %v5069 = vpop.f32.mrb[0].mxu0
        %v5070 = vadd.f32 %v4706, %v5069
        %v5071 = vpop.f32.mrb[0].mxu0
        %v5072 = vadd.f32 %v4708, %v5071
        %5073 = vmatprep.mubr.bf16.mxu0 0
        %5074 = vmatmul.mubr.bf16.gmra.mrb[0].mxu0 %v636
        %v5075 = vpop.f32.mrb[0].mxu0
        %v5076 = vadd.f32 %v4712, %v5075
        %v5077 = vpop.f32.mrb[0].mxu0
        %v5078 = vadd.f32 %v4714, %v5077
        %v5079 = vpop.f32.mrb[0].mxu0
        %v5080 = vadd.f32 %v4716, %v5079
        %v5081 = vpop.f32.mrb[0].mxu0
        %v5082 = vadd.f32 %v4718, %v5081
        %5083 = vmatprep.mubr.bf16.mxu0 0
        %5084 = vmatmul.mubr.bf16.gmra.mrb[0].mxu0 %v639
        %v5085 = vpop.f32.mrb[0].mxu0
        %v5086 = vadd.f32 %v4722, %v5085
        %v5087 = vpop.f32.mrb[0].mxu0
        %v5088 = vadd.f32 %v4724, %v5087
        %v5089 = vpop.f32.mrb[0].mxu0
        %v5090 = vadd.f32 %v4726, %v5089
        %v5091 = vpop.f32.mrb[0].mxu0
        %v5092 = vadd.f32 %v4728, %v5091
        %5093 = vmatprep.mubr.bf16.mxu0 0
        %5094 = vmatmul.mubr.bf16.gmra.mrb[0].mxu0 %v642
        %v5095 = vpop.f32.mrb[0].mxu0
        %v5096 = vadd.f32 %v4732, %v5095
        %v5097 = vpop.f32.mrb[0].mxu0
        %v5098 = vadd.f32 %v4734, %v5097
        %v5099 = vpop.f32.mrb[0].mxu0
        %v5100 = vadd.f32 %v4736, %v5099
        %v5101 = vpop.f32.mrb[0].mxu0
        %v5102 = vadd.f32 %v4738, %v5101
        %5103 = vmatprep.mubr.bf16.mxu0 0
        %5104 = vmatmul.mubr.bf16.gmra.mrb[0].mxu0 %v645
        %v5105 = vpop.f32.mrb[0].mxu0
        %v5106 = vadd.f32 %v4742, %v5105
        %v5107 = vpop.f32.mrb[0].mxu0
        %v5108 = vadd.f32 %v4744, %v5107
        %v5109 = vpop.f32.mrb[0].mxu0
        %v5110 = vadd.f32 %v4746, %v5109
        %v5111 = vpop.f32.mrb[0].mxu0
        %v5112 = vadd.f32 %v4748, %v5111
        %5113 = vdwg.mxu0
        %s5114 = scalar_lea.vmem %s3, 5
        %v5115 = vld [vmem:[%s5114] ss:$8 sm:$0x3]
        %v5117 = vlaneseq
        %v5118 = vshrl.u32 %v5117, 7
        %v5119 = vsub.s32 0, %v5118
        %v5120 = vrot.slane %v5115, %v5119
        %v5121 = vlaneseq
        %v5122 = vshrl.u32 %v5121, 7
        %v5123 = vsub.s32 1, %v5122
        %v5124 = vrot.slane %v5115, %v5123
        %v5127 = vadd.f32 %v4796, %v5120
        %v5128 = vadd.f32 %v4798, %v5124
        %v5129 = vadd.f32 %v4800, %v5120
        %v5130 = vadd.f32 %v4802, %v5124
        %v5131 = vadd.f32 %v4806, %v5120
        %v5132 = vadd.f32 %v4808, %v5124
        %v5133 = vadd.f32 %v4810, %v5120
        %v5134 = vadd.f32 %v4812, %v5124
        %v5135 = vadd.f32 %v4816, %v5120
        %v5136 = vadd.f32 %v4818, %v5124
        %v5137 = vadd.f32 %v4820, %v5120
        %v5138 = vadd.f32 %v4822, %v5124
        %v5139 = vadd.f32 %v4826, %v5120
        %v5140 = vadd.f32 %v4828, %v5124
        %v5141 = vadd.f32 %v4830, %v5120
        %v5142 = vadd.f32 %v4832, %v5124
        %v5143 = vadd.f32 %v4836, %v5120
        %v5144 = vadd.f32 %v4838, %v5124
        %v5145 = vadd.f32 %v4840, %v5120
        %v5146 = vadd.f32 %v4842, %v5124
        %v5147 = vadd.f32 %v4846, %v5120
        %v5148 = vadd.f32 %v4848, %v5124
        %v5149 = vadd.f32 %v4850, %v5120
        %v5150 = vadd.f32 %v4852, %v5124
        %v5151 = vadd.f32 %v4856, %v5120
        %v5152 = vadd.f32 %v4858, %v5124
        %v5153 = vadd.f32 %v4860, %v5120
        %v5154 = vadd.f32 %v4862, %v5124
        %v5155 = vadd.f32 %v4866, %v5120
        %v5156 = vadd.f32 %v4868, %v5124
        %v5157 = vadd.f32 %v4870, %v5120
        %v5158 = vadd.f32 %v4872, %v5124
        %v5159 = vadd.f32 %v4876, %v5120
        %v5160 = vadd.f32 %v4878, %v5124
        %v5161 = vadd.f32 %v4880, %v5120
        %v5162 = vadd.f32 %v4882, %v5124
        %v5163 = vadd.f32 %v4886, %v5120
        %v5164 = vadd.f32 %v4888, %v5124
        %v5165 = vadd.f32 %v4890, %v5120
        %v5166 = vadd.f32 %v4892, %v5124
        %v5167 = vadd.f32 %v4896, %v5120
        %v5168 = vadd.f32 %v4898, %v5124
        %v5169 = vadd.f32 %v4900, %v5120
        %v5170 = vadd.f32 %v4902, %v5124
        %v5171 = vadd.f32 %v4906, %v5120
        %v5172 = vadd.f32 %v4908, %v5124
        %v5173 = vadd.f32 %v4910, %v5120
        %v5174 = vadd.f32 %v4912, %v5124
        %v5175 = vadd.f32 %v4916, %v5120
        %v5176 = vadd.f32 %v4918, %v5124
        %v5177 = vadd.f32 %v4920, %v5120
        %v5178 = vadd.f32 %v4922, %v5124
        %v5179 = vadd.f32 %v4926, %v5120
        %v5180 = vadd.f32 %v4928, %v5124
        %v5181 = vadd.f32 %v4930, %v5120
        %v5182 = vadd.f32 %v4932, %v5124
        %v5183 = vadd.f32 %v4936, %v5120
        %v5184 = vadd.f32 %v4938, %v5124
        %v5185 = vadd.f32 %v4940, %v5120
        %v5186 = vadd.f32 %v4942, %v5124
        %v5187 = vadd.f32 %v4946, %v5120
        %v5188 = vadd.f32 %v4948, %v5124
        %v5189 = vadd.f32 %v4950, %v5120
        %v5190 = vadd.f32 %v4952, %v5124
        %v5191 = vadd.f32 %v4956, %v5120
        %v5192 = vadd.f32 %v4958, %v5124
        %v5193 = vadd.f32 %v4960, %v5120
        %v5194 = vadd.f32 %v4962, %v5124
        %v5195 = vadd.f32 %v4966, %v5120
        %v5196 = vadd.f32 %v4968, %v5124
        %v5197 = vadd.f32 %v4970, %v5120
        %v5198 = vadd.f32 %v4972, %v5124
        %v5199 = vadd.f32 %v4976, %v5120
        %v5200 = vadd.f32 %v4978, %v5124
        %v5201 = vadd.f32 %v4980, %v5120
        %v5202 = vadd.f32 %v4982, %v5124
        %v5203 = vadd.f32 %v4986, %v5120
        %v5204 = vadd.f32 %v4988, %v5124
        %v5205 = vadd.f32 %v4990, %v5120
        %v5206 = vadd.f32 %v4992, %v5124
        %v5207 = vadd.f32 %v4996, %v5120
        %v5208 = vadd.f32 %v4998, %v5124
        %v5209 = vadd.f32 %v5000, %v5120
        %v5210 = vadd.f32 %v5002, %v5124
        %v5211 = vadd.f32 %v5006, %v5120
        %v5212 = vadd.f32 %v5008, %v5124
        %v5213 = vadd.f32 %v5010, %v5120
        %v5214 = vadd.f32 %v5012, %v5124
        %v5215 = vadd.f32 %v5016, %v5120
        %v5216 = vadd.f32 %v5018, %v5124
        %v5217 = vadd.f32 %v5020, %v5120
        %v5218 = vadd.f32 %v5022, %v5124
        %v5219 = vadd.f32 %v5026, %v5120
        %v5220 = vadd.f32 %v5028, %v5124
        %v5221 = vadd.f32 %v5030, %v5120
        %v5222 = vadd.f32 %v5032, %v5124
        %v5223 = vadd.f32 %v5036, %v5120
        %v5224 = vadd.f32 %v5038, %v5124
        %v5225 = vadd.f32 %v5040, %v5120
        %v5226 = vadd.f32 %v5042, %v5124
        %v5227 = vadd.f32 %v5046, %v5120
        %v5228 = vadd.f32 %v5048, %v5124
        %v5229 = vadd.f32 %v5050, %v5120
        %v5230 = vadd.f32 %v5052, %v5124
        %v5231 = vadd.f32 %v5056, %v5120
        %v5232 = vadd.f32 %v5058, %v5124
        %v5233 = vadd.f32 %v5060, %v5120
        %v5234 = vadd.f32 %v5062, %v5124
        %v5235 = vadd.f32 %v5066, %v5120
        %v5236 = vadd.f32 %v5068, %v5124
        %v5237 = vadd.f32 %v5070, %v5120
        %v5238 = vadd.f32 %v5072, %v5124
        %v5239 = vadd.f32 %v5076, %v5120
        %v5240 = vadd.f32 %v5078, %v5124
        %v5241 = vadd.f32 %v5080, %v5120
        %v5242 = vadd.f32 %v5082, %v5124
        %v5243 = vadd.f32 %v5086, %v5120
        %v5244 = vadd.f32 %v5088, %v5124
        %v5245 = vadd.f32 %v5090, %v5120
        %v5246 = vadd.f32 %v5092, %v5124
        %v5247 = vadd.f32 %v5096, %v5120
        %v5248 = vadd.f32 %v5098, %v5124
        %v5249 = vadd.f32 %v5100, %v5120
        %v5250 = vadd.f32 %v5102, %v5124
        %v5251 = vadd.f32 %v5106, %v5120
        %v5252 = vadd.f32 %v5108, %v5124
        %v5253 = vadd.f32 %v5110, %v5120
        %v5254 = vadd.f32 %v5112, %v5124
        %v5255 = vmax.f32 %v5127, 0.0
        %v5256 = vmax.f32 %v5128, 0.0
        %v5257 = vmax.f32 %v5129, 0.0
        %v5258 = vmax.f32 %v5130, 0.0
        %v5259 = vmax.f32 %v5131, 0.0
        %v5260 = vmax.f32 %v5132, 0.0
        %v5261 = vmax.f32 %v5133, 0.0
        %v5262 = vmax.f32 %v5134, 0.0
        %v5263 = vmax.f32 %v5135, 0.0
        %v5264 = vmax.f32 %v5136, 0.0
        %v5265 = vmax.f32 %v5137, 0.0
        %v5266 = vmax.f32 %v5138, 0.0
        %v5267 = vmax.f32 %v5139, 0.0
        %v5268 = vmax.f32 %v5140, 0.0
        %v5269 = vmax.f32 %v5141, 0.0
        %v5270 = vmax.f32 %v5142, 0.0
        %v5271 = vmax.f32 %v5143, 0.0
        %v5272 = vmax.f32 %v5144, 0.0
        %v5273 = vmax.f32 %v5145, 0.0
        %v5274 = vmax.f32 %v5146, 0.0
        %v5275 = vmax.f32 %v5147, 0.0
        %v5276 = vmax.f32 %v5148, 0.0
        %v5277 = vmax.f32 %v5149, 0.0
        %v5278 = vmax.f32 %v5150, 0.0
        %v5279 = vmax.f32 %v5151, 0.0
        %v5280 = vmax.f32 %v5152, 0.0
        %v5281 = vmax.f32 %v5153, 0.0
        %v5282 = vmax.f32 %v5154, 0.0
        %v5283 = vmax.f32 %v5155, 0.0
        %v5284 = vmax.f32 %v5156, 0.0
        %v5285 = vmax.f32 %v5157, 0.0
        %v5286 = vmax.f32 %v5158, 0.0
        %v5287 = vmax.f32 %v5159, 0.0
        %v5288 = vmax.f32 %v5160, 0.0
        %v5289 = vmax.f32 %v5161, 0.0
        %v5290 = vmax.f32 %v5162, 0.0
        %v5291 = vmax.f32 %v5163, 0.0
        %v5292 = vmax.f32 %v5164, 0.0
        %v5293 = vmax.f32 %v5165, 0.0
        %v5294 = vmax.f32 %v5166, 0.0
        %v5295 = vmax.f32 %v5167, 0.0
        %v5296 = vmax.f32 %v5168, 0.0
        %v5297 = vmax.f32 %v5169, 0.0
        %v5298 = vmax.f32 %v5170, 0.0
        %v5299 = vmax.f32 %v5171, 0.0
        %v5300 = vmax.f32 %v5172, 0.0
        %v5301 = vmax.f32 %v5173, 0.0
        %v5302 = vmax.f32 %v5174, 0.0
        %v5303 = vmax.f32 %v5175, 0.0
        %v5304 = vmax.f32 %v5176, 0.0
        %v5305 = vmax.f32 %v5177, 0.0
        %v5306 = vmax.f32 %v5178, 0.0
        %v5307 = vmax.f32 %v5179, 0.0
        %v5308 = vmax.f32 %v5180, 0.0
        %v5309 = vmax.f32 %v5181, 0.0
        %v5310 = vmax.f32 %v5182, 0.0
        %v5311 = vmax.f32 %v5183, 0.0
        %v5312 = vmax.f32 %v5184, 0.0
        %v5313 = vmax.f32 %v5185, 0.0
        %v5314 = vmax.f32 %v5186, 0.0
        %v5315 = vmax.f32 %v5187, 0.0
        %v5316 = vmax.f32 %v5188, 0.0
        %v5317 = vmax.f32 %v5189, 0.0
        %v5318 = vmax.f32 %v5190, 0.0
        %v5319 = vmax.f32 %v5191, 0.0
        %v5320 = vmax.f32 %v5192, 0.0
        %v5321 = vmax.f32 %v5193, 0.0
        %v5322 = vmax.f32 %v5194, 0.0
        %v5323 = vmax.f32 %v5195, 0.0
        %v5324 = vmax.f32 %v5196, 0.0
        %v5325 = vmax.f32 %v5197, 0.0
        %v5326 = vmax.f32 %v5198, 0.0
        %v5327 = vmax.f32 %v5199, 0.0
        %v5328 = vmax.f32 %v5200, 0.0
        %v5329 = vmax.f32 %v5201, 0.0
        %v5330 = vmax.f32 %v5202, 0.0
        %v5331 = vmax.f32 %v5203, 0.0
        %v5332 = vmax.f32 %v5204, 0.0
        %v5333 = vmax.f32 %v5205, 0.0
        %v5334 = vmax.f32 %v5206, 0.0
        %v5335 = vmax.f32 %v5207, 0.0
        %v5336 = vmax.f32 %v5208, 0.0
        %v5337 = vmax.f32 %v5209, 0.0
        %v5338 = vmax.f32 %v5210, 0.0
        %v5339 = vmax.f32 %v5211, 0.0
        %v5340 = vmax.f32 %v5212, 0.0
        %v5341 = vmax.f32 %v5213, 0.0
        %v5342 = vmax.f32 %v5214, 0.0
        %v5343 = vmax.f32 %v5215, 0.0
        %v5344 = vmax.f32 %v5216, 0.0
        %v5345 = vmax.f32 %v5217, 0.0
        %v5346 = vmax.f32 %v5218, 0.0
        %v5347 = vmax.f32 %v5219, 0.0
        %v5348 = vmax.f32 %v5220, 0.0
        %v5349 = vmax.f32 %v5221, 0.0
        %v5350 = vmax.f32 %v5222, 0.0
        %v5351 = vmax.f32 %v5223, 0.0
        %v5352 = vmax.f32 %v5224, 0.0
        %v5353 = vmax.f32 %v5225, 0.0
        %v5354 = vmax.f32 %v5226, 0.0
        %v5355 = vmax.f32 %v5227, 0.0
        %v5356 = vmax.f32 %v5228, 0.0
        %v5357 = vmax.f32 %v5229, 0.0
        %v5358 = vmax.f32 %v5230, 0.0
        %v5359 = vmax.f32 %v5231, 0.0
        %v5360 = vmax.f32 %v5232, 0.0
        %v5361 = vmax.f32 %v5233, 0.0
        %v5362 = vmax.f32 %v5234, 0.0
        %v5363 = vmax.f32 %v5235, 0.0
        %v5364 = vmax.f32 %v5236, 0.0
        %v5365 = vmax.f32 %v5237, 0.0
        %v5366 = vmax.f32 %v5238, 0.0
        %v5367 = vmax.f32 %v5239, 0.0
        %v5368 = vmax.f32 %v5240, 0.0
        %v5369 = vmax.f32 %v5241, 0.0
        %v5370 = vmax.f32 %v5242, 0.0
        %v5371 = vmax.f32 %v5243, 0.0
        %v5372 = vmax.f32 %v5244, 0.0
        %v5373 = vmax.f32 %v5245, 0.0
        %v5374 = vmax.f32 %v5246, 0.0
        %v5375 = vmax.f32 %v5247, 0.0
        %v5376 = vmax.f32 %v5248, 0.0
        %v5377 = vmax.f32 %v5249, 0.0
        %v5378 = vmax.f32 %v5250, 0.0
        %v5379 = vmax.f32 %v5251, 0.0
        %v5380 = vmax.f32 %v5252, 0.0
        %v5381 = vmax.f32 %v5253, 0.0
        %v5382 = vmax.f32 %v5254, 0.0
        %v5383 = vpack.c.bf16 %v5257, %v5255
        %v5384 = vpack.c.bf16 %v5258, %v5256
        %v5385 = vpack.c.bf16 %v5261, %v5259
        %v5386 = vpack.c.bf16 %v5262, %v5260
        %v5387 = vpack.c.bf16 %v5265, %v5263
        %v5388 = vpack.c.bf16 %v5266, %v5264
        %v5389 = vpack.c.bf16 %v5269, %v5267
        %v5390 = vpack.c.bf16 %v5270, %v5268
        %v5391 = vpack.c.bf16 %v5273, %v5271
        %v5392 = vpack.c.bf16 %v5274, %v5272
        %v5393 = vpack.c.bf16 %v5277, %v5275
        %v5394 = vpack.c.bf16 %v5278, %v5276
        %v5395 = vpack.c.bf16 %v5281, %v5279
        %v5396 = vpack.c.bf16 %v5282, %v5280
        %v5397 = vpack.c.bf16 %v5285, %v5283
        %v5398 = vpack.c.bf16 %v5286, %v5284
        %v5399 = vpack.c.bf16 %v5289, %v5287
        %v5400 = vpack.c.bf16 %v5290, %v5288
        %v5401 = vpack.c.bf16 %v5293, %v5291
        %v5402 = vpack.c.bf16 %v5294, %v5292
        %v5403 = vpack.c.bf16 %v5297, %v5295
        %v5404 = vpack.c.bf16 %v5298, %v5296
        %v5405 = vpack.c.bf16 %v5301, %v5299
        %v5406 = vpack.c.bf16 %v5302, %v5300
        %v5407 = vpack.c.bf16 %v5305, %v5303
        %v5408 = vpack.c.bf16 %v5306, %v5304
        %v5409 = vpack.c.bf16 %v5309, %v5307
        %v5410 = vpack.c.bf16 %v5310, %v5308
        %v5411 = vpack.c.bf16 %v5313, %v5311
        %v5412 = vpack.c.bf16 %v5314, %v5312
        %v5413 = vpack.c.bf16 %v5317, %v5315
        %v5414 = vpack.c.bf16 %v5318, %v5316
        %v5415 = vpack.c.bf16 %v5321, %v5319
        %v5416 = vpack.c.bf16 %v5322, %v5320
        %v5417 = vpack.c.bf16 %v5325, %v5323
        %v5418 = vpack.c.bf16 %v5326, %v5324
        %v5419 = vpack.c.bf16 %v5329, %v5327
        %v5420 = vpack.c.bf16 %v5330, %v5328
        %v5421 = vpack.c.bf16 %v5333, %v5331
        %v5422 = vpack.c.bf16 %v5334, %v5332
        %v5423 = vpack.c.bf16 %v5337, %v5335
        %v5424 = vpack.c.bf16 %v5338, %v5336
        %v5425 = vpack.c.bf16 %v5341, %v5339
        %v5426 = vpack.c.bf16 %v5342, %v5340
        %v5427 = vpack.c.bf16 %v5345, %v5343
        %v5428 = vpack.c.bf16 %v5346, %v5344
        %v5429 = vpack.c.bf16 %v5349, %v5347
        %v5430 = vpack.c.bf16 %v5350, %v5348
        %v5431 = vpack.c.bf16 %v5353, %v5351
        %v5432 = vpack.c.bf16 %v5354, %v5352
        %v5433 = vpack.c.bf16 %v5357, %v5355
        %v5434 = vpack.c.bf16 %v5358, %v5356
        %v5435 = vpack.c.bf16 %v5361, %v5359
        %v5436 = vpack.c.bf16 %v5362, %v5360
        %v5437 = vpack.c.bf16 %v5365, %v5363
        %v5438 = vpack.c.bf16 %v5366, %v5364
        %v5439 = vpack.c.bf16 %v5369, %v5367
        %v5440 = vpack.c.bf16 %v5370, %v5368
        %v5441 = vpack.c.bf16 %v5373, %v5371
        %v5442 = vpack.c.bf16 %v5374, %v5372
        %v5443 = vpack.c.bf16 %v5377, %v5375
        %v5444 = vpack.c.bf16 %v5378, %v5376
        %v5445 = vpack.c.bf16 %v5381, %v5379
        %v5446 = vpack.c.bf16 %v5382, %v5380
        %s5447 = scalar_lea.vmem [#allocation2], 1280
        %v5448 = vld [vmem:[%s5447] sm:$0xff]
        %v5449 = vld [vmem:[%s5447 + $0x8] sm:$0xff]
        %v5450 = vld [vmem:[%s5447 + $0x10] sm:$0xff]
        %v5451 = vld [vmem:[%s5447 + $0x18] sm:$0xff]
        %v5452 = vld [vmem:[%s5447 + $0x20] sm:$0xff]
        %v5453 = vld [vmem:[%s5447 + $0x28] sm:$0xff]
        %v5454 = vld [vmem:[%s5447 + $0x30] sm:$0xff]
        %v5455 = vld [vmem:[%s5447 + $0x38] sm:$0xff]
        %v5456 = vld [vmem:[%s5447 + $0x40] sm:$0xff]
        %v5457 = vld [vmem:[%s5447 + $0x48] sm:$0xff]
        %v5458 = vld [vmem:[%s5447 + $0x50] sm:$0xff]
        %v5459 = vld [vmem:[%s5447 + $0x58] sm:$0xff]
        %v5460 = vld [vmem:[%s5447 + $0x60] sm:$0xff]
        %v5461 = vld [vmem:[%s5447 + $0x68] sm:$0xff]
        %v5462 = vld [vmem:[%s5447 + $0x70] sm:$0xff]
        %v5463 = vld [vmem:[%s5447 + $0x78] sm:$0xff]
        %v5464 = vld [vmem:[%s5447 + $0x80] sm:$0xff]
        %v5465 = vld [vmem:[%s5447 + $0x88] sm:$0xff]
        %v5466 = vld [vmem:[%s5447 + $0x90] sm:$0xff]
        %v5467 = vld [vmem:[%s5447 + $0x98] sm:$0xff]
        %v5468 = vld [vmem:[%s5447 + $0xa0] sm:$0xff]
        %v5469 = vld [vmem:[%s5447 + $0xa8] sm:$0xff]
        %v5470 = vld [vmem:[%s5447 + $0xb0] sm:$0xff]
        %v5471 = vld [vmem:[%s5447 + $0xb8] sm:$0xff]
        %v5472 = vld [vmem:[%s5447 + $0xc0] sm:$0xff]
        %v5473 = vld [vmem:[%s5447 + $0xc8] sm:$0xff]
        %v5474 = vld [vmem:[%s5447 + $0xd0] sm:$0xff]
        %v5475 = vld [vmem:[%s5447 + $0xd8] sm:$0xff]
        %v5476 = vld [vmem:[%s5447 + $0xe0] sm:$0xff]
        %v5477 = vld [vmem:[%s5447 + $0xe8] sm:$0xff]
        %v5478 = vld [vmem:[%s5447 + $0xf0] sm:$0xff]
        %v5479 = vld [vmem:[%s5447 + $0xf8] sm:$0xff]
        %s5480 = scalar_lea.vmem %s3, 6
        %v5481 = vld [vmem:[%s5480] ss:$8 sm:$0x3]
        %v5483 = vlaneseq
        %v5484 = vshrl.u32 %v5483, 7
        %v5485 = vsub.s32 0, %v5484
        %v5486 = vrot.slane %v5481, %v5485
        %v5487 = vlaneseq
        %v5488 = vshrl.u32 %v5487, 7
        %v5489 = vsub.s32 1, %v5488
        %v5490 = vrot.slane %v5481, %v5489
        %v5525 = vunpack.c.l.b16 %v5448
        %v5526 = vunpack.c.h.b16 %v5448
        %v5527 = vunpack.c.l.b16 %v5449
        %v5528 = vunpack.c.h.b16 %v5449
        %v5529 = vunpack.c.l.b16 %v5450
        %v5530 = vunpack.c.h.b16 %v5450
        %v5531 = vunpack.c.l.b16 %v5451
        %v5532 = vunpack.c.h.b16 %v5451
        %v5533 = vunpack.c.l.b16 %v5452
        %v5534 = vunpack.c.h.b16 %v5452
        %v5535 = vunpack.c.l.b16 %v5453
        %v5536 = vunpack.c.h.b16 %v5453
        %v5537 = vunpack.c.l.b16 %v5454
        %v5538 = vunpack.c.h.b16 %v5454
        %v5539 = vunpack.c.l.b16 %v5455
        %v5540 = vunpack.c.h.b16 %v5455
        %v5541 = vunpack.c.l.b16 %v5456
        %v5542 = vunpack.c.h.b16 %v5456
        %v5543 = vunpack.c.l.b16 %v5457
        %v5544 = vunpack.c.h.b16 %v5457
        %v5545 = vunpack.c.l.b16 %v5458
        %v5546 = vunpack.c.h.b16 %v5458
        %v5547 = vunpack.c.l.b16 %v5459
        %v5548 = vunpack.c.h.b16 %v5459
        %v5549 = vunpack.c.l.b16 %v5460
        %v5550 = vunpack.c.h.b16 %v5460
        %v5551 = vunpack.c.l.b16 %v5461
        %v5552 = vunpack.c.h.b16 %v5461
        %v5553 = vunpack.c.l.b16 %v5462
        %v5554 = vunpack.c.h.b16 %v5462
        %v5555 = vunpack.c.l.b16 %v5463
        %v5556 = vunpack.c.h.b16 %v5463
        %v5557 = vunpack.c.l.b16 %v5464
        %v5558 = vunpack.c.h.b16 %v5464
        %v5559 = vunpack.c.l.b16 %v5465
        %v5560 = vunpack.c.h.b16 %v5465
        %v5561 = vunpack.c.l.b16 %v5466
        %v5562 = vunpack.c.h.b16 %v5466
        %v5563 = vunpack.c.l.b16 %v5467
        %v5564 = vunpack.c.h.b16 %v5467
        %v5565 = vunpack.c.l.b16 %v5468
        %v5566 = vunpack.c.h.b16 %v5468
        %v5567 = vunpack.c.l.b16 %v5469
        %v5568 = vunpack.c.h.b16 %v5469
        %v5569 = vunpack.c.l.b16 %v5470
        %v5570 = vunpack.c.h.b16 %v5470
        %v5571 = vunpack.c.l.b16 %v5471
        %v5572 = vunpack.c.h.b16 %v5471
        %v5573 = vunpack.c.l.b16 %v5472
        %v5574 = vunpack.c.h.b16 %v5472
        %v5575 = vunpack.c.l.b16 %v5473
        %v5576 = vunpack.c.h.b16 %v5473
        %v5577 = vunpack.c.l.b16 %v5474
        %v5578 = vunpack.c.h.b16 %v5474
        %v5579 = vunpack.c.l.b16 %v5475
        %v5580 = vunpack.c.h.b16 %v5475
        %v5581 = vunpack.c.l.b16 %v5476
        %v5582 = vunpack.c.h.b16 %v5476
        %v5583 = vunpack.c.l.b16 %v5477
        %v5584 = vunpack.c.h.b16 %v5477
        %v5585 = vunpack.c.l.b16 %v5478
        %v5586 = vunpack.c.h.b16 %v5478
        %v5587 = vunpack.c.l.b16 %v5479
        %v5588 = vunpack.c.h.b16 %v5479
        %v5589 = vpack.c.b16 %v5527, %v5525
        %v5590 = vpack.c.b16 %v5528, %v5526
        %v5591 = vpack.c.b16 %v5531, %v5529
        %v5592 = vpack.c.b16 %v5532, %v5530
        %v5593 = vpack.c.b16 %v5535, %v5533
        %v5594 = vpack.c.b16 %v5536, %v5534
        %v5595 = vpack.c.b16 %v5539, %v5537
        %v5596 = vpack.c.b16 %v5540, %v5538
        %v5597 = vpack.c.b16 %v5543, %v5541
        %v5598 = vpack.c.b16 %v5544, %v5542
        %v5599 = vpack.c.b16 %v5547, %v5545
        %v5600 = vpack.c.b16 %v5548, %v5546
        %v5601 = vpack.c.b16 %v5551, %v5549
        %v5602 = vpack.c.b16 %v5552, %v5550
        %v5603 = vpack.c.b16 %v5555, %v5553
        %v5604 = vpack.c.b16 %v5556, %v5554
        %v5605 = vpack.c.b16 %v5559, %v5557
        %v5606 = vpack.c.b16 %v5560, %v5558
        %v5607 = vpack.c.b16 %v5563, %v5561
        %v5608 = vpack.c.b16 %v5564, %v5562
        %v5609 = vpack.c.b16 %v5567, %v5565
        %v5610 = vpack.c.b16 %v5568, %v5566
        %v5611 = vpack.c.b16 %v5571, %v5569
        %v5612 = vpack.c.b16 %v5572, %v5570
        %v5613 = vpack.c.b16 %v5575, %v5573
        %v5614 = vpack.c.b16 %v5576, %v5574
        %v5615 = vpack.c.b16 %v5579, %v5577
        %v5616 = vpack.c.b16 %v5580, %v5578
        %v5617 = vpack.c.b16 %v5583, %v5581
        %v5618 = vpack.c.b16 %v5584, %v5582
        %v5619 = vpack.c.b16 %v5587, %v5585
        %v5620 = vpack.c.b16 %v5588, %v5586
        %5653 = vmatprep.subr.bf16.mxu0 %v5590
        %5654 = vmatpush1.bf16.msra.mxu0 %v5589
        %5655 = vmatprep.subr.bf16.mxu0 %v5592
        %5656 = vmatpush1.bf16.msra.mxu0 %v5591
        %5657 = vmatprep.subr.bf16.mxu0 %v5594
        %5658 = vmatpush1.bf16.msra.mxu0 %v5593
        %5659 = vmatprep.subr.bf16.mxu0 %v5596
        %5660 = vmatpush1.bf16.msra.mxu0 %v5595
        %5661 = vmatprep.subr.bf16.mxu0 %v5598
        %5662 = vmatpush1.bf16.msra.mxu0 %v5597
        %5663 = vmatprep.subr.bf16.mxu0 %v5600
        %5664 = vmatpush1.bf16.msra.mxu0 %v5599
        %5665 = vmatprep.subr.bf16.mxu0 %v5602
        %5666 = vmatpush1.bf16.msra.mxu0 %v5601
        %5667 = vmatprep.subr.bf16.mxu0 %v5604
        %5668 = vmatpush1.bf16.msra.mxu0 %v5603
        %5669 = vmatprep.subr.bf16.mxu0 %v5606
        %5670 = vmatpush1.bf16.msra.mxu0 %v5605
        %5671 = vmatprep.subr.bf16.mxu0 %v5608
        %5672 = vmatpush1.bf16.msra.mxu0 %v5607
        %5673 = vmatprep.subr.bf16.mxu0 %v5610
        %5674 = vmatpush1.bf16.msra.mxu0 %v5609
        %5675 = vmatprep.subr.bf16.mxu0 %v5612
        %5676 = vmatpush1.bf16.msra.mxu0 %v5611
        %5677 = vmatprep.subr.bf16.mxu0 %v5614
        %5678 = vmatpush1.bf16.msra.mxu0 %v5613
        %5679 = vmatprep.subr.bf16.mxu0 %v5616
        %5680 = vmatpush1.bf16.msra.mxu0 %v5615
        %5681 = vmatprep.subr.bf16.mxu0 %v5618
        %5682 = vmatpush1.bf16.msra.mxu0 %v5617
        %5683 = vmatprep.subr.bf16.mxu0 %v5620
        %5684 = vmatpush1.bf16.msra.mxu0 %v5619
        %5685 = vmatprep.mubr.bf16.mxu0 %v5384
        %5686 = vmatmul.mubr.bf16.gmra.mrb[0].mxu0 %v5383
        %v5687 = vpop.f32.mrb[0].mxu0
        %v5688 = vadd.f32 %v5486, %v5687
        %v5689 = vpop.f32.mrb[0].mxu0
        %v5690 = vadd.f32 %v5490, %v5689
        %v5691 = vpop.f32.mrb[0].mxu0
        %v5692 = vadd.f32 %v5486, %v5691
        %v5693 = vpop.f32.mrb[0].mxu0
        %v5694 = vadd.f32 %v5490, %v5693
        %5695 = vmatprep.mubr.bf16.mxu0 %v5386
        %5696 = vmatmul.mubr.bf16.gmra.mrb[0].mxu0 %v5385
        %v5697 = vpop.f32.mrb[0].mxu0
        %v5698 = vadd.f32 %v5486, %v5697
        %v5699 = vpop.f32.mrb[0].mxu0
        %v5700 = vadd.f32 %v5490, %v5699
        %v5701 = vpop.f32.mrb[0].mxu0
        %v5702 = vadd.f32 %v5486, %v5701
        %v5703 = vpop.f32.mrb[0].mxu0
        %v5704 = vadd.f32 %v5490, %v5703
        %5705 = vmatprep.mubr.bf16.mxu0 %v5388
        %5706 = vmatmul.mubr.bf16.gmra.mrb[0].mxu0 %v5387
        %v5707 = vpop.f32.mrb[0].mxu0
        %v5708 = vadd.f32 %v5486, %v5707
        %v5709 = vpop.f32.mrb[0].mxu0
        %v5710 = vadd.f32 %v5490, %v5709
        %v5711 = vpop.f32.mrb[0].mxu0
        %v5712 = vadd.f32 %v5486, %v5711
        %v5713 = vpop.f32.mrb[0].mxu0
        %v5714 = vadd.f32 %v5490, %v5713
        %5715 = vmatprep.mubr.bf16.mxu0 %v5390
        %5716 = vmatmul.mubr.bf16.gmra.mrb[0].mxu0 %v5389
        %v5717 = vpop.f32.mrb[0].mxu0
        %v5718 = vadd.f32 %v5486, %v5717
        %v5719 = vpop.f32.mrb[0].mxu0
        %v5720 = vadd.f32 %v5490, %v5719
        %v5721 = vpop.f32.mrb[0].mxu0
        %v5722 = vadd.f32 %v5486, %v5721
        %v5723 = vpop.f32.mrb[0].mxu0
        %v5724 = vadd.f32 %v5490, %v5723
        %5725 = vmatprep.mubr.bf16.mxu0 %v5392
        %5726 = vmatmul.mubr.bf16.gmra.mrb[0].mxu0 %v5391
        %v5727 = vpop.f32.mrb[0].mxu0
        %v5728 = vadd.f32 %v5486, %v5727
        %v5729 = vpop.f32.mrb[0].mxu0
        %v5730 = vadd.f32 %v5490, %v5729
        %v5731 = vpop.f32.mrb[0].mxu0
        %v5732 = vadd.f32 %v5486, %v5731
        %v5733 = vpop.f32.mrb[0].mxu0
        %v5734 = vadd.f32 %v5490, %v5733
        %5735 = vmatprep.mubr.bf16.mxu0 %v5394
        %5736 = vmatmul.mubr.bf16.gmra.mrb[0].mxu0 %v5393
        %v5737 = vpop.f32.mrb[0].mxu0
        %v5738 = vadd.f32 %v5486, %v5737
        %v5739 = vpop.f32.mrb[0].mxu0
        %v5740 = vadd.f32 %v5490, %v5739
        %v5741 = vpop.f32.mrb[0].mxu0
        %v5742 = vadd.f32 %v5486, %v5741
        %v5743 = vpop.f32.mrb[0].mxu0
        %v5744 = vadd.f32 %v5490, %v5743
        %5745 = vmatprep.mubr.bf16.mxu0 %v5396
        %5746 = vmatmul.mubr.bf16.gmra.mrb[0].mxu0 %v5395
        %v5747 = vpop.f32.mrb[0].mxu0
        %v5748 = vadd.f32 %v5486, %v5747
        %v5749 = vpop.f32.mrb[0].mxu0
        %v5750 = vadd.f32 %v5490, %v5749
        %v5751 = vpop.f32.mrb[0].mxu0
        %v5752 = vadd.f32 %v5486, %v5751
        %v5753 = vpop.f32.mrb[0].mxu0
        %v5754 = vadd.f32 %v5490, %v5753
        %5755 = vmatprep.mubr.bf16.mxu0 %v5398
        %5756 = vmatmul.mubr.bf16.gmra.mrb[0].mxu0 %v5397
        %v5757 = vpop.f32.mrb[0].mxu0
        %v5758 = vadd.f32 %v5486, %v5757
        %v5759 = vpop.f32.mrb[0].mxu0
        %v5760 = vadd.f32 %v5490, %v5759
        %v5761 = vpop.f32.mrb[0].mxu0
        %v5762 = vadd.f32 %v5486, %v5761
        %v5763 = vpop.f32.mrb[0].mxu0
        %v5764 = vadd.f32 %v5490, %v5763
        %5765 = vmatprep.mubr.bf16.mxu0 %v5400
        %5766 = vmatmul.mubr.bf16.gmra.mrb[0].mxu0 %v5399
        %v5767 = vpop.f32.mrb[0].mxu0
        %v5768 = vadd.f32 %v5486, %v5767
        %v5769 = vpop.f32.mrb[0].mxu0
        %v5770 = vadd.f32 %v5490, %v5769
        %v5771 = vpop.f32.mrb[0].mxu0
        %v5772 = vadd.f32 %v5486, %v5771
        %v5773 = vpop.f32.mrb[0].mxu0
        %v5774 = vadd.f32 %v5490, %v5773
        %5775 = vmatprep.mubr.bf16.mxu0 %v5402
        %5776 = vmatmul.mubr.bf16.gmra.mrb[0].mxu0 %v5401
        %v5777 = vpop.f32.mrb[0].mxu0
        %v5778 = vadd.f32 %v5486, %v5777
        %v5779 = vpop.f32.mrb[0].mxu0
        %v5780 = vadd.f32 %v5490, %v5779
        %v5781 = vpop.f32.mrb[0].mxu0
        %v5782 = vadd.f32 %v5486, %v5781
        %v5783 = vpop.f32.mrb[0].mxu0
        %v5784 = vadd.f32 %v5490, %v5783
        %5785 = vmatprep.mubr.bf16.mxu0 %v5404
        %5786 = vmatmul.mubr.bf16.gmra.mrb[0].mxu0 %v5403
        %v5787 = vpop.f32.mrb[0].mxu0
        %v5788 = vadd.f32 %v5486, %v5787
        %v5789 = vpop.f32.mrb[0].mxu0
        %v5790 = vadd.f32 %v5490, %v5789
        %v5791 = vpop.f32.mrb[0].mxu0
        %v5792 = vadd.f32 %v5486, %v5791
        %v5793 = vpop.f32.mrb[0].mxu0
        %v5794 = vadd.f32 %v5490, %v5793
        %5795 = vmatprep.mubr.bf16.mxu0 %v5406
        %5796 = vmatmul.mubr.bf16.gmra.mrb[0].mxu0 %v5405
        %v5797 = vpop.f32.mrb[0].mxu0
        %v5798 = vadd.f32 %v5486, %v5797
        %v5799 = vpop.f32.mrb[0].mxu0
        %v5800 = vadd.f32 %v5490, %v5799
        %v5801 = vpop.f32.mrb[0].mxu0
        %v5802 = vadd.f32 %v5486, %v5801
        %v5803 = vpop.f32.mrb[0].mxu0
        %v5804 = vadd.f32 %v5490, %v5803
        %5805 = vmatprep.mubr.bf16.mxu0 %v5408
        %5806 = vmatmul.mubr.bf16.gmra.mrb[0].mxu0 %v5407
        %v5807 = vpop.f32.mrb[0].mxu0
        %v5808 = vadd.f32 %v5486, %v5807
        %v5809 = vpop.f32.mrb[0].mxu0
        %v5810 = vadd.f32 %v5490, %v5809
        %v5811 = vpop.f32.mrb[0].mxu0
        %v5812 = vadd.f32 %v5486, %v5811
        %v5813 = vpop.f32.mrb[0].mxu0
        %v5814 = vadd.f32 %v5490, %v5813
        %5815 = vmatprep.mubr.bf16.mxu0 %v5410
        %5816 = vmatmul.mubr.bf16.gmra.mrb[0].mxu0 %v5409
        %v5817 = vpop.f32.mrb[0].mxu0
        %v5818 = vadd.f32 %v5486, %v5817
        %v5819 = vpop.f32.mrb[0].mxu0
        %v5820 = vadd.f32 %v5490, %v5819
        %v5821 = vpop.f32.mrb[0].mxu0
        %v5822 = vadd.f32 %v5486, %v5821
        %v5823 = vpop.f32.mrb[0].mxu0
        %v5824 = vadd.f32 %v5490, %v5823
        %5825 = vmatprep.mubr.bf16.mxu0 %v5412
        %5826 = vmatmul.mubr.bf16.gmra.mrb[0].mxu0 %v5411
        %v5827 = vpop.f32.mrb[0].mxu0
        %v5828 = vadd.f32 %v5486, %v5827
        %v5829 = vpop.f32.mrb[0].mxu0
        %v5830 = vadd.f32 %v5490, %v5829
        %v5831 = vpop.f32.mrb[0].mxu0
        %v5832 = vadd.f32 %v5486, %v5831
        %v5833 = vpop.f32.mrb[0].mxu0
        %v5834 = vadd.f32 %v5490, %v5833
        %5835 = vmatprep.mubr.bf16.mxu0 %v5414
        %5836 = vmatmul.mubr.bf16.gmra.mrb[0].mxu0 %v5413
        %v5837 = vpop.f32.mrb[0].mxu0
        %v5838 = vadd.f32 %v5486, %v5837
        %v5839 = vpop.f32.mrb[0].mxu0
        %v5840 = vadd.f32 %v5490, %v5839
        %v5841 = vpop.f32.mrb[0].mxu0
        %v5842 = vadd.f32 %v5486, %v5841
        %v5843 = vpop.f32.mrb[0].mxu0
        %v5844 = vadd.f32 %v5490, %v5843
        %5845 = vmatprep.mubr.bf16.mxu0 %v5416
        %5846 = vmatmul.mubr.bf16.gmra.mrb[0].mxu0 %v5415
        %v5847 = vpop.f32.mrb[0].mxu0
        %v5848 = vadd.f32 %v5486, %v5847
        %v5849 = vpop.f32.mrb[0].mxu0
        %v5850 = vadd.f32 %v5490, %v5849
        %v5851 = vpop.f32.mrb[0].mxu0
        %v5852 = vadd.f32 %v5486, %v5851
        %v5853 = vpop.f32.mrb[0].mxu0
        %v5854 = vadd.f32 %v5490, %v5853
        %5855 = vmatprep.mubr.bf16.mxu0 %v5418
        %5856 = vmatmul.mubr.bf16.gmra.mrb[0].mxu0 %v5417
        %v5857 = vpop.f32.mrb[0].mxu0
        %v5858 = vadd.f32 %v5486, %v5857
        %v5859 = vpop.f32.mrb[0].mxu0
        %v5860 = vadd.f32 %v5490, %v5859
        %v5861 = vpop.f32.mrb[0].mxu0
        %v5862 = vadd.f32 %v5486, %v5861
        %v5863 = vpop.f32.mrb[0].mxu0
        %v5864 = vadd.f32 %v5490, %v5863
        %5865 = vmatprep.mubr.bf16.mxu0 %v5420
        %5866 = vmatmul.mubr.bf16.gmra.mrb[0].mxu0 %v5419
        %v5867 = vpop.f32.mrb[0].mxu0
        %v5868 = vadd.f32 %v5486, %v5867
        %v5869 = vpop.f32.mrb[0].mxu0
        %v5870 = vadd.f32 %v5490, %v5869
        %v5871 = vpop.f32.mrb[0].mxu0
        %v5872 = vadd.f32 %v5486, %v5871
        %v5873 = vpop.f32.mrb[0].mxu0
        %v5874 = vadd.f32 %v5490, %v5873
        %5875 = vmatprep.mubr.bf16.mxu0 %v5422
        %5876 = vmatmul.mubr.bf16.gmra.mrb[0].mxu0 %v5421
        %v5877 = vpop.f32.mrb[0].mxu0
        %v5878 = vadd.f32 %v5486, %v5877
        %v5879 = vpop.f32.mrb[0].mxu0
        %v5880 = vadd.f32 %v5490, %v5879
        %v5881 = vpop.f32.mrb[0].mxu0
        %v5882 = vadd.f32 %v5486, %v5881
        %v5883 = vpop.f32.mrb[0].mxu0
        %v5884 = vadd.f32 %v5490, %v5883
        %5885 = vmatprep.mubr.bf16.mxu0 %v5424
        %5886 = vmatmul.mubr.bf16.gmra.mrb[0].mxu0 %v5423
        %v5887 = vpop.f32.mrb[0].mxu0
        %v5888 = vadd.f32 %v5486, %v5887
        %v5889 = vpop.f32.mrb[0].mxu0
        %v5890 = vadd.f32 %v5490, %v5889
        %v5891 = vpop.f32.mrb[0].mxu0
        %v5892 = vadd.f32 %v5486, %v5891
        %v5893 = vpop.f32.mrb[0].mxu0
        %v5894 = vadd.f32 %v5490, %v5893
        %5895 = vmatprep.mubr.bf16.mxu0 %v5426
        %5896 = vmatmul.mubr.bf16.gmra.mrb[0].mxu0 %v5425
        %v5897 = vpop.f32.mrb[0].mxu0
        %v5898 = vadd.f32 %v5486, %v5897
        %v5899 = vpop.f32.mrb[0].mxu0
        %v5900 = vadd.f32 %v5490, %v5899
        %v5901 = vpop.f32.mrb[0].mxu0
        %v5902 = vadd.f32 %v5486, %v5901
        %v5903 = vpop.f32.mrb[0].mxu0
        %v5904 = vadd.f32 %v5490, %v5903
        %5905 = vmatprep.mubr.bf16.mxu0 %v5428
        %5906 = vmatmul.mubr.bf16.gmra.mrb[0].mxu0 %v5427
        %v5907 = vpop.f32.mrb[0].mxu0
        %v5908 = vadd.f32 %v5486, %v5907
        %v5909 = vpop.f32.mrb[0].mxu0
        %v5910 = vadd.f32 %v5490, %v5909
        %v5911 = vpop.f32.mrb[0].mxu0
        %v5912 = vadd.f32 %v5486, %v5911
        %v5913 = vpop.f32.mrb[0].mxu0
        %v5914 = vadd.f32 %v5490, %v5913
        %5915 = vmatprep.mubr.bf16.mxu0 %v5430
        %5916 = vmatmul.mubr.bf16.gmra.mrb[0].mxu0 %v5429
        %v5917 = vpop.f32.mrb[0].mxu0
        %v5918 = vadd.f32 %v5486, %v5917
        %v5919 = vpop.f32.mrb[0].mxu0
        %v5920 = vadd.f32 %v5490, %v5919
        %v5921 = vpop.f32.mrb[0].mxu0
        %v5922 = vadd.f32 %v5486, %v5921
        %v5923 = vpop.f32.mrb[0].mxu0
        %v5924 = vadd.f32 %v5490, %v5923
        %5925 = vmatprep.mubr.bf16.mxu0 %v5432
        %5926 = vmatmul.mubr.bf16.gmra.mrb[0].mxu0 %v5431
        %v5927 = vpop.f32.mrb[0].mxu0
        %v5928 = vadd.f32 %v5486, %v5927
        %v5929 = vpop.f32.mrb[0].mxu0
        %v5930 = vadd.f32 %v5490, %v5929
        %v5931 = vpop.f32.mrb[0].mxu0
        %v5932 = vadd.f32 %v5486, %v5931
        %v5933 = vpop.f32.mrb[0].mxu0
        %v5934 = vadd.f32 %v5490, %v5933
        %5935 = vmatprep.mubr.bf16.mxu0 %v5434
        %5936 = vmatmul.mubr.bf16.gmra.mrb[0].mxu0 %v5433
        %v5937 = vpop.f32.mrb[0].mxu0
        %v5938 = vadd.f32 %v5486, %v5937
        %v5939 = vpop.f32.mrb[0].mxu0
        %v5940 = vadd.f32 %v5490, %v5939
        %v5941 = vpop.f32.mrb[0].mxu0
        %v5942 = vadd.f32 %v5486, %v5941
        %v5943 = vpop.f32.mrb[0].mxu0
        %v5944 = vadd.f32 %v5490, %v5943
        %5945 = vmatprep.mubr.bf16.mxu0 %v5436
        %5946 = vmatmul.mubr.bf16.gmra.mrb[0].mxu0 %v5435
        %v5947 = vpop.f32.mrb[0].mxu0
        %v5948 = vadd.f32 %v5486, %v5947
        %v5949 = vpop.f32.mrb[0].mxu0
        %v5950 = vadd.f32 %v5490, %v5949
        %v5951 = vpop.f32.mrb[0].mxu0
        %v5952 = vadd.f32 %v5486, %v5951
        %v5953 = vpop.f32.mrb[0].mxu0
        %v5954 = vadd.f32 %v5490, %v5953
        %5955 = vmatprep.mubr.bf16.mxu0 %v5438
        %5956 = vmatmul.mubr.bf16.gmra.mrb[0].mxu0 %v5437
        %v5957 = vpop.f32.mrb[0].mxu0
        %v5958 = vadd.f32 %v5486, %v5957
        %v5959 = vpop.f32.mrb[0].mxu0
        %v5960 = vadd.f32 %v5490, %v5959
        %v5961 = vpop.f32.mrb[0].mxu0
        %v5962 = vadd.f32 %v5486, %v5961
        %v5963 = vpop.f32.mrb[0].mxu0
        %v5964 = vadd.f32 %v5490, %v5963
        %5965 = vmatprep.mubr.bf16.mxu0 %v5440
        %5966 = vmatmul.mubr.bf16.gmra.mrb[0].mxu0 %v5439
        %v5967 = vpop.f32.mrb[0].mxu0
        %v5968 = vadd.f32 %v5486, %v5967
        %v5969 = vpop.f32.mrb[0].mxu0
        %v5970 = vadd.f32 %v5490, %v5969
        %v5971 = vpop.f32.mrb[0].mxu0
        %v5972 = vadd.f32 %v5486, %v5971
        %v5973 = vpop.f32.mrb[0].mxu0
        %v5974 = vadd.f32 %v5490, %v5973
        %5975 = vmatprep.mubr.bf16.mxu0 %v5442
        %5976 = vmatmul.mubr.bf16.gmra.mrb[0].mxu0 %v5441
        %v5977 = vpop.f32.mrb[0].mxu0
        %v5978 = vadd.f32 %v5486, %v5977
        %v5979 = vpop.f32.mrb[0].mxu0
        %v5980 = vadd.f32 %v5490, %v5979
        %v5981 = vpop.f32.mrb[0].mxu0
        %v5982 = vadd.f32 %v5486, %v5981
        %v5983 = vpop.f32.mrb[0].mxu0
        %v5984 = vadd.f32 %v5490, %v5983
        %5985 = vmatprep.mubr.bf16.mxu0 %v5444
        %5986 = vmatmul.mubr.bf16.gmra.mrb[0].mxu0 %v5443
        %v5987 = vpop.f32.mrb[0].mxu0
        %v5988 = vadd.f32 %v5486, %v5987
        %v5989 = vpop.f32.mrb[0].mxu0
        %v5990 = vadd.f32 %v5490, %v5989
        %v5991 = vpop.f32.mrb[0].mxu0
        %v5992 = vadd.f32 %v5486, %v5991
        %v5993 = vpop.f32.mrb[0].mxu0
        %v5994 = vadd.f32 %v5490, %v5993
        %5995 = vmatprep.mubr.bf16.mxu0 %v5446
        %5996 = vmatmul.mubr.bf16.gmra.mrb[0].mxu0 %v5445
        %v5997 = vpop.f32.mrb[0].mxu0
        %v5998 = vadd.f32 %v5486, %v5997
        %v5999 = vpop.f32.mrb[0].mxu0
        %v6000 = vadd.f32 %v5490, %v5999
        %v6001 = vpop.f32.mrb[0].mxu0
        %v6002 = vadd.f32 %v5486, %v6001
        %v6003 = vpop.f32.mrb[0].mxu0
        %v6004 = vadd.f32 %v5490, %v6003
        %6005 = vdwg.mxu0
        %v6006 = vmax.f32 %v5688, 0.0
        %v6007 = vmax.f32 %v5690, 0.0
        %v6008 = vmax.f32 %v5692, 0.0
        %v6009 = vmax.f32 %v5694, 0.0
        %v6010 = vmax.f32 %v5698, 0.0
        %v6011 = vmax.f32 %v5700, 0.0
        %v6012 = vmax.f32 %v5702, 0.0
        %v6013 = vmax.f32 %v5704, 0.0
        %v6014 = vmax.f32 %v5708, 0.0
        %v6015 = vmax.f32 %v5710, 0.0
        %v6016 = vmax.f32 %v5712, 0.0
        %v6017 = vmax.f32 %v5714, 0.0
        %v6018 = vmax.f32 %v5718, 0.0
        %v6019 = vmax.f32 %v5720, 0.0
        %v6020 = vmax.f32 %v5722, 0.0
        %v6021 = vmax.f32 %v5724, 0.0
        %v6022 = vmax.f32 %v5728, 0.0
        %v6023 = vmax.f32 %v5730, 0.0
        %v6024 = vmax.f32 %v5732, 0.0
        %v6025 = vmax.f32 %v5734, 0.0
        %v6026 = vmax.f32 %v5738, 0.0
        %v6027 = vmax.f32 %v5740, 0.0
        %v6028 = vmax.f32 %v5742, 0.0
        %v6029 = vmax.f32 %v5744, 0.0
        %v6030 = vmax.f32 %v5748, 0.0
        %v6031 = vmax.f32 %v5750, 0.0
        %v6032 = vmax.f32 %v5752, 0.0
        %v6033 = vmax.f32 %v5754, 0.0
        %v6034 = vmax.f32 %v5758, 0.0
        %v6035 = vmax.f32 %v5760, 0.0
        %v6036 = vmax.f32 %v5762, 0.0
        %v6037 = vmax.f32 %v5764, 0.0
        %v6038 = vmax.f32 %v5768, 0.0
        %v6039 = vmax.f32 %v5770, 0.0
        %v6040 = vmax.f32 %v5772, 0.0
        %v6041 = vmax.f32 %v5774, 0.0
        %v6042 = vmax.f32 %v5778, 0.0
        %v6043 = vmax.f32 %v5780, 0.0
        %v6044 = vmax.f32 %v5782, 0.0
        %v6045 = vmax.f32 %v5784, 0.0
        %v6046 = vmax.f32 %v5788, 0.0
        %v6047 = vmax.f32 %v5790, 0.0
        %v6048 = vmax.f32 %v5792, 0.0
        %v6049 = vmax.f32 %v5794, 0.0
        %v6050 = vmax.f32 %v5798, 0.0
        %v6051 = vmax.f32 %v5800, 0.0
        %v6052 = vmax.f32 %v5802, 0.0
        %v6053 = vmax.f32 %v5804, 0.0
        %v6054 = vmax.f32 %v5808, 0.0
        %v6055 = vmax.f32 %v5810, 0.0
        %v6056 = vmax.f32 %v5812, 0.0
        %v6057 = vmax.f32 %v5814, 0.0
        %v6058 = vmax.f32 %v5818, 0.0
        %v6059 = vmax.f32 %v5820, 0.0
        %v6060 = vmax.f32 %v5822, 0.0
        %v6061 = vmax.f32 %v5824, 0.0
        %v6062 = vmax.f32 %v5828, 0.0
        %v6063 = vmax.f32 %v5830, 0.0
        %v6064 = vmax.f32 %v5832, 0.0
        %v6065 = vmax.f32 %v5834, 0.0
        %v6066 = vmax.f32 %v5838, 0.0
        %v6067 = vmax.f32 %v5840, 0.0
        %v6068 = vmax.f32 %v5842, 0.0
        %v6069 = vmax.f32 %v5844, 0.0
        %v6070 = vmax.f32 %v5848, 0.0
        %v6071 = vmax.f32 %v5850, 0.0
        %v6072 = vmax.f32 %v5852, 0.0
        %v6073 = vmax.f32 %v5854, 0.0
        %v6074 = vmax.f32 %v5858, 0.0
        %v6075 = vmax.f32 %v5860, 0.0
        %v6076 = vmax.f32 %v5862, 0.0
        %v6077 = vmax.f32 %v5864, 0.0
        %v6078 = vmax.f32 %v5868, 0.0
        %v6079 = vmax.f32 %v5870, 0.0
        %v6080 = vmax.f32 %v5872, 0.0
        %v6081 = vmax.f32 %v5874, 0.0
        %v6082 = vmax.f32 %v5878, 0.0
        %v6083 = vmax.f32 %v5880, 0.0
        %v6084 = vmax.f32 %v5882, 0.0
        %v6085 = vmax.f32 %v5884, 0.0
        %v6086 = vmax.f32 %v5888, 0.0
        %v6087 = vmax.f32 %v5890, 0.0
        %v6088 = vmax.f32 %v5892, 0.0
        %v6089 = vmax.f32 %v5894, 0.0
        %v6090 = vmax.f32 %v5898, 0.0
        %v6091 = vmax.f32 %v5900, 0.0
        %v6092 = vmax.f32 %v5902, 0.0
        %v6093 = vmax.f32 %v5904, 0.0
        %v6094 = vmax.f32 %v5908, 0.0
        %v6095 = vmax.f32 %v5910, 0.0
        %v6096 = vmax.f32 %v5912, 0.0
        %v6097 = vmax.f32 %v5914, 0.0
        %v6098 = vmax.f32 %v5918, 0.0
        %v6099 = vmax.f32 %v5920, 0.0
        %v6100 = vmax.f32 %v5922, 0.0
        %v6101 = vmax.f32 %v5924, 0.0
        %v6102 = vmax.f32 %v5928, 0.0
        %v6103 = vmax.f32 %v5930, 0.0
        %v6104 = vmax.f32 %v5932, 0.0
        %v6105 = vmax.f32 %v5934, 0.0
        %v6106 = vmax.f32 %v5938, 0.0
        %v6107 = vmax.f32 %v5940, 0.0
        %v6108 = vmax.f32 %v5942, 0.0
        %v6109 = vmax.f32 %v5944, 0.0
        %v6110 = vmax.f32 %v5948, 0.0
        %v6111 = vmax.f32 %v5950, 0.0
        %v6112 = vmax.f32 %v5952, 0.0
        %v6113 = vmax.f32 %v5954, 0.0
        %v6114 = vmax.f32 %v5958, 0.0
        %v6115 = vmax.f32 %v5960, 0.0
        %v6116 = vmax.f32 %v5962, 0.0
        %v6117 = vmax.f32 %v5964, 0.0
        %v6118 = vmax.f32 %v5968, 0.0
        %v6119 = vmax.f32 %v5970, 0.0
        %v6120 = vmax.f32 %v5972, 0.0
        %v6121 = vmax.f32 %v5974, 0.0
        %v6122 = vmax.f32 %v5978, 0.0
        %v6123 = vmax.f32 %v5980, 0.0
        %v6124 = vmax.f32 %v5982, 0.0
        %v6125 = vmax.f32 %v5984, 0.0
        %v6126 = vmax.f32 %v5988, 0.0
        %v6127 = vmax.f32 %v5990, 0.0
        %v6128 = vmax.f32 %v5992, 0.0
        %v6129 = vmax.f32 %v5994, 0.0
        %v6130 = vmax.f32 %v5998, 0.0
        %v6131 = vmax.f32 %v6000, 0.0
        %v6132 = vmax.f32 %v6002, 0.0
        %v6133 = vmax.f32 %v6004, 0.0
        %v6134 = vpack.c.bf16 %v6008, %v6006
        %v6135 = vpack.c.bf16 %v6009, %v6007
        %v6136 = vpack.c.bf16 %v6012, %v6010
        %v6137 = vpack.c.bf16 %v6013, %v6011
        %v6138 = vpack.c.bf16 %v6016, %v6014
        %v6139 = vpack.c.bf16 %v6017, %v6015
        %v6140 = vpack.c.bf16 %v6020, %v6018
        %v6141 = vpack.c.bf16 %v6021, %v6019
        %v6142 = vpack.c.bf16 %v6024, %v6022
        %v6143 = vpack.c.bf16 %v6025, %v6023
        %v6144 = vpack.c.bf16 %v6028, %v6026
        %v6145 = vpack.c.bf16 %v6029, %v6027
        %v6146 = vpack.c.bf16 %v6032, %v6030
        %v6147 = vpack.c.bf16 %v6033, %v6031
        %v6148 = vpack.c.bf16 %v6036, %v6034
        %v6149 = vpack.c.bf16 %v6037, %v6035
        %v6150 = vpack.c.bf16 %v6040, %v6038
        %v6151 = vpack.c.bf16 %v6041, %v6039
        %v6152 = vpack.c.bf16 %v6044, %v6042
        %v6153 = vpack.c.bf16 %v6045, %v6043
        %v6154 = vpack.c.bf16 %v6048, %v6046
        %v6155 = vpack.c.bf16 %v6049, %v6047
        %v6156 = vpack.c.bf16 %v6052, %v6050
        %v6157 = vpack.c.bf16 %v6053, %v6051
        %v6158 = vpack.c.bf16 %v6056, %v6054
        %v6159 = vpack.c.bf16 %v6057, %v6055
        %v6160 = vpack.c.bf16 %v6060, %v6058
        %v6161 = vpack.c.bf16 %v6061, %v6059
        %v6162 = vpack.c.bf16 %v6064, %v6062
        %v6163 = vpack.c.bf16 %v6065, %v6063
        %v6164 = vpack.c.bf16 %v6068, %v6066
        %v6165 = vpack.c.bf16 %v6069, %v6067
        %v6166 = vpack.c.bf16 %v6072, %v6070
        %v6167 = vpack.c.bf16 %v6073, %v6071
        %v6168 = vpack.c.bf16 %v6076, %v6074
        %v6169 = vpack.c.bf16 %v6077, %v6075
        %v6170 = vpack.c.bf16 %v6080, %v6078
        %v6171 = vpack.c.bf16 %v6081, %v6079
        %v6172 = vpack.c.bf16 %v6084, %v6082
        %v6173 = vpack.c.bf16 %v6085, %v6083
        %v6174 = vpack.c.bf16 %v6088, %v6086
        %v6175 = vpack.c.bf16 %v6089, %v6087
        %v6176 = vpack.c.bf16 %v6092, %v6090
        %v6177 = vpack.c.bf16 %v6093, %v6091
        %v6178 = vpack.c.bf16 %v6096, %v6094
        %v6179 = vpack.c.bf16 %v6097, %v6095
        %v6180 = vpack.c.bf16 %v6100, %v6098
        %v6181 = vpack.c.bf16 %v6101, %v6099
        %v6182 = vpack.c.bf16 %v6104, %v6102
        %v6183 = vpack.c.bf16 %v6105, %v6103
        %v6184 = vpack.c.bf16 %v6108, %v6106
        %v6185 = vpack.c.bf16 %v6109, %v6107
        %v6186 = vpack.c.bf16 %v6112, %v6110
        %v6187 = vpack.c.bf16 %v6113, %v6111
        %v6188 = vpack.c.bf16 %v6116, %v6114
        %v6189 = vpack.c.bf16 %v6117, %v6115
        %v6190 = vpack.c.bf16 %v6120, %v6118
        %v6191 = vpack.c.bf16 %v6121, %v6119
        %v6192 = vpack.c.bf16 %v6124, %v6122
        %v6193 = vpack.c.bf16 %v6125, %v6123
        %v6194 = vpack.c.bf16 %v6128, %v6126
        %v6195 = vpack.c.bf16 %v6129, %v6127
        %v6196 = vpack.c.bf16 %v6132, %v6130
        %v6197 = vpack.c.bf16 %v6133, %v6131
        %s6198 = scalar_lea.vmem [#allocation2], 1536
        %v6199 = vld [vmem:[%s6198] sm:$0xff]
        %v6200 = vld [vmem:[%s6198 + $0x8] sm:$0xff]
        %v6201 = vld [vmem:[%s6198 + $0x10] sm:$0xff]
        %v6202 = vld [vmem:[%s6198 + $0x18] sm:$0xff]
        %v6203 = vld [vmem:[%s6198 + $0x20] sm:$0xff]
        %v6204 = vld [vmem:[%s6198 + $0x28] sm:$0xff]
        %v6205 = vld [vmem:[%s6198 + $0x30] sm:$0xff]
        %v6206 = vld [vmem:[%s6198 + $0x38] sm:$0xff]
        %v6207 = vld [vmem:[%s6198 + $0x40] sm:$0xff]
        %v6208 = vld [vmem:[%s6198 + $0x48] sm:$0xff]
        %v6209 = vld [vmem:[%s6198 + $0x50] sm:$0xff]
        %v6210 = vld [vmem:[%s6198 + $0x58] sm:$0xff]
        %v6211 = vld [vmem:[%s6198 + $0x60] sm:$0xff]
        %v6212 = vld [vmem:[%s6198 + $0x68] sm:$0xff]
        %v6213 = vld [vmem:[%s6198 + $0x70] sm:$0xff]
        %v6214 = vld [vmem:[%s6198 + $0x78] sm:$0xff]
        %v6215 = vld [vmem:[%s6198 + $0x80] sm:$0xff]
        %v6216 = vld [vmem:[%s6198 + $0x88] sm:$0xff]
        %v6217 = vld [vmem:[%s6198 + $0x90] sm:$0xff]
        %v6218 = vld [vmem:[%s6198 + $0x98] sm:$0xff]
        %v6219 = vld [vmem:[%s6198 + $0xa0] sm:$0xff]
        %v6220 = vld [vmem:[%s6198 + $0xa8] sm:$0xff]
        %v6221 = vld [vmem:[%s6198 + $0xb0] sm:$0xff]
        %v6222 = vld [vmem:[%s6198 + $0xb8] sm:$0xff]
        %v6223 = vld [vmem:[%s6198 + $0xc0] sm:$0xff]
        %v6224 = vld [vmem:[%s6198 + $0xc8] sm:$0xff]
        %v6225 = vld [vmem:[%s6198 + $0xd0] sm:$0xff]
        %v6226 = vld [vmem:[%s6198 + $0xd8] sm:$0xff]
        %v6227 = vld [vmem:[%s6198 + $0xe0] sm:$0xff]
        %v6228 = vld [vmem:[%s6198 + $0xe8] sm:$0xff]
        %v6229 = vld [vmem:[%s6198 + $0xf0] sm:$0xff]
        %v6230 = vld [vmem:[%s6198 + $0xf8] sm:$0xff]
        %s6231 = scalar_lea.vmem %s3, 7
        %v6232 = vld [vmem:[%s6231] ss:$8 sm:$0x3]
        %v6234 = vlaneseq
        %v6235 = vshrl.u32 %v6234, 7
        %v6236 = vsub.s32 0, %v6235
        %v6237 = vrot.slane %v6232, %v6236
        %v6238 = vlaneseq
        %v6239 = vshrl.u32 %v6238, 7
        %v6240 = vsub.s32 1, %v6239
        %v6241 = vrot.slane %v6232, %v6240
        %v6276 = vunpack.c.l.b16 %v6199
        %v6277 = vunpack.c.h.b16 %v6199
        %v6278 = vunpack.c.l.b16 %v6200
        %v6279 = vunpack.c.h.b16 %v6200
        %v6280 = vunpack.c.l.b16 %v6201
        %v6281 = vunpack.c.h.b16 %v6201
        %v6282 = vunpack.c.l.b16 %v6202
        %v6283 = vunpack.c.h.b16 %v6202
        %v6284 = vunpack.c.l.b16 %v6203
        %v6285 = vunpack.c.h.b16 %v6203
        %v6286 = vunpack.c.l.b16 %v6204
        %v6287 = vunpack.c.h.b16 %v6204
        %v6288 = vunpack.c.l.b16 %v6205
        %v6289 = vunpack.c.h.b16 %v6205
        %v6290 = vunpack.c.l.b16 %v6206
        %v6291 = vunpack.c.h.b16 %v6206
        %v6292 = vunpack.c.l.b16 %v6207
        %v6293 = vunpack.c.h.b16 %v6207
        %v6294 = vunpack.c.l.b16 %v6208
        %v6295 = vunpack.c.h.b16 %v6208
        %v6296 = vunpack.c.l.b16 %v6209
        %v6297 = vunpack.c.h.b16 %v6209
        %v6298 = vunpack.c.l.b16 %v6210
        %v6299 = vunpack.c.h.b16 %v6210
        %v6300 = vunpack.c.l.b16 %v6211
        %v6301 = vunpack.c.h.b16 %v6211
        %v6302 = vunpack.c.l.b16 %v6212
        %v6303 = vunpack.c.h.b16 %v6212
        %v6304 = vunpack.c.l.b16 %v6213
        %v6305 = vunpack.c.h.b16 %v6213
        %v6306 = vunpack.c.l.b16 %v6214
        %v6307 = vunpack.c.h.b16 %v6214
        %v6308 = vunpack.c.l.b16 %v6215
        %v6309 = vunpack.c.h.b16 %v6215
        %v6310 = vunpack.c.l.b16 %v6216
        %v6311 = vunpack.c.h.b16 %v6216
        %v6312 = vunpack.c.l.b16 %v6217
        %v6313 = vunpack.c.h.b16 %v6217
        %v6314 = vunpack.c.l.b16 %v6218
        %v6315 = vunpack.c.h.b16 %v6218
        %v6316 = vunpack.c.l.b16 %v6219
        %v6317 = vunpack.c.h.b16 %v6219
        %v6318 = vunpack.c.l.b16 %v6220
        %v6319 = vunpack.c.h.b16 %v6220
        %v6320 = vunpack.c.l.b16 %v6221
        %v6321 = vunpack.c.h.b16 %v6221
        %v6322 = vunpack.c.l.b16 %v6222
        %v6323 = vunpack.c.h.b16 %v6222
        %v6324 = vunpack.c.l.b16 %v6223
        %v6325 = vunpack.c.h.b16 %v6223
        %v6326 = vunpack.c.l.b16 %v6224
        %v6327 = vunpack.c.h.b16 %v6224
        %v6328 = vunpack.c.l.b16 %v6225
        %v6329 = vunpack.c.h.b16 %v6225
        %v6330 = vunpack.c.l.b16 %v6226
        %v6331 = vunpack.c.h.b16 %v6226
        %v6332 = vunpack.c.l.b16 %v6227
        %v6333 = vunpack.c.h.b16 %v6227
        %v6334 = vunpack.c.l.b16 %v6228
        %v6335 = vunpack.c.h.b16 %v6228
        %v6336 = vunpack.c.l.b16 %v6229
        %v6337 = vunpack.c.h.b16 %v6229
        %v6338 = vunpack.c.l.b16 %v6230
        %v6339 = vunpack.c.h.b16 %v6230
        %v6340 = vpack.c.b16 %v6278, %v6276
        %v6341 = vpack.c.b16 %v6279, %v6277
        %v6342 = vpack.c.b16 %v6282, %v6280
        %v6343 = vpack.c.b16 %v6283, %v6281
        %v6344 = vpack.c.b16 %v6286, %v6284
        %v6345 = vpack.c.b16 %v6287, %v6285
        %v6346 = vpack.c.b16 %v6290, %v6288
        %v6347 = vpack.c.b16 %v6291, %v6289
        %v6348 = vpack.c.b16 %v6294, %v6292
        %v6349 = vpack.c.b16 %v6295, %v6293
        %v6350 = vpack.c.b16 %v6298, %v6296
        %v6351 = vpack.c.b16 %v6299, %v6297
        %v6352 = vpack.c.b16 %v6302, %v6300
        %v6353 = vpack.c.b16 %v6303, %v6301
        %v6354 = vpack.c.b16 %v6306, %v6304
        %v6355 = vpack.c.b16 %v6307, %v6305
        %v6356 = vpack.c.b16 %v6310, %v6308
        %v6357 = vpack.c.b16 %v6311, %v6309
        %v6358 = vpack.c.b16 %v6314, %v6312
        %v6359 = vpack.c.b16 %v6315, %v6313
        %v6360 = vpack.c.b16 %v6318, %v6316
        %v6361 = vpack.c.b16 %v6319, %v6317
        %v6362 = vpack.c.b16 %v6322, %v6320
        %v6363 = vpack.c.b16 %v6323, %v6321
        %v6364 = vpack.c.b16 %v6326, %v6324
        %v6365 = vpack.c.b16 %v6327, %v6325
        %v6366 = vpack.c.b16 %v6330, %v6328
        %v6367 = vpack.c.b16 %v6331, %v6329
        %v6368 = vpack.c.b16 %v6334, %v6332
        %v6369 = vpack.c.b16 %v6335, %v6333
        %v6370 = vpack.c.b16 %v6338, %v6336
        %v6371 = vpack.c.b16 %v6339, %v6337
        %6404 = vmatprep.subr.bf16.mxu0 %v6341
        %6405 = vmatpush1.bf16.msra.mxu0 %v6340
        %6406 = vmatprep.subr.bf16.mxu0 %v6343
        %6407 = vmatpush1.bf16.msra.mxu0 %v6342
        %6408 = vmatprep.subr.bf16.mxu0 %v6345
        %6409 = vmatpush1.bf16.msra.mxu0 %v6344
        %6410 = vmatprep.subr.bf16.mxu0 %v6347
        %6411 = vmatpush1.bf16.msra.mxu0 %v6346
        %6412 = vmatprep.subr.bf16.mxu0 %v6349
        %6413 = vmatpush1.bf16.msra.mxu0 %v6348
        %6414 = vmatprep.subr.bf16.mxu0 %v6351
        %6415 = vmatpush1.bf16.msra.mxu0 %v6350
        %6416 = vmatprep.subr.bf16.mxu0 %v6353
        %6417 = vmatpush1.bf16.msra.mxu0 %v6352
        %6418 = vmatprep.subr.bf16.mxu0 %v6355
        %6419 = vmatpush1.bf16.msra.mxu0 %v6354
        %6420 = vmatprep.subr.bf16.mxu0 %v6357
        %6421 = vmatpush1.bf16.msra.mxu0 %v6356
        %6422 = vmatprep.subr.bf16.mxu0 %v6359
        %6423 = vmatpush1.bf16.msra.mxu0 %v6358
        %6424 = vmatprep.subr.bf16.mxu0 %v6361
        %6425 = vmatpush1.bf16.msra.mxu0 %v6360
        %6426 = vmatprep.subr.bf16.mxu0 %v6363
        %6427 = vmatpush1.bf16.msra.mxu0 %v6362
        %6428 = vmatprep.subr.bf16.mxu0 %v6365
        %6429 = vmatpush1.bf16.msra.mxu0 %v6364
        %6430 = vmatprep.subr.bf16.mxu0 %v6367
        %6431 = vmatpush1.bf16.msra.mxu0 %v6366
        %6432 = vmatprep.subr.bf16.mxu0 %v6369
        %6433 = vmatpush1.bf16.msra.mxu0 %v6368
        %6434 = vmatprep.subr.bf16.mxu0 %v6371
        %6435 = vmatpush1.bf16.msra.mxu0 %v6370
        %6436 = vmatprep.mubr.bf16.mxu0 %v6135
        %6437 = vmatmul.mubr.bf16.gmra.mrb[0].mxu0 %v6134
        %v6438 = vpop.f32.mrb[0].mxu0
        %v6439 = vadd.f32 %v6237, %v6438
        %v6440 = vpop.f32.mrb[0].mxu0
        %v6441 = vadd.f32 %v6241, %v6440
        %v6442 = vpop.f32.mrb[0].mxu0
        %v6443 = vadd.f32 %v6237, %v6442
        %v6444 = vpop.f32.mrb[0].mxu0
        %v6445 = vadd.f32 %v6241, %v6444
        %6446 = vmatprep.mubr.bf16.mxu0 %v6137
        %6447 = vmatmul.mubr.bf16.gmra.mrb[0].mxu0 %v6136
        %v6448 = vpop.f32.mrb[0].mxu0
        %v6449 = vadd.f32 %v6237, %v6448
        %v6450 = vpop.f32.mrb[0].mxu0
        %v6451 = vadd.f32 %v6241, %v6450
        %v6452 = vpop.f32.mrb[0].mxu0
        %v6453 = vadd.f32 %v6237, %v6452
        %v6454 = vpop.f32.mrb[0].mxu0
        %v6455 = vadd.f32 %v6241, %v6454
        %6456 = vmatprep.mubr.bf16.mxu0 %v6139
        %6457 = vmatmul.mubr.bf16.gmra.mrb[0].mxu0 %v6138
        %v6458 = vpop.f32.mrb[0].mxu0
        %v6459 = vadd.f32 %v6237, %v6458
        %v6460 = vpop.f32.mrb[0].mxu0
        %v6461 = vadd.f32 %v6241, %v6460
        %v6462 = vpop.f32.mrb[0].mxu0
        %v6463 = vadd.f32 %v6237, %v6462
        %v6464 = vpop.f32.mrb[0].mxu0
        %v6465 = vadd.f32 %v6241, %v6464
        %6466 = vmatprep.mubr.bf16.mxu0 %v6141
        %6467 = vmatmul.mubr.bf16.gmra.mrb[0].mxu0 %v6140
        %v6468 = vpop.f32.mrb[0].mxu0
        %v6469 = vadd.f32 %v6237, %v6468
        %v6470 = vpop.f32.mrb[0].mxu0
        %v6471 = vadd.f32 %v6241, %v6470
        %v6472 = vpop.f32.mrb[0].mxu0
        %v6473 = vadd.f32 %v6237, %v6472
        %v6474 = vpop.f32.mrb[0].mxu0
        %v6475 = vadd.f32 %v6241, %v6474
        %6476 = vmatprep.mubr.bf16.mxu0 %v6143
        %6477 = vmatmul.mubr.bf16.gmra.mrb[0].mxu0 %v6142
        %v6478 = vpop.f32.mrb[0].mxu0
        %v6479 = vadd.f32 %v6237, %v6478
        %v6480 = vpop.f32.mrb[0].mxu0
        %v6481 = vadd.f32 %v6241, %v6480
        %v6482 = vpop.f32.mrb[0].mxu0
        %v6483 = vadd.f32 %v6237, %v6482
        %v6484 = vpop.f32.mrb[0].mxu0
        %v6485 = vadd.f32 %v6241, %v6484
        %6486 = vmatprep.mubr.bf16.mxu0 %v6145
        %6487 = vmatmul.mubr.bf16.gmra.mrb[0].mxu0 %v6144
        %v6488 = vpop.f32.mrb[0].mxu0
        %v6489 = vadd.f32 %v6237, %v6488
        %v6490 = vpop.f32.mrb[0].mxu0
        %v6491 = vadd.f32 %v6241, %v6490
        %v6492 = vpop.f32.mrb[0].mxu0
        %v6493 = vadd.f32 %v6237, %v6492
        %v6494 = vpop.f32.mrb[0].mxu0
        %v6495 = vadd.f32 %v6241, %v6494
        %6496 = vmatprep.mubr.bf16.mxu0 %v6147
        %6497 = vmatmul.mubr.bf16.gmra.mrb[0].mxu0 %v6146
        %v6498 = vpop.f32.mrb[0].mxu0
        %v6499 = vadd.f32 %v6237, %v6498
        %v6500 = vpop.f32.mrb[0].mxu0
        %v6501 = vadd.f32 %v6241, %v6500
        %v6502 = vpop.f32.mrb[0].mxu0
        %v6503 = vadd.f32 %v6237, %v6502
        %v6504 = vpop.f32.mrb[0].mxu0
        %v6505 = vadd.f32 %v6241, %v6504
        %6506 = vmatprep.mubr.bf16.mxu0 %v6149
        %6507 = vmatmul.mubr.bf16.gmra.mrb[0].mxu0 %v6148
        %v6508 = vpop.f32.mrb[0].mxu0
        %v6509 = vadd.f32 %v6237, %v6508
        %v6510 = vpop.f32.mrb[0].mxu0
        %v6511 = vadd.f32 %v6241, %v6510
        %v6512 = vpop.f32.mrb[0].mxu0
        %v6513 = vadd.f32 %v6237, %v6512
        %v6514 = vpop.f32.mrb[0].mxu0
        %v6515 = vadd.f32 %v6241, %v6514
        %6516 = vmatprep.mubr.bf16.mxu0 %v6151
        %6517 = vmatmul.mubr.bf16.gmra.mrb[0].mxu0 %v6150
        %v6518 = vpop.f32.mrb[0].mxu0
        %v6519 = vadd.f32 %v6237, %v6518
        %v6520 = vpop.f32.mrb[0].mxu0
        %v6521 = vadd.f32 %v6241, %v6520
        %v6522 = vpop.f32.mrb[0].mxu0
        %v6523 = vadd.f32 %v6237, %v6522
        %v6524 = vpop.f32.mrb[0].mxu0
        %v6525 = vadd.f32 %v6241, %v6524
        %6526 = vmatprep.mubr.bf16.mxu0 %v6153
        %6527 = vmatmul.mubr.bf16.gmra.mrb[0].mxu0 %v6152
        %v6528 = vpop.f32.mrb[0].mxu0
        %v6529 = vadd.f32 %v6237, %v6528
        %v6530 = vpop.f32.mrb[0].mxu0
        %v6531 = vadd.f32 %v6241, %v6530
        %v6532 = vpop.f32.mrb[0].mxu0
        %v6533 = vadd.f32 %v6237, %v6532
        %v6534 = vpop.f32.mrb[0].mxu0
        %v6535 = vadd.f32 %v6241, %v6534
        %6536 = vmatprep.mubr.bf16.mxu0 %v6155
        %6537 = vmatmul.mubr.bf16.gmra.mrb[0].mxu0 %v6154
        %v6538 = vpop.f32.mrb[0].mxu0
        %v6539 = vadd.f32 %v6237, %v6538
        %v6540 = vpop.f32.mrb[0].mxu0
        %v6541 = vadd.f32 %v6241, %v6540
        %v6542 = vpop.f32.mrb[0].mxu0
        %v6543 = vadd.f32 %v6237, %v6542
        %v6544 = vpop.f32.mrb[0].mxu0
        %v6545 = vadd.f32 %v6241, %v6544
        %6546 = vmatprep.mubr.bf16.mxu0 %v6157
        %6547 = vmatmul.mubr.bf16.gmra.mrb[0].mxu0 %v6156
        %v6548 = vpop.f32.mrb[0].mxu0
        %v6549 = vadd.f32 %v6237, %v6548
        %v6550 = vpop.f32.mrb[0].mxu0
        %v6551 = vadd.f32 %v6241, %v6550
        %v6552 = vpop.f32.mrb[0].mxu0
        %v6553 = vadd.f32 %v6237, %v6552
        %v6554 = vpop.f32.mrb[0].mxu0
        %v6555 = vadd.f32 %v6241, %v6554
        %6556 = vmatprep.mubr.bf16.mxu0 %v6159
        %6557 = vmatmul.mubr.bf16.gmra.mrb[0].mxu0 %v6158
        %v6558 = vpop.f32.mrb[0].mxu0
        %v6559 = vadd.f32 %v6237, %v6558
        %v6560 = vpop.f32.mrb[0].mxu0
        %v6561 = vadd.f32 %v6241, %v6560
        %v6562 = vpop.f32.mrb[0].mxu0
        %v6563 = vadd.f32 %v6237, %v6562
        %v6564 = vpop.f32.mrb[0].mxu0
        %v6565 = vadd.f32 %v6241, %v6564
        %6566 = vmatprep.mubr.bf16.mxu0 %v6161
        %6567 = vmatmul.mubr.bf16.gmra.mrb[0].mxu0 %v6160
        %v6568 = vpop.f32.mrb[0].mxu0
        %v6569 = vadd.f32 %v6237, %v6568
        %v6570 = vpop.f32.mrb[0].mxu0
        %v6571 = vadd.f32 %v6241, %v6570
        %v6572 = vpop.f32.mrb[0].mxu0
        %v6573 = vadd.f32 %v6237, %v6572
        %v6574 = vpop.f32.mrb[0].mxu0
        %v6575 = vadd.f32 %v6241, %v6574
        %6576 = vmatprep.mubr.bf16.mxu0 %v6163
        %6577 = vmatmul.mubr.bf16.gmra.mrb[0].mxu0 %v6162
        %v6578 = vpop.f32.mrb[0].mxu0
        %v6579 = vadd.f32 %v6237, %v6578
        %v6580 = vpop.f32.mrb[0].mxu0
        %v6581 = vadd.f32 %v6241, %v6580
        %v6582 = vpop.f32.mrb[0].mxu0
        %v6583 = vadd.f32 %v6237, %v6582
        %v6584 = vpop.f32.mrb[0].mxu0
        %v6585 = vadd.f32 %v6241, %v6584
        %6586 = vmatprep.mubr.bf16.mxu0 %v6165
        %6587 = vmatmul.mubr.bf16.gmra.mrb[0].mxu0 %v6164
        %v6588 = vpop.f32.mrb[0].mxu0
        %v6589 = vadd.f32 %v6237, %v6588
        %v6590 = vpop.f32.mrb[0].mxu0
        %v6591 = vadd.f32 %v6241, %v6590
        %v6592 = vpop.f32.mrb[0].mxu0
        %v6593 = vadd.f32 %v6237, %v6592
        %v6594 = vpop.f32.mrb[0].mxu0
        %v6595 = vadd.f32 %v6241, %v6594
        %6596 = vmatprep.mubr.bf16.mxu0 %v6167
        %6597 = vmatmul.mubr.bf16.gmra.mrb[0].mxu0 %v6166
        %v6598 = vpop.f32.mrb[0].mxu0
        %v6599 = vadd.f32 %v6237, %v6598
        %v6600 = vpop.f32.mrb[0].mxu0
        %v6601 = vadd.f32 %v6241, %v6600
        %v6602 = vpop.f32.mrb[0].mxu0
        %v6603 = vadd.f32 %v6237, %v6602
        %v6604 = vpop.f32.mrb[0].mxu0
        %v6605 = vadd.f32 %v6241, %v6604
        %6606 = vmatprep.mubr.bf16.mxu0 %v6169
        %6607 = vmatmul.mubr.bf16.gmra.mrb[0].mxu0 %v6168
        %v6608 = vpop.f32.mrb[0].mxu0
        %v6609 = vadd.f32 %v6237, %v6608
        %v6610 = vpop.f32.mrb[0].mxu0
        %v6611 = vadd.f32 %v6241, %v6610
        %v6612 = vpop.f32.mrb[0].mxu0
        %v6613 = vadd.f32 %v6237, %v6612
        %v6614 = vpop.f32.mrb[0].mxu0
        %v6615 = vadd.f32 %v6241, %v6614
        %6616 = vmatprep.mubr.bf16.mxu0 %v6171
        %6617 = vmatmul.mubr.bf16.gmra.mrb[0].mxu0 %v6170
        %v6618 = vpop.f32.mrb[0].mxu0
        %v6619 = vadd.f32 %v6237, %v6618
        %v6620 = vpop.f32.mrb[0].mxu0
        %v6621 = vadd.f32 %v6241, %v6620
        %v6622 = vpop.f32.mrb[0].mxu0
        %v6623 = vadd.f32 %v6237, %v6622
        %v6624 = vpop.f32.mrb[0].mxu0
        %v6625 = vadd.f32 %v6241, %v6624
        %6626 = vmatprep.mubr.bf16.mxu0 %v6173
        %6627 = vmatmul.mubr.bf16.gmra.mrb[0].mxu0 %v6172
        %v6628 = vpop.f32.mrb[0].mxu0
        %v6629 = vadd.f32 %v6237, %v6628
        %v6630 = vpop.f32.mrb[0].mxu0
        %v6631 = vadd.f32 %v6241, %v6630
        %v6632 = vpop.f32.mrb[0].mxu0
        %v6633 = vadd.f32 %v6237, %v6632
        %v6634 = vpop.f32.mrb[0].mxu0
        %v6635 = vadd.f32 %v6241, %v6634
        %6636 = vmatprep.mubr.bf16.mxu0 %v6175
        %6637 = vmatmul.mubr.bf16.gmra.mrb[0].mxu0 %v6174
        %v6638 = vpop.f32.mrb[0].mxu0
        %v6639 = vadd.f32 %v6237, %v6638
        %v6640 = vpop.f32.mrb[0].mxu0
        %v6641 = vadd.f32 %v6241, %v6640
        %v6642 = vpop.f32.mrb[0].mxu0
        %v6643 = vadd.f32 %v6237, %v6642
        %v6644 = vpop.f32.mrb[0].mxu0
        %v6645 = vadd.f32 %v6241, %v6644
        %6646 = vmatprep.mubr.bf16.mxu0 %v6177
        %6647 = vmatmul.mubr.bf16.gmra.mrb[0].mxu0 %v6176
        %v6648 = vpop.f32.mrb[0].mxu0
        %v6649 = vadd.f32 %v6237, %v6648
        %v6650 = vpop.f32.mrb[0].mxu0
        %v6651 = vadd.f32 %v6241, %v6650
        %v6652 = vpop.f32.mrb[0].mxu0
        %v6653 = vadd.f32 %v6237, %v6652
        %v6654 = vpop.f32.mrb[0].mxu0
        %v6655 = vadd.f32 %v6241, %v6654
        %6656 = vmatprep.mubr.bf16.mxu0 %v6179
        %6657 = vmatmul.mubr.bf16.gmra.mrb[0].mxu0 %v6178
        %v6658 = vpop.f32.mrb[0].mxu0
        %v6659 = vadd.f32 %v6237, %v6658
        %v6660 = vpop.f32.mrb[0].mxu0
        %v6661 = vadd.f32 %v6241, %v6660
        %v6662 = vpop.f32.mrb[0].mxu0
        %v6663 = vadd.f32 %v6237, %v6662
        %v6664 = vpop.f32.mrb[0].mxu0
        %v6665 = vadd.f32 %v6241, %v6664
        %6666 = vmatprep.mubr.bf16.mxu0 %v6181
        %6667 = vmatmul.mubr.bf16.gmra.mrb[0].mxu0 %v6180
        %v6668 = vpop.f32.mrb[0].mxu0
        %v6669 = vadd.f32 %v6237, %v6668
        %v6670 = vpop.f32.mrb[0].mxu0
        %v6671 = vadd.f32 %v6241, %v6670
        %v6672 = vpop.f32.mrb[0].mxu0
        %v6673 = vadd.f32 %v6237, %v6672
        %v6674 = vpop.f32.mrb[0].mxu0
        %v6675 = vadd.f32 %v6241, %v6674
        %6676 = vmatprep.mubr.bf16.mxu0 %v6183
        %6677 = vmatmul.mubr.bf16.gmra.mrb[0].mxu0 %v6182
        %v6678 = vpop.f32.mrb[0].mxu0
        %v6679 = vadd.f32 %v6237, %v6678
        %v6680 = vpop.f32.mrb[0].mxu0
        %v6681 = vadd.f32 %v6241, %v6680
        %v6682 = vpop.f32.mrb[0].mxu0
        %v6683 = vadd.f32 %v6237, %v6682
        %v6684 = vpop.f32.mrb[0].mxu0
        %v6685 = vadd.f32 %v6241, %v6684
        %6686 = vmatprep.mubr.bf16.mxu0 %v6185
        %6687 = vmatmul.mubr.bf16.gmra.mrb[0].mxu0 %v6184
        %v6688 = vpop.f32.mrb[0].mxu0
        %v6689 = vadd.f32 %v6237, %v6688
        %v6690 = vpop.f32.mrb[0].mxu0
        %v6691 = vadd.f32 %v6241, %v6690
        %v6692 = vpop.f32.mrb[0].mxu0
        %v6693 = vadd.f32 %v6237, %v6692
        %v6694 = vpop.f32.mrb[0].mxu0
        %v6695 = vadd.f32 %v6241, %v6694
        %6696 = vmatprep.mubr.bf16.mxu0 %v6187
        %6697 = vmatmul.mubr.bf16.gmra.mrb[0].mxu0 %v6186
        %v6698 = vpop.f32.mrb[0].mxu0
        %v6699 = vadd.f32 %v6237, %v6698
        %v6700 = vpop.f32.mrb[0].mxu0
        %v6701 = vadd.f32 %v6241, %v6700
        %v6702 = vpop.f32.mrb[0].mxu0
        %v6703 = vadd.f32 %v6237, %v6702
        %v6704 = vpop.f32.mrb[0].mxu0
        %v6705 = vadd.f32 %v6241, %v6704
        %6706 = vmatprep.mubr.bf16.mxu0 %v6189
        %6707 = vmatmul.mubr.bf16.gmra.mrb[0].mxu0 %v6188
        %v6708 = vpop.f32.mrb[0].mxu0
        %v6709 = vadd.f32 %v6237, %v6708
        %v6710 = vpop.f32.mrb[0].mxu0
        %v6711 = vadd.f32 %v6241, %v6710
        %v6712 = vpop.f32.mrb[0].mxu0
        %v6713 = vadd.f32 %v6237, %v6712
        %v6714 = vpop.f32.mrb[0].mxu0
        %v6715 = vadd.f32 %v6241, %v6714
        %6716 = vmatprep.mubr.bf16.mxu0 %v6191
        %6717 = vmatmul.mubr.bf16.gmra.mrb[0].mxu0 %v6190
        %v6718 = vpop.f32.mrb[0].mxu0
        %v6719 = vadd.f32 %v6237, %v6718
        %v6720 = vpop.f32.mrb[0].mxu0
        %v6721 = vadd.f32 %v6241, %v6720
        %v6722 = vpop.f32.mrb[0].mxu0
        %v6723 = vadd.f32 %v6237, %v6722
        %v6724 = vpop.f32.mrb[0].mxu0
        %v6725 = vadd.f32 %v6241, %v6724
        %6726 = vmatprep.mubr.bf16.mxu0 %v6193
        %6727 = vmatmul.mubr.bf16.gmra.mrb[0].mxu0 %v6192
        %v6728 = vpop.f32.mrb[0].mxu0
        %v6729 = vadd.f32 %v6237, %v6728
        %v6730 = vpop.f32.mrb[0].mxu0
        %v6731 = vadd.f32 %v6241, %v6730
        %v6732 = vpop.f32.mrb[0].mxu0
        %v6733 = vadd.f32 %v6237, %v6732
        %v6734 = vpop.f32.mrb[0].mxu0
        %v6735 = vadd.f32 %v6241, %v6734
        %6736 = vmatprep.mubr.bf16.mxu0 %v6195
        %6737 = vmatmul.mubr.bf16.gmra.mrb[0].mxu0 %v6194
        %v6738 = vpop.f32.mrb[0].mxu0
        %v6739 = vadd.f32 %v6237, %v6738
        %v6740 = vpop.f32.mrb[0].mxu0
        %v6741 = vadd.f32 %v6241, %v6740
        %v6742 = vpop.f32.mrb[0].mxu0
        %v6743 = vadd.f32 %v6237, %v6742
        %v6744 = vpop.f32.mrb[0].mxu0
        %v6745 = vadd.f32 %v6241, %v6744
        %6746 = vmatprep.mubr.bf16.mxu0 %v6197
        %6747 = vmatmul.mubr.bf16.gmra.mrb[0].mxu0 %v6196
        %v6748 = vpop.f32.mrb[0].mxu0
        %v6749 = vadd.f32 %v6237, %v6748
        %v6750 = vpop.f32.mrb[0].mxu0
        %v6751 = vadd.f32 %v6241, %v6750
        %v6752 = vpop.f32.mrb[0].mxu0
        %v6753 = vadd.f32 %v6237, %v6752
        %v6754 = vpop.f32.mrb[0].mxu0
        %v6755 = vadd.f32 %v6241, %v6754
        %6756 = vdwg.mxu0
        %v6757 = vmax.f32 %v6439, 0.0
        %v6758 = vmax.f32 %v6441, 0.0
        %v6759 = vmax.f32 %v6443, 0.0
        %v6760 = vmax.f32 %v6445, 0.0
        %v6761 = vmax.f32 %v6449, 0.0
        %v6762 = vmax.f32 %v6451, 0.0
        %v6763 = vmax.f32 %v6453, 0.0
        %v6764 = vmax.f32 %v6455, 0.0
        %v6765 = vmax.f32 %v6459, 0.0
        %v6766 = vmax.f32 %v6461, 0.0
        %v6767 = vmax.f32 %v6463, 0.0
        %v6768 = vmax.f32 %v6465, 0.0
        %v6769 = vmax.f32 %v6469, 0.0
        %v6770 = vmax.f32 %v6471, 0.0
        %v6771 = vmax.f32 %v6473, 0.0
        %v6772 = vmax.f32 %v6475, 0.0
        %v6773 = vmax.f32 %v6479, 0.0
        %v6774 = vmax.f32 %v6481, 0.0
        %v6775 = vmax.f32 %v6483, 0.0
        %v6776 = vmax.f32 %v6485, 0.0
        %v6777 = vmax.f32 %v6489, 0.0
        %v6778 = vmax.f32 %v6491, 0.0
        %v6779 = vmax.f32 %v6493, 0.0
        %v6780 = vmax.f32 %v6495, 0.0
        %v6781 = vmax.f32 %v6499, 0.0
        %v6782 = vmax.f32 %v6501, 0.0
        %v6783 = vmax.f32 %v6503, 0.0
        %v6784 = vmax.f32 %v6505, 0.0
        %v6785 = vmax.f32 %v6509, 0.0
        %v6786 = vmax.f32 %v6511, 0.0
        %v6787 = vmax.f32 %v6513, 0.0
        %v6788 = vmax.f32 %v6515, 0.0
        %v6789 = vmax.f32 %v6519, 0.0
        %v6790 = vmax.f32 %v6521, 0.0
        %v6791 = vmax.f32 %v6523, 0.0
        %v6792 = vmax.f32 %v6525, 0.0
        %v6793 = vmax.f32 %v6529, 0.0
        %v6794 = vmax.f32 %v6531, 0.0
        %v6795 = vmax.f32 %v6533, 0.0
        %v6796 = vmax.f32 %v6535, 0.0
        %v6797 = vmax.f32 %v6539, 0.0
        %v6798 = vmax.f32 %v6541, 0.0
        %v6799 = vmax.f32 %v6543, 0.0
        %v6800 = vmax.f32 %v6545, 0.0
        %v6801 = vmax.f32 %v6549, 0.0
        %v6802 = vmax.f32 %v6551, 0.0
        %v6803 = vmax.f32 %v6553, 0.0
        %v6804 = vmax.f32 %v6555, 0.0
        %v6805 = vmax.f32 %v6559, 0.0
        %v6806 = vmax.f32 %v6561, 0.0
        %v6807 = vmax.f32 %v6563, 0.0
        %v6808 = vmax.f32 %v6565, 0.0
        %v6809 = vmax.f32 %v6569, 0.0
        %v6810 = vmax.f32 %v6571, 0.0
        %v6811 = vmax.f32 %v6573, 0.0
        %v6812 = vmax.f32 %v6575, 0.0
        %v6813 = vmax.f32 %v6579, 0.0
        %v6814 = vmax.f32 %v6581, 0.0
        %v6815 = vmax.f32 %v6583, 0.0
        %v6816 = vmax.f32 %v6585, 0.0
        %v6817 = vmax.f32 %v6589, 0.0
        %v6818 = vmax.f32 %v6591, 0.0
        %v6819 = vmax.f32 %v6593, 0.0
        %v6820 = vmax.f32 %v6595, 0.0
        %v6821 = vmax.f32 %v6599, 0.0
        %v6822 = vmax.f32 %v6601, 0.0
        %v6823 = vmax.f32 %v6603, 0.0
        %v6824 = vmax.f32 %v6605, 0.0
        %v6825 = vmax.f32 %v6609, 0.0
        %v6826 = vmax.f32 %v6611, 0.0
        %v6827 = vmax.f32 %v6613, 0.0
        %v6828 = vmax.f32 %v6615, 0.0
        %v6829 = vmax.f32 %v6619, 0.0
        %v6830 = vmax.f32 %v6621, 0.0
        %v6831 = vmax.f32 %v6623, 0.0
        %v6832 = vmax.f32 %v6625, 0.0
        %v6833 = vmax.f32 %v6629, 0.0
        %v6834 = vmax.f32 %v6631, 0.0
        %v6835 = vmax.f32 %v6633, 0.0
        %v6836 = vmax.f32 %v6635, 0.0
        %v6837 = vmax.f32 %v6639, 0.0
        %v6838 = vmax.f32 %v6641, 0.0
        %v6839 = vmax.f32 %v6643, 0.0
        %v6840 = vmax.f32 %v6645, 0.0
        %v6841 = vmax.f32 %v6649, 0.0
        %v6842 = vmax.f32 %v6651, 0.0
        %v6843 = vmax.f32 %v6653, 0.0
        %v6844 = vmax.f32 %v6655, 0.0
        %v6845 = vmax.f32 %v6659, 0.0
        %v6846 = vmax.f32 %v6661, 0.0
        %v6847 = vmax.f32 %v6663, 0.0
        %v6848 = vmax.f32 %v6665, 0.0
        %v6849 = vmax.f32 %v6669, 0.0
        %v6850 = vmax.f32 %v6671, 0.0
        %v6851 = vmax.f32 %v6673, 0.0
        %v6852 = vmax.f32 %v6675, 0.0
        %v6853 = vmax.f32 %v6679, 0.0
        %v6854 = vmax.f32 %v6681, 0.0
        %v6855 = vmax.f32 %v6683, 0.0
        %v6856 = vmax.f32 %v6685, 0.0
        %v6857 = vmax.f32 %v6689, 0.0
        %v6858 = vmax.f32 %v6691, 0.0
        %v6859 = vmax.f32 %v6693, 0.0
        %v6860 = vmax.f32 %v6695, 0.0
        %v6861 = vmax.f32 %v6699, 0.0
        %v6862 = vmax.f32 %v6701, 0.0
        %v6863 = vmax.f32 %v6703, 0.0
        %v6864 = vmax.f32 %v6705, 0.0
        %v6865 = vmax.f32 %v6709, 0.0
        %v6866 = vmax.f32 %v6711, 0.0
        %v6867 = vmax.f32 %v6713, 0.0
        %v6868 = vmax.f32 %v6715, 0.0
        %v6869 = vmax.f32 %v6719, 0.0
        %v6870 = vmax.f32 %v6721, 0.0
        %v6871 = vmax.f32 %v6723, 0.0
        %v6872 = vmax.f32 %v6725, 0.0
        %v6873 = vmax.f32 %v6729, 0.0
        %v6874 = vmax.f32 %v6731, 0.0
        %v6875 = vmax.f32 %v6733, 0.0
        %v6876 = vmax.f32 %v6735, 0.0
        %v6877 = vmax.f32 %v6739, 0.0
        %v6878 = vmax.f32 %v6741, 0.0
        %v6879 = vmax.f32 %v6743, 0.0
        %v6880 = vmax.f32 %v6745, 0.0
        %v6881 = vmax.f32 %v6749, 0.0
        %v6882 = vmax.f32 %v6751, 0.0
        %v6883 = vmax.f32 %v6753, 0.0
        %v6884 = vmax.f32 %v6755, 0.0
        %v6885 = vpack.c.bf16 %v6759, %v6757
        %v6886 = vpack.c.bf16 %v6760, %v6758
        %v6887 = vpack.c.bf16 %v6763, %v6761
        %v6888 = vpack.c.bf16 %v6764, %v6762
        %v6889 = vpack.c.bf16 %v6767, %v6765
        %v6890 = vpack.c.bf16 %v6768, %v6766
        %v6891 = vpack.c.bf16 %v6771, %v6769
        %v6892 = vpack.c.bf16 %v6772, %v6770
        %v6893 = vpack.c.bf16 %v6775, %v6773
        %v6894 = vpack.c.bf16 %v6776, %v6774
        %v6895 = vpack.c.bf16 %v6779, %v6777
        %v6896 = vpack.c.bf16 %v6780, %v6778
        %v6897 = vpack.c.bf16 %v6783, %v6781
        %v6898 = vpack.c.bf16 %v6784, %v6782
        %v6899 = vpack.c.bf16 %v6787, %v6785
        %v6900 = vpack.c.bf16 %v6788, %v6786
        %v6901 = vpack.c.bf16 %v6791, %v6789
        %v6902 = vpack.c.bf16 %v6792, %v6790
        %v6903 = vpack.c.bf16 %v6795, %v6793
        %v6904 = vpack.c.bf16 %v6796, %v6794
        %v6905 = vpack.c.bf16 %v6799, %v6797
        %v6906 = vpack.c.bf16 %v6800, %v6798
        %v6907 = vpack.c.bf16 %v6803, %v6801
        %v6908 = vpack.c.bf16 %v6804, %v6802
        %v6909 = vpack.c.bf16 %v6807, %v6805
        %v6910 = vpack.c.bf16 %v6808, %v6806
        %v6911 = vpack.c.bf16 %v6811, %v6809
        %v6912 = vpack.c.bf16 %v6812, %v6810
        %v6913 = vpack.c.bf16 %v6815, %v6813
        %v6914 = vpack.c.bf16 %v6816, %v6814
        %v6915 = vpack.c.bf16 %v6819, %v6817
        %v6916 = vpack.c.bf16 %v6820, %v6818
        %v6917 = vpack.c.bf16 %v6823, %v6821
        %v6918 = vpack.c.bf16 %v6824, %v6822
        %v6919 = vpack.c.bf16 %v6827, %v6825
        %v6920 = vpack.c.bf16 %v6828, %v6826
        %v6921 = vpack.c.bf16 %v6831, %v6829
        %v6922 = vpack.c.bf16 %v6832, %v6830
        %v6923 = vpack.c.bf16 %v6835, %v6833
        %v6924 = vpack.c.bf16 %v6836, %v6834
        %v6925 = vpack.c.bf16 %v6839, %v6837
        %v6926 = vpack.c.bf16 %v6840, %v6838
        %v6927 = vpack.c.bf16 %v6843, %v6841
        %v6928 = vpack.c.bf16 %v6844, %v6842
        %v6929 = vpack.c.bf16 %v6847, %v6845
        %v6930 = vpack.c.bf16 %v6848, %v6846
        %v6931 = vpack.c.bf16 %v6851, %v6849
        %v6932 = vpack.c.bf16 %v6852, %v6850
        %v6933 = vpack.c.bf16 %v6855, %v6853
        %v6934 = vpack.c.bf16 %v6856, %v6854
        %v6935 = vpack.c.bf16 %v6859, %v6857
        %v6936 = vpack.c.bf16 %v6860, %v6858
        %v6937 = vpack.c.bf16 %v6863, %v6861
        %v6938 = vpack.c.bf16 %v6864, %v6862
        %v6939 = vpack.c.bf16 %v6867, %v6865
        %v6940 = vpack.c.bf16 %v6868, %v6866
        %v6941 = vpack.c.bf16 %v6871, %v6869
        %v6942 = vpack.c.bf16 %v6872, %v6870
        %v6943 = vpack.c.bf16 %v6875, %v6873
        %v6944 = vpack.c.bf16 %v6876, %v6874
        %v6945 = vpack.c.bf16 %v6879, %v6877
        %v6946 = vpack.c.bf16 %v6880, %v6878
        %v6947 = vpack.c.bf16 %v6883, %v6881
        %v6948 = vpack.c.bf16 %v6884, %v6882
        %v7013 = vunpack.c.l.b16 %v6885
        %v7014 = vunpack.c.l.b16 %v6886
        %v7015 = vunpack.c.h.b16 %v6885
        %v7016 = vunpack.c.h.b16 %v6886
        %v7017 = vunpack.c.l.b16 %v6887
        %v7018 = vunpack.c.l.b16 %v6888
        %v7019 = vunpack.c.h.b16 %v6887
        %v7020 = vunpack.c.h.b16 %v6888
        %v7021 = vunpack.c.l.b16 %v6889
        %v7022 = vunpack.c.l.b16 %v6890
        %v7023 = vunpack.c.h.b16 %v6889
        %v7024 = vunpack.c.h.b16 %v6890
        %v7025 = vunpack.c.l.b16 %v6891
        %v7026 = vunpack.c.l.b16 %v6892
        %v7027 = vunpack.c.h.b16 %v6891
        %v7028 = vunpack.c.h.b16 %v6892
        %v7029 = vunpack.c.l.b16 %v6893
        %v7030 = vunpack.c.l.b16 %v6894
        %v7031 = vunpack.c.h.b16 %v6893
        %v7032 = vunpack.c.h.b16 %v6894
        %v7033 = vunpack.c.l.b16 %v6895
        %v7034 = vunpack.c.l.b16 %v6896
        %v7035 = vunpack.c.h.b16 %v6895
        %v7036 = vunpack.c.h.b16 %v6896
        %v7037 = vunpack.c.l.b16 %v6897
        %v7038 = vunpack.c.l.b16 %v6898
        %v7039 = vunpack.c.h.b16 %v6897
        %v7040 = vunpack.c.h.b16 %v6898
        %v7041 = vunpack.c.l.b16 %v6899
        %v7042 = vunpack.c.l.b16 %v6900
        %v7043 = vunpack.c.h.b16 %v6899
        %v7044 = vunpack.c.h.b16 %v6900
        %v7045 = vunpack.c.l.b16 %v6901
        %v7046 = vunpack.c.l.b16 %v6902
        %v7047 = vunpack.c.h.b16 %v6901
        %v7048 = vunpack.c.h.b16 %v6902
        %v7049 = vunpack.c.l.b16 %v6903
        %v7050 = vunpack.c.l.b16 %v6904
        %v7051 = vunpack.c.h.b16 %v6903
        %v7052 = vunpack.c.h.b16 %v6904
        %v7053 = vunpack.c.l.b16 %v6905
        %v7054 = vunpack.c.l.b16 %v6906
        %v7055 = vunpack.c.h.b16 %v6905
        %v7056 = vunpack.c.h.b16 %v6906
        %v7057 = vunpack.c.l.b16 %v6907
        %v7058 = vunpack.c.l.b16 %v6908
        %v7059 = vunpack.c.h.b16 %v6907
        %v7060 = vunpack.c.h.b16 %v6908
        %v7061 = vunpack.c.l.b16 %v6909
        %v7062 = vunpack.c.l.b16 %v6910
        %v7063 = vunpack.c.h.b16 %v6909
        %v7064 = vunpack.c.h.b16 %v6910
        %v7065 = vunpack.c.l.b16 %v6911
        %v7066 = vunpack.c.l.b16 %v6912
        %v7067 = vunpack.c.h.b16 %v6911
        %v7068 = vunpack.c.h.b16 %v6912
        %v7069 = vunpack.c.l.b16 %v6913
        %v7070 = vunpack.c.l.b16 %v6914
        %v7071 = vunpack.c.h.b16 %v6913
        %v7072 = vunpack.c.h.b16 %v6914
        %v7073 = vunpack.c.l.b16 %v6915
        %v7074 = vunpack.c.l.b16 %v6916
        %v7075 = vunpack.c.h.b16 %v6915
        %v7076 = vunpack.c.h.b16 %v6916
        %v7077 = vunpack.c.l.b16 %v6917
        %v7078 = vunpack.c.l.b16 %v6918
        %v7079 = vunpack.c.h.b16 %v6917
        %v7080 = vunpack.c.h.b16 %v6918
        %v7081 = vunpack.c.l.b16 %v6919
        %v7082 = vunpack.c.l.b16 %v6920
        %v7083 = vunpack.c.h.b16 %v6919
        %v7084 = vunpack.c.h.b16 %v6920
        %v7085 = vunpack.c.l.b16 %v6921
        %v7086 = vunpack.c.l.b16 %v6922
        %v7087 = vunpack.c.h.b16 %v6921
        %v7088 = vunpack.c.h.b16 %v6922
        %v7089 = vunpack.c.l.b16 %v6923
        %v7090 = vunpack.c.l.b16 %v6924
        %v7091 = vunpack.c.h.b16 %v6923
        %v7092 = vunpack.c.h.b16 %v6924
        %v7093 = vunpack.c.l.b16 %v6925
        %v7094 = vunpack.c.l.b16 %v6926
        %v7095 = vunpack.c.h.b16 %v6925
        %v7096 = vunpack.c.h.b16 %v6926
        %v7097 = vunpack.c.l.b16 %v6927
        %v7098 = vunpack.c.l.b16 %v6928
        %v7099 = vunpack.c.h.b16 %v6927
        %v7100 = vunpack.c.h.b16 %v6928
        %v7101 = vunpack.c.l.b16 %v6929
        %v7102 = vunpack.c.l.b16 %v6930
        %v7103 = vunpack.c.h.b16 %v6929
        %v7104 = vunpack.c.h.b16 %v6930
        %v7105 = vunpack.c.l.b16 %v6931
        %v7106 = vunpack.c.l.b16 %v6932
        %v7107 = vunpack.c.h.b16 %v6931
        %v7108 = vunpack.c.h.b16 %v6932
        %v7109 = vunpack.c.l.b16 %v6933
        %v7110 = vunpack.c.l.b16 %v6934
        %v7111 = vunpack.c.h.b16 %v6933
        %v7112 = vunpack.c.h.b16 %v6934
        %v7113 = vunpack.c.l.b16 %v6935
        %v7114 = vunpack.c.l.b16 %v6936
        %v7115 = vunpack.c.h.b16 %v6935
        %v7116 = vunpack.c.h.b16 %v6936
        %v7117 = vunpack.c.l.b16 %v6937
        %v7118 = vunpack.c.l.b16 %v6938
        %v7119 = vunpack.c.h.b16 %v6937
        %v7120 = vunpack.c.h.b16 %v6938
        %v7121 = vunpack.c.l.b16 %v6939
        %v7122 = vunpack.c.l.b16 %v6940
        %v7123 = vunpack.c.h.b16 %v6939
        %v7124 = vunpack.c.h.b16 %v6940
        %v7125 = vunpack.c.l.b16 %v6941
        %v7126 = vunpack.c.l.b16 %v6942
        %v7127 = vunpack.c.h.b16 %v6941
        %v7128 = vunpack.c.h.b16 %v6942
        %v7129 = vunpack.c.l.b16 %v6943
        %v7130 = vunpack.c.l.b16 %v6944
        %v7131 = vunpack.c.h.b16 %v6943
        %v7132 = vunpack.c.h.b16 %v6944
        %v7133 = vunpack.c.l.b16 %v6945
        %v7134 = vunpack.c.l.b16 %v6946
        %v7135 = vunpack.c.h.b16 %v6945
        %v7136 = vunpack.c.h.b16 %v6946
        %v7137 = vunpack.c.l.b16 %v6947
        %v7138 = vunpack.c.l.b16 %v6948
        %v7139 = vunpack.c.h.b16 %v6947
        %v7140 = vunpack.c.h.b16 %v6948
        %v7141 = vpack.c.b16 %v7014, %v7013
        %v7142 = vpack.c.b16 %v7016, %v7015
        %v7143 = vpack.c.b16 %v7018, %v7017
        %v7144 = vpack.c.b16 %v7020, %v7019
        %v7145 = vpack.c.b16 %v7022, %v7021
        %v7146 = vpack.c.b16 %v7024, %v7023
        %v7147 = vpack.c.b16 %v7026, %v7025
        %v7148 = vpack.c.b16 %v7028, %v7027
        %v7149 = vpack.c.b16 %v7030, %v7029
        %v7150 = vpack.c.b16 %v7032, %v7031
        %v7151 = vpack.c.b16 %v7034, %v7033
        %v7152 = vpack.c.b16 %v7036, %v7035
        %v7153 = vpack.c.b16 %v7038, %v7037
        %v7154 = vpack.c.b16 %v7040, %v7039
        %v7155 = vpack.c.b16 %v7042, %v7041
        %v7156 = vpack.c.b16 %v7044, %v7043
        %v7157 = vpack.c.b16 %v7046, %v7045
        %v7158 = vpack.c.b16 %v7048, %v7047
        %v7159 = vpack.c.b16 %v7050, %v7049
        %v7160 = vpack.c.b16 %v7052, %v7051
        %v7161 = vpack.c.b16 %v7054, %v7053
        %v7162 = vpack.c.b16 %v7056, %v7055
        %v7163 = vpack.c.b16 %v7058, %v7057
        %v7164 = vpack.c.b16 %v7060, %v7059
        %v7165 = vpack.c.b16 %v7062, %v7061
        %v7166 = vpack.c.b16 %v7064, %v7063
        %v7167 = vpack.c.b16 %v7066, %v7065
        %v7168 = vpack.c.b16 %v7068, %v7067
        %v7169 = vpack.c.b16 %v7070, %v7069
        %v7170 = vpack.c.b16 %v7072, %v7071
        %v7171 = vpack.c.b16 %v7074, %v7073
        %v7172 = vpack.c.b16 %v7076, %v7075
        %v7173 = vpack.c.b16 %v7078, %v7077
        %v7174 = vpack.c.b16 %v7080, %v7079
        %v7175 = vpack.c.b16 %v7082, %v7081
        %v7176 = vpack.c.b16 %v7084, %v7083
        %v7177 = vpack.c.b16 %v7086, %v7085
        %v7178 = vpack.c.b16 %v7088, %v7087
        %v7179 = vpack.c.b16 %v7090, %v7089
        %v7180 = vpack.c.b16 %v7092, %v7091
        %v7181 = vpack.c.b16 %v7094, %v7093
        %v7182 = vpack.c.b16 %v7096, %v7095
        %v7183 = vpack.c.b16 %v7098, %v7097
        %v7184 = vpack.c.b16 %v7100, %v7099
        %v7185 = vpack.c.b16 %v7102, %v7101
        %v7186 = vpack.c.b16 %v7104, %v7103
        %v7187 = vpack.c.b16 %v7106, %v7105
        %v7188 = vpack.c.b16 %v7108, %v7107
        %v7189 = vpack.c.b16 %v7110, %v7109
        %v7190 = vpack.c.b16 %v7112, %v7111
        %v7191 = vpack.c.b16 %v7114, %v7113
        %v7192 = vpack.c.b16 %v7116, %v7115
        %v7193 = vpack.c.b16 %v7118, %v7117
        %v7194 = vpack.c.b16 %v7120, %v7119
        %v7195 = vpack.c.b16 %v7122, %v7121
        %v7196 = vpack.c.b16 %v7124, %v7123
        %v7197 = vpack.c.b16 %v7126, %v7125
        %v7198 = vpack.c.b16 %v7128, %v7127
        %v7199 = vpack.c.b16 %v7130, %v7129
        %v7200 = vpack.c.b16 %v7132, %v7131
        %v7201 = vpack.c.b16 %v7134, %v7133
        %v7202 = vpack.c.b16 %v7136, %v7135
        %v7203 = vpack.c.b16 %v7138, %v7137
        %v7204 = vpack.c.b16 %v7140, %v7139
        %7269 = vst [vmem:[%s298] sm:$0xff] %v7141
        %7270 = vst [vmem:[%s298 + $0x8] sm:$0xff] %v7142
        %7271 = vst [vmem:[%s298 + $0x10] sm:$0xff] %v7143
        %7272 = vst [vmem:[%s298 + $0x18] sm:$0xff] %v7144
        %7273 = vst [vmem:[%s298 + $0x20] sm:$0xff] %v7145
        %7274 = vst [vmem:[%s298 + $0x28] sm:$0xff] %v7146
        %7275 = vst [vmem:[%s298 + $0x30] sm:$0xff] %v7147
        %7276 = vst [vmem:[%s298 + $0x38] sm:$0xff] %v7148
        %7277 = vst [vmem:[%s298 + $0x40] sm:$0xff] %v7149
        %7278 = vst [vmem:[%s298 + $0x48] sm:$0xff] %v7150
        %7279 = vst [vmem:[%s298 + $0x50] sm:$0xff] %v7151
        %7280 = vst [vmem:[%s298 + $0x58] sm:$0xff] %v7152
        %7281 = vst [vmem:[%s298 + $0x60] sm:$0xff] %v7153
        %7282 = vst [vmem:[%s298 + $0x68] sm:$0xff] %v7154
        %7283 = vst [vmem:[%s298 + $0x70] sm:$0xff] %v7155
        %7284 = vst [vmem:[%s298 + $0x78] sm:$0xff] %v7156
        %7285 = vst [vmem:[%s298 + $0x80] sm:$0xff] %v7157
        %7286 = vst [vmem:[%s298 + $0x88] sm:$0xff] %v7158
        %7287 = vst [vmem:[%s298 + $0x90] sm:$0xff] %v7159
        %7288 = vst [vmem:[%s298 + $0x98] sm:$0xff] %v7160
        %7289 = vst [vmem:[%s298 + $0xa0] sm:$0xff] %v7161
        %7290 = vst [vmem:[%s298 + $0xa8] sm:$0xff] %v7162
        %7291 = vst [vmem:[%s298 + $0xb0] sm:$0xff] %v7163
        %7292 = vst [vmem:[%s298 + $0xb8] sm:$0xff] %v7164
        %7293 = vst [vmem:[%s298 + $0xc0] sm:$0xff] %v7165
        %7294 = vst [vmem:[%s298 + $0xc8] sm:$0xff] %v7166
        %7295 = vst [vmem:[%s298 + $0xd0] sm:$0xff] %v7167
        %7296 = vst [vmem:[%s298 + $0xd8] sm:$0xff] %v7168
        %7297 = vst [vmem:[%s298 + $0xe0] sm:$0xff] %v7169
        %7298 = vst [vmem:[%s298 + $0xe8] sm:$0xff] %v7170
        %7299 = vst [vmem:[%s298 + $0xf0] sm:$0xff] %v7171
        %7300 = vst [vmem:[%s298 + $0xf8] sm:$0xff] %v7172
        %7301 = vst [vmem:[%s298 + $0x100] sm:$0xff] %v7173
        %7302 = vst [vmem:[%s298 + $0x108] sm:$0xff] %v7174
        %7303 = vst [vmem:[%s298 + $0x110] sm:$0xff] %v7175
        %7304 = vst [vmem:[%s298 + $0x118] sm:$0xff] %v7176
        %7305 = vst [vmem:[%s298 + $0x120] sm:$0xff] %v7177
        %7306 = vst [vmem:[%s298 + $0x128] sm:$0xff] %v7178
        %7307 = vst [vmem:[%s298 + $0x130] sm:$0xff] %v7179
        %7308 = vst [vmem:[%s298 + $0x138] sm:$0xff] %v7180
        %7309 = vst [vmem:[%s298 + $0x140] sm:$0xff] %v7181
        %7310 = vst [vmem:[%s298 + $0x148] sm:$0xff] %v7182
        %7311 = vst [vmem:[%s298 + $0x150] sm:$0xff] %v7183
        %7312 = vst [vmem:[%s298 + $0x158] sm:$0xff] %v7184
        %7313 = vst [vmem:[%s298 + $0x160] sm:$0xff] %v7185
        %7314 = vst [vmem:[%s298 + $0x168] sm:$0xff] %v7186
        %7315 = vst [vmem:[%s298 + $0x170] sm:$0xff] %v7187
        %7316 = vst [vmem:[%s298 + $0x178] sm:$0xff] %v7188
        %7317 = vst [vmem:[%s298 + $0x180] sm:$0xff] %v7189
        %7318 = vst [vmem:[%s298 + $0x188] sm:$0xff] %v7190
        %7319 = vst [vmem:[%s298 + $0x190] sm:$0xff] %v7191
        %7320 = vst [vmem:[%s298 + $0x198] sm:$0xff] %v7192
        %7321 = vst [vmem:[%s298 + $0x1a0] sm:$0xff] %v7193
        %7322 = vst [vmem:[%s298 + $0x1a8] sm:$0xff] %v7194
        %7323 = vst [vmem:[%s298 + $0x1b0] sm:$0xff] %v7195
        %7324 = vst [vmem:[%s298 + $0x1b8] sm:$0xff] %v7196
        %7325 = vst [vmem:[%s298 + $0x1c0] sm:$0xff] %v7197
        %7326 = vst [vmem:[%s298 + $0x1c8] sm:$0xff] %v7198
        %7327 = vst [vmem:[%s298 + $0x1d0] sm:$0xff] %v7199
        %7328 = vst [vmem:[%s298 + $0x1d8] sm:$0xff] %v7200
        %7329 = vst [vmem:[%s298 + $0x1e0] sm:$0xff] %v7201
        %7330 = vst [vmem:[%s298 + $0x1e8] sm:$0xff] %v7202
        %7331 = vst [vmem:[%s298 + $0x1f0] sm:$0xff] %v7203
        %7332 = vst [vmem:[%s298 + $0x1f8] sm:$0xff] %v7204
        %v7333 = vld [vmem:[%s4] sm:$0xf]
        %v7334 = vld [vmem:[%s4 + $0x4] sm:$0xf]
        %v7335 = vld [vmem:[%s4 + $0x8] sm:$0xf]
        %v7336 = vld [vmem:[%s4 + $0xc] sm:$0xf]
        %v7337 = vld [vmem:[%s4 + $0x10] sm:$0xf]
        %v7338 = vld [vmem:[%s4 + $0x14] sm:$0xf]
        %v7339 = vld [vmem:[%s4 + $0x18] sm:$0xf]
        %v7340 = vld [vmem:[%s4 + $0x1c] sm:$0xf]
        %v7341 = vld [vmem:[%s4 + $0x20] sm:$0xf]
        %v7342 = vld [vmem:[%s4 + $0x24] sm:$0xf]
        %v7343 = vld [vmem:[%s4 + $0x28] sm:$0xf]
        %v7344 = vld [vmem:[%s4 + $0x2c] sm:$0xf]
        %v7345 = vld [vmem:[%s4 + $0x30] sm:$0xf]
        %v7346 = vld [vmem:[%s4 + $0x34] sm:$0xf]
        %v7347 = vld [vmem:[%s4 + $0x38] sm:$0xf]
        %v7348 = vld [vmem:[%s4 + $0x3c] sm:$0xf]
        %v7349 = vld [vmem:[%s4 + $0x40] sm:$0xf]
        %v7350 = vld [vmem:[%s4 + $0x44] sm:$0xf]
        %v7351 = vld [vmem:[%s4 + $0x48] sm:$0xf]
        %v7352 = vld [vmem:[%s4 + $0x4c] sm:$0xf]
        %v7353 = vld [vmem:[%s4 + $0x50] sm:$0xf]
        %v7354 = vld [vmem:[%s4 + $0x54] sm:$0xf]
        %v7355 = vld [vmem:[%s4 + $0x58] sm:$0xf]
        %v7356 = vld [vmem:[%s4 + $0x5c] sm:$0xf]
        %v7357 = vld [vmem:[%s4 + $0x60] sm:$0xf]
        %v7358 = vld [vmem:[%s4 + $0x64] sm:$0xf]
        %v7359 = vld [vmem:[%s4 + $0x68] sm:$0xf]
        %v7360 = vld [vmem:[%s4 + $0x6c] sm:$0xf]
        %v7361 = vld [vmem:[%s4 + $0x70] sm:$0xf]
        %v7362 = vld [vmem:[%s4 + $0x74] sm:$0xf]
        %v7363 = vld [vmem:[%s4 + $0x78] sm:$0xf]
        %v7364 = vld [vmem:[%s4 + $0x7c] sm:$0xf]
        %v7365 = vld [vmem:[%s5] sm:$0x1]
        %v7367 = vlaneseq
        %v7368 = vshrl.u32 %v7367, 7
        %v7369 = vsub.s32 0, %v7368
        %v7370 = vrot.slane %v7365, %v7369
        %v7404 = vunpack.c.l.b16 %v7333
        %v7405 = vunpack.c.l.b16 %v7334
        %v7406 = vunpack.c.l.b16 %v7335
        %v7407 = vunpack.c.l.b16 %v7336
        %v7408 = vunpack.c.l.b16 %v7337
        %v7409 = vunpack.c.l.b16 %v7338
        %v7410 = vunpack.c.l.b16 %v7339
        %v7411 = vunpack.c.l.b16 %v7340
        %v7412 = vunpack.c.l.b16 %v7341
        %v7413 = vunpack.c.l.b16 %v7342
        %v7414 = vunpack.c.l.b16 %v7343
        %v7415 = vunpack.c.l.b16 %v7344
        %v7416 = vunpack.c.l.b16 %v7345
        %v7417 = vunpack.c.l.b16 %v7346
        %v7418 = vunpack.c.l.b16 %v7347
        %v7419 = vunpack.c.l.b16 %v7348
        %v7420 = vunpack.c.l.b16 %v7349
        %v7421 = vunpack.c.l.b16 %v7350
        %v7422 = vunpack.c.l.b16 %v7351
        %v7423 = vunpack.c.l.b16 %v7352
        %v7424 = vunpack.c.l.b16 %v7353
        %v7425 = vunpack.c.l.b16 %v7354
        %v7426 = vunpack.c.l.b16 %v7355
        %v7427 = vunpack.c.l.b16 %v7356
        %v7428 = vunpack.c.l.b16 %v7357
        %v7429 = vunpack.c.l.b16 %v7358
        %v7430 = vunpack.c.l.b16 %v7359
        %v7431 = vunpack.c.l.b16 %v7360
        %v7432 = vunpack.c.l.b16 %v7361
        %v7433 = vunpack.c.l.b16 %v7362
        %v7434 = vunpack.c.l.b16 %v7363
        %v7435 = vunpack.c.l.b16 %v7364
        %v7436 = vpack.c.b16 %v7405, %v7404
        %v7437 = vpack.c.b16 %v7407, %v7406
        %v7438 = vpack.c.b16 %v7409, %v7408
        %v7439 = vpack.c.b16 %v7411, %v7410
        %v7440 = vpack.c.b16 %v7413, %v7412
        %v7441 = vpack.c.b16 %v7415, %v7414
        %v7442 = vpack.c.b16 %v7417, %v7416
        %v7443 = vpack.c.b16 %v7419, %v7418
        %v7444 = vpack.c.b16 %v7421, %v7420
        %v7445 = vpack.c.b16 %v7423, %v7422
        %v7446 = vpack.c.b16 %v7425, %v7424
        %v7447 = vpack.c.b16 %v7427, %v7426
        %v7448 = vpack.c.b16 %v7429, %v7428
        %v7449 = vpack.c.b16 %v7431, %v7430
        %v7450 = vpack.c.b16 %v7433, %v7432
        %v7451 = vpack.c.b16 %v7435, %v7434
        %7468 = vmatprep.subr.bf16.mxu0 0
        %7469 = vmatpush1.bf16.msra.mxu0 %v7436
        %7470 = vmatprep.subr.bf16.mxu0 0
        %7471 = vmatpush1.bf16.msra.mxu0 %v7437
        %7472 = vmatprep.subr.bf16.mxu0 0
        %7473 = vmatpush1.bf16.msra.mxu0 %v7438
        %7474 = vmatprep.subr.bf16.mxu0 0
        %7475 = vmatpush1.bf16.msra.mxu0 %v7439
        %7476 = vmatprep.subr.bf16.mxu0 0
        %7477 = vmatpush1.bf16.msra.mxu0 %v7440
        %7478 = vmatprep.subr.bf16.mxu0 0
        %7479 = vmatpush1.bf16.msra.mxu0 %v7441
        %7480 = vmatprep.subr.bf16.mxu0 0
        %7481 = vmatpush1.bf16.msra.mxu0 %v7442
        %7482 = vmatprep.subr.bf16.mxu0 0
        %7483 = vmatpush1.bf16.msra.mxu0 %v7443
        %7484 = vmatprep.subr.bf16.mxu0 0
        %7485 = vmatpush1.bf16.msra.mxu0 %v7444
        %7486 = vmatprep.subr.bf16.mxu0 0
        %7487 = vmatpush1.bf16.msra.mxu0 %v7445
        %7488 = vmatprep.subr.bf16.mxu0 0
        %7489 = vmatpush1.bf16.msra.mxu0 %v7446
        %7490 = vmatprep.subr.bf16.mxu0 0
        %7491 = vmatpush1.bf16.msra.mxu0 %v7447
        %7492 = vmatprep.subr.bf16.mxu0 0
        %7493 = vmatpush1.bf16.msra.mxu0 %v7448
        %7494 = vmatprep.subr.bf16.mxu0 0
        %7495 = vmatpush1.bf16.msra.mxu0 %v7449
        %7496 = vmatprep.subr.bf16.mxu0 0
        %7497 = vmatpush1.bf16.msra.mxu0 %v7450
        %7498 = vmatprep.subr.bf16.mxu0 0
        %7499 = vmatpush1.bf16.msra.mxu0 %v7451
        %7500 = vmatprep.mubr.bf16.mxu0 %v6886
        %7501 = vmatmul.mubr.bf16.gmra.mrb[0].mxu0 %v6885
        %v7502 = vpop.f32.mrb[0].mxu0
        %v7503 = vadd.f32 %v7370, %v7502
        %v7504 = vpop.f32.mrb[0].mxu0
        %v7505 = vpop.f32.mrb[0].mxu0
        %v7506 = vadd.f32 %v7370, %v7505
        %v7507 = vpop.f32.mrb[0].mxu0
        %7508 = vmatprep.mubr.bf16.mxu0 %v6888
        %7509 = vmatmul.mubr.bf16.gmra.mrb[0].mxu0 %v6887
        %v7510 = vpop.f32.mrb[0].mxu0
        %v7511 = vadd.f32 %v7370, %v7510
        %v7512 = vpop.f32.mrb[0].mxu0
        %v7513 = vpop.f32.mrb[0].mxu0
        %v7514 = vadd.f32 %v7370, %v7513
        %v7515 = vpop.f32.mrb[0].mxu0
        %7516 = vmatprep.mubr.bf16.mxu0 %v6890
        %7517 = vmatmul.mubr.bf16.gmra.mrb[0].mxu0 %v6889
        %v7518 = vpop.f32.mrb[0].mxu0
        %v7519 = vadd.f32 %v7370, %v7518
        %v7520 = vpop.f32.mrb[0].mxu0
        %v7521 = vpop.f32.mrb[0].mxu0
        %v7522 = vadd.f32 %v7370, %v7521
        %v7523 = vpop.f32.mrb[0].mxu0
        %7524 = vmatprep.mubr.bf16.mxu0 %v6892
        %7525 = vmatmul.mubr.bf16.gmra.mrb[0].mxu0 %v6891
        %v7526 = vpop.f32.mrb[0].mxu0
        %v7527 = vadd.f32 %v7370, %v7526
        %v7528 = vpop.f32.mrb[0].mxu0
        %v7529 = vpop.f32.mrb[0].mxu0
        %v7530 = vadd.f32 %v7370, %v7529
        %v7531 = vpop.f32.mrb[0].mxu0
        %7532 = vmatprep.mubr.bf16.mxu0 %v6894
        %7533 = vmatmul.mubr.bf16.gmra.mrb[0].mxu0 %v6893
        %v7534 = vpop.f32.mrb[0].mxu0
        %v7535 = vadd.f32 %v7370, %v7534
        %v7536 = vpop.f32.mrb[0].mxu0
        %v7537 = vpop.f32.mrb[0].mxu0
        %v7538 = vadd.f32 %v7370, %v7537
        %v7539 = vpop.f32.mrb[0].mxu0
        %7540 = vmatprep.mubr.bf16.mxu0 %v6896
        %7541 = vmatmul.mubr.bf16.gmra.mrb[0].mxu0 %v6895
        %v7542 = vpop.f32.mrb[0].mxu0
        %v7543 = vadd.f32 %v7370, %v7542
        %v7544 = vpop.f32.mrb[0].mxu0
        %v7545 = vpop.f32.mrb[0].mxu0
        %v7546 = vadd.f32 %v7370, %v7545
        %v7547 = vpop.f32.mrb[0].mxu0
        %7548 = vmatprep.mubr.bf16.mxu0 %v6898
        %7549 = vmatmul.mubr.bf16.gmra.mrb[0].mxu0 %v6897
        %v7550 = vpop.f32.mrb[0].mxu0
        %v7551 = vadd.f32 %v7370, %v7550
        %v7552 = vpop.f32.mrb[0].mxu0
        %v7553 = vpop.f32.mrb[0].mxu0
        %v7554 = vadd.f32 %v7370, %v7553
        %v7555 = vpop.f32.mrb[0].mxu0
        %7556 = vmatprep.mubr.bf16.mxu0 %v6900
        %7557 = vmatmul.mubr.bf16.gmra.mrb[0].mxu0 %v6899
        %v7558 = vpop.f32.mrb[0].mxu0
        %v7559 = vadd.f32 %v7370, %v7558
        %v7560 = vpop.f32.mrb[0].mxu0
        %v7561 = vpop.f32.mrb[0].mxu0
        %v7562 = vadd.f32 %v7370, %v7561
        %v7563 = vpop.f32.mrb[0].mxu0
        %7564 = vmatprep.mubr.bf16.mxu0 %v6902
        %7565 = vmatmul.mubr.bf16.gmra.mrb[0].mxu0 %v6901
        %v7566 = vpop.f32.mrb[0].mxu0
        %v7567 = vadd.f32 %v7370, %v7566
        %v7568 = vpop.f32.mrb[0].mxu0
        %v7569 = vpop.f32.mrb[0].mxu0
        %v7570 = vadd.f32 %v7370, %v7569
        %v7571 = vpop.f32.mrb[0].mxu0
        %7572 = vmatprep.mubr.bf16.mxu0 %v6904
        %7573 = vmatmul.mubr.bf16.gmra.mrb[0].mxu0 %v6903
        %v7574 = vpop.f32.mrb[0].mxu0
        %v7575 = vadd.f32 %v7370, %v7574
        %v7576 = vpop.f32.mrb[0].mxu0
        %v7577 = vpop.f32.mrb[0].mxu0
        %v7578 = vadd.f32 %v7370, %v7577
        %v7579 = vpop.f32.mrb[0].mxu0
        %7580 = vmatprep.mubr.bf16.mxu0 %v6906
        %7581 = vmatmul.mubr.bf16.gmra.mrb[0].mxu0 %v6905
        %v7582 = vpop.f32.mrb[0].mxu0
        %v7583 = vadd.f32 %v7370, %v7582
        %v7584 = vpop.f32.mrb[0].mxu0
        %v7585 = vpop.f32.mrb[0].mxu0
        %v7586 = vadd.f32 %v7370, %v7585
        %v7587 = vpop.f32.mrb[0].mxu0
        %7588 = vmatprep.mubr.bf16.mxu0 %v6908
        %7589 = vmatmul.mubr.bf16.gmra.mrb[0].mxu0 %v6907
        %v7590 = vpop.f32.mrb[0].mxu0
        %v7591 = vadd.f32 %v7370, %v7590
        %v7592 = vpop.f32.mrb[0].mxu0
        %v7593 = vpop.f32.mrb[0].mxu0
        %v7594 = vadd.f32 %v7370, %v7593
        %v7595 = vpop.f32.mrb[0].mxu0
        %7596 = vmatprep.mubr.bf16.mxu0 %v6910
        %7597 = vmatmul.mubr.bf16.gmra.mrb[0].mxu0 %v6909
        %v7598 = vpop.f32.mrb[0].mxu0
        %v7599 = vadd.f32 %v7370, %v7598
        %v7600 = vpop.f32.mrb[0].mxu0
        %v7601 = vpop.f32.mrb[0].mxu0
        %v7602 = vadd.f32 %v7370, %v7601
        %v7603 = vpop.f32.mrb[0].mxu0
        %7604 = vmatprep.mubr.bf16.mxu0 %v6912
        %7605 = vmatmul.mubr.bf16.gmra.mrb[0].mxu0 %v6911
        %v7606 = vpop.f32.mrb[0].mxu0
        %v7607 = vadd.f32 %v7370, %v7606
        %v7608 = vpop.f32.mrb[0].mxu0
        %v7609 = vpop.f32.mrb[0].mxu0
        %v7610 = vadd.f32 %v7370, %v7609
        %v7611 = vpop.f32.mrb[0].mxu0
        %7612 = vmatprep.mubr.bf16.mxu0 %v6914
        %7613 = vmatmul.mubr.bf16.gmra.mrb[0].mxu0 %v6913
        %v7614 = vpop.f32.mrb[0].mxu0
        %v7615 = vadd.f32 %v7370, %v7614
        %v7616 = vpop.f32.mrb[0].mxu0
        %v7617 = vpop.f32.mrb[0].mxu0
        %v7618 = vadd.f32 %v7370, %v7617
        %v7619 = vpop.f32.mrb[0].mxu0
        %7620 = vmatprep.mubr.bf16.mxu0 %v6916
        %7621 = vmatmul.mubr.bf16.gmra.mrb[0].mxu0 %v6915
        %v7622 = vpop.f32.mrb[0].mxu0
        %v7623 = vadd.f32 %v7370, %v7622
        %v7624 = vpop.f32.mrb[0].mxu0
        %v7625 = vpop.f32.mrb[0].mxu0
        %v7626 = vadd.f32 %v7370, %v7625
        %v7627 = vpop.f32.mrb[0].mxu0
        %7628 = vmatprep.mubr.bf16.mxu0 %v6918
        %7629 = vmatmul.mubr.bf16.gmra.mrb[0].mxu0 %v6917
        %v7630 = vpop.f32.mrb[0].mxu0
        %v7631 = vadd.f32 %v7370, %v7630
        %v7632 = vpop.f32.mrb[0].mxu0
        %v7633 = vpop.f32.mrb[0].mxu0
        %v7634 = vadd.f32 %v7370, %v7633
        %v7635 = vpop.f32.mrb[0].mxu0
        %7636 = vmatprep.mubr.bf16.mxu0 %v6920
        %7637 = vmatmul.mubr.bf16.gmra.mrb[0].mxu0 %v6919
        %v7638 = vpop.f32.mrb[0].mxu0
        %v7639 = vadd.f32 %v7370, %v7638
        %v7640 = vpop.f32.mrb[0].mxu0
        %v7641 = vpop.f32.mrb[0].mxu0
        %v7642 = vadd.f32 %v7370, %v7641
        %v7643 = vpop.f32.mrb[0].mxu0
        %7644 = vmatprep.mubr.bf16.mxu0 %v6922
        %7645 = vmatmul.mubr.bf16.gmra.mrb[0].mxu0 %v6921
        %v7646 = vpop.f32.mrb[0].mxu0
        %v7647 = vadd.f32 %v7370, %v7646
        %v7648 = vpop.f32.mrb[0].mxu0
        %v7649 = vpop.f32.mrb[0].mxu0
        %v7650 = vadd.f32 %v7370, %v7649
        %v7651 = vpop.f32.mrb[0].mxu0
        %7652 = vmatprep.mubr.bf16.mxu0 %v6924
        %7653 = vmatmul.mubr.bf16.gmra.mrb[0].mxu0 %v6923
        %v7654 = vpop.f32.mrb[0].mxu0
        %v7655 = vadd.f32 %v7370, %v7654
        %v7656 = vpop.f32.mrb[0].mxu0
        %v7657 = vpop.f32.mrb[0].mxu0
        %v7658 = vadd.f32 %v7370, %v7657
        %v7659 = vpop.f32.mrb[0].mxu0
        %7660 = vmatprep.mubr.bf16.mxu0 %v6926
        %7661 = vmatmul.mubr.bf16.gmra.mrb[0].mxu0 %v6925
        %v7662 = vpop.f32.mrb[0].mxu0
        %v7663 = vadd.f32 %v7370, %v7662
        %v7664 = vpop.f32.mrb[0].mxu0
        %v7665 = vpop.f32.mrb[0].mxu0
        %v7666 = vadd.f32 %v7370, %v7665
        %v7667 = vpop.f32.mrb[0].mxu0
        %7668 = vmatprep.mubr.bf16.mxu0 %v6928
        %7669 = vmatmul.mubr.bf16.gmra.mrb[0].mxu0 %v6927
        %v7670 = vpop.f32.mrb[0].mxu0
        %v7671 = vadd.f32 %v7370, %v7670
        %v7672 = vpop.f32.mrb[0].mxu0
        %v7673 = vpop.f32.mrb[0].mxu0
        %v7674 = vadd.f32 %v7370, %v7673
        %v7675 = vpop.f32.mrb[0].mxu0
        %7676 = vmatprep.mubr.bf16.mxu0 %v6930
        %7677 = vmatmul.mubr.bf16.gmra.mrb[0].mxu0 %v6929
        %v7678 = vpop.f32.mrb[0].mxu0
        %v7679 = vadd.f32 %v7370, %v7678
        %v7680 = vpop.f32.mrb[0].mxu0
        %v7681 = vpop.f32.mrb[0].mxu0
        %v7682 = vadd.f32 %v7370, %v7681
        %v7683 = vpop.f32.mrb[0].mxu0
        %7684 = vmatprep.mubr.bf16.mxu0 %v6932
        %7685 = vmatmul.mubr.bf16.gmra.mrb[0].mxu0 %v6931
        %v7686 = vpop.f32.mrb[0].mxu0
        %v7687 = vadd.f32 %v7370, %v7686
        %v7688 = vpop.f32.mrb[0].mxu0
        %v7689 = vpop.f32.mrb[0].mxu0
        %v7690 = vadd.f32 %v7370, %v7689
        %v7691 = vpop.f32.mrb[0].mxu0
        %7692 = vmatprep.mubr.bf16.mxu0 %v6934
        %7693 = vmatmul.mubr.bf16.gmra.mrb[0].mxu0 %v6933
        %v7694 = vpop.f32.mrb[0].mxu0
        %v7695 = vadd.f32 %v7370, %v7694
        %v7696 = vpop.f32.mrb[0].mxu0
        %v7697 = vpop.f32.mrb[0].mxu0
        %v7698 = vadd.f32 %v7370, %v7697
        %v7699 = vpop.f32.mrb[0].mxu0
        %7700 = vmatprep.mubr.bf16.mxu0 %v6936
        %7701 = vmatmul.mubr.bf16.gmra.mrb[0].mxu0 %v6935
        %v7702 = vpop.f32.mrb[0].mxu0
        %v7703 = vadd.f32 %v7370, %v7702
        %v7704 = vpop.f32.mrb[0].mxu0
        %v7705 = vpop.f32.mrb[0].mxu0
        %v7706 = vadd.f32 %v7370, %v7705
        %v7707 = vpop.f32.mrb[0].mxu0
        %7708 = vmatprep.mubr.bf16.mxu0 %v6938
        %7709 = vmatmul.mubr.bf16.gmra.mrb[0].mxu0 %v6937
        %v7710 = vpop.f32.mrb[0].mxu0
        %v7711 = vadd.f32 %v7370, %v7710
        %v7712 = vpop.f32.mrb[0].mxu0
        %v7713 = vpop.f32.mrb[0].mxu0
        %v7714 = vadd.f32 %v7370, %v7713
        %v7715 = vpop.f32.mrb[0].mxu0
        %7716 = vmatprep.mubr.bf16.mxu0 %v6940
        %7717 = vmatmul.mubr.bf16.gmra.mrb[0].mxu0 %v6939
        %v7718 = vpop.f32.mrb[0].mxu0
        %v7719 = vadd.f32 %v7370, %v7718
        %v7720 = vpop.f32.mrb[0].mxu0
        %v7721 = vpop.f32.mrb[0].mxu0
        %v7722 = vadd.f32 %v7370, %v7721
        %v7723 = vpop.f32.mrb[0].mxu0
        %7724 = vmatprep.mubr.bf16.mxu0 %v6942
        %7725 = vmatmul.mubr.bf16.gmra.mrb[0].mxu0 %v6941
        %v7726 = vpop.f32.mrb[0].mxu0
        %v7727 = vadd.f32 %v7370, %v7726
        %v7728 = vpop.f32.mrb[0].mxu0
        %v7729 = vpop.f32.mrb[0].mxu0
        %v7730 = vadd.f32 %v7370, %v7729
        %v7731 = vpop.f32.mrb[0].mxu0
        %7732 = vmatprep.mubr.bf16.mxu0 %v6944
        %7733 = vmatmul.mubr.bf16.gmra.mrb[0].mxu0 %v6943
        %v7734 = vpop.f32.mrb[0].mxu0
        %v7735 = vadd.f32 %v7370, %v7734
        %v7736 = vpop.f32.mrb[0].mxu0
        %v7737 = vpop.f32.mrb[0].mxu0
        %v7738 = vadd.f32 %v7370, %v7737
        %v7739 = vpop.f32.mrb[0].mxu0
        %7740 = vmatprep.mubr.bf16.mxu0 %v6946
        %7741 = vmatmul.mubr.bf16.gmra.mrb[0].mxu0 %v6945
        %v7742 = vpop.f32.mrb[0].mxu0
        %v7743 = vadd.f32 %v7370, %v7742
        %v7744 = vpop.f32.mrb[0].mxu0
        %v7745 = vpop.f32.mrb[0].mxu0
        %v7746 = vadd.f32 %v7370, %v7745
        %v7747 = vpop.f32.mrb[0].mxu0
        %7748 = vmatprep.mubr.bf16.mxu0 %v6948
        %7749 = vmatmul.mubr.bf16.gmra.mrb[0].mxu0 %v6947
        %v7750 = vpop.f32.mrb[0].mxu0
        %v7751 = vadd.f32 %v7370, %v7750
        %v7752 = vpop.f32.mrb[0].mxu0
        %v7753 = vpop.f32.mrb[0].mxu0
        %v7754 = vadd.f32 %v7370, %v7753
        %v7755 = vpop.f32.mrb[0].mxu0
        %7756 = vdwg.mxu0
        %7757 = vst [vmem:[%s291] sm:$0xff] %v7503
        %7758 = vst [vmem:[%s291 + $0x8] sm:$0xff] %v7506
        %7759 = vst [vmem:[%s291 + $0x10] sm:$0xff] %v7511
        %7760 = vst [vmem:[%s291 + $0x18] sm:$0xff] %v7514
        %7761 = vst [vmem:[%s291 + $0x20] sm:$0xff] %v7519
        %7762 = vst [vmem:[%s291 + $0x28] sm:$0xff] %v7522
        %7763 = vst [vmem:[%s291 + $0x30] sm:$0xff] %v7527
        %7764 = vst [vmem:[%s291 + $0x38] sm:$0xff] %v7530
        %7765 = vst [vmem:[%s291 + $0x40] sm:$0xff] %v7535
        %7766 = vst [vmem:[%s291 + $0x48] sm:$0xff] %v7538
        %7767 = vst [vmem:[%s291 + $0x50] sm:$0xff] %v7543
        %7768 = vst [vmem:[%s291 + $0x58] sm:$0xff] %v7546
        %7769 = vst [vmem:[%s291 + $0x60] sm:$0xff] %v7551
        %7770 = vst [vmem:[%s291 + $0x68] sm:$0xff] %v7554
        %7771 = vst [vmem:[%s291 + $0x70] sm:$0xff] %v7559
        %7772 = vst [vmem:[%s291 + $0x78] sm:$0xff] %v7562
        %7773 = vst [vmem:[%s291 + $0x80] sm:$0xff] %v7567
        %7774 = vst [vmem:[%s291 + $0x88] sm:$0xff] %v7570
        %7775 = vst [vmem:[%s291 + $0x90] sm:$0xff] %v7575
        %7776 = vst [vmem:[%s291 + $0x98] sm:$0xff] %v7578
        %7777 = vst [vmem:[%s291 + $0xa0] sm:$0xff] %v7583
        %7778 = vst [vmem:[%s291 + $0xa8] sm:$0xff] %v7586
        %7779 = vst [vmem:[%s291 + $0xb0] sm:$0xff] %v7591
        %7780 = vst [vmem:[%s291 + $0xb8] sm:$0xff] %v7594
        %7781 = vst [vmem:[%s291 + $0xc0] sm:$0xff] %v7599
        %7782 = vst [vmem:[%s291 + $0xc8] sm:$0xff] %v7602
        %7783 = vst [vmem:[%s291 + $0xd0] sm:$0xff] %v7607
        %7784 = vst [vmem:[%s291 + $0xd8] sm:$0xff] %v7610
        %7785 = vst [vmem:[%s291 + $0xe0] sm:$0xff] %v7615
        %7786 = vst [vmem:[%s291 + $0xe8] sm:$0xff] %v7618
        %7787 = vst [vmem:[%s291 + $0xf0] sm:$0xff] %v7623
        %7788 = vst [vmem:[%s291 + $0xf8] sm:$0xff] %v7626
        %7789 = vst [vmem:[%s291 + $0x100] sm:$0xff] %v7631
        %7790 = vst [vmem:[%s291 + $0x108] sm:$0xff] %v7634
        %7791 = vst [vmem:[%s291 + $0x110] sm:$0xff] %v7639
        %7792 = vst [vmem:[%s291 + $0x118] sm:$0xff] %v7642
        %7793 = vst [vmem:[%s291 + $0x120] sm:$0xff] %v7647
        %7794 = vst [vmem:[%s291 + $0x128] sm:$0xff] %v7650
        %7795 = vst [vmem:[%s291 + $0x130] sm:$0xff] %v7655
        %7796 = vst [vmem:[%s291 + $0x138] sm:$0xff] %v7658
        %7797 = vst [vmem:[%s291 + $0x140] sm:$0xff] %v7663
        %7798 = vst [vmem:[%s291 + $0x148] sm:$0xff] %v7666
        %7799 = vst [vmem:[%s291 + $0x150] sm:$0xff] %v7671
        %7800 = vst [vmem:[%s291 + $0x158] sm:$0xff] %v7674
        %7801 = vst [vmem:[%s291 + $0x160] sm:$0xff] %v7679
        %7802 = vst [vmem:[%s291 + $0x168] sm:$0xff] %v7682
        %7803 = vst [vmem:[%s291 + $0x170] sm:$0xff] %v7687
        %7804 = vst [vmem:[%s291 + $0x178] sm:$0xff] %v7690
        %7805 = vst [vmem:[%s291 + $0x180] sm:$0xff] %v7695
        %7806 = vst [vmem:[%s291 + $0x188] sm:$0xff] %v7698
        %7807 = vst [vmem:[%s291 + $0x190] sm:$0xff] %v7703
        %7808 = vst [vmem:[%s291 + $0x198] sm:$0xff] %v7706
        %7809 = vst [vmem:[%s291 + $0x1a0] sm:$0xff] %v7711
        %7810 = vst [vmem:[%s291 + $0x1a8] sm:$0xff] %v7714
        %7811 = vst [vmem:[%s291 + $0x1b0] sm:$0xff] %v7719
        %7812 = vst [vmem:[%s291 + $0x1b8] sm:$0xff] %v7722
        %7813 = vst [vmem:[%s291 + $0x1c0] sm:$0xff] %v7727
        %7814 = vst [vmem:[%s291 + $0x1c8] sm:$0xff] %v7730
        %7815 = vst [vmem:[%s291 + $0x1d0] sm:$0xff] %v7735
        %7816 = vst [vmem:[%s291 + $0x1d8] sm:$0xff] %v7738
        %7817 = vst [vmem:[%s291 + $0x1e0] sm:$0xff] %v7743
        %7818 = vst [vmem:[%s291 + $0x1e8] sm:$0xff] %v7746
        %7819 = vst [vmem:[%s291 + $0x1f0] sm:$0xff] %v7751
        %7820 = vst [vmem:[%s291 + $0x1f8] sm:$0xff] %v7754
        %s7821 = sand.u32 %s165, 1
        %s7822 = scalar_lea.sflag [#allocation4], %s7821
        %s7823 = sand.u32 %s165, 1
        %s7824 = smul.addr %s7823, 512
        %s7825 = scalar_lea.vmem [#allocation5], %s7824
        %s7826 = sand.u32 %s191, 1
        %s7827 = scalar_lea.sflag [#allocation7], %s7826
        %s7828 = sand.u32 %s191, 1
        %s7829 = smul.addr %s7828, 512
        %s7830 = scalar_lea.vmem [#allocation6], %s7829
        // Predicated region
        $region49: #{tpu_custom_call.1} parent=43 // pred_check
          %p7831 = pneg %p175
        $region50: #{tpu_custom_call.1} parent=43 // pred_check_branch
          %7833 = sbr.rel (%p7831) target = $region52
        $region51: #{tpu_custom_call.1} parent=43 // pred_region
          %s7834 = smul.u32 64, %s26
          %s7836 = ssub.s32 8192, 8192
          %7837 = vsyncadd %s7822, %s7836
          %s7838 = smul.addr %s7834, 128
          %s7839 = scalar_lea.hbm %s6, %s7838
          %s7840 = sshll.u32 %s7825, 4
          %s7841 = int_to_ptr.vmem [resolvable:$true] %s7840
          %7846 = dma.vmem_to_hbm [thread:$0]  %s7841, 8192, %s7839, %s7822, 128, 128, 8
        $region52: #{tpu_custom_call.1} parent=43 // pred_fallthru
          _
        // Predicated region
        $region53: #{tpu_custom_call.1} parent=43 // pred_check
          %p7847 = pneg %p201
        $region54: #{tpu_custom_call.1} parent=43 // pred_check_branch
          %7849 = sbr.rel (%p7847) target = $region56
        $region55: #{tpu_custom_call.1} parent=43 // pred_region
          %s7850 = smul.u32 64, %s26
          %s7852 = ssub.s32 8192, 8192
          %7853 = vsyncadd %s7827, %s7852
          %s7854 = smul.addr %s7850, 2
          %s7855 = smul.addr %s7854, 64
          %s7856 = scalar_lea.hbm %s7, %s7855
          %s7857 = sshll.u32 %s7830, 4
          %s7858 = int_to_ptr.vmem [resolvable:$true] %s7857
          %7863 = dma.vmem_to_hbm [thread:$0]  %s7858, 8192, %s7856, %s7827, 128, 128, 8
        $region56: #{tpu_custom_call.1} parent=43 // pred_fallthru
          _
      $region44: #{tpu_custom_call.1} parent=5 // pred_fallthru
        _
      %p7864 = scmp.le.s32.totalorder 2, %s21
      // Predicated region
      $region57: #{tpu_custom_call.1} parent=5 // pred_check
        %p7865 = pneg %p7864
      $region58: #{tpu_custom_call.1} parent=5 // pred_check_branch
        %7867 = sbr.rel (%p7865) target = $region60
      $region59: #{tpu_custom_call.1} parent=5 // pred_region
        %s7868 = ssub.s32 %s21, 2
        // Predicated region
        $region61: #{tpu_custom_call.1} parent=59 // pred_check
          %p7869 = pneg %p181
        $region62: #{tpu_custom_call.1} parent=59 // pred_check_branch
          %7871 = sbr.rel (%p7869) target = $region64
        $region63: #{tpu_custom_call.1} parent=59 // pred_region
          %s7872 = sand.u32 %s166, 1
          %s7873 = scalar_lea.sflag [#allocation4], %s7872
          %s7874 = sand.u32 %s166, 1
          %s7875 = smul.addr %s7874, 512
          %s7876 = scalar_lea.vmem [#allocation5], %s7875
          %7877 = dma.done %s7873, 8192
        $region64: #{tpu_custom_call.1} parent=59 // pred_fallthru
          _
        // Predicated region
        $region65: #{tpu_custom_call.1} parent=59 // pred_check
          %p7878 = pneg %p207
        $region66: #{tpu_custom_call.1} parent=59 // pred_check_branch
          %7880 = sbr.rel (%p7878) target = $region68
        $region67: #{tpu_custom_call.1} parent=59 // pred_region
          %s7881 = sand.u32 %s192, 1
          %s7882 = scalar_lea.sflag [#allocation7], %s7881
          %s7883 = sand.u32 %s192, 1
          %s7884 = smul.addr %s7883, 512
          %s7885 = scalar_lea.vmem [#allocation6], %s7884
          %7886 = dma.done %s7882, 8192
        $region68: #{tpu_custom_call.1} parent=59 // pred_fallthru
          _
      $region60: #{tpu_custom_call.1} parent=5 // pred_fallthru
        _
    $region6: #{tpu_custom_call.1} parent=1 // loop_footer
      %s25 = sadd.s32 1, %s21
    $region7: #{tpu_custom_call.1} parent=1 // loop_footer_branch
      %20 = sbr.rel target = $region3
    $region8: #{tpu_custom_call.1} parent=1 // loop_exit
      _
    %7887 = vsyncpa [#allocation3], 1
    %s7888 = scalar_lea.sflag [#allocation3], 1
    %7889 = vsyncpa %s7888, 1
    %7890 = vsyncpa [#allocation4], 1
    %s7891 = scalar_lea.sflag [#allocation4], 1
    %7892 = vsyncpa %s7891, 1
    %7893 = vsyncpa [#allocation7], 1
    %s7894 = scalar_lea.sflag [#allocation7], 1
    %7895 = vsyncpa %s7894, 1

</llo_original>
